<compile_context>
chip_gen: v6e
topology: v6e:2x2x1
jax: 0.10.0
libtpu: 0.0.40
codegen_flags: <defaults>
</compile_context>

<pallas_src>
import math

import jax
import jax.numpy as jnp
from jax.experimental import pallas as pl
from jax.experimental.pallas import tpu as pltpu

# ------------------------------ config -------------------------------------
COUNT = 4            # PSUM.count (module default count=4)
NUM_LABELS = 2       # PSUM(count, config, 2)
HIDDEN = 32
NUM_HEADS = 4
HEAD_DIM = HIDDEN // NUM_HEADS
INTER = 64           # config.intermediate_size
BATCH = 2
SEQ = 8
BS = BATCH * SEQ
LANE = 128           # lane-dense output slab width
LN_EPS = 1e-12


# --------------------------- shared math helpers ----------------------------
def _layernorm(x, g, b):
    mu = jnp.mean(x, axis=-1, keepdims=True)
    xc = x - mu
    var = jnp.mean(xc * xc, axis=-1, keepdims=True)
    return xc * jax.lax.rsqrt(var + LN_EPS) * g + b


def _gelu(x):
    # TODO(synk): HF "gelu" is erf-based; tanh approximation kept for robust Mosaic lowering
    # (used identically in kernel and reference).
    c = math.sqrt(2.0 / math.pi)
    return 0.5 * x * (1.0 + jnp.tanh(c * (x + 0.044715 * x * x * x)))


# ------------------------------ the kernel ----------------------------------
def psum_mixlayer_kernel(x_ref,      # [COUNT, B*S, H]   un-replicated flat layer activations
                         mask_ref,   # [B, 1, S]         additive key mask (0 / -1e4)
                         wqkv_ref,   # [COUNT, H, 3H]    [Wq*scale | Wk | Wv]
                         wo_ref,     # [COUNT, H, H]     attention output projection
                         wffn1_ref,  # [COUNT, H, INTER]
                         wffn2_ref,  # [COUNT, INTER, H]
                         vec_ref,    # [COUNT, 8, 128]   rows: bqkv, bo, ln1g, ln1b, bi, bo2, ln2g, ln2b
                         wslab_ref,  # [H, 128]          [Identity | Wcls | 0]
                         bslab_ref,  # [1, 128]          [0 ... 0 | bcls | 0]
                         out_ref,    # [B*S, 128]        lane-dense slab: hidden (0:H) | logits (H:H+2)
                         ctx_ref):   # VMEM scratch [B*S, H]: heads laid contiguously on lanes
    mask = mask_ref[...]                                  # [B, 1, S]
    dn_qkt = (((2,), (2,)), ((0,), (0,)))                 # [B,S,HD] x [B,S,HD] -> [B,S,S]
    dn_pv = (((2,), (1,)), ((0,), (0,)))                  # [B,S,S]  x [B,S,HD] -> [B,S,HD]

    hid_sum = jnp.zeros((BS, HIDDEN), jnp.float32)

    for c in range(COUNT):                                # static unroll: COUNT is small (4)
        x = x_ref[c]                                      # [B*S, H]  (residual + matmul stream)
        vec = vec_ref[c]                                  # [8, 128]

        # --- fused Q/K/V projection: one MXU-shaped matmul with K = H --------
        qkv = (jnp.dot(x, wqkv_ref[c], preferred_element_type=jnp.float32)
               + vec[0:1, :3 * HIDDEN])                   # [B*S, 3H]
        # (1/sqrt(HD) folded into the Wq/bq block; bk dropped: per-query constant along the
        #  key axis, cancelled exactly by the row-max subtraction; bv lives in the bias row.)

        # --- per-head scores / PV (batch-leading batched dots, contraction = HD) ----
        for n in range(NUM_HEADS):
            o = n * HEAD_DIM
            q = qkv[:, o:o + HEAD_DIM].reshape(BATCH, SEQ, HEAD_DIM)
            k = qkv[:, HIDDEN + o:HIDDEN + o + HEAD_DIM].reshape(BATCH, SEQ, HEAD_DIM)
            v = qkv[:, 2 * HIDDEN + o:2 * HIDDEN + o + HEAD_DIM].reshape(BATCH, SEQ, HEAD_DIM)

            s = jax.lax.dot_general(q, k, dn_qkt, preferred_element_type=jnp.float32) + mask
            s = s - jnp.max(s, axis=-1, keepdims=True)
            p = jnp.exp(s)
            p = p * pl.reciprocal(jnp.sum(p, axis=-1, keepdims=True), approx=True)

            ctx = jax.lax.dot_general(p, v, dn_pv, preferred_element_type=jnp.float32)  # [B,S,HD]
            ctx_ref[:, o:o + HEAD_DIM] = ctx.reshape(BS, HEAD_DIM)   # heads contiguous on lanes

        # --- single output projection with K = H ------------------------------------
        attn = (jnp.dot(ctx_ref[...], wo_ref[c], preferred_element_type=jnp.float32)
                + vec[1:2, :HIDDEN])
        h1 = _layernorm(attn + x, vec[2:3, :HIDDEN], vec[3:4, :HIDDEN])

        # --- feed-forward (position-wise, flat B*S rows) -----------------------------
        inter = _gelu(jnp.dot(h1, wffn1_ref[c], preferred_element_type=jnp.float32)
                      + vec[4:5, :INTER])
        ff = jnp.dot(inter, wffn2_ref[c], preferred_element_type=jnp.float32) + vec[5:6, :HIDDEN]
        hid_sum = hid_sum + _layernorm(ff + h1, vec[6:7, :HIDDEN], vec[7:8, :HIDDEN])

    hid_avg = hid_sum * (1.0 / COUNT)
    # One matmul builds the whole 128-lane output slab ([hidden | logits | 0]),
    # giving a single unmasked lane-dense store.
    out_ref[...] = (jnp.dot(hid_avg, wslab_ref[...], preferred_element_type=jnp.float32)
                    + bslab_ref[...])


# --------------------------- wrapper-side packing ----------------------------
def _pad_row(v):
    return jnp.zeros((LANE,), jnp.float32).at[: v.shape[0]].set(v)


def _pack_params(params):
    """Pack per-layer parameters into a handful of VMEM-friendly arrays.
    No batch / head replication; exact bias folds; lane padding — all outside the kernel."""
    scale = 1.0 / math.sqrt(HEAD_DIM)

    wqkv, wo, wffn1, wffn2, vec_rows = [], [], [], [], []
    for lp in params['layers']:
        # weights stored [in, out] so y = x @ W + b
        wqkv.append(jnp.concatenate([lp['wq'] * scale, lp['wk'], lp['wv']], axis=1))  # [H, 3H]
        wo.append(lp['wo'])
        wffn1.append(lp['wi'])
        wffn2.append(lp['wo2'])
        bqkv = jnp.concatenate([lp['bq'] * scale,
                                jnp.zeros((HIDDEN,), jnp.float32),   # bk dropped (softmax-invariant)
                                lp['bv']])                           # [3H]
        vec_rows.append(jnp.stack([
            _pad_row(bqkv),          # 0: fused qkv bias (3H <= 128)
            _pad_row(lp['bo']),      # 1
            _pad_row(lp['ln1g']),    # 2
            _pad_row(lp['ln1b']),    # 3
            _pad_row(lp['bi']),      # 4 (INTER <= 128)
            _pad_row(lp['bo2']),     # 5
            _pad_row(lp['ln2g']),    # 6
            _pad_row(lp['ln2b']),    # 7
        ]))

    # combined [Identity | Wcls | 0] -> one matmul emits the lane-dense output slab
    wc = params['classifier']['w']                                   # [H, NUM_LABELS]
    bc = params['classifier']['b']                                   # [NUM_LABELS]
    wslab = (jnp.zeros((HIDDEN, LANE), jnp.float32)
             .at[:, :HIDDEN].set(jnp.eye(HIDDEN, dtype=jnp.float32))
             .at[:, HIDDEN:HIDDEN + NUM_LABELS].set(wc))
    bslab = jnp.zeros((1, LANE), jnp.float32).at[0, HIDDEN:HIDDEN + NUM_LABELS].set(bc)

    return (jnp.stack(wqkv),      # [COUNT, H, 3H]
            jnp.stack(wo),        # [COUNT, H, H]
            jnp.stack(wffn1),     # [COUNT, H, INTER]
            jnp.stack(wffn2),     # [COUNT, INTER, H]
            jnp.stack(vec_rows),  # [COUNT, 8, LANE]
            wslab,                # [H, LANE]
            bslab)                # [1, LANE]


def psum_mixlayer_forward(layers_stack, attention_mask, params):
    """layers_stack: [L, B, S, H] encoder hidden states (L >= COUNT); PSUM consumes
    layers_stack[-i-1] for i = 0..COUNT-1.  attention_mask: [B, S], 1.0 = keep / 0.0 = pad.
    Returns (avg_hidden [B,S,H], avg_logits [B,S,NUM_LABELS])."""
    wqkv, wo, wffn1, wffn2, vecs, wslab, bslab = _pack_params(params)

    sel = jnp.stack([layers_stack[-i - 1] for i in range(COUNT)])          # [COUNT,B,S,H]
    x_flat = sel.reshape(COUNT, BS, HIDDEN)                                # no head broadcast
    addmask = ((1.0 - attention_mask) * -10000.0)[:, None, :]              # [B, 1, S]

    args = (x_flat, addmask, wqkv, wo, wffn1, wffn2, vecs, wslab, bslab)

    flops = COUNT * (2 * BS * HIDDEN * 3 * HIDDEN                  # fused QKV
                     + 2 * 2 * BATCH * NUM_HEADS * SEQ * SEQ * HEAD_DIM   # scores + PV
                     + 2 * BS * HIDDEN * HIDDEN                    # out proj
                     + 2 * 2 * BS * HIDDEN * INTER                 # FFN
                     ) + 2 * BS * HIDDEN * LANE                    # output slab
    transcendentals = COUNT * (BATCH * NUM_HEADS * SEQ * SEQ + BS * INTER)
    bytes_accessed = sum(int(a.size) * a.dtype.itemsize for a in args) + BS * LANE * 4

    vmem = pl.BlockSpec(memory_space=pltpu.MemorySpace.VMEM)
    slab = pl.pallas_call(
        psum_mixlayer_kernel,
        in_specs=[vmem] * len(args),
        out_specs=vmem,
        out_shape=jax.ShapeDtypeStruct((BS, LANE), jnp.float32),
        scratch_shapes=[pltpu.VMEM((BS, HIDDEN), jnp.float32)],
        cost_estimate=pl.CostEstimate(flops=flops, transcendentals=transcendentals,
                                      bytes_accessed=bytes_accessed),
    )(*args)

    avg_hidden = slab[:, :HIDDEN].reshape(BATCH, SEQ, HIDDEN)
    avg_logits = slab[:, HIDDEN:HIDDEN + NUM_LABELS].reshape(BATCH, SEQ, NUM_LABELS)
    return avg_hidden, avg_logits


# ------------------------- pure-JAX reference (PSUM) -------------------------
def _reference_forward(layers_stack, attention_mask, params):
    addmask = ((1.0 - attention_mask) * -10000.0)[:, None, None, :]        # [B,1,1,S]
    outs = []
    for i in range(COUNT):
        x = layers_stack[-i - 1]
        lp = params['layers'][i]
        q = x @ lp['wq'] + lp['bq']
        k = x @ lp['wk'] + lp['bk']
        v = x @ lp['wv'] + lp['bv']

        def heads(t):
            return t.reshape(BATCH, SEQ, NUM_HEADS, HEAD_DIM).transpose(0, 2, 1, 3)

        qh, kh, vh = heads(q), heads(k), heads(v)
        s = jnp.einsum('bhqd,bhkd->bhqk', qh, kh) / math.sqrt(HEAD_DIM) + addmask
        p = jax.nn.softmax(s, axis=-1)
        ctx = jnp.einsum('bhqk,bhkd->bhqd', p, vh).transpose(0, 2, 1, 3).reshape(BATCH, SEQ, HIDDEN)
        attn = ctx @ lp['wo'] + lp['bo']
        h1 = _layernorm(attn + x, lp['ln1g'], lp['ln1b'])
        inter = _gelu(h1 @ lp['wi'] + lp['bi'])
        ff = inter @ lp['wo2'] + lp['bo2']
        outs.append(_layernorm(ff + h1, lp['ln2g'], lp['ln2b']))
    hid = sum(outs) / COUNT
    logits = hid @ params['classifier']['w'] + params['classifier']['b']
    return hid, logits


# ----------------------- deterministic parameter init -----------------------
def init_params(key):
    keys = jax.random.split(key, 1 + COUNT)
    bound = math.sqrt(6.0 / (NUM_LABELS + HIDDEN))       # xavier_uniform_ on the classifier
    classifier = {
        'w': jax.random.uniform(keys[0], (HIDDEN, NUM_LABELS), jnp.float32, -bound, bound),
        'b': jnp.zeros((NUM_LABELS,), jnp.float32),      # PSUM.init_weight: bias.uniform_(0, 0)
    }

    def lin(k, fi, fo):
        lim = 1.0 / math.sqrt(fi)
        return jax.random.uniform(k, (fi, fo), jnp.float32, -lim, lim)

    layers = []
    for i in range(COUNT):
        ks = jax.random.split(keys[1 + i], 16)
        layers.append({
            'wq': lin(ks[0], HIDDEN, HIDDEN), 'bq': 0.3 * jax.random.normal(ks[6], (HIDDEN,), jnp.float32),
            'wk': lin(ks[1], HIDDEN, HIDDEN), 'bk': 0.3 * jax.random.normal(ks[7], (HIDDEN,), jnp.float32),
            'wv': lin(ks[2], HIDDEN, HIDDEN), 'bv': 0.3 * jax.random.normal(ks[8], (HIDDEN,), jnp.float32),
            'wo': lin(ks[3], HIDDEN, HIDDEN), 'bo': 0.3 * jax.random.normal(ks[9], (HIDDEN,), jnp.float32),
            'ln1g': 1.0 + 0.1 * jax.random.normal(ks[10], (HIDDEN,), jnp.float32),
            'ln1b': 0.1 * jax.random.normal(ks[11], (HIDDEN,), jnp.float32),
            'wi': lin(ks[4], HIDDEN, INTER), 'bi': 0.3 * jax.random.normal(ks[12], (INTER,), jnp.float32),
            'wo2': lin(ks[5], INTER, HIDDEN), 'bo2': 0.3 * jax.random.normal(ks[13], (HIDDEN,), jnp.float32),
            'ln2g': 1.0 + 0.1 * jax.random.normal(ks[14], (HIDDEN,), jnp.float32),
            'ln2b': 0.1 * jax.random.normal(ks[15], (HIDDEN,), jnp.float32),
        })
    return {'classifier': classifier, 'layers': layers}


# --------------------------------- main --------------------------------------
if __name__ == "__main__":
    key = jax.random.PRNGKey(0)
    kp, kl = jax.random.split(key)
    params = init_params(kp)

    num_encoder_layers = 6                      # mixlayer consumes the last COUNT of these
    layers_stack = jax.random.normal(kl, (num_encoder_layers, BATCH, SEQ, HIDDEN), jnp.float32)
    # 1/0 keep mask: batch 0 fully visible, batch 1 has the last 3 key positions padded
    attention_mask = jnp.array([[1.0] * SEQ, [1.0] * 5 + [0.0] * 3], jnp.float32)

    avg_hidden, avg_logits = jax.jit(psum_mixlayer_forward)(layers_stack, attention_mask, params)
    jax.block_until_ready((avg_hidden, avg_logits))
    assert avg_hidden.shape == (BATCH, SEQ, HIDDEN)
    assert avg_logits.shape == (BATCH, SEQ, NUM_LABELS)

    ref_hidden, ref_logits = _reference_forward(layers_stack, attention_mask, params)
    err = max(float(jnp.max(jnp.abs(avg_hidden - ref_hidden))),
              float(jnp.max(jnp.abs(avg_logits - ref_logits))))
    assert err < 5e-2, f"kernel/reference mismatch: max abs err = {err}"
    print("KERNEL_OK")
</pallas_src>

<mosaic_0001>
module attributes {stable_mosaic.version = 11 : i64} {
  func.func @psum_mixlayer_kernel(%arg0: memref<4x16x32xf32, #tpu.memory_space<vmem>>, %arg1: memref<2x1x8xf32, #tpu.memory_space<vmem>>, %arg2: memref<4x32x96xf32, #tpu.memory_space<vmem>>, %arg3: memref<4x32x32xf32, #tpu.memory_space<vmem>>, %arg4: memref<4x32x64xf32, #tpu.memory_space<vmem>>, %arg5: memref<4x64x32xf32, #tpu.memory_space<vmem>>, %arg6: memref<4x8x128xf32, #tpu.memory_space<vmem>>, %arg7: memref<32x128xf32, #tpu.memory_space<vmem>>, %arg8: memref<1x128xf32, #tpu.memory_space<vmem>>, %arg9: memref<16x128xf32, #tpu.memory_space<vmem>>, %arg10: memref<16x32xf32, #tpu.memory_space<vmem>>) attributes {dimension_semantics = [], scalar_prefetch = 0 : i64, scratch_operands = 1 : i64, tpu.core_type = #tpu.core_type<tc>} {
    %c0 = arith.constant 0 : index
    %c0_0 = arith.constant 0 : index
    %c0_1 = arith.constant 0 : index
    %0 = vector.load %arg1[%c0, %c0_0, %c0_1] : memref<2x1x8xf32, #tpu.memory_space<vmem>>, vector<2x1x8xf32>
    %cst = arith.constant 0.000000e+00 : f32
    %1 = vector.broadcast %cst : f32 to vector<16x32xf32>
    %c0_2 = arith.constant 0 : index
    %c0_3 = arith.constant 0 : index
    %c0_4 = arith.constant 0 : index
    %2 = vector.load %arg0[%c0_2, %c0_3, %c0_4] : memref<4x16x32xf32, #tpu.memory_space<vmem>>, vector<1x16x32xf32>
    %3 = vector.shape_cast %2 : vector<1x16x32xf32> to vector<16x32xf32>
    %c0_5 = arith.constant 0 : index
    %c0_6 = arith.constant 0 : index
    %c0_7 = arith.constant 0 : index
    %4 = vector.load %arg6[%c0_5, %c0_6, %c0_7] : memref<4x8x128xf32, #tpu.memory_space<vmem>>, vector<1x8x128xf32>
    %5 = vector.shape_cast %4 : vector<1x8x128xf32> to vector<8x128xf32>
    %c0_8 = arith.constant 0 : index
    %c0_9 = arith.constant 0 : index
    %c0_10 = arith.constant 0 : index
    %6 = vector.load %arg2[%c0_8, %c0_9, %c0_10] : memref<4x32x96xf32, #tpu.memory_space<vmem>>, vector<1x32x96xf32>
    %7 = vector.shape_cast %6 : vector<1x32x96xf32> to vector<32x96xf32>
    %cst_11 = arith.constant dense<0.000000e+00> : vector<16x96xf32>
    %8 = tpu.matmul %3, %7, %cst_11 {dimension_numbers = #tpu.dot_dimension_numbers<[1], [0], [0], [1], [0, 0, 1, 1], [], []>} : vector<16x32xf32>, vector<32x96xf32>, vector<16x96xf32> -> vector<16x96xf32>
    %9 = vector.extract_strided_slice %5 {offsets = [0, 0], sizes = [1, 96], strides = [1, 1]} : vector<8x128xf32> to vector<1x96xf32>
    %10 = vector.broadcast %9 : vector<1x96xf32> to vector<16x96xf32>
    %11 = arith.addf %8, %10 : vector<16x96xf32>
    %12 = vector.extract_strided_slice %11 {offsets = [0, 0], sizes = [16, 8], strides = [1, 1]} : vector<16x96xf32> to vector<16x8xf32>
    %13 = vector.shape_cast %12 : vector<16x8xf32> to vector<2x8x8xf32>
    %14 = vector.extract_strided_slice %11 {offsets = [0, 32], sizes = [16, 8], strides = [1, 1]} : vector<16x96xf32> to vector<16x8xf32>
    %15 = vector.shape_cast %14 : vector<16x8xf32> to vector<2x8x8xf32>
    %16 = vector.extract_strided_slice %11 {offsets = [0, 64], sizes = [16, 8], strides = [1, 1]} : vector<16x96xf32> to vector<16x8xf32>
    %17 = vector.shape_cast %16 : vector<16x8xf32> to vector<2x8x8xf32>
    %cst_12 = arith.constant dense<0.000000e+00> : vector<2x8x8xf32>
    %18 = tpu.matmul %13, %15, %cst_12 {dimension_numbers = #tpu.dot_dimension_numbers<[2], [2], [1], [1], [0, 0, 0, 1, 1, 1], [0], [0]>} : vector<2x8x8xf32>, vector<2x8x8xf32>, vector<2x8x8xf32> -> vector<2x8x8xf32>
    %19 = vector.broadcast %0 : vector<2x1x8xf32> to vector<2x8x8xf32>
    %20 = arith.addf %18, %19 : vector<2x8x8xf32>
    %cst_13 = arith.constant dense<0xFF800000> : vector<2x8xf32>
    %21 = vector.multi_reduction <maximumf>, %20, %cst_13 [2] : vector<2x8x8xf32> to vector<2x8xf32>
    %22 = vector.shape_cast %21 : vector<2x8xf32> to vector<2x8x1xf32>
    %23 = vector.broadcast %22 : vector<2x8x1xf32> to vector<2x8x8xf32>
    %24 = arith.subf %20, %23 : vector<2x8x8xf32>
    %25 = math.exp %24 : vector<2x8x8xf32>
    %cst_14 = arith.constant dense<0.000000e+00> : vector<2x8xf32>
    %26 = vector.multi_reduction <add>, %25, %cst_14 [2] : vector<2x8x8xf32> to vector<2x8xf32>
    %27 = vector.shape_cast %26 : vector<2x8xf32> to vector<2x8x1xf32>
    %28 = tpu.reciprocal %27 {approx = true} : vector<2x8x1xf32> -> vector<2x8x1xf32>
    %29 = vector.broadcast %28 : vector<2x8x1xf32> to vector<2x8x8xf32>
    %30 = arith.mulf %25, %29 : vector<2x8x8xf32>
    %cst_15 = arith.constant dense<0.000000e+00> : vector<2x8x8xf32>
    %31 = tpu.matmul %30, %17, %cst_15 {dimension_numbers = #tpu.dot_dimension_numbers<[2], [1], [1], [2], [0, 0, 0, 1, 1, 2], [0], [0]>} : vector<2x8x8xf32>, vector<2x8x8xf32>, vector<2x8x8xf32> -> vector<2x8x8xf32>
    %32 = vector.shape_cast %31 : vector<2x8x8xf32> to vector<16x8xf32>
    %c0_16 = arith.constant 0 : index
    %c0_17 = arith.constant 0 : index
    %33 = vector.load %arg10[%c0_16, %c0_17] : memref<16x32xf32, #tpu.memory_space<vmem>>, vector<16x8xf32>
    tpu.vector_store %arg10[%c0_16, %c0_17], %32 {strides = array<i32>} : memref<16x32xf32, #tpu.memory_space<vmem>>, vector<16x8xf32>,
    %34 = vector.extract_strided_slice %11 {offsets = [0, 8], sizes = [16, 8], strides = [1, 1]} : vector<16x96xf32> to vector<16x8xf32>
    %35 = vector.shape_cast %34 : vector<16x8xf32> to vector<2x8x8xf32>
    %36 = vector.extract_strided_slice %11 {offsets = [0, 40], sizes = [16, 8], strides = [1, 1]} : vector<16x96xf32> to vector<16x8xf32>
    %37 = vector.shape_cast %36 : vector<16x8xf32> to vector<2x8x8xf32>
    %38 = vector.extract_strided_slice %11 {offsets = [0, 72], sizes = [16, 8], strides = [1, 1]} : vector<16x96xf32> to vector<16x8xf32>
    %39 = vector.shape_cast %38 : vector<16x8xf32> to vector<2x8x8xf32>
    %cst_18 = arith.constant dense<0.000000e+00> : vector<2x8x8xf32>
    %40 = tpu.matmul %35, %37, %cst_18 {dimension_numbers = #tpu.dot_dimension_numbers<[2], [2], [1], [1], [0, 0, 0, 1, 1, 1], [0], [0]>} : vector<2x8x8xf32>, vector<2x8x8xf32>, vector<2x8x8xf32> -> vector<2x8x8xf32>
    %41 = vector.broadcast %0 : vector<2x1x8xf32> to vector<2x8x8xf32>
    %42 = arith.addf %40, %41 : vector<2x8x8xf32>
    %cst_19 = arith.constant dense<0xFF800000> : vector<2x8xf32>
    %43 = vector.multi_reduction <maximumf>, %42, %cst_19 [2] : vector<2x8x8xf32> to vector<2x8xf32>
    %44 = vector.shape_cast %43 : vector<2x8xf32> to vector<2x8x1xf32>
    %45 = vector.broadcast %44 : vector<2x8x1xf32> to vector<2x8x8xf32>
    %46 = arith.subf %42, %45 : vector<2x8x8xf32>
    %47 = math.exp %46 : vector<2x8x8xf32>
    %cst_20 = arith.constant dense<0.000000e+00> : vector<2x8xf32>
    %48 = vector.multi_reduction <add>, %47, %cst_20 [2] : vector<2x8x8xf32> to vector<2x8xf32>
    %49 = vector.shape_cast %48 : vector<2x8xf32> to vector<2x8x1xf32>
    %50 = tpu.reciprocal %49 {approx = true} : vector<2x8x1xf32> -> vector<2x8x1xf32>
    %51 = vector.broadcast %50 : vector<2x8x1xf32> to vector<2x8x8xf32>
    %52 = arith.mulf %47, %51 : vector<2x8x8xf32>
    %cst_21 = arith.constant dense<0.000000e+00> : vector<2x8x8xf32>
    %53 = tpu.matmul %52, %39, %cst_21 {dimension_numbers = #tpu.dot_dimension_numbers<[2], [1], [1], [2], [0, 0, 0, 1, 1, 2], [0], [0]>} : vector<2x8x8xf32>, vector<2x8x8xf32>, vector<2x8x8xf32> -> vector<2x8x8xf32>
    %54 = vector.shape_cast %53 : vector<2x8x8xf32> to vector<16x8xf32>
    %c0_22 = arith.constant 0 : index
    %c8 = arith.constant 8 : index
    %55 = vector.load %arg10[%c0_22, %c8] : memref<16x32xf32, #tpu.memory_space<vmem>>, vector<16x8xf32>
    tpu.vector_store %arg10[%c0_22, %c8], %54 {strides = array<i32>} : memref<16x32xf32, #tpu.memory_space<vmem>>, vector<16x8xf32>,
    %56 = vector.extract_strided_slice %11 {offsets = [0, 16], sizes = [16, 8], strides = [1, 1]} : vector<16x96xf32> to vector<16x8xf32>
    %57 = vector.shape_cast %56 : vector<16x8xf32> to vector<2x8x8xf32>
    %58 = vector.extract_strided_slice %11 {offsets = [0, 48], sizes = [16, 8], strides = [1, 1]} : vector<16x96xf32> to vector<16x8xf32>
    %59 = vector.shape_cast %58 : vector<16x8xf32> to vector<2x8x8xf32>
    %60 = vector.extract_strided_slice %11 {offsets = [0, 80], sizes = [16, 8], strides = [1, 1]} : vector<16x96xf32> to vector<16x8xf32>
    %61 = vector.shape_cast %60 : vector<16x8xf32> to vector<2x8x8xf32>
    %cst_23 = arith.constant dense<0.000000e+00> : vector<2x8x8xf32>
    %62 = tpu.matmul %57, %59, %cst_23 {dimension_numbers = #tpu.dot_dimension_numbers<[2], [2], [1], [1], [0, 0, 0, 1, 1, 1], [0], [0]>} : vector<2x8x8xf32>, vector<2x8x8xf32>, vector<2x8x8xf32> -> vector<2x8x8xf32>
    %63 = vector.broadcast %0 : vector<2x1x8xf32> to vector<2x8x8xf32>
    %64 = arith.addf %62, %63 : vector<2x8x8xf32>
    %cst_24 = arith.constant dense<0xFF800000> : vector<2x8xf32>
    %65 = vector.multi_reduction <maximumf>, %64, %cst_24 [2] : vector<2x8x8xf32> to vector<2x8xf32>
    %66 = vector.shape_cast %65 : vector<2x8xf32> to vector<2x8x1xf32>
    %67 = vector.broadcast %66 : vector<2x8x1xf32> to vector<2x8x8xf32>
    %68 = arith.subf %64, %67 : vector<2x8x8xf32>
    %69 = math.exp %68 : vector<2x8x8xf32>
    %cst_25 = arith.constant dense<0.000000e+00> : vector<2x8xf32>
    %70 = vector.multi_reduction <add>, %69, %cst_25 [2] : vector<2x8x8xf32> to vector<2x8xf32>
    %71 = vector.shape_cast %70 : vector<2x8xf32> to vector<2x8x1xf32>
    %72 = tpu.reciprocal %71 {approx = true} : vector<2x8x1xf32> -> vector<2x8x1xf32>
    %73 = vector.broadcast %72 : vector<2x8x1xf32> to vector<2x8x8xf32>
    %74 = arith.mulf %69, %73 : vector<2x8x8xf32>
    %cst_26 = arith.constant dense<0.000000e+00> : vector<2x8x8xf32>
    %75 = tpu.matmul %74, %61, %cst_26 {dimension_numbers = #tpu.dot_dimension_numbers<[2], [1], [1], [2], [0, 0, 0, 1, 1, 2], [0], [0]>} : vector<2x8x8xf32>, vector<2x8x8xf32>, vector<2x8x8xf32> -> vector<2x8x8xf32>
    %76 = vector.shape_cast %75 : vector<2x8x8xf32> to vector<16x8xf32>
    %c0_27 = arith.constant 0 : index
    %c16 = arith.constant 16 : index
    %77 = vector.load %arg10[%c0_27, %c16] : memref<16x32xf32, #tpu.memory_space<vmem>>, vector<16x8xf32>
    tpu.vector_store %arg10[%c0_27, %c16], %76 {strides = array<i32>} : memref<16x32xf32, #tpu.memory_space<vmem>>, vector<16x8xf32>,
    %78 = vector.extract_strided_slice %11 {offsets = [0, 24], sizes = [16, 8], strides = [1, 1]} : vector<16x96xf32> to vector<16x8xf32>
    %79 = vector.shape_cast %78 : vector<16x8xf32> to vector<2x8x8xf32>
    %80 = vector.extract_strided_slice %11 {offsets = [0, 56], sizes = [16, 8], strides = [1, 1]} : vector<16x96xf32> to vector<16x8xf32>
    %81 = vector.shape_cast %80 : vector<16x8xf32> to vector<2x8x8xf32>
    %82 = vector.extract_strided_slice %11 {offsets = [0, 88], sizes = [16, 8], strides = [1, 1]} : vector<16x96xf32> to vector<16x8xf32>
    %83 = vector.shape_cast %82 : vector<16x8xf32> to vector<2x8x8xf32>
    %cst_28 = arith.constant dense<0.000000e+00> : vector<2x8x8xf32>
    %84 = tpu.matmul %79, %81, %cst_28 {dimension_numbers = #tpu.dot_dimension_numbers<[2], [2], [1], [1], [0, 0, 0, 1, 1, 1], [0], [0]>} : vector<2x8x8xf32>, vector<2x8x8xf32>, vector<2x8x8xf32> -> vector<2x8x8xf32>
    %85 = vector.broadcast %0 : vector<2x1x8xf32> to vector<2x8x8xf32>
    %86 = arith.addf %84, %85 : vector<2x8x8xf32>
    %cst_29 = arith.constant dense<0xFF800000> : vector<2x8xf32>
    %87 = vector.multi_reduction <maximumf>, %86, %cst_29 [2] : vector<2x8x8xf32> to vector<2x8xf32>
    %88 = vector.shape_cast %87 : vector<2x8xf32> to vector<2x8x1xf32>
    %89 = vector.broadcast %88 : vector<2x8x1xf32> to vector<2x8x8xf32>
    %90 = arith.subf %86, %89 : vector<2x8x8xf32>
    %91 = math.exp %90 : vector<2x8x8xf32>
    %cst_30 = arith.constant dense<0.000000e+00> : vector<2x8xf32>
    %92 = vector.multi_reduction <add>, %91, %cst_30 [2] : vector<2x8x8xf32> to vector<2x8xf32>
    %93 = vector.shape_cast %92 : vector<2x8xf32> to vector<2x8x1xf32>
    %94 = tpu.reciprocal %93 {approx = true} : vector<2x8x1xf32> -> vector<2x8x1xf32>
    %95 = vector.broadcast %94 : vector<2x8x1xf32> to vector<2x8x8xf32>
    %96 = arith.mulf %91, %95 : vector<2x8x8xf32>
    %cst_31 = arith.constant dense<0.000000e+00> : vector<2x8x8xf32>
    %97 = tpu.matmul %96, %83, %cst_31 {dimension_numbers = #tpu.dot_dimension_numbers<[2], [1], [1], [2], [0, 0, 0, 1, 1, 2], [0], [0]>} : vector<2x8x8xf32>, vector<2x8x8xf32>, vector<2x8x8xf32> -> vector<2x8x8xf32>
    %98 = vector.shape_cast %97 : vector<2x8x8xf32> to vector<16x8xf32>
    %c0_32 = arith.constant 0 : index
    %c24 = arith.constant 24 : index
    %99 = vector.load %arg10[%c0_32, %c24] : memref<16x32xf32, #tpu.memory_space<vmem>>, vector<16x8xf32>
    tpu.vector_store %arg10[%c0_32, %c24], %98 {strides = array<i32>} : memref<16x32xf32, #tpu.memory_space<vmem>>, vector<16x8xf32>,
    %c0_33 = arith.constant 0 : index
    %c0_34 = arith.constant 0 : index
    %100 = vector.load %arg10[%c0_33, %c0_34] : memref<16x32xf32, #tpu.memory_space<vmem>>, vector<16x32xf32>
    %c0_35 = arith.constant 0 : index
    %c0_36 = arith.constant 0 : index
    %c0_37 = arith.constant 0 : index
    %101 = vector.load %arg3[%c0_35, %c0_36, %c0_37] : memref<4x32x32xf32, #tpu.memory_space<vmem>>, vector<1x32x32xf32>
    %102 = vector.shape_cast %101 : vector<1x32x32xf32> to vector<32x32xf32>
    %cst_38 = arith.constant dense<0.000000e+00> : vector<16x32xf32>
    %103 = tpu.matmul %100, %102, %cst_38 {dimension_numbers = #tpu.dot_dimension_numbers<[1], [0], [0], [1], [0, 0, 1, 1], [], []>} : vector<16x32xf32>, vector<32x32xf32>, vector<16x32xf32> -> vector<16x32xf32>
    %104 = vector.extract_strided_slice %5 {offsets = [1, 0], sizes = [1, 32], strides = [1, 1]} : vector<8x128xf32> to vector<1x32xf32>
    %105 = vector.broadcast %104 : vector<1x32xf32> to vector<16x32xf32>
    %106 = arith.addf %103, %105 : vector<16x32xf32>
    %107 = arith.addf %106, %3 : vector<16x32xf32>
    %108 = vector.extract_strided_slice %5 {offsets = [2, 0], sizes = [1, 32], strides = [1, 1]} : vector<8x128xf32> to vector<1x32xf32>
    %109 = vector.extract_strided_slice %5 {offsets = [3, 0], sizes = [1, 32], strides = [1, 1]} : vector<8x128xf32> to vector<1x32xf32>
    %cst_39 = arith.constant dense<0.000000e+00> : vector<16xf32>
    %110 = vector.multi_reduction <add>, %107, %cst_39 [1] : vector<16x32xf32> to vector<16xf32>
    %111 = vector.shape_cast %110 : vector<16xf32> to vector<16x1xf32>
    %cst_40 = arith.constant 3.200000e+01 : f32
    %112 = vector.broadcast %cst_40 : f32 to vector<16x1xf32>
    %113 = arith.divf %111, %112 : vector<16x1xf32>
    %114 = vector.broadcast %113 : vector<16x1xf32> to vector<16x32xf32>
    %115 = arith.subf %107, %114 : vector<16x32xf32>
    %116 = arith.mulf %115, %115 : vector<16x32xf32>
    %cst_41 = arith.constant dense<0.000000e+00> : vector<16xf32>
    %117 = vector.multi_reduction <add>, %116, %cst_41 [1] : vector<16x32xf32> to vector<16xf32>
    %118 = vector.shape_cast %117 : vector<16xf32> to vector<16x1xf32>
    %cst_42 = arith.constant 3.200000e+01 : f32
    %119 = vector.broadcast %cst_42 : f32 to vector<16x1xf32>
    %120 = arith.divf %118, %119 : vector<16x1xf32>
    %cst_43 = arith.constant 9.99999996E-13 : f32
    %121 = vector.broadcast %cst_43 : f32 to vector<16x1xf32>
    %122 = arith.addf %120, %121 : vector<16x1xf32>
    %123 = math.rsqrt %122 : vector<16x1xf32>
    %124 = vector.broadcast %123 : vector<16x1xf32> to vector<16x32xf32>
    %125 = arith.mulf %115, %124 : vector<16x32xf32>
    %126 = vector.broadcast %108 : vector<1x32xf32> to vector<16x32xf32>
    %127 = arith.mulf %125, %126 : vector<16x32xf32>
    %128 = vector.broadcast %109 : vector<1x32xf32> to vector<16x32xf32>
    %129 = arith.addf %127, %128 : vector<16x32xf32>
    %c0_44 = arith.constant 0 : index
    %c0_45 = arith.constant 0 : index
    %c0_46 = arith.constant 0 : index
    %130 = vector.load %arg4[%c0_44, %c0_45, %c0_46] : memref<4x32x64xf32, #tpu.memory_space<vmem>>, vector<1x32x64xf32>
    %131 = vector.shape_cast %130 : vector<1x32x64xf32> to vector<32x64xf32>
    %cst_47 = arith.constant dense<0.000000e+00> : vector<16x64xf32>
    %132 = tpu.matmul %129, %131, %cst_47 {dimension_numbers = #tpu.dot_dimension_numbers<[1], [0], [0], [1], [0, 0, 1, 1], [], []>} : vector<16x32xf32>, vector<32x64xf32>, vector<16x64xf32> -> vector<16x64xf32>
    %133 = vector.extract_strided_slice %5 {offsets = [4, 0], sizes = [1, 64], strides = [1, 1]} : vector<8x128xf32> to vector<1x64xf32>
    %134 = vector.broadcast %133 : vector<1x64xf32> to vector<16x64xf32>
    %135 = arith.addf %132, %134 : vector<16x64xf32>
    %cst_48 = arith.constant 5.000000e-01 : f32
    %136 = vector.broadcast %cst_48 : f32 to vector<16x64xf32>
    %137 = arith.mulf %136, %135 : vector<16x64xf32>
    %cst_49 = arith.constant 4.471500e-02 : f32
    %138 = vector.broadcast %cst_49 : f32 to vector<16x64xf32>
    %139 = arith.mulf %138, %135 : vector<16x64xf32>
    %140 = arith.mulf %139, %135 : vector<16x64xf32>
    %141 = arith.mulf %140, %135 : vector<16x64xf32>
    %142 = arith.addf %135, %141 : vector<16x64xf32>
    %cst_50 = arith.constant 0.797884583 : f32
    %143 = vector.broadcast %cst_50 : f32 to vector<16x64xf32>
    %144 = arith.mulf %143, %142 : vector<16x64xf32>
    %145 = math.tanh %144 : vector<16x64xf32>
    %cst_51 = arith.constant 1.000000e+00 : f32
    %146 = vector.broadcast %cst_51 : f32 to vector<16x64xf32>
    %147 = arith.addf %146, %145 : vector<16x64xf32>
    %148 = arith.mulf %137, %147 : vector<16x64xf32>
    %c0_52 = arith.constant 0 : index
    %c0_53 = arith.constant 0 : index
    %c0_54 = arith.constant 0 : index
    %149 = vector.load %arg5[%c0_52, %c0_53, %c0_54] : memref<4x64x32xf32, #tpu.memory_space<vmem>>, vector<1x64x32xf32>
    %150 = vector.shape_cast %149 : vector<1x64x32xf32> to vector<64x32xf32>
    %cst_55 = arith.constant dense<0.000000e+00> : vector<16x32xf32>
    %151 = tpu.matmul %148, %150, %cst_55 {dimension_numbers = #tpu.dot_dimension_numbers<[1], [0], [0], [1], [0, 0, 1, 1], [], []>} : vector<16x64xf32>, vector<64x32xf32>, vector<16x32xf32> -> vector<16x32xf32>
    %152 = vector.extract_strided_slice %5 {offsets = [5, 0], sizes = [1, 32], strides = [1, 1]} : vector<8x128xf32> to vector<1x32xf32>
    %153 = vector.broadcast %152 : vector<1x32xf32> to vector<16x32xf32>
    %154 = arith.addf %151, %153 : vector<16x32xf32>
    %155 = arith.addf %154, %129 : vector<16x32xf32>
    %156 = vector.extract_strided_slice %5 {offsets = [6, 0], sizes = [1, 32], strides = [1, 1]} : vector<8x128xf32> to vector<1x32xf32>
    %157 = vector.extract_strided_slice %5 {offsets = [7, 0], sizes = [1, 32], strides = [1, 1]} : vector<8x128xf32> to vector<1x32xf32>
    %cst_56 = arith.constant dense<0.000000e+00> : vector<16xf32>
    %158 = vector.multi_reduction <add>, %155, %cst_56 [1] : vector<16x32xf32> to vector<16xf32>
    %159 = vector.shape_cast %158 : vector<16xf32> to vector<16x1xf32>
    %cst_57 = arith.constant 3.200000e+01 : f32
    %160 = vector.broadcast %cst_57 : f32 to vector<16x1xf32>
    %161 = arith.divf %159, %160 : vector<16x1xf32>
    %162 = vector.broadcast %161 : vector<16x1xf32> to vector<16x32xf32>
    %163 = arith.subf %155, %162 : vector<16x32xf32>
    %164 = arith.mulf %163, %163 : vector<16x32xf32>
    %cst_58 = arith.constant dense<0.000000e+00> : vector<16xf32>
    %165 = vector.multi_reduction <add>, %164, %cst_58 [1] : vector<16x32xf32> to vector<16xf32>
    %166 = vector.shape_cast %165 : vector<16xf32> to vector<16x1xf32>
    %cst_59 = arith.constant 3.200000e+01 : f32
    %167 = vector.broadcast %cst_59 : f32 to vector<16x1xf32>
    %168 = arith.divf %166, %167 : vector<16x1xf32>
    %cst_60 = arith.constant 9.99999996E-13 : f32
    %169 = vector.broadcast %cst_60 : f32 to vector<16x1xf32>
    %170 = arith.addf %168, %169 : vector<16x1xf32>
    %171 = math.rsqrt %170 : vector<16x1xf32>
    %172 = vector.broadcast %171 : vector<16x1xf32> to vector<16x32xf32>
    %173 = arith.mulf %163, %172 : vector<16x32xf32>
    %174 = vector.broadcast %156 : vector<1x32xf32> to vector<16x32xf32>
    %175 = arith.mulf %173, %174 : vector<16x32xf32>
    %176 = vector.broadcast %157 : vector<1x32xf32> to vector<16x32xf32>
    %177 = arith.addf %175, %176 : vector<16x32xf32>
    %178 = arith.addf %1, %177 : vector<16x32xf32>
    %c1 = arith.constant 1 : index
    %c0_61 = arith.constant 0 : index
    %c0_62 = arith.constant 0 : index
    %179 = vector.load %arg0[%c1, %c0_61, %c0_62] : memref<4x16x32xf32, #tpu.memory_space<vmem>>, vector<1x16x32xf32>
    %180 = vector.shape_cast %179 : vector<1x16x32xf32> to vector<16x32xf32>
    %c1_63 = arith.constant 1 : index
    %c0_64 = arith.constant 0 : index
    %c0_65 = arith.constant 0 : index
    %181 = vector.load %arg6[%c1_63, %c0_64, %c0_65] : memref<4x8x128xf32, #tpu.memory_space<vmem>>, vector<1x8x128xf32>
    %182 = vector.shape_cast %181 : vector<1x8x128xf32> to vector<8x128xf32>
    %c1_66 = arith.constant 1 : index
    %c0_67 = arith.constant 0 : index
    %c0_68 = arith.constant 0 : index
    %183 = vector.load %arg2[%c1_66, %c0_67, %c0_68] : memref<4x32x96xf32, #tpu.memory_space<vmem>>, vector<1x32x96xf32>
    %184 = vector.shape_cast %183 : vector<1x32x96xf32> to vector<32x96xf32>
    %cst_69 = arith.constant dense<0.000000e+00> : vector<16x96xf32>
    %185 = tpu.matmul %180, %184, %cst_69 {dimension_numbers = #tpu.dot_dimension_numbers<[1], [0], [0], [1], [0, 0, 1, 1], [], []>} : vector<16x32xf32>, vector<32x96xf32>, vector<16x96xf32> -> vector<16x96xf32>
    %186 = vector.extract_strided_slice %182 {offsets = [0, 0], sizes = [1, 96], strides = [1, 1]} : vector<8x128xf32> to vector<1x96xf32>
    %187 = vector.broadcast %186 : vector<1x96xf32> to vector<16x96xf32>
    %188 = arith.addf %185, %187 : vector<16x96xf32>
    %189 = vector.extract_strided_slice %188 {offsets = [0, 0], sizes = [16, 8], strides = [1, 1]} : vector<16x96xf32> to vector<16x8xf32>
    %190 = vector.shape_cast %189 : vector<16x8xf32> to vector<2x8x8xf32>
    %191 = vector.extract_strided_slice %188 {offsets = [0, 32], sizes = [16, 8], strides = [1, 1]} : vector<16x96xf32> to vector<16x8xf32>
    %192 = vector.shape_cast %191 : vector<16x8xf32> to vector<2x8x8xf32>
    %193 = vector.extract_strided_slice %188 {offsets = [0, 64], sizes = [16, 8], strides = [1, 1]} : vector<16x96xf32> to vector<16x8xf32>
    %194 = vector.shape_cast %193 : vector<16x8xf32> to vector<2x8x8xf32>
    %cst_70 = arith.constant dense<0.000000e+00> : vector<2x8x8xf32>
    %195 = tpu.matmul %190, %192, %cst_70 {dimension_numbers = #tpu.dot_dimension_numbers<[2], [2], [1], [1], [0, 0, 0, 1, 1, 1], [0], [0]>} : vector<2x8x8xf32>, vector<2x8x8xf32>, vector<2x8x8xf32> -> vector<2x8x8xf32>
    %196 = vector.broadcast %0 : vector<2x1x8xf32> to vector<2x8x8xf32>
    %197 = arith.addf %195, %196 : vector<2x8x8xf32>
    %cst_71 = arith.constant dense<0xFF800000> : vector<2x8xf32>
    %198 = vector.multi_reduction <maximumf>, %197, %cst_71 [2] : vector<2x8x8xf32> to vector<2x8xf32>
    %199 = vector.shape_cast %198 : vector<2x8xf32> to vector<2x8x1xf32>
    %200 = vector.broadcast %199 : vector<2x8x1xf32> to vector<2x8x8xf32>
    %201 = arith.subf %197, %200 : vector<2x8x8xf32>
    %202 = math.exp %201 : vector<2x8x8xf32>
    %cst_72 = arith.constant dense<0.000000e+00> : vector<2x8xf32>
    %203 = vector.multi_reduction <add>, %202, %cst_72 [2] : vector<2x8x8xf32> to vector<2x8xf32>
    %204 = vector.shape_cast %203 : vector<2x8xf32> to vector<2x8x1xf32>
    %205 = tpu.reciprocal %204 {approx = true} : vector<2x8x1xf32> -> vector<2x8x1xf32>
    %206 = vector.broadcast %205 : vector<2x8x1xf32> to vector<2x8x8xf32>
    %207 = arith.mulf %202, %206 : vector<2x8x8xf32>
    %cst_73 = arith.constant dense<0.000000e+00> : vector<2x8x8xf32>
    %208 = tpu.matmul %207, %194, %cst_73 {dimension_numbers = #tpu.dot_dimension_numbers<[2], [1], [1], [2], [0, 0, 0, 1, 1, 2], [0], [0]>} : vector<2x8x8xf32>, vector<2x8x8xf32>, vector<2x8x8xf32> -> vector<2x8x8xf32>
    %209 = vector.shape_cast %208 : vector<2x8x8xf32> to vector<16x8xf32>
    %c0_74 = arith.constant 0 : index
    %c0_75 = arith.constant 0 : index
    %210 = vector.load %arg10[%c0_74, %c0_75] : memref<16x32xf32, #tpu.memory_space<vmem>>, vector<16x8xf32>
    tpu.vector_store %arg10[%c0_74, %c0_75], %209 {strides = array<i32>} : memref<16x32xf32, #tpu.memory_space<vmem>>, vector<16x8xf32>,
    %211 = vector.extract_strided_slice %188 {offsets = [0, 8], sizes = [16, 8], strides = [1, 1]} : vector<16x96xf32> to vector<16x8xf32>
    %212 = vector.shape_cast %211 : vector<16x8xf32> to vector<2x8x8xf32>
    %213 = vector.extract_strided_slice %188 {offsets = [0, 40], sizes = [16, 8], strides = [1, 1]} : vector<16x96xf32> to vector<16x8xf32>
    %214 = vector.shape_cast %213 : vector<16x8xf32> to vector<2x8x8xf32>
    %215 = vector.extract_strided_slice %188 {offsets = [0, 72], sizes = [16, 8], strides = [1, 1]} : vector<16x96xf32> to vector<16x8xf32>
    %216 = vector.shape_cast %215 : vector<16x8xf32> to vector<2x8x8xf32>
    %cst_76 = arith.constant dense<0.000000e+00> : vector<2x8x8xf32>
    %217 = tpu.matmul %212, %214, %cst_76 {dimension_numbers = #tpu.dot_dimension_numbers<[2], [2], [1], [1], [0, 0, 0, 1, 1, 1], [0], [0]>} : vector<2x8x8xf32>, vector<2x8x8xf32>, vector<2x8x8xf32> -> vector<2x8x8xf32>
    %218 = vector.broadcast %0 : vector<2x1x8xf32> to vector<2x8x8xf32>
    %219 = arith.addf %217, %218 : vector<2x8x8xf32>
    %cst_77 = arith.constant dense<0xFF800000> : vector<2x8xf32>
    %220 = vector.multi_reduction <maximumf>, %219, %cst_77 [2] : vector<2x8x8xf32> to vector<2x8xf32>
    %221 = vector.shape_cast %220 : vector<2x8xf32> to vector<2x8x1xf32>
    %222 = vector.broadcast %221 : vector<2x8x1xf32> to vector<2x8x8xf32>
    %223 = arith.subf %219, %222 : vector<2x8x8xf32>
    %224 = math.exp %223 : vector<2x8x8xf32>
    %cst_78 = arith.constant dense<0.000000e+00> : vector<2x8xf32>
    %225 = vector.multi_reduction <add>, %224, %cst_78 [2] : vector<2x8x8xf32> to vector<2x8xf32>
    %226 = vector.shape_cast %225 : vector<2x8xf32> to vector<2x8x1xf32>
    %227 = tpu.reciprocal %226 {approx = true} : vector<2x8x1xf32> -> vector<2x8x1xf32>
    %228 = vector.broadcast %227 : vector<2x8x1xf32> to vector<2x8x8xf32>
    %229 = arith.mulf %224, %228 : vector<2x8x8xf32>
    %cst_79 = arith.constant dense<0.000000e+00> : vector<2x8x8xf32>
    %230 = tpu.matmul %229, %216, %cst_79 {dimension_numbers = #tpu.dot_dimension_numbers<[2], [1], [1], [2], [0, 0, 0, 1, 1, 2], [0], [0]>} : vector<2x8x8xf32>, vector<2x8x8xf32>, vector<2x8x8xf32> -> vector<2x8x8xf32>
    %231 = vector.shape_cast %230 : vector<2x8x8xf32> to vector<16x8xf32>
    %c0_80 = arith.constant 0 : index
    %c8_81 = arith.constant 8 : index
    %232 = vector.load %arg10[%c0_80, %c8_81] : memref<16x32xf32, #tpu.memory_space<vmem>>, vector<16x8xf32>
    tpu.vector_store %arg10[%c0_80, %c8_81], %231 {strides = array<i32>} : memref<16x32xf32, #tpu.memory_space<vmem>>, vector<16x8xf32>,
    %233 = vector.extract_strided_slice %188 {offsets = [0, 16], sizes = [16, 8], strides = [1, 1]} : vector<16x96xf32> to vector<16x8xf32>
    %234 = vector.shape_cast %233 : vector<16x8xf32> to vector<2x8x8xf32>
    %235 = vector.extract_strided_slice %188 {offsets = [0, 48], sizes = [16, 8], strides = [1, 1]} : vector<16x96xf32> to vector<16x8xf32>
    %236 = vector.shape_cast %235 : vector<16x8xf32> to vector<2x8x8xf32>
    %237 = vector.extract_strided_slice %188 {offsets = [0, 80], sizes = [16, 8], strides = [1, 1]} : vector<16x96xf32> to vector<16x8xf32>
    %238 = vector.shape_cast %237 : vector<16x8xf32> to vector<2x8x8xf32>
    %cst_82 = arith.constant dense<0.000000e+00> : vector<2x8x8xf32>
    %239 = tpu.matmul %234, %236, %cst_82 {dimension_numbers = #tpu.dot_dimension_numbers<[2], [2], [1], [1], [0, 0, 0, 1, 1, 1], [0], [0]>} : vector<2x8x8xf32>, vector<2x8x8xf32>, vector<2x8x8xf32> -> vector<2x8x8xf32>
    %240 = vector.broadcast %0 : vector<2x1x8xf32> to vector<2x8x8xf32>
    %241 = arith.addf %239, %240 : vector<2x8x8xf32>
    %cst_83 = arith.constant dense<0xFF800000> : vector<2x8xf32>
    %242 = vector.multi_reduction <maximumf>, %241, %cst_83 [2] : vector<2x8x8xf32> to vector<2x8xf32>
    %243 = vector.shape_cast %242 : vector<2x8xf32> to vector<2x8x1xf32>
    %244 = vector.broadcast %243 : vector<2x8x1xf32> to vector<2x8x8xf32>
    %245 = arith.subf %241, %244 : vector<2x8x8xf32>
    %246 = math.exp %245 : vector<2x8x8xf32>
    %cst_84 = arith.constant dense<0.000000e+00> : vector<2x8xf32>
    %247 = vector.multi_reduction <add>, %246, %cst_84 [2] : vector<2x8x8xf32> to vector<2x8xf32>
    %248 = vector.shape_cast %247 : vector<2x8xf32> to vector<2x8x1xf32>
    %249 = tpu.reciprocal %248 {approx = true} : vector<2x8x1xf32> -> vector<2x8x1xf32>
    %250 = vector.broadcast %249 : vector<2x8x1xf32> to vector<2x8x8xf32>
    %251 = arith.mulf %246, %250 : vector<2x8x8xf32>
    %cst_85 = arith.constant dense<0.000000e+00> : vector<2x8x8xf32>
    %252 = tpu.matmul %251, %238, %cst_85 {dimension_numbers = #tpu.dot_dimension_numbers<[2], [1], [1], [2], [0, 0, 0, 1, 1, 2], [0], [0]>} : vector<2x8x8xf32>, vector<2x8x8xf32>, vector<2x8x8xf32> -> vector<2x8x8xf32>
    %253 = vector.shape_cast %252 : vector<2x8x8xf32> to vector<16x8xf32>
    %c0_86 = arith.constant 0 : index
    %c16_87 = arith.constant 16 : index
    %254 = vector.load %arg10[%c0_86, %c16_87] : memref<16x32xf32, #tpu.memory_space<vmem>>, vector<16x8xf32>
    tpu.vector_store %arg10[%c0_86, %c16_87], %253 {strides = array<i32>} : memref<16x32xf32, #tpu.memory_space<vmem>>, vector<16x8xf32>,
    %255 = vector.extract_strided_slice %188 {offsets = [0, 24], sizes = [16, 8], strides = [1, 1]} : vector<16x96xf32> to vector<16x8xf32>
    %256 = vector.shape_cast %255 : vector<16x8xf32> to vector<2x8x8xf32>
    %257 = vector.extract_strided_slice %188 {offsets = [0, 56], sizes = [16, 8], strides = [1, 1]} : vector<16x96xf32> to vector<16x8xf32>
    %258 = vector.shape_cast %257 : vector<16x8xf32> to vector<2x8x8xf32>
    %259 = vector.extract_strided_slice %188 {offsets = [0, 88], sizes = [16, 8], strides = [1, 1]} : vector<16x96xf32> to vector<16x8xf32>
    %260 = vector.shape_cast %259 : vector<16x8xf32> to vector<2x8x8xf32>
    %cst_88 = arith.constant dense<0.000000e+00> : vector<2x8x8xf32>
    %261 = tpu.matmul %256, %258, %cst_88 {dimension_numbers = #tpu.dot_dimension_numbers<[2], [2], [1], [1], [0, 0, 0, 1, 1, 1], [0], [0]>} : vector<2x8x8xf32>, vector<2x8x8xf32>, vector<2x8x8xf32> -> vector<2x8x8xf32>
    %262 = vector.broadcast %0 : vector<2x1x8xf32> to vector<2x8x8xf32>
    %263 = arith.addf %261, %262 : vector<2x8x8xf32>
    %cst_89 = arith.constant dense<0xFF800000> : vector<2x8xf32>
    %264 = vector.multi_reduction <maximumf>, %263, %cst_89 [2] : vector<2x8x8xf32> to vector<2x8xf32>
    %265 = vector.shape_cast %264 : vector<2x8xf32> to vector<2x8x1xf32>
    %266 = vector.broadcast %265 : vector<2x8x1xf32> to vector<2x8x8xf32>
    %267 = arith.subf %263, %266 : vector<2x8x8xf32>
    %268 = math.exp %267 : vector<2x8x8xf32>
    %cst_90 = arith.constant dense<0.000000e+00> : vector<2x8xf32>
    %269 = vector.multi_reduction <add>, %268, %cst_90 [2] : vector<2x8x8xf32> to vector<2x8xf32>
    %270 = vector.shape_cast %269 : vector<2x8xf32> to vector<2x8x1xf32>
    %271 = tpu.reciprocal %270 {approx = true} : vector<2x8x1xf32> -> vector<2x8x1xf32>
    %272 = vector.broadcast %271 : vector<2x8x1xf32> to vector<2x8x8xf32>
    %273 = arith.mulf %268, %272 : vector<2x8x8xf32>
    %cst_91 = arith.constant dense<0.000000e+00> : vector<2x8x8xf32>
    %274 = tpu.matmul %273, %260, %cst_91 {dimension_numbers = #tpu.dot_dimension_numbers<[2], [1], [1], [2], [0, 0, 0, 1, 1, 2], [0], [0]>} : vector<2x8x8xf32>, vector<2x8x8xf32>, vector<2x8x8xf32> -> vector<2x8x8xf32>
    %275 = vector.shape_cast %274 : vector<2x8x8xf32> to vector<16x8xf32>
    %c0_92 = arith.constant 0 : index
    %c24_93 = arith.constant 24 : index
    %276 = vector.load %arg10[%c0_92, %c24_93] : memref<16x32xf32, #tpu.memory_space<vmem>>, vector<16x8xf32>
    tpu.vector_store %arg10[%c0_92, %c24_93], %275 {strides = array<i32>} : memref<16x32xf32, #tpu.memory_space<vmem>>, vector<16x8xf32>,
    %c0_94 = arith.constant 0 : index
    %c0_95 = arith.constant 0 : index
    %277 = vector.load %arg10[%c0_94, %c0_95] : memref<16x32xf32, #tpu.memory_space<vmem>>, vector<16x32xf32>
    %c1_96 = arith.constant 1 : index
    %c0_97 = arith.constant 0 : index
    %c0_98 = arith.constant 0 : index
    %278 = vector.load %arg3[%c1_96, %c0_97, %c0_98] : memref<4x32x32xf32, #tpu.memory_space<vmem>>, vector<1x32x32xf32>
    %279 = vector.shape_cast %278 : vector<1x32x32xf32> to vector<32x32xf32>
    %cst_99 = arith.constant dense<0.000000e+00> : vector<16x32xf32>
    %280 = tpu.matmul %277, %279, %cst_99 {dimension_numbers = #tpu.dot_dimension_numbers<[1], [0], [0], [1], [0, 0, 1, 1], [], []>} : vector<16x32xf32>, vector<32x32xf32>, vector<16x32xf32> -> vector<16x32xf32>
    %281 = vector.extract_strided_slice %182 {offsets = [1, 0], sizes = [1, 32], strides = [1, 1]} : vector<8x128xf32> to vector<1x32xf32>
    %282 = vector.broadcast %281 : vector<1x32xf32> to vector<16x32xf32>
    %283 = arith.addf %280, %282 : vector<16x32xf32>
    %284 = arith.addf %283, %180 : vector<16x32xf32>
    %285 = vector.extract_strided_slice %182 {offsets = [2, 0], sizes = [1, 32], strides = [1, 1]} : vector<8x128xf32> to vector<1x32xf32>
    %286 = vector.extract_strided_slice %182 {offsets = [3, 0], sizes = [1, 32], strides = [1, 1]} : vector<8x128xf32> to vector<1x32xf32>
    %cst_100 = arith.constant dense<0.000000e+00> : vector<16xf32>
    %287 = vector.multi_reduction <add>, %284, %cst_100 [1] : vector<16x32xf32> to vector<16xf32>
    %288 = vector.shape_cast %287 : vector<16xf32> to vector<16x1xf32>
    %cst_101 = arith.constant 3.200000e+01 : f32
    %289 = vector.broadcast %cst_101 : f32 to vector<16x1xf32>
    %290 = arith.divf %288, %289 : vector<16x1xf32>
    %291 = vector.broadcast %290 : vector<16x1xf32> to vector<16x32xf32>
    %292 = arith.subf %284, %291 : vector<16x32xf32>
    %293 = arith.mulf %292, %292 : vector<16x32xf32>
    %cst_102 = arith.constant dense<0.000000e+00> : vector<16xf32>
    %294 = vector.multi_reduction <add>, %293, %cst_102 [1] : vector<16x32xf32> to vector<16xf32>
    %295 = vector.shape_cast %294 : vector<16xf32> to vector<16x1xf32>
    %cst_103 = arith.constant 3.200000e+01 : f32
    %296 = vector.broadcast %cst_103 : f32 to vector<16x1xf32>
    %297 = arith.divf %295, %296 : vector<16x1xf32>
    %cst_104 = arith.constant 9.99999996E-13 : f32
    %298 = vector.broadcast %cst_104 : f32 to vector<16x1xf32>
    %299 = arith.addf %297, %298 : vector<16x1xf32>
    %300 = math.rsqrt %299 : vector<16x1xf32>
    %301 = vector.broadcast %300 : vector<16x1xf32> to vector<16x32xf32>
    %302 = arith.mulf %292, %301 : vector<16x32xf32>
    %303 = vector.broadcast %285 : vector<1x32xf32> to vector<16x32xf32>
    %304 = arith.mulf %302, %303 : vector<16x32xf32>
    %305 = vector.broadcast %286 : vector<1x32xf32> to vector<16x32xf32>
    %306 = arith.addf %304, %305 : vector<16x32xf32>
    %c1_105 = arith.constant 1 : index
    %c0_106 = arith.constant 0 : index
    %c0_107 = arith.constant 0 : index
    %307 = vector.load %arg4[%c1_105, %c0_106, %c0_107] : memref<4x32x64xf32, #tpu.memory_space<vmem>>, vector<1x32x64xf32>
    %308 = vector.shape_cast %307 : vector<1x32x64xf32> to vector<32x64xf32>
    %cst_108 = arith.constant dense<0.000000e+00> : vector<16x64xf32>
    %309 = tpu.matmul %306, %308, %cst_108 {dimension_numbers = #tpu.dot_dimension_numbers<[1], [0], [0], [1], [0, 0, 1, 1], [], []>} : vector<16x32xf32>, vector<32x64xf32>, vector<16x64xf32> -> vector<16x64xf32>
    %310 = vector.extract_strided_slice %182 {offsets = [4, 0], sizes = [1, 64], strides = [1, 1]} : vector<8x128xf32> to vector<1x64xf32>
    %311 = vector.broadcast %310 : vector<1x64xf32> to vector<16x64xf32>
    %312 = arith.addf %309, %311 : vector<16x64xf32>
    %cst_109 = arith.constant 5.000000e-01 : f32
    %313 = vector.broadcast %cst_109 : f32 to vector<16x64xf32>
    %314 = arith.mulf %313, %312 : vector<16x64xf32>
    %cst_110 = arith.constant 4.471500e-02 : f32
    %315 = vector.broadcast %cst_110 : f32 to vector<16x64xf32>
    %316 = arith.mulf %315, %312 : vector<16x64xf32>
    %317 = arith.mulf %316, %312 : vector<16x64xf32>
    %318 = arith.mulf %317, %312 : vector<16x64xf32>
    %319 = arith.addf %312, %318 : vector<16x64xf32>
    %cst_111 = arith.constant 0.797884583 : f32
    %320 = vector.broadcast %cst_111 : f32 to vector<16x64xf32>
    %321 = arith.mulf %320, %319 : vector<16x64xf32>
    %322 = math.tanh %321 : vector<16x64xf32>
    %cst_112 = arith.constant 1.000000e+00 : f32
    %323 = vector.broadcast %cst_112 : f32 to vector<16x64xf32>
    %324 = arith.addf %323, %322 : vector<16x64xf32>
    %325 = arith.mulf %314, %324 : vector<16x64xf32>
    %c1_113 = arith.constant 1 : index
    %c0_114 = arith.constant 0 : index
    %c0_115 = arith.constant 0 : index
    %326 = vector.load %arg5[%c1_113, %c0_114, %c0_115] : memref<4x64x32xf32, #tpu.memory_space<vmem>>, vector<1x64x32xf32>
    %327 = vector.shape_cast %326 : vector<1x64x32xf32> to vector<64x32xf32>
    %cst_116 = arith.constant dense<0.000000e+00> : vector<16x32xf32>
    %328 = tpu.matmul %325, %327, %cst_116 {dimension_numbers = #tpu.dot_dimension_numbers<[1], [0], [0], [1], [0, 0, 1, 1], [], []>} : vector<16x64xf32>, vector<64x32xf32>, vector<16x32xf32> -> vector<16x32xf32>
    %329 = vector.extract_strided_slice %182 {offsets = [5, 0], sizes = [1, 32], strides = [1, 1]} : vector<8x128xf32> to vector<1x32xf32>
    %330 = vector.broadcast %329 : vector<1x32xf32> to vector<16x32xf32>
    %331 = arith.addf %328, %330 : vector<16x32xf32>
    %332 = arith.addf %331, %306 : vector<16x32xf32>
    %333 = vector.extract_strided_slice %182 {offsets = [6, 0], sizes = [1, 32], strides = [1, 1]} : vector<8x128xf32> to vector<1x32xf32>
    %334 = vector.extract_strided_slice %182 {offsets = [7, 0], sizes = [1, 32], strides = [1, 1]} : vector<8x128xf32> to vector<1x32xf32>
    %cst_117 = arith.constant dense<0.000000e+00> : vector<16xf32>
    %335 = vector.multi_reduction <add>, %332, %cst_117 [1] : vector<16x32xf32> to vector<16xf32>
    %336 = vector.shape_cast %335 : vector<16xf32> to vector<16x1xf32>
    %cst_118 = arith.constant 3.200000e+01 : f32
    %337 = vector.broadcast %cst_118 : f32 to vector<16x1xf32>
    %338 = arith.divf %336, %337 : vector<16x1xf32>
    %339 = vector.broadcast %338 : vector<16x1xf32> to vector<16x32xf32>
    %340 = arith.subf %332, %339 : vector<16x32xf32>
    %341 = arith.mulf %340, %340 : vector<16x32xf32>
    %cst_119 = arith.constant dense<0.000000e+00> : vector<16xf32>
    %342 = vector.multi_reduction <add>, %341, %cst_119 [1] : vector<16x32xf32> to vector<16xf32>
    %343 = vector.shape_cast %342 : vector<16xf32> to vector<16x1xf32>
    %cst_120 = arith.constant 3.200000e+01 : f32
    %344 = vector.broadcast %cst_120 : f32 to vector<16x1xf32>
    %345 = arith.divf %343, %344 : vector<16x1xf32>
    %cst_121 = arith.constant 9.99999996E-13 : f32
    %346 = vector.broadcast %cst_121 : f32 to vector<16x1xf32>
    %347 = arith.addf %345, %346 : vector<16x1xf32>
    %348 = math.rsqrt %347 : vector<16x1xf32>
    %349 = vector.broadcast %348 : vector<16x1xf32> to vector<16x32xf32>
    %350 = arith.mulf %340, %349 : vector<16x32xf32>
    %351 = vector.broadcast %333 : vector<1x32xf32> to vector<16x32xf32>
    %352 = arith.mulf %350, %351 : vector<16x32xf32>
    %353 = vector.broadcast %334 : vector<1x32xf32> to vector<16x32xf32>
    %354 = arith.addf %352, %353 : vector<16x32xf32>
    %355 = arith.addf %178, %354 : vector<16x32xf32>
    %c2 = arith.constant 2 : index
    %c0_122 = arith.constant 0 : index
    %c0_123 = arith.constant 0 : index
    %356 = vector.load %arg0[%c2, %c0_122, %c0_123] : memref<4x16x32xf32, #tpu.memory_space<vmem>>, vector<1x16x32xf32>
    %357 = vector.shape_cast %356 : vector<1x16x32xf32> to vector<16x32xf32>
    %c2_124 = arith.constant 2 : index
    %c0_125 = arith.constant 0 : index
    %c0_126 = arith.constant 0 : index
    %358 = vector.load %arg6[%c2_124, %c0_125, %c0_126] : memref<4x8x128xf32, #tpu.memory_space<vmem>>, vector<1x8x128xf32>
    %359 = vector.shape_cast %358 : vector<1x8x128xf32> to vector<8x128xf32>
    %c2_127 = arith.constant 2 : index
    %c0_128 = arith.constant 0 : index
    %c0_129 = arith.constant 0 : index
    %360 = vector.load %arg2[%c2_127, %c0_128, %c0_129] : memref<4x32x96xf32, #tpu.memory_space<vmem>>, vector<1x32x96xf32>
    %361 = vector.shape_cast %360 : vector<1x32x96xf32> to vector<32x96xf32>
    %cst_130 = arith.constant dense<0.000000e+00> : vector<16x96xf32>
    %362 = tpu.matmul %357, %361, %cst_130 {dimension_numbers = #tpu.dot_dimension_numbers<[1], [0], [0], [1], [0, 0, 1, 1], [], []>} : vector<16x32xf32>, vector<32x96xf32>, vector<16x96xf32> -> vector<16x96xf32>
    %363 = vector.extract_strided_slice %359 {offsets = [0, 0], sizes = [1, 96], strides = [1, 1]} : vector<8x128xf32> to vector<1x96xf32>
    %364 = vector.broadcast %363 : vector<1x96xf32> to vector<16x96xf32>
    %365 = arith.addf %362, %364 : vector<16x96xf32>
    %366 = vector.extract_strided_slice %365 {offsets = [0, 0], sizes = [16, 8], strides = [1, 1]} : vector<16x96xf32> to vector<16x8xf32>
    %367 = vector.shape_cast %366 : vector<16x8xf32> to vector<2x8x8xf32>
    %368 = vector.extract_strided_slice %365 {offsets = [0, 32], sizes = [16, 8], strides = [1, 1]} : vector<16x96xf32> to vector<16x8xf32>
    %369 = vector.shape_cast %368 : vector<16x8xf32> to vector<2x8x8xf32>
    %370 = vector.extract_strided_slice %365 {offsets = [0, 64], sizes = [16, 8], strides = [1, 1]} : vector<16x96xf32> to vector<16x8xf32>
    %371 = vector.shape_cast %370 : vector<16x8xf32> to vector<2x8x8xf32>
    %cst_131 = arith.constant dense<0.000000e+00> : vector<2x8x8xf32>
    %372 = tpu.matmul %367, %369, %cst_131 {dimension_numbers = #tpu.dot_dimension_numbers<[2], [2], [1], [1], [0, 0, 0, 1, 1, 1], [0], [0]>} : vector<2x8x8xf32>, vector<2x8x8xf32>, vector<2x8x8xf32> -> vector<2x8x8xf32>
    %373 = vector.broadcast %0 : vector<2x1x8xf32> to vector<2x8x8xf32>
    %374 = arith.addf %372, %373 : vector<2x8x8xf32>
    %cst_132 = arith.constant dense<0xFF800000> : vector<2x8xf32>
    %375 = vector.multi_reduction <maximumf>, %374, %cst_132 [2] : vector<2x8x8xf32> to vector<2x8xf32>
    %376 = vector.shape_cast %375 : vector<2x8xf32> to vector<2x8x1xf32>
    %377 = vector.broadcast %376 : vector<2x8x1xf32> to vector<2x8x8xf32>
    %378 = arith.subf %374, %377 : vector<2x8x8xf32>
    %379 = math.exp %378 : vector<2x8x8xf32>
    %cst_133 = arith.constant dense<0.000000e+00> : vector<2x8xf32>
    %380 = vector.multi_reduction <add>, %379, %cst_133 [2] : vector<2x8x8xf32> to vector<2x8xf32>
    %381 = vector.shape_cast %380 : vector<2x8xf32> to vector<2x8x1xf32>
    %382 = tpu.reciprocal %381 {approx = true} : vector<2x8x1xf32> -> vector<2x8x1xf32>
    %383 = vector.broadcast %382 : vector<2x8x1xf32> to vector<2x8x8xf32>
    %384 = arith.mulf %379, %383 : vector<2x8x8xf32>
    %cst_134 = arith.constant dense<0.000000e+00> : vector<2x8x8xf32>
    %385 = tpu.matmul %384, %371, %cst_134 {dimension_numbers = #tpu.dot_dimension_numbers<[2], [1], [1], [2], [0, 0, 0, 1, 1, 2], [0], [0]>} : vector<2x8x8xf32>, vector<2x8x8xf32>, vector<2x8x8xf32> -> vector<2x8x8xf32>
    %386 = vector.shape_cast %385 : vector<2x8x8xf32> to vector<16x8xf32>
    %c0_135 = arith.constant 0 : index
    %c0_136 = arith.constant 0 : index
    %387 = vector.load %arg10[%c0_135, %c0_136] : memref<16x32xf32, #tpu.memory_space<vmem>>, vector<16x8xf32>
    tpu.vector_store %arg10[%c0_135, %c0_136], %386 {strides = array<i32>} : memref<16x32xf32, #tpu.memory_space<vmem>>, vector<16x8xf32>,
    %388 = vector.extract_strided_slice %365 {offsets = [0, 8], sizes = [16, 8], strides = [1, 1]} : vector<16x96xf32> to vector<16x8xf32>
    %389 = vector.shape_cast %388 : vector<16x8xf32> to vector<2x8x8xf32>
    %390 = vector.extract_strided_slice %365 {offsets = [0, 40], sizes = [16, 8], strides = [1, 1]} : vector<16x96xf32> to vector<16x8xf32>
    %391 = vector.shape_cast %390 : vector<16x8xf32> to vector<2x8x8xf32>
    %392 = vector.extract_strided_slice %365 {offsets = [0, 72], sizes = [16, 8], strides = [1, 1]} : vector<16x96xf32> to vector<16x8xf32>
    %393 = vector.shape_cast %392 : vector<16x8xf32> to vector<2x8x8xf32>
    %cst_137 = arith.constant dense<0.000000e+00> : vector<2x8x8xf32>
    %394 = tpu.matmul %389, %391, %cst_137 {dimension_numbers = #tpu.dot_dimension_numbers<[2], [2], [1], [1], [0, 0, 0, 1, 1, 1], [0], [0]>} : vector<2x8x8xf32>, vector<2x8x8xf32>, vector<2x8x8xf32> -> vector<2x8x8xf32>
    %395 = vector.broadcast %0 : vector<2x1x8xf32> to vector<2x8x8xf32>
    %396 = arith.addf %394, %395 : vector<2x8x8xf32>
    %cst_138 = arith.constant dense<0xFF800000> : vector<2x8xf32>
    %397 = vector.multi_reduction <maximumf>, %396, %cst_138 [2] : vector<2x8x8xf32> to vector<2x8xf32>
    %398 = vector.shape_cast %397 : vector<2x8xf32> to vector<2x8x1xf32>
    %399 = vector.broadcast %398 : vector<2x8x1xf32> to vector<2x8x8xf32>
    %400 = arith.subf %396, %399 : vector<2x8x8xf32>
    %401 = math.exp %400 : vector<2x8x8xf32>
    %cst_139 = arith.constant dense<0.000000e+00> : vector<2x8xf32>
    %402 = vector.multi_reduction <add>, %401, %cst_139 [2] : vector<2x8x8xf32> to vector<2x8xf32>
    %403 = vector.shape_cast %402 : vector<2x8xf32> to vector<2x8x1xf32>
    %404 = tpu.reciprocal %403 {approx = true} : vector<2x8x1xf32> -> vector<2x8x1xf32>
    %405 = vector.broadcast %404 : vector<2x8x1xf32> to vector<2x8x8xf32>
    %406 = arith.mulf %401, %405 : vector<2x8x8xf32>
    %cst_140 = arith.constant dense<0.000000e+00> : vector<2x8x8xf32>
    %407 = tpu.matmul %406, %393, %cst_140 {dimension_numbers = #tpu.dot_dimension_numbers<[2], [1], [1], [2], [0, 0, 0, 1, 1, 2], [0], [0]>} : vector<2x8x8xf32>, vector<2x8x8xf32>, vector<2x8x8xf32> -> vector<2x8x8xf32>
    %408 = vector.shape_cast %407 : vector<2x8x8xf32> to vector<16x8xf32>
    %c0_141 = arith.constant 0 : index
    %c8_142 = arith.constant 8 : index
    %409 = vector.load %arg10[%c0_141, %c8_142] : memref<16x32xf32, #tpu.memory_space<vmem>>, vector<16x8xf32>
    tpu.vector_store %arg10[%c0_141, %c8_142], %408 {strides = array<i32>} : memref<16x32xf32, #tpu.memory_space<vmem>>, vector<16x8xf32>,
    %410 = vector.extract_strided_slice %365 {offsets = [0, 16], sizes = [16, 8], strides = [1, 1]} : vector<16x96xf32> to vector<16x8xf32>
    %411 = vector.shape_cast %410 : vector<16x8xf32> to vector<2x8x8xf32>
    %412 = vector.extract_strided_slice %365 {offsets = [0, 48], sizes = [16, 8], strides = [1, 1]} : vector<16x96xf32> to vector<16x8xf32>
    %413 = vector.shape_cast %412 : vector<16x8xf32> to vector<2x8x8xf32>
    %414 = vector.extract_strided_slice %365 {offsets = [0, 80], sizes = [16, 8], strides = [1, 1]} : vector<16x96xf32> to vector<16x8xf32>
    %415 = vector.shape_cast %414 : vector<16x8xf32> to vector<2x8x8xf32>
    %cst_143 = arith.constant dense<0.000000e+00> : vector<2x8x8xf32>
    %416 = tpu.matmul %411, %413, %cst_143 {dimension_numbers = #tpu.dot_dimension_numbers<[2], [2], [1], [1], [0, 0, 0, 1, 1, 1], [0], [0]>} : vector<2x8x8xf32>, vector<2x8x8xf32>, vector<2x8x8xf32> -> vector<2x8x8xf32>
    %417 = vector.broadcast %0 : vector<2x1x8xf32> to vector<2x8x8xf32>
    %418 = arith.addf %416, %417 : vector<2x8x8xf32>
    %cst_144 = arith.constant dense<0xFF800000> : vector<2x8xf32>
    %419 = vector.multi_reduction <maximumf>, %418, %cst_144 [2] : vector<2x8x8xf32> to vector<2x8xf32>
    %420 = vector.shape_cast %419 : vector<2x8xf32> to vector<2x8x1xf32>
    %421 = vector.broadcast %420 : vector<2x8x1xf32> to vector<2x8x8xf32>
    %422 = arith.subf %418, %421 : vector<2x8x8xf32>
    %423 = math.exp %422 : vector<2x8x8xf32>
    %cst_145 = arith.constant dense<0.000000e+00> : vector<2x8xf32>
    %424 = vector.multi_reduction <add>, %423, %cst_145 [2] : vector<2x8x8xf32> to vector<2x8xf32>
    %425 = vector.shape_cast %424 : vector<2x8xf32> to vector<2x8x1xf32>
    %426 = tpu.reciprocal %425 {approx = true} : vector<2x8x1xf32> -> vector<2x8x1xf32>
    %427 = vector.broadcast %426 : vector<2x8x1xf32> to vector<2x8x8xf32>
    %428 = arith.mulf %423, %427 : vector<2x8x8xf32>
    %cst_146 = arith.constant dense<0.000000e+00> : vector<2x8x8xf32>
    %429 = tpu.matmul %428, %415, %cst_146 {dimension_numbers = #tpu.dot_dimension_numbers<[2], [1], [1], [2], [0, 0, 0, 1, 1, 2], [0], [0]>} : vector<2x8x8xf32>, vector<2x8x8xf32>, vector<2x8x8xf32> -> vector<2x8x8xf32>
    %430 = vector.shape_cast %429 : vector<2x8x8xf32> to vector<16x8xf32>
    %c0_147 = arith.constant 0 : index
    %c16_148 = arith.constant 16 : index
    %431 = vector.load %arg10[%c0_147, %c16_148] : memref<16x32xf32, #tpu.memory_space<vmem>>, vector<16x8xf32>
    tpu.vector_store %arg10[%c0_147, %c16_148], %430 {strides = array<i32>} : memref<16x32xf32, #tpu.memory_space<vmem>>, vector<16x8xf32>,
    %432 = vector.extract_strided_slice %365 {offsets = [0, 24], sizes = [16, 8], strides = [1, 1]} : vector<16x96xf32> to vector<16x8xf32>
    %433 = vector.shape_cast %432 : vector<16x8xf32> to vector<2x8x8xf32>
    %434 = vector.extract_strided_slice %365 {offsets = [0, 56], sizes = [16, 8], strides = [1, 1]} : vector<16x96xf32> to vector<16x8xf32>
    %435 = vector.shape_cast %434 : vector<16x8xf32> to vector<2x8x8xf32>
    %436 = vector.extract_strided_slice %365 {offsets = [0, 88], sizes = [16, 8], strides = [1, 1]} : vector<16x96xf32> to vector<16x8xf32>
    %437 = vector.shape_cast %436 : vector<16x8xf32> to vector<2x8x8xf32>
    %cst_149 = arith.constant dense<0.000000e+00> : vector<2x8x8xf32>
    %438 = tpu.matmul %433, %435, %cst_149 {dimension_numbers = #tpu.dot_dimension_numbers<[2], [2], [1], [1], [0, 0, 0, 1, 1, 1], [0], [0]>} : vector<2x8x8xf32>, vector<2x8x8xf32>, vector<2x8x8xf32> -> vector<2x8x8xf32>
    %439 = vector.broadcast %0 : vector<2x1x8xf32> to vector<2x8x8xf32>
    %440 = arith.addf %438, %439 : vector<2x8x8xf32>
    %cst_150 = arith.constant dense<0xFF800000> : vector<2x8xf32>
    %441 = vector.multi_reduction <maximumf>, %440, %cst_150 [2] : vector<2x8x8xf32> to vector<2x8xf32>
    %442 = vector.shape_cast %441 : vector<2x8xf32> to vector<2x8x1xf32>
    %443 = vector.broadcast %442 : vector<2x8x1xf32> to vector<2x8x8xf32>
    %444 = arith.subf %440, %443 : vector<2x8x8xf32>
    %445 = math.exp %444 : vector<2x8x8xf32>
    %cst_151 = arith.constant dense<0.000000e+00> : vector<2x8xf32>
    %446 = vector.multi_reduction <add>, %445, %cst_151 [2] : vector<2x8x8xf32> to vector<2x8xf32>
    %447 = vector.shape_cast %446 : vector<2x8xf32> to vector<2x8x1xf32>
    %448 = tpu.reciprocal %447 {approx = true} : vector<2x8x1xf32> -> vector<2x8x1xf32>
    %449 = vector.broadcast %448 : vector<2x8x1xf32> to vector<2x8x8xf32>
    %450 = arith.mulf %445, %449 : vector<2x8x8xf32>
    %cst_152 = arith.constant dense<0.000000e+00> : vector<2x8x8xf32>
    %451 = tpu.matmul %450, %437, %cst_152 {dimension_numbers = #tpu.dot_dimension_numbers<[2], [1], [1], [2], [0, 0, 0, 1, 1, 2], [0], [0]>} : vector<2x8x8xf32>, vector<2x8x8xf32>, vector<2x8x8xf32> -> vector<2x8x8xf32>
    %452 = vector.shape_cast %451 : vector<2x8x8xf32> to vector<16x8xf32>
    %c0_153 = arith.constant 0 : index
    %c24_154 = arith.constant 24 : index
    %453 = vector.load %arg10[%c0_153, %c24_154] : memref<16x32xf32, #tpu.memory_space<vmem>>, vector<16x8xf32>
    tpu.vector_store %arg10[%c0_153, %c24_154], %452 {strides = array<i32>} : memref<16x32xf32, #tpu.memory_space<vmem>>, vector<16x8xf32>,
    %c0_155 = arith.constant 0 : index
    %c0_156 = arith.constant 0 : index
    %454 = vector.load %arg10[%c0_155, %c0_156] : memref<16x32xf32, #tpu.memory_space<vmem>>, vector<16x32xf32>
    %c2_157 = arith.constant 2 : index
    %c0_158 = arith.constant 0 : index
    %c0_159 = arith.constant 0 : index
    %455 = vector.load %arg3[%c2_157, %c0_158, %c0_159] : memref<4x32x32xf32, #tpu.memory_space<vmem>>, vector<1x32x32xf32>
    %456 = vector.shape_cast %455 : vector<1x32x32xf32> to vector<32x32xf32>
    %cst_160 = arith.constant dense<0.000000e+00> : vector<16x32xf32>
    %457 = tpu.matmul %454, %456, %cst_160 {dimension_numbers = #tpu.dot_dimension_numbers<[1], [0], [0], [1], [0, 0, 1, 1], [], []>} : vector<16x32xf32>, vector<32x32xf32>, vector<16x32xf32> -> vector<16x32xf32>
    %458 = vector.extract_strided_slice %359 {offsets = [1, 0], sizes = [1, 32], strides = [1, 1]} : vector<8x128xf32> to vector<1x32xf32>
    %459 = vector.broadcast %458 : vector<1x32xf32> to vector<16x32xf32>
    %460 = arith.addf %457, %459 : vector<16x32xf32>
    %461 = arith.addf %460, %357 : vector<16x32xf32>
    %462 = vector.extract_strided_slice %359 {offsets = [2, 0], sizes = [1, 32], strides = [1, 1]} : vector<8x128xf32> to vector<1x32xf32>
    %463 = vector.extract_strided_slice %359 {offsets = [3, 0], sizes = [1, 32], strides = [1, 1]} : vector<8x128xf32> to vector<1x32xf32>
    %cst_161 = arith.constant dense<0.000000e+00> : vector<16xf32>
    %464 = vector.multi_reduction <add>, %461, %cst_161 [1] : vector<16x32xf32> to vector<16xf32>
    %465 = vector.shape_cast %464 : vector<16xf32> to vector<16x1xf32>
    %cst_162 = arith.constant 3.200000e+01 : f32
    %466 = vector.broadcast %cst_162 : f32 to vector<16x1xf32>
    %467 = arith.divf %465, %466 : vector<16x1xf32>
    %468 = vector.broadcast %467 : vector<16x1xf32> to vector<16x32xf32>
    %469 = arith.subf %461, %468 : vector<16x32xf32>
    %470 = arith.mulf %469, %469 : vector<16x32xf32>
    %cst_163 = arith.constant dense<0.000000e+00> : vector<16xf32>
    %471 = vector.multi_reduction <add>, %470, %cst_163 [1] : vector<16x32xf32> to vector<16xf32>
    %472 = vector.shape_cast %471 : vector<16xf32> to vector<16x1xf32>
    %cst_164 = arith.constant 3.200000e+01 : f32
    %473 = vector.broadcast %cst_164 : f32 to vector<16x1xf32>
    %474 = arith.divf %472, %473 : vector<16x1xf32>
    %cst_165 = arith.constant 9.99999996E-13 : f32
    %475 = vector.broadcast %cst_165 : f32 to vector<16x1xf32>
    %476 = arith.addf %474, %475 : vector<16x1xf32>
    %477 = math.rsqrt %476 : vector<16x1xf32>
    %478 = vector.broadcast %477 : vector<16x1xf32> to vector<16x32xf32>
    %479 = arith.mulf %469, %478 : vector<16x32xf32>
    %480 = vector.broadcast %462 : vector<1x32xf32> to vector<16x32xf32>
    %481 = arith.mulf %479, %480 : vector<16x32xf32>
    %482 = vector.broadcast %463 : vector<1x32xf32> to vector<16x32xf32>
    %483 = arith.addf %481, %482 : vector<16x32xf32>
    %c2_166 = arith.constant 2 : index
    %c0_167 = arith.constant 0 : index
    %c0_168 = arith.constant 0 : index
    %484 = vector.load %arg4[%c2_166, %c0_167, %c0_168] : memref<4x32x64xf32, #tpu.memory_space<vmem>>, vector<1x32x64xf32>
    %485 = vector.shape_cast %484 : vector<1x32x64xf32> to vector<32x64xf32>
    %cst_169 = arith.constant dense<0.000000e+00> : vector<16x64xf32>
    %486 = tpu.matmul %483, %485, %cst_169 {dimension_numbers = #tpu.dot_dimension_numbers<[1], [0], [0], [1], [0, 0, 1, 1], [], []>} : vector<16x32xf32>, vector<32x64xf32>, vector<16x64xf32> -> vector<16x64xf32>
    %487 = vector.extract_strided_slice %359 {offsets = [4, 0], sizes = [1, 64], strides = [1, 1]} : vector<8x128xf32> to vector<1x64xf32>
    %488 = vector.broadcast %487 : vector<1x64xf32> to vector<16x64xf32>
    %489 = arith.addf %486, %488 : vector<16x64xf32>
    %cst_170 = arith.constant 5.000000e-01 : f32
    %490 = vector.broadcast %cst_170 : f32 to vector<16x64xf32>
    %491 = arith.mulf %490, %489 : vector<16x64xf32>
    %cst_171 = arith.constant 4.471500e-02 : f32
    %492 = vector.broadcast %cst_171 : f32 to vector<16x64xf32>
    %493 = arith.mulf %492, %489 : vector<16x64xf32>
    %494 = arith.mulf %493, %489 : vector<16x64xf32>
    %495 = arith.mulf %494, %489 : vector<16x64xf32>
    %496 = arith.addf %489, %495 : vector<16x64xf32>
    %cst_172 = arith.constant 0.797884583 : f32
    %497 = vector.broadcast %cst_172 : f32 to vector<16x64xf32>
    %498 = arith.mulf %497, %496 : vector<16x64xf32>
    %499 = math.tanh %498 : vector<16x64xf32>
    %cst_173 = arith.constant 1.000000e+00 : f32
    %500 = vector.broadcast %cst_173 : f32 to vector<16x64xf32>
    %501 = arith.addf %500, %499 : vector<16x64xf32>
    %502 = arith.mulf %491, %501 : vector<16x64xf32>
    %c2_174 = arith.constant 2 : index
    %c0_175 = arith.constant 0 : index
    %c0_176 = arith.constant 0 : index
    %503 = vector.load %arg5[%c2_174, %c0_175, %c0_176] : memref<4x64x32xf32, #tpu.memory_space<vmem>>, vector<1x64x32xf32>
    %504 = vector.shape_cast %503 : vector<1x64x32xf32> to vector<64x32xf32>
    %cst_177 = arith.constant dense<0.000000e+00> : vector<16x32xf32>
    %505 = tpu.matmul %502, %504, %cst_177 {dimension_numbers = #tpu.dot_dimension_numbers<[1], [0], [0], [1], [0, 0, 1, 1], [], []>} : vector<16x64xf32>, vector<64x32xf32>, vector<16x32xf32> -> vector<16x32xf32>
    %506 = vector.extract_strided_slice %359 {offsets = [5, 0], sizes = [1, 32], strides = [1, 1]} : vector<8x128xf32> to vector<1x32xf32>
    %507 = vector.broadcast %506 : vector<1x32xf32> to vector<16x32xf32>
    %508 = arith.addf %505, %507 : vector<16x32xf32>
    %509 = arith.addf %508, %483 : vector<16x32xf32>
    %510 = vector.extract_strided_slice %359 {offsets = [6, 0], sizes = [1, 32], strides = [1, 1]} : vector<8x128xf32> to vector<1x32xf32>
    %511 = vector.extract_strided_slice %359 {offsets = [7, 0], sizes = [1, 32], strides = [1, 1]} : vector<8x128xf32> to vector<1x32xf32>
    %cst_178 = arith.constant dense<0.000000e+00> : vector<16xf32>
    %512 = vector.multi_reduction <add>, %509, %cst_178 [1] : vector<16x32xf32> to vector<16xf32>
    %513 = vector.shape_cast %512 : vector<16xf32> to vector<16x1xf32>
    %cst_179 = arith.constant 3.200000e+01 : f32
    %514 = vector.broadcast %cst_179 : f32 to vector<16x1xf32>
    %515 = arith.divf %513, %514 : vector<16x1xf32>
    %516 = vector.broadcast %515 : vector<16x1xf32> to vector<16x32xf32>
    %517 = arith.subf %509, %516 : vector<16x32xf32>
    %518 = arith.mulf %517, %517 : vector<16x32xf32>
    %cst_180 = arith.constant dense<0.000000e+00> : vector<16xf32>
    %519 = vector.multi_reduction <add>, %518, %cst_180 [1] : vector<16x32xf32> to vector<16xf32>
    %520 = vector.shape_cast %519 : vector<16xf32> to vector<16x1xf32>
    %cst_181 = arith.constant 3.200000e+01 : f32
    %521 = vector.broadcast %cst_181 : f32 to vector<16x1xf32>
    %522 = arith.divf %520, %521 : vector<16x1xf32>
    %cst_182 = arith.constant 9.99999996E-13 : f32
    %523 = vector.broadcast %cst_182 : f32 to vector<16x1xf32>
    %524 = arith.addf %522, %523 : vector<16x1xf32>
    %525 = math.rsqrt %524 : vector<16x1xf32>
    %526 = vector.broadcast %525 : vector<16x1xf32> to vector<16x32xf32>
    %527 = arith.mulf %517, %526 : vector<16x32xf32>
    %528 = vector.broadcast %510 : vector<1x32xf32> to vector<16x32xf32>
    %529 = arith.mulf %527, %528 : vector<16x32xf32>
    %530 = vector.broadcast %511 : vector<1x32xf32> to vector<16x32xf32>
    %531 = arith.addf %529, %530 : vector<16x32xf32>
    %532 = arith.addf %355, %531 : vector<16x32xf32>
    %c3 = arith.constant 3 : index
    %c0_183 = arith.constant 0 : index
    %c0_184 = arith.constant 0 : index
    %533 = vector.load %arg0[%c3, %c0_183, %c0_184] : memref<4x16x32xf32, #tpu.memory_space<vmem>>, vector<1x16x32xf32>
    %534 = vector.shape_cast %533 : vector<1x16x32xf32> to vector<16x32xf32>
    %c3_185 = arith.constant 3 : index
    %c0_186 = arith.constant 0 : index
    %c0_187 = arith.constant 0 : index
    %535 = vector.load %arg6[%c3_185, %c0_186, %c0_187] : memref<4x8x128xf32, #tpu.memory_space<vmem>>, vector<1x8x128xf32>
    %536 = vector.shape_cast %535 : vector<1x8x128xf32> to vector<8x128xf32>
    %c3_188 = arith.constant 3 : index
    %c0_189 = arith.constant 0 : index
    %c0_190 = arith.constant 0 : index
    %537 = vector.load %arg2[%c3_188, %c0_189, %c0_190] : memref<4x32x96xf32, #tpu.memory_space<vmem>>, vector<1x32x96xf32>
    %538 = vector.shape_cast %537 : vector<1x32x96xf32> to vector<32x96xf32>
    %cst_191 = arith.constant dense<0.000000e+00> : vector<16x96xf32>
    %539 = tpu.matmul %534, %538, %cst_191 {dimension_numbers = #tpu.dot_dimension_numbers<[1], [0], [0], [1], [0, 0, 1, 1], [], []>} : vector<16x32xf32>, vector<32x96xf32>, vector<16x96xf32> -> vector<16x96xf32>
    %540 = vector.extract_strided_slice %536 {offsets = [0, 0], sizes = [1, 96], strides = [1, 1]} : vector<8x128xf32> to vector<1x96xf32>
    %541 = vector.broadcast %540 : vector<1x96xf32> to vector<16x96xf32>
    %542 = arith.addf %539, %541 : vector<16x96xf32>
    %543 = vector.extract_strided_slice %542 {offsets = [0, 0], sizes = [16, 8], strides = [1, 1]} : vector<16x96xf32> to vector<16x8xf32>
    %544 = vector.shape_cast %543 : vector<16x8xf32> to vector<2x8x8xf32>
    %545 = vector.extract_strided_slice %542 {offsets = [0, 32], sizes = [16, 8], strides = [1, 1]} : vector<16x96xf32> to vector<16x8xf32>
    %546 = vector.shape_cast %545 : vector<16x8xf32> to vector<2x8x8xf32>
    %547 = vector.extract_strided_slice %542 {offsets = [0, 64], sizes = [16, 8], strides = [1, 1]} : vector<16x96xf32> to vector<16x8xf32>
    %548 = vector.shape_cast %547 : vector<16x8xf32> to vector<2x8x8xf32>
    %cst_192 = arith.constant dense<0.000000e+00> : vector<2x8x8xf32>
    %549 = tpu.matmul %544, %546, %cst_192 {dimension_numbers = #tpu.dot_dimension_numbers<[2], [2], [1], [1], [0, 0, 0, 1, 1, 1], [0], [0]>} : vector<2x8x8xf32>, vector<2x8x8xf32>, vector<2x8x8xf32> -> vector<2x8x8xf32>
    %550 = vector.broadcast %0 : vector<2x1x8xf32> to vector<2x8x8xf32>
    %551 = arith.addf %549, %550 : vector<2x8x8xf32>
    %cst_193 = arith.constant dense<0xFF800000> : vector<2x8xf32>
    %552 = vector.multi_reduction <maximumf>, %551, %cst_193 [2] : vector<2x8x8xf32> to vector<2x8xf32>
    %553 = vector.shape_cast %552 : vector<2x8xf32> to vector<2x8x1xf32>
    %554 = vector.broadcast %553 : vector<2x8x1xf32> to vector<2x8x8xf32>
    %555 = arith.subf %551, %554 : vector<2x8x8xf32>
    %556 = math.exp %555 : vector<2x8x8xf32>
    %cst_194 = arith.constant dense<0.000000e+00> : vector<2x8xf32>
    %557 = vector.multi_reduction <add>, %556, %cst_194 [2] : vector<2x8x8xf32> to vector<2x8xf32>
    %558 = vector.shape_cast %557 : vector<2x8xf32> to vector<2x8x1xf32>
    %559 = tpu.reciprocal %558 {approx = true} : vector<2x8x1xf32> -> vector<2x8x1xf32>
    %560 = vector.broadcast %559 : vector<2x8x1xf32> to vector<2x8x8xf32>
    %561 = arith.mulf %556, %560 : vector<2x8x8xf32>
    %cst_195 = arith.constant dense<0.000000e+00> : vector<2x8x8xf32>
    %562 = tpu.matmul %561, %548, %cst_195 {dimension_numbers = #tpu.dot_dimension_numbers<[2], [1], [1], [2], [0, 0, 0, 1, 1, 2], [0], [0]>} : vector<2x8x8xf32>, vector<2x8x8xf32>, vector<2x8x8xf32> -> vector<2x8x8xf32>
    %563 = vector.shape_cast %562 : vector<2x8x8xf32> to vector<16x8xf32>
    %c0_196 = arith.constant 0 : index
    %c0_197 = arith.constant 0 : index
    %564 = vector.load %arg10[%c0_196, %c0_197] : memref<16x32xf32, #tpu.memory_space<vmem>>, vector<16x8xf32>
    tpu.vector_store %arg10[%c0_196, %c0_197], %563 {strides = array<i32>} : memref<16x32xf32, #tpu.memory_space<vmem>>, vector<16x8xf32>,
    %565 = vector.extract_strided_slice %542 {offsets = [0, 8], sizes = [16, 8], strides = [1, 1]} : vector<16x96xf32> to vector<16x8xf32>
    %566 = vector.shape_cast %565 : vector<16x8xf32> to vector<2x8x8xf32>
    %567 = vector.extract_strided_slice %542 {offsets = [0, 40], sizes = [16, 8], strides = [1, 1]} : vector<16x96xf32> to vector<16x8xf32>
    %568 = vector.shape_cast %567 : vector<16x8xf32> to vector<2x8x8xf32>
    %569 = vector.extract_strided_slice %542 {offsets = [0, 72], sizes = [16, 8], strides = [1, 1]} : vector<16x96xf32> to vector<16x8xf32>
    %570 = vector.shape_cast %569 : vector<16x8xf32> to vector<2x8x8xf32>
    %cst_198 = arith.constant dense<0.000000e+00> : vector<2x8x8xf32>
    %571 = tpu.matmul %566, %568, %cst_198 {dimension_numbers = #tpu.dot_dimension_numbers<[2], [2], [1], [1], [0, 0, 0, 1, 1, 1], [0], [0]>} : vector<2x8x8xf32>, vector<2x8x8xf32>, vector<2x8x8xf32> -> vector<2x8x8xf32>
    %572 = vector.broadcast %0 : vector<2x1x8xf32> to vector<2x8x8xf32>
    %573 = arith.addf %571, %572 : vector<2x8x8xf32>
    %cst_199 = arith.constant dense<0xFF800000> : vector<2x8xf32>
    %574 = vector.multi_reduction <maximumf>, %573, %cst_199 [2] : vector<2x8x8xf32> to vector<2x8xf32>
    %575 = vector.shape_cast %574 : vector<2x8xf32> to vector<2x8x1xf32>
    %576 = vector.broadcast %575 : vector<2x8x1xf32> to vector<2x8x8xf32>
    %577 = arith.subf %573, %576 : vector<2x8x8xf32>
    %578 = math.exp %577 : vector<2x8x8xf32>
    %cst_200 = arith.constant dense<0.000000e+00> : vector<2x8xf32>
    %579 = vector.multi_reduction <add>, %578, %cst_200 [2] : vector<2x8x8xf32> to vector<2x8xf32>
    %580 = vector.shape_cast %579 : vector<2x8xf32> to vector<2x8x1xf32>
    %581 = tpu.reciprocal %580 {approx = true} : vector<2x8x1xf32> -> vector<2x8x1xf32>
    %582 = vector.broadcast %581 : vector<2x8x1xf32> to vector<2x8x8xf32>
    %583 = arith.mulf %578, %582 : vector<2x8x8xf32>
    %cst_201 = arith.constant dense<0.000000e+00> : vector<2x8x8xf32>
    %584 = tpu.matmul %583, %570, %cst_201 {dimension_numbers = #tpu.dot_dimension_numbers<[2], [1], [1], [2], [0, 0, 0, 1, 1, 2], [0], [0]>} : vector<2x8x8xf32>, vector<2x8x8xf32>, vector<2x8x8xf32> -> vector<2x8x8xf32>
    %585 = vector.shape_cast %584 : vector<2x8x8xf32> to vector<16x8xf32>
    %c0_202 = arith.constant 0 : index
    %c8_203 = arith.constant 8 : index
    %586 = vector.load %arg10[%c0_202, %c8_203] : memref<16x32xf32, #tpu.memory_space<vmem>>, vector<16x8xf32>
    tpu.vector_store %arg10[%c0_202, %c8_203], %585 {strides = array<i32>} : memref<16x32xf32, #tpu.memory_space<vmem>>, vector<16x8xf32>,
    %587 = vector.extract_strided_slice %542 {offsets = [0, 16], sizes = [16, 8], strides = [1, 1]} : vector<16x96xf32> to vector<16x8xf32>
    %588 = vector.shape_cast %587 : vector<16x8xf32> to vector<2x8x8xf32>
    %589 = vector.extract_strided_slice %542 {offsets = [0, 48], sizes = [16, 8], strides = [1, 1]} : vector<16x96xf32> to vector<16x8xf32>
    %590 = vector.shape_cast %589 : vector<16x8xf32> to vector<2x8x8xf32>
    %591 = vector.extract_strided_slice %542 {offsets = [0, 80], sizes = [16, 8], strides = [1, 1]} : vector<16x96xf32> to vector<16x8xf32>
    %592 = vector.shape_cast %591 : vector<16x8xf32> to vector<2x8x8xf32>
    %cst_204 = arith.constant dense<0.000000e+00> : vector<2x8x8xf32>
    %593 = tpu.matmul %588, %590, %cst_204 {dimension_numbers = #tpu.dot_dimension_numbers<[2], [2], [1], [1], [0, 0, 0, 1, 1, 1], [0], [0]>} : vector<2x8x8xf32>, vector<2x8x8xf32>, vector<2x8x8xf32> -> vector<2x8x8xf32>
    %594 = vector.broadcast %0 : vector<2x1x8xf32> to vector<2x8x8xf32>
    %595 = arith.addf %593, %594 : vector<2x8x8xf32>
    %cst_205 = arith.constant dense<0xFF800000> : vector<2x8xf32>
    %596 = vector.multi_reduction <maximumf>, %595, %cst_205 [2] : vector<2x8x8xf32> to vector<2x8xf32>
    %597 = vector.shape_cast %596 : vector<2x8xf32> to vector<2x8x1xf32>
    %598 = vector.broadcast %597 : vector<2x8x1xf32> to vector<2x8x8xf32>
    %599 = arith.subf %595, %598 : vector<2x8x8xf32>
    %600 = math.exp %599 : vector<2x8x8xf32>
    %cst_206 = arith.constant dense<0.000000e+00> : vector<2x8xf32>
    %601 = vector.multi_reduction <add>, %600, %cst_206 [2] : vector<2x8x8xf32> to vector<2x8xf32>
    %602 = vector.shape_cast %601 : vector<2x8xf32> to vector<2x8x1xf32>
    %603 = tpu.reciprocal %602 {approx = true} : vector<2x8x1xf32> -> vector<2x8x1xf32>
    %604 = vector.broadcast %603 : vector<2x8x1xf32> to vector<2x8x8xf32>
    %605 = arith.mulf %600, %604 : vector<2x8x8xf32>
    %cst_207 = arith.constant dense<0.000000e+00> : vector<2x8x8xf32>
    %606 = tpu.matmul %605, %592, %cst_207 {dimension_numbers = #tpu.dot_dimension_numbers<[2], [1], [1], [2], [0, 0, 0, 1, 1, 2], [0], [0]>} : vector<2x8x8xf32>, vector<2x8x8xf32>, vector<2x8x8xf32> -> vector<2x8x8xf32>
    %607 = vector.shape_cast %606 : vector<2x8x8xf32> to vector<16x8xf32>
    %c0_208 = arith.constant 0 : index
    %c16_209 = arith.constant 16 : index
    %608 = vector.load %arg10[%c0_208, %c16_209] : memref<16x32xf32, #tpu.memory_space<vmem>>, vector<16x8xf32>
    tpu.vector_store %arg10[%c0_208, %c16_209], %607 {strides = array<i32>} : memref<16x32xf32, #tpu.memory_space<vmem>>, vector<16x8xf32>,
    %609 = vector.extract_strided_slice %542 {offsets = [0, 24], sizes = [16, 8], strides = [1, 1]} : vector<16x96xf32> to vector<16x8xf32>
    %610 = vector.shape_cast %609 : vector<16x8xf32> to vector<2x8x8xf32>
    %611 = vector.extract_strided_slice %542 {offsets = [0, 56], sizes = [16, 8], strides = [1, 1]} : vector<16x96xf32> to vector<16x8xf32>
    %612 = vector.shape_cast %611 : vector<16x8xf32> to vector<2x8x8xf32>
    %613 = vector.extract_strided_slice %542 {offsets = [0, 88], sizes = [16, 8], strides = [1, 1]} : vector<16x96xf32> to vector<16x8xf32>
    %614 = vector.shape_cast %613 : vector<16x8xf32> to vector<2x8x8xf32>
    %cst_210 = arith.constant dense<0.000000e+00> : vector<2x8x8xf32>
    %615 = tpu.matmul %610, %612, %cst_210 {dimension_numbers = #tpu.dot_dimension_numbers<[2], [2], [1], [1], [0, 0, 0, 1, 1, 1], [0], [0]>} : vector<2x8x8xf32>, vector<2x8x8xf32>, vector<2x8x8xf32> -> vector<2x8x8xf32>
    %616 = vector.broadcast %0 : vector<2x1x8xf32> to vector<2x8x8xf32>
    %617 = arith.addf %615, %616 : vector<2x8x8xf32>
    %cst_211 = arith.constant dense<0xFF800000> : vector<2x8xf32>
    %618 = vector.multi_reduction <maximumf>, %617, %cst_211 [2] : vector<2x8x8xf32> to vector<2x8xf32>
    %619 = vector.shape_cast %618 : vector<2x8xf32> to vector<2x8x1xf32>
    %620 = vector.broadcast %619 : vector<2x8x1xf32> to vector<2x8x8xf32>
    %621 = arith.subf %617, %620 : vector<2x8x8xf32>
    %622 = math.exp %621 : vector<2x8x8xf32>
    %cst_212 = arith.constant dense<0.000000e+00> : vector<2x8xf32>
    %623 = vector.multi_reduction <add>, %622, %cst_212 [2] : vector<2x8x8xf32> to vector<2x8xf32>
    %624 = vector.shape_cast %623 : vector<2x8xf32> to vector<2x8x1xf32>
    %625 = tpu.reciprocal %624 {approx = true} : vector<2x8x1xf32> -> vector<2x8x1xf32>
    %626 = vector.broadcast %625 : vector<2x8x1xf32> to vector<2x8x8xf32>
    %627 = arith.mulf %622, %626 : vector<2x8x8xf32>
    %cst_213 = arith.constant dense<0.000000e+00> : vector<2x8x8xf32>
    %628 = tpu.matmul %627, %614, %cst_213 {dimension_numbers = #tpu.dot_dimension_numbers<[2], [1], [1], [2], [0, 0, 0, 1, 1, 2], [0], [0]>} : vector<2x8x8xf32>, vector<2x8x8xf32>, vector<2x8x8xf32> -> vector<2x8x8xf32>
    %629 = vector.shape_cast %628 : vector<2x8x8xf32> to vector<16x8xf32>
    %c0_214 = arith.constant 0 : index
    %c24_215 = arith.constant 24 : index
    %630 = vector.load %arg10[%c0_214, %c24_215] : memref<16x32xf32, #tpu.memory_space<vmem>>, vector<16x8xf32>
    tpu.vector_store %arg10[%c0_214, %c24_215], %629 {strides = array<i32>} : memref<16x32xf32, #tpu.memory_space<vmem>>, vector<16x8xf32>,
    %c0_216 = arith.constant 0 : index
    %c0_217 = arith.constant 0 : index
    %631 = vector.load %arg10[%c0_216, %c0_217] : memref<16x32xf32, #tpu.memory_space<vmem>>, vector<16x32xf32>
    %c3_218 = arith.constant 3 : index
    %c0_219 = arith.constant 0 : index
    %c0_220 = arith.constant 0 : index
    %632 = vector.load %arg3[%c3_218, %c0_219, %c0_220] : memref<4x32x32xf32, #tpu.memory_space<vmem>>, vector<1x32x32xf32>
    %633 = vector.shape_cast %632 : vector<1x32x32xf32> to vector<32x32xf32>
    %cst_221 = arith.constant dense<0.000000e+00> : vector<16x32xf32>
    %634 = tpu.matmul %631, %633, %cst_221 {dimension_numbers = #tpu.dot_dimension_numbers<[1], [0], [0], [1], [0, 0, 1, 1], [], []>} : vector<16x32xf32>, vector<32x32xf32>, vector<16x32xf32> -> vector<16x32xf32>
    %635 = vector.extract_strided_slice %536 {offsets = [1, 0], sizes = [1, 32], strides = [1, 1]} : vector<8x128xf32> to vector<1x32xf32>
    %636 = vector.broadcast %635 : vector<1x32xf32> to vector<16x32xf32>
    %637 = arith.addf %634, %636 : vector<16x32xf32>
    %638 = arith.addf %637, %534 : vector<16x32xf32>
    %639 = vector.extract_strided_slice %536 {offsets = [2, 0], sizes = [1, 32], strides = [1, 1]} : vector<8x128xf32> to vector<1x32xf32>
    %640 = vector.extract_strided_slice %536 {offsets = [3, 0], sizes = [1, 32], strides = [1, 1]} : vector<8x128xf32> to vector<1x32xf32>
    %cst_222 = arith.constant dense<0.000000e+00> : vector<16xf32>
    %641 = vector.multi_reduction <add>, %638, %cst_222 [1] : vector<16x32xf32> to vector<16xf32>
    %642 = vector.shape_cast %641 : vector<16xf32> to vector<16x1xf32>
    %cst_223 = arith.constant 3.200000e+01 : f32
    %643 = vector.broadcast %cst_223 : f32 to vector<16x1xf32>
    %644 = arith.divf %642, %643 : vector<16x1xf32>
    %645 = vector.broadcast %644 : vector<16x1xf32> to vector<16x32xf32>
    %646 = arith.subf %638, %645 : vector<16x32xf32>
    %647 = arith.mulf %646, %646 : vector<16x32xf32>
    %cst_224 = arith.constant dense<0.000000e+00> : vector<16xf32>
    %648 = vector.multi_reduction <add>, %647, %cst_224 [1] : vector<16x32xf32> to vector<16xf32>
    %649 = vector.shape_cast %648 : vector<16xf32> to vector<16x1xf32>
    %cst_225 = arith.constant 3.200000e+01 : f32
    %650 = vector.broadcast %cst_225 : f32 to vector<16x1xf32>
    %651 = arith.divf %649, %650 : vector<16x1xf32>
    %cst_226 = arith.constant 9.99999996E-13 : f32
    %652 = vector.broadcast %cst_226 : f32 to vector<16x1xf32>
    %653 = arith.addf %651, %652 : vector<16x1xf32>
    %654 = math.rsqrt %653 : vector<16x1xf32>
    %655 = vector.broadcast %654 : vector<16x1xf32> to vector<16x32xf32>
    %656 = arith.mulf %646, %655 : vector<16x32xf32>
    %657 = vector.broadcast %639 : vector<1x32xf32> to vector<16x32xf32>
    %658 = arith.mulf %656, %657 : vector<16x32xf32>
    %659 = vector.broadcast %640 : vector<1x32xf32> to vector<16x32xf32>
    %660 = arith.addf %658, %659 : vector<16x32xf32>
    %c3_227 = arith.constant 3 : index
    %c0_228 = arith.constant 0 : index
    %c0_229 = arith.constant 0 : index
    %661 = vector.load %arg4[%c3_227, %c0_228, %c0_229] : memref<4x32x64xf32, #tpu.memory_space<vmem>>, vector<1x32x64xf32>
    %662 = vector.shape_cast %661 : vector<1x32x64xf32> to vector<32x64xf32>
    %cst_230 = arith.constant dense<0.000000e+00> : vector<16x64xf32>
    %663 = tpu.matmul %660, %662, %cst_230 {dimension_numbers = #tpu.dot_dimension_numbers<[1], [0], [0], [1], [0, 0, 1, 1], [], []>} : vector<16x32xf32>, vector<32x64xf32>, vector<16x64xf32> -> vector<16x64xf32>
    %664 = vector.extract_strided_slice %536 {offsets = [4, 0], sizes = [1, 64], strides = [1, 1]} : vector<8x128xf32> to vector<1x64xf32>
    %665 = vector.broadcast %664 : vector<1x64xf32> to vector<16x64xf32>
    %666 = arith.addf %663, %665 : vector<16x64xf32>
    %cst_231 = arith.constant 5.000000e-01 : f32
    %667 = vector.broadcast %cst_231 : f32 to vector<16x64xf32>
    %668 = arith.mulf %667, %666 : vector<16x64xf32>
    %cst_232 = arith.constant 4.471500e-02 : f32
    %669 = vector.broadcast %cst_232 : f32 to vector<16x64xf32>
    %670 = arith.mulf %669, %666 : vector<16x64xf32>
    %671 = arith.mulf %670, %666 : vector<16x64xf32>
    %672 = arith.mulf %671, %666 : vector<16x64xf32>
    %673 = arith.addf %666, %672 : vector<16x64xf32>
    %cst_233 = arith.constant 0.797884583 : f32
    %674 = vector.broadcast %cst_233 : f32 to vector<16x64xf32>
    %675 = arith.mulf %674, %673 : vector<16x64xf32>
    %676 = math.tanh %675 : vector<16x64xf32>
    %cst_234 = arith.constant 1.000000e+00 : f32
    %677 = vector.broadcast %cst_234 : f32 to vector<16x64xf32>
    %678 = arith.addf %677, %676 : vector<16x64xf32>
    %679 = arith.mulf %668, %678 : vector<16x64xf32>
    %c3_235 = arith.constant 3 : index
    %c0_236 = arith.constant 0 : index
    %c0_237 = arith.constant 0 : index
    %680 = vector.load %arg5[%c3_235, %c0_236, %c0_237] : memref<4x64x32xf32, #tpu.memory_space<vmem>>, vector<1x64x32xf32>
    %681 = vector.shape_cast %680 : vector<1x64x32xf32> to vector<64x32xf32>
    %cst_238 = arith.constant dense<0.000000e+00> : vector<16x32xf32>
    %682 = tpu.matmul %679, %681, %cst_238 {dimension_numbers = #tpu.dot_dimension_numbers<[1], [0], [0], [1], [0, 0, 1, 1], [], []>} : vector<16x64xf32>, vector<64x32xf32>, vector<16x32xf32> -> vector<16x32xf32>
    %683 = vector.extract_strided_slice %536 {offsets = [5, 0], sizes = [1, 32], strides = [1, 1]} : vector<8x128xf32> to vector<1x32xf32>
    %684 = vector.broadcast %683 : vector<1x32xf32> to vector<16x32xf32>
    %685 = arith.addf %682, %684 : vector<16x32xf32>
    %686 = arith.addf %685, %660 : vector<16x32xf32>
    %687 = vector.extract_strided_slice %536 {offsets = [6, 0], sizes = [1, 32], strides = [1, 1]} : vector<8x128xf32> to vector<1x32xf32>
    %688 = vector.extract_strided_slice %536 {offsets = [7, 0], sizes = [1, 32], strides = [1, 1]} : vector<8x128xf32> to vector<1x32xf32>
    %cst_239 = arith.constant dense<0.000000e+00> : vector<16xf32>
    %689 = vector.multi_reduction <add>, %686, %cst_239 [1] : vector<16x32xf32> to vector<16xf32>
    %690 = vector.shape_cast %689 : vector<16xf32> to vector<16x1xf32>
    %cst_240 = arith.constant 3.200000e+01 : f32
    %691 = vector.broadcast %cst_240 : f32 to vector<16x1xf32>
    %692 = arith.divf %690, %691 : vector<16x1xf32>
    %693 = vector.broadcast %692 : vector<16x1xf32> to vector<16x32xf32>
    %694 = arith.subf %686, %693 : vector<16x32xf32>
    %695 = arith.mulf %694, %694 : vector<16x32xf32>
    %cst_241 = arith.constant dense<0.000000e+00> : vector<16xf32>
    %696 = vector.multi_reduction <add>, %695, %cst_241 [1] : vector<16x32xf32> to vector<16xf32>
    %697 = vector.shape_cast %696 : vector<16xf32> to vector<16x1xf32>
    %cst_242 = arith.constant 3.200000e+01 : f32
    %698 = vector.broadcast %cst_242 : f32 to vector<16x1xf32>
    %699 = arith.divf %697, %698 : vector<16x1xf32>
    %cst_243 = arith.constant 9.99999996E-13 : f32
    %700 = vector.broadcast %cst_243 : f32 to vector<16x1xf32>
    %701 = arith.addf %699, %700 : vector<16x1xf32>
    %702 = math.rsqrt %701 : vector<16x1xf32>
    %703 = vector.broadcast %702 : vector<16x1xf32> to vector<16x32xf32>
    %704 = arith.mulf %694, %703 : vector<16x32xf32>
    %705 = vector.broadcast %687 : vector<1x32xf32> to vector<16x32xf32>
    %706 = arith.mulf %704, %705 : vector<16x32xf32>
    %707 = vector.broadcast %688 : vector<1x32xf32> to vector<16x32xf32>
    %708 = arith.addf %706, %707 : vector<16x32xf32>
    %709 = arith.addf %532, %708 : vector<16x32xf32>
    %cst_244 = arith.constant 2.500000e-01 : f32
    %710 = vector.broadcast %cst_244 : f32 to vector<16x32xf32>
    %711 = arith.mulf %709, %710 : vector<16x32xf32>
    %c0_245 = arith.constant 0 : index
    %c0_246 = arith.constant 0 : index
    %712 = vector.load %arg7[%c0_245, %c0_246] : memref<32x128xf32, #tpu.memory_space<vmem>>, vector<32x128xf32>
    %cst_247 = arith.constant dense<0.000000e+00> : vector<16x128xf32>
    %713 = tpu.matmul %711, %712, %cst_247 {dimension_numbers = #tpu.dot_dimension_numbers<[1], [0], [0], [1], [0, 0, 1, 1], [], []>} : vector<16x32xf32>, vector<32x128xf32>, vector<16x128xf32> -> vector<16x128xf32>
    %c0_248 = arith.constant 0 : index
    %c0_249 = arith.constant 0 : index
    %714 = vector.load %arg8[%c0_248, %c0_249] : memref<1x128xf32, #tpu.memory_space<vmem>>, vector<1x128xf32>
    %715 = vector.broadcast %714 : vector<1x128xf32> to vector<16x128xf32>
    %716 = arith.addf %713, %715 : vector<16x128xf32>
    %c0_250 = arith.constant 0 : index
    %c0_251 = arith.constant 0 : index
    %717 = vector.load %arg9[%c0_250, %c0_251] : memref<16x128xf32, #tpu.memory_space<vmem>>, vector<16x128xf32>
    tpu.vector_store %arg9[%c0_250, %c0_251], %716 {strides = array<i32>} : memref<16x128xf32, #tpu.memory_space<vmem>>, vector<16x128xf32>,
    return
  }
}

</mosaic_0001>

<llo_original>
// kernel: psum_mixlayer_forward.1
$region0: #{psum_mixlayer_forward.1}
  #allocation0 [shape = 'u32[]', space=smem, size = 0x4, offset = 0x4, fixed_abs, tag = 'smem constant byte address 0x4 - core index']
  #allocation1 [shape = 'u32[144,128]{1,0:T(1,128)}', space=vmem, size = 0x12000, scoped, tag = 'internal scratch']
  #allocation2 [shape = 'f32[16,32]{1,0:T(8,128)}', space=vmem, size = 0x2000, scoped, tag = 'scratch operand']
  %s0 = inlined_call_operand.vmem [shape: f32[4,16,32], index: 0, kind: input, shape index: {}]
  %s1 = inlined_call_operand.vmem [shape: f32[2,1,8], index: 1, kind: input, shape index: {}]
  %s2 = inlined_call_operand.vmem [shape: f32[4,32,96], index: 2, kind: input, shape index: {}]
  %s3 = inlined_call_operand.vmem [shape: f32[4,32,32], index: 3, kind: input, shape index: {}]
  %s4 = inlined_call_operand.vmem [shape: f32[4,32,64], index: 4, kind: input, shape index: {}]
  %s5 = inlined_call_operand.vmem [shape: f32[4,64,32], index: 5, kind: input, shape index: {}]
  %s6 = inlined_call_operand.vmem [shape: f32[4,8,128], index: 6, kind: input, shape index: {}]
  %s7 = inlined_call_operand.vmem [shape: f32[32,128], index: 7, kind: input, shape index: {}]
  %s8 = inlined_call_operand.vmem [shape: f32[1,128], index: 8, kind: input, shape index: {}]
  %s9 = inlined_call_operand.vmem [shape: f32[16,128], index: 9, kind: output, shape index: {}]
  %s10 = sld [smem:[#allocation0]]
  $region46: #{psum_mixlayer_forward.1} parent=0
    _
  %s12 = ssub.s32 1, %s10
  %s13 = scalar_select 0, %s12, %s10
  // Predicated region
  $region2: #{psum_mixlayer_forward.1} parent=0 // pred_check
    _
  $region3: #{psum_mixlayer_forward.1} parent=0 // pred_check_branch
    %15 = sbr.rel (0) target = $region5
  $region4: #{psum_mixlayer_forward.1} parent=0 // pred_region
    _
  $region5: #{psum_mixlayer_forward.1} parent=0 // pred_fallthru
    _
  // Predicated region
  $region6: #{psum_mixlayer_forward.1} parent=0 // pred_check
    _
  $region7: #{psum_mixlayer_forward.1} parent=0 // pred_check_branch
    %17 = sbr.rel (0) target = $region9
  $region8: #{psum_mixlayer_forward.1} parent=0 // pred_region
    _
  $region9: #{psum_mixlayer_forward.1} parent=0 // pred_fallthru
    _
  // Predicated region
  $region10: #{psum_mixlayer_forward.1} parent=0 // pred_check
    _
  $region11: #{psum_mixlayer_forward.1} parent=0 // pred_check_branch
    %19 = sbr.rel (0) target = $region13
  $region12: #{psum_mixlayer_forward.1} parent=0 // pred_region
    _
  $region13: #{psum_mixlayer_forward.1} parent=0 // pred_fallthru
    _
  // Predicated region
  $region14: #{psum_mixlayer_forward.1} parent=0 // pred_check
    _
  $region15: #{psum_mixlayer_forward.1} parent=0 // pred_check_branch
    %21 = sbr.rel (0) target = $region17
  $region16: #{psum_mixlayer_forward.1} parent=0 // pred_region
    _
  $region17: #{psum_mixlayer_forward.1} parent=0 // pred_fallthru
    _
  // Predicated region
  $region18: #{psum_mixlayer_forward.1} parent=0 // pred_check
    _
  $region19: #{psum_mixlayer_forward.1} parent=0 // pred_check_branch
    %23 = sbr.rel (0) target = $region21
  $region20: #{psum_mixlayer_forward.1} parent=0 // pred_region
    _
  $region21: #{psum_mixlayer_forward.1} parent=0 // pred_fallthru
    _
  // Predicated region
  $region22: #{psum_mixlayer_forward.1} parent=0 // pred_check
    _
  $region23: #{psum_mixlayer_forward.1} parent=0 // pred_check_branch
    %25 = sbr.rel (0) target = $region25
  $region24: #{psum_mixlayer_forward.1} parent=0 // pred_region
    _
  $region25: #{psum_mixlayer_forward.1} parent=0 // pred_fallthru
    _
  // Predicated region
  $region26: #{psum_mixlayer_forward.1} parent=0 // pred_check
    _
  $region27: #{psum_mixlayer_forward.1} parent=0 // pred_check_branch
    %27 = sbr.rel (0) target = $region29
  $region28: #{psum_mixlayer_forward.1} parent=0 // pred_region
    _
  $region29: #{psum_mixlayer_forward.1} parent=0 // pred_fallthru
    _
  // Predicated region
  $region30: #{psum_mixlayer_forward.1} parent=0 // pred_check
    _
  $region31: #{psum_mixlayer_forward.1} parent=0 // pred_check_branch
    %29 = sbr.rel (0) target = $region33
  $region32: #{psum_mixlayer_forward.1} parent=0 // pred_region
    _
  $region33: #{psum_mixlayer_forward.1} parent=0 // pred_fallthru
    _
  // Predicated region
  $region34: #{psum_mixlayer_forward.1} parent=0 // pred_check
    _
  $region35: #{psum_mixlayer_forward.1} parent=0 // pred_check_branch
    %31 = sbr.rel (0) target = $region37
  $region36: #{psum_mixlayer_forward.1} parent=0 // pred_region
    _
  $region37: #{psum_mixlayer_forward.1} parent=0 // pred_fallthru
    _
  %v32 = vld [vmem:[%s1] sm:$0x1]
  %v33 = vld [vmem:[%s1 + $0x1] sm:$0x1]
  %v34 = vld [vmem:[%s0] sm:$0xff]
  %v35 = vld [vmem:[%s0 + $0x8] sm:$0xff]
  %v36 = vld [vmem:[%s6] sm:$0xff]
  %v37 = vld [vmem:[%s2] sm:$0xff]
  %v38 = vld [vmem:[%s2 + $0x8] sm:$0xff]
  %v39 = vld [vmem:[%s2 + $0x10] sm:$0xff]
  %v40 = vld [vmem:[%s2 + $0x18] sm:$0xff]
  %v41 = vlaneseq
  %v42 = vshrl.u32 %v41, 7
  %v43 = vsub.s32 0, %v42
  %v44 = vrot.slane %v36, %v43
  %vm45 = vcmask 261120
  %v47 = vsel %vm45, %v34, 0
  %v50 = vsel %vm45, %v35, 0
  %52 = vmatprep.subr.mxu0 0.0
  %53 = vmatpush1.msra.mxu0 0.0
  %54 = vmatprep.subr.mxu0 0.0
  %55 = vmatpush1.msra.mxu0 0.0
  %56 = vmatprep.subr.mxu0 0.0
  %57 = vmatpush1.msra.mxu0 0.0
  %58 = vmatprep.subr.mxu0 0.0
  %59 = vmatpush1.msra.mxu0 0.0
  %60 = vmatprep.subr.mxu0 0.0
  %61 = vmatpush1.msra.mxu0 0.0
  %62 = vmatprep.subr.mxu0 0.0
  %63 = vmatpush1.msra.mxu0 0.0
  %64 = vmatprep.subr.mxu0 0.0
  %65 = vmatpush1.msra.mxu0 0.0
  %66 = vmatprep.subr.mxu0 0.0
  %67 = vmatpush1.msra.mxu0 0.0
  %68 = vmatprep.subr.mxu0 0.0
  %69 = vmatpush1.msra.mxu0 0.0
  %70 = vmatprep.subr.mxu0 0.0
  %71 = vmatpush1.msra.mxu0 0.0
  %72 = vmatprep.subr.mxu0 0.0
  %73 = vmatpush1.msra.mxu0 0.0
  %74 = vmatprep.subr.mxu0 0.0
  %75 = vmatpush1.msra.mxu0 0.0
  %76 = vmatprep.subr.mxu0 0.0
  %77 = vmatpush1.msra.mxu0 %v40
  %78 = vmatprep.subr.mxu0 0.0
  %79 = vmatpush1.msra.mxu0 %v39
  %80 = vmatprep.subr.mxu0 0.0
  %81 = vmatpush1.msra.mxu0 %v38
  %82 = vmatprep.subr.mxu0 0.0
  %83 = vmatpush1.msra.mxu0 %v37
  %84 = vmatprep.subr.mxu0 0.0
  %85 = vmatpush2.msra.mxu0 0.0
  %86 = vmatprep.subr.mxu0 0.0
  %87 = vmatpush2.msra.mxu0 0.0
  %88 = vmatprep.subr.mxu0 0.0
  %89 = vmatpush2.msra.mxu0 0.0
  %90 = vmatprep.subr.mxu0 0.0
  %91 = vmatpush2.msra.mxu0 0.0
  %92 = vmatprep.subr.mxu0 0.0
  %93 = vmatpush2.msra.mxu0 0.0
  %94 = vmatprep.subr.mxu0 0.0
  %95 = vmatpush2.msra.mxu0 0.0
  %96 = vmatprep.subr.mxu0 0.0
  %97 = vmatpush2.msra.mxu0 0.0
  %98 = vmatprep.subr.mxu0 0.0
  %99 = vmatpush2.msra.mxu0 0.0
  %100 = vmatprep.subr.mxu0 0.0
  %101 = vmatpush2.msra.mxu0 0.0
  %102 = vmatprep.subr.mxu0 0.0
  %103 = vmatpush2.msra.mxu0 0.0
  %104 = vmatprep.subr.mxu0 0.0
  %105 = vmatpush2.msra.mxu0 0.0
  %106 = vmatprep.subr.mxu0 0.0
  %107 = vmatpush2.msra.mxu0 0.0
  %108 = vmatprep.subr.mxu0 0.0
  %109 = vmatpush2.msra.mxu0 0.0
  %110 = vmatprep.subr.mxu0 0.0
  %111 = vmatpush2.msra.mxu0 0.0
  %112 = vmatprep.subr.mxu0 0.0
  %113 = vmatpush2.msra.mxu0 0.0
  %114 = vmatprep.subr.mxu0 0.0
  %115 = vmatpush2.msra.mxu0 0.0
  %116 = vmatprep.mubr.f32.mxu0 0.0
  %117 = vmatmul.mubr.f32.gmra.mxu0 %v47
  %v118 = vpop.f32.mrf.mxu0
  %v119 = vadd.f32 %v44, %v118
  %v120 = vpop.f32.mrf.mxu0
  %121 = vmatprep.mubr.f32.mxu0 0.0
  %122 = vmatmul.mubr.f32.gmra.mxu0 %v50
  %v123 = vpop.f32.mrf.mxu0
  %v124 = vadd.f32 %v44, %v123
  %v125 = vpop.f32.mrf.mxu0
  %126 = vdwg.mxu0
  %v129 = vlaneseq
  %v130 = vshrl.u32 %v129, 7
  %v131 = vsub.s32 0, %v130
  %v132 = vrot.slane %v32, %v131
  %v133 = vlaneseq
  %v134 = vshrl.u32 %v133, 7
  %v135 = vsub.s32 0, %v134
  %v136 = vrot.slane %v33, %v135
  %140 = vrot.lane.b32.xlu0 %v119, 96
  %v141 = vpop.permute.xlu0 %140
  %vm142 = vcmask 64512
  %v143 = vsel %vm142, %v119, 0
  %v145 = vsel %vm142, %v141, 0
  %147 = vmatprep.subr.mxu0 0.0
  %148 = vmatpush1.xpose.msra.mxu0 0.0
  %149 = vmatprep.subr.mxu0 0.0
  %150 = vmatpush1.xpose.msra.mxu0 0.0
  %151 = vmatprep.subr.mxu0 0.0
  %152 = vmatpush1.xpose.msra.mxu0 0.0
  %153 = vmatprep.subr.mxu0 0.0
  %154 = vmatpush1.xpose.msra.mxu0 0.0
  %155 = vmatprep.subr.mxu0 0.0
  %156 = vmatpush1.xpose.msra.mxu0 0.0
  %157 = vmatprep.subr.mxu0 0.0
  %158 = vmatpush1.xpose.msra.mxu0 0.0
  %159 = vmatprep.subr.mxu0 0.0
  %160 = vmatpush1.xpose.msra.mxu0 0.0
  %161 = vmatprep.subr.mxu0 0.0
  %162 = vmatpush1.xpose.msra.mxu0 0.0
  %163 = vmatprep.subr.mxu0 0.0
  %164 = vmatpush1.xpose.msra.mxu0 0.0
  %165 = vmatprep.subr.mxu0 0.0
  %166 = vmatpush1.xpose.msra.mxu0 0.0
  %167 = vmatprep.subr.mxu0 0.0
  %168 = vmatpush1.xpose.msra.mxu0 0.0
  %169 = vmatprep.subr.mxu0 0.0
  %170 = vmatpush1.xpose.msra.mxu0 0.0
  %171 = vmatprep.subr.mxu0 0.0
  %172 = vmatpush1.xpose.msra.mxu0 0.0
  %173 = vmatprep.subr.mxu0 0.0
  %174 = vmatpush1.xpose.msra.mxu0 0.0
  %175 = vmatprep.subr.mxu0 0.0
  %176 = vmatpush1.xpose.msra.mxu0 0.0
  %177 = vmatprep.subr.mxu0 0.0
  %178 = vmatpush1.xpose.msra.mxu0 %v145
  %179 = vmatprep.subr.mxu0 0.0
  %180 = vmatpush2.xpose.msra.mxu0 0.0
  %181 = vmatprep.subr.mxu0 0.0
  %182 = vmatpush2.xpose.msra.mxu0 0.0
  %183 = vmatprep.subr.mxu0 0.0
  %184 = vmatpush2.xpose.msra.mxu0 0.0
  %185 = vmatprep.subr.mxu0 0.0
  %186 = vmatpush2.xpose.msra.mxu0 0.0
  %187 = vmatprep.subr.mxu0 0.0
  %188 = vmatpush2.xpose.msra.mxu0 0.0
  %189 = vmatprep.subr.mxu0 0.0
  %190 = vmatpush2.xpose.msra.mxu0 0.0
  %191 = vmatprep.subr.mxu0 0.0
  %192 = vmatpush2.xpose.msra.mxu0 0.0
  %193 = vmatprep.subr.mxu0 0.0
  %194 = vmatpush2.xpose.msra.mxu0 0.0
  %195 = vmatprep.subr.mxu0 0.0
  %196 = vmatpush2.xpose.msra.mxu0 0.0
  %197 = vmatprep.subr.mxu0 0.0
  %198 = vmatpush2.xpose.msra.mxu0 0.0
  %199 = vmatprep.subr.mxu0 0.0
  %200 = vmatpush2.xpose.msra.mxu0 0.0
  %201 = vmatprep.subr.mxu0 0.0
  %202 = vmatpush2.xpose.msra.mxu0 0.0
  %203 = vmatprep.subr.mxu0 0.0
  %204 = vmatpush2.xpose.msra.mxu0 0.0
  %205 = vmatprep.subr.mxu0 0.0
  %206 = vmatpush2.xpose.msra.mxu0 0.0
  %207 = vmatprep.subr.mxu0 0.0
  %208 = vmatpush2.xpose.msra.mxu0 0.0
  %209 = vmatprep.subr.mxu0 0.0
  %210 = vmatpush2.xpose.msra.mxu0 0.0
  %211 = vmatprep.mubr.f32.mxu0 0.0
  %212 = vmatmul.mubr.f32.gmra.mxu0 %v143
  %v213 = vpop.f32.mrf.mxu0
  %v214 = vadd.f32 %v132, %v213
  %v215 = vpop.f32.mrf.mxu0
  %216 = vdwg.mxu0
  %218 = vrot.lane.b32.xlu0 %v124, 96
  %v219 = vpop.permute.xlu0 %218
  %v220 = vsel %vm142, %v124, 0
  %v222 = vsel %vm142, %v219, 0
  %224 = vmatprep.subr.mxu0 0.0
  %225 = vmatpush1.xpose.msra.mxu0 0.0
  %226 = vmatprep.subr.mxu0 0.0
  %227 = vmatpush1.xpose.msra.mxu0 0.0
  %228 = vmatprep.subr.mxu0 0.0
  %229 = vmatpush1.xpose.msra.mxu0 0.0
  %230 = vmatprep.subr.mxu0 0.0
  %231 = vmatpush1.xpose.msra.mxu0 0.0
  %232 = vmatprep.subr.mxu0 0.0
  %233 = vmatpush1.xpose.msra.mxu0 0.0
  %234 = vmatprep.subr.mxu0 0.0
  %235 = vmatpush1.xpose.msra.mxu0 0.0
  %236 = vmatprep.subr.mxu0 0.0
  %237 = vmatpush1.xpose.msra.mxu0 0.0
  %238 = vmatprep.subr.mxu0 0.0
  %239 = vmatpush1.xpose.msra.mxu0 0.0
  %240 = vmatprep.subr.mxu0 0.0
  %241 = vmatpush1.xpose.msra.mxu0 0.0
  %242 = vmatprep.subr.mxu0 0.0
  %243 = vmatpush1.xpose.msra.mxu0 0.0
  %244 = vmatprep.subr.mxu0 0.0
  %245 = vmatpush1.xpose.msra.mxu0 0.0
  %246 = vmatprep.subr.mxu0 0.0
  %247 = vmatpush1.xpose.msra.mxu0 0.0
  %248 = vmatprep.subr.mxu0 0.0
  %249 = vmatpush1.xpose.msra.mxu0 0.0
  %250 = vmatprep.subr.mxu0 0.0
  %251 = vmatpush1.xpose.msra.mxu0 0.0
  %252 = vmatprep.subr.mxu0 0.0
  %253 = vmatpush1.xpose.msra.mxu0 0.0
  %254 = vmatprep.subr.mxu0 0.0
  %255 = vmatpush1.xpose.msra.mxu0 %v222
  %256 = vmatprep.subr.mxu0 0.0
  %257 = vmatpush2.xpose.msra.mxu0 0.0
  %258 = vmatprep.subr.mxu0 0.0
  %259 = vmatpush2.xpose.msra.mxu0 0.0
  %260 = vmatprep.subr.mxu0 0.0
  %261 = vmatpush2.xpose.msra.mxu0 0.0
  %262 = vmatprep.subr.mxu0 0.0
  %263 = vmatpush2.xpose.msra.mxu0 0.0
  %264 = vmatprep.subr.mxu0 0.0
  %265 = vmatpush2.xpose.msra.mxu0 0.0
  %266 = vmatprep.subr.mxu0 0.0
  %267 = vmatpush2.xpose.msra.mxu0 0.0
  %268 = vmatprep.subr.mxu0 0.0
  %269 = vmatpush2.xpose.msra.mxu0 0.0
  %270 = vmatprep.subr.mxu0 0.0
  %271 = vmatpush2.xpose.msra.mxu0 0.0
  %272 = vmatprep.subr.mxu0 0.0
  %273 = vmatpush2.xpose.msra.mxu0 0.0
  %274 = vmatprep.subr.mxu0 0.0
  %275 = vmatpush2.xpose.msra.mxu0 0.0
  %276 = vmatprep.subr.mxu0 0.0
  %277 = vmatpush2.xpose.msra.mxu0 0.0
  %278 = vmatprep.subr.mxu0 0.0
  %279 = vmatpush2.xpose.msra.mxu0 0.0
  %280 = vmatprep.subr.mxu0 0.0
  %281 = vmatpush2.xpose.msra.mxu0 0.0
  %282 = vmatprep.subr.mxu0 0.0
  %283 = vmatpush2.xpose.msra.mxu0 0.0
  %284 = vmatprep.subr.mxu0 0.0
  %285 = vmatpush2.xpose.msra.mxu0 0.0
  %286 = vmatprep.subr.mxu0 0.0
  %287 = vmatpush2.xpose.msra.mxu0 0.0
  %288 = vmatprep.mubr.f32.mxu0 0.0
  %289 = vmatmul.mubr.f32.gmra.mxu0 %v220
  %v290 = vpop.f32.mrf.mxu0
  %v291 = vadd.f32 %v136, %v290
  %v292 = vpop.f32.mrf.mxu0
  %293 = vdwg.mxu0
  %v294 = vsel %vm142, %v214, -inf
  %295 = vmax.xlane.f32.xlu0 %v294
  %v296 = vpop.xlane.xlu0 %295
  %v297 = vsel %vm142, %v291, -inf
  %298 = vmax.xlane.f32.xlu0 %v297
  %v299 = vpop.xlane.xlu0 %298
  %v300 = vsub.f32 %v214, %v296
  %v301 = vsub.f32 %v291, %v299
  %v302 = vmul.f32 %v300, 1.442695
  %v303 = vpow.pop %v302
  %v304 = vmul.f32 %v301, 1.442695
  %v305 = vpow.pop %v304
  %v306 = vsel %vm142, %v303, 0.0
  %307 = vadd.xlane.f32.xlu0 %v306
  %v308 = vpop.xlane.xlu0 %307
  %v309 = vsel %vm142, %v305, 0.0
  %310 = vadd.xlane.f32.xlu0 %v309
  %v311 = vpop.xlane.xlu0 %310
  %v312 = vrcp.pop %v308
  %v313 = vrcp.pop %v311
  %v314 = vmul.f32 %v303, %v312
  %v315 = vmul.f32 %v305, %v313
  %316 = vrot.lane.b32.xlu0 %v119, 64
  %v317 = vpop.permute.xlu0 %316
  %v320 = vsel %vm142, %v314, 0
  %322 = vmatprep.subr.mxu0 0.0
  %323 = vmatpush1.msra.mxu0 0.0
  %324 = vmatprep.subr.mxu0 0.0
  %325 = vmatpush1.msra.mxu0 0.0
  %326 = vmatprep.subr.mxu0 0.0
  %327 = vmatpush1.msra.mxu0 0.0
  %328 = vmatprep.subr.mxu0 0.0
  %329 = vmatpush1.msra.mxu0 0.0
  %330 = vmatprep.subr.mxu0 0.0
  %331 = vmatpush1.msra.mxu0 0.0
  %332 = vmatprep.subr.mxu0 0.0
  %333 = vmatpush1.msra.mxu0 0.0
  %334 = vmatprep.subr.mxu0 0.0
  %335 = vmatpush1.msra.mxu0 0.0
  %336 = vmatprep.subr.mxu0 0.0
  %337 = vmatpush1.msra.mxu0 0.0
  %338 = vmatprep.subr.mxu0 0.0
  %339 = vmatpush1.msra.mxu0 0.0
  %340 = vmatprep.subr.mxu0 0.0
  %341 = vmatpush1.msra.mxu0 0.0
  %342 = vmatprep.subr.mxu0 0.0
  %343 = vmatpush1.msra.mxu0 0.0
  %344 = vmatprep.subr.mxu0 0.0
  %345 = vmatpush1.msra.mxu0 0.0
  %346 = vmatprep.subr.mxu0 0.0
  %347 = vmatpush1.msra.mxu0 0.0
  %348 = vmatprep.subr.mxu0 0.0
  %349 = vmatpush1.msra.mxu0 0.0
  %350 = vmatprep.subr.mxu0 0.0
  %351 = vmatpush1.msra.mxu0 0.0
  %352 = vmatprep.subr.mxu0 0.0
  %353 = vmatpush1.msra.mxu0 %v317
  %354 = vmatprep.subr.mxu0 0.0
  %355 = vmatpush2.msra.mxu0 0.0
  %356 = vmatprep.subr.mxu0 0.0
  %357 = vmatpush2.msra.mxu0 0.0
  %358 = vmatprep.subr.mxu0 0.0
  %359 = vmatpush2.msra.mxu0 0.0
  %360 = vmatprep.subr.mxu0 0.0
  %361 = vmatpush2.msra.mxu0 0.0
  %362 = vmatprep.subr.mxu0 0.0
  %363 = vmatpush2.msra.mxu0 0.0
  %364 = vmatprep.subr.mxu0 0.0
  %365 = vmatpush2.msra.mxu0 0.0
  %366 = vmatprep.subr.mxu0 0.0
  %367 = vmatpush2.msra.mxu0 0.0
  %368 = vmatprep.subr.mxu0 0.0
  %369 = vmatpush2.msra.mxu0 0.0
  %370 = vmatprep.subr.mxu0 0.0
  %371 = vmatpush2.msra.mxu0 0.0
  %372 = vmatprep.subr.mxu0 0.0
  %373 = vmatpush2.msra.mxu0 0.0
  %374 = vmatprep.subr.mxu0 0.0
  %375 = vmatpush2.msra.mxu0 0.0
  %376 = vmatprep.subr.mxu0 0.0
  %377 = vmatpush2.msra.mxu0 0.0
  %378 = vmatprep.subr.mxu0 0.0
  %379 = vmatpush2.msra.mxu0 0.0
  %380 = vmatprep.subr.mxu0 0.0
  %381 = vmatpush2.msra.mxu0 0.0
  %382 = vmatprep.subr.mxu0 0.0
  %383 = vmatpush2.msra.mxu0 0.0
  %384 = vmatprep.subr.mxu0 0.0
  %385 = vmatpush2.msra.mxu0 0.0
  %386 = vmatprep.mubr.f32.mxu0 0.0
  %387 = vmatmul.mubr.f32.gmra.mxu0 %v320
  %v388 = vpop.f32.mrf.mxu0
  %v389 = vadd.f32 0.0, %v388
  %v390 = vpop.f32.mrf.mxu0
  %391 = vdwg.mxu0
  %392 = vrot.lane.b32.xlu0 %v124, 64
  %v393 = vpop.permute.xlu0 %392
  %v396 = vsel %vm142, %v315, 0
  %398 = vmatprep.subr.mxu0 0.0
  %399 = vmatpush1.msra.mxu0 0.0
  %400 = vmatprep.subr.mxu0 0.0
  %401 = vmatpush1.msra.mxu0 0.0
  %402 = vmatprep.subr.mxu0 0.0
  %403 = vmatpush1.msra.mxu0 0.0
  %404 = vmatprep.subr.mxu0 0.0
  %405 = vmatpush1.msra.mxu0 0.0
  %406 = vmatprep.subr.mxu0 0.0
  %407 = vmatpush1.msra.mxu0 0.0
  %408 = vmatprep.subr.mxu0 0.0
  %409 = vmatpush1.msra.mxu0 0.0
  %410 = vmatprep.subr.mxu0 0.0
  %411 = vmatpush1.msra.mxu0 0.0
  %412 = vmatprep.subr.mxu0 0.0
  %413 = vmatpush1.msra.mxu0 0.0
  %414 = vmatprep.subr.mxu0 0.0
  %415 = vmatpush1.msra.mxu0 0.0
  %416 = vmatprep.subr.mxu0 0.0
  %417 = vmatpush1.msra.mxu0 0.0
  %418 = vmatprep.subr.mxu0 0.0
  %419 = vmatpush1.msra.mxu0 0.0
  %420 = vmatprep.subr.mxu0 0.0
  %421 = vmatpush1.msra.mxu0 0.0
  %422 = vmatprep.subr.mxu0 0.0
  %423 = vmatpush1.msra.mxu0 0.0
  %424 = vmatprep.subr.mxu0 0.0
  %425 = vmatpush1.msra.mxu0 0.0
  %426 = vmatprep.subr.mxu0 0.0
  %427 = vmatpush1.msra.mxu0 0.0
  %428 = vmatprep.subr.mxu0 0.0
  %429 = vmatpush1.msra.mxu0 %v393
  %430 = vmatprep.subr.mxu0 0.0
  %431 = vmatpush2.msra.mxu0 0.0
  %432 = vmatprep.subr.mxu0 0.0
  %433 = vmatpush2.msra.mxu0 0.0
  %434 = vmatprep.subr.mxu0 0.0
  %435 = vmatpush2.msra.mxu0 0.0
  %436 = vmatprep.subr.mxu0 0.0
  %437 = vmatpush2.msra.mxu0 0.0
  %438 = vmatprep.subr.mxu0 0.0
  %439 = vmatpush2.msra.mxu0 0.0
  %440 = vmatprep.subr.mxu0 0.0
  %441 = vmatpush2.msra.mxu0 0.0
  %442 = vmatprep.subr.mxu0 0.0
  %443 = vmatpush2.msra.mxu0 0.0
  %444 = vmatprep.subr.mxu0 0.0
  %445 = vmatpush2.msra.mxu0 0.0
  %446 = vmatprep.subr.mxu0 0.0
  %447 = vmatpush2.msra.mxu0 0.0
  %448 = vmatprep.subr.mxu0 0.0
  %449 = vmatpush2.msra.mxu0 0.0
  %450 = vmatprep.subr.mxu0 0.0
  %451 = vmatpush2.msra.mxu0 0.0
  %452 = vmatprep.subr.mxu0 0.0
  %453 = vmatpush2.msra.mxu0 0.0
  %454 = vmatprep.subr.mxu0 0.0
  %455 = vmatpush2.msra.mxu0 0.0
  %456 = vmatprep.subr.mxu0 0.0
  %457 = vmatpush2.msra.mxu0 0.0
  %458 = vmatprep.subr.mxu0 0.0
  %459 = vmatpush2.msra.mxu0 0.0
  %460 = vmatprep.subr.mxu0 0.0
  %461 = vmatpush2.msra.mxu0 0.0
  %462 = vmatprep.mubr.f32.mxu0 0.0
  %463 = vmatmul.mubr.f32.gmra.mxu0 %v396
  %v464 = vpop.f32.mrf.mxu0
  %v465 = vadd.f32 0.0, %v464
  %v466 = vpop.f32.mrf.mxu0
  %467 = vdwg.mxu0
  %468 = vst.msk [vmem:[#allocation2] sm:$0xff] %vm142, %v389
  %469 = vst.msk [vmem:[#allocation2 + $0x8] sm:$0xff] %vm142, %v465
  %470 = vrot.lane.b32.xlu0 %v119, 120
  %v471 = vpop.permute.xlu0 %470
  %472 = vrot.lane.b32.xlu0 %v119, 88
  %v473 = vpop.permute.xlu0 %472
  %v474 = vsel %vm142, %v471, 0
  %v476 = vsel %vm142, %v473, 0
  %478 = vmatprep.subr.mxu0 0.0
  %479 = vmatpush1.xpose.msra.mxu0 0.0
  %480 = vmatprep.subr.mxu0 0.0
  %481 = vmatpush1.xpose.msra.mxu0 0.0
  %482 = vmatprep.subr.mxu0 0.0
  %483 = vmatpush1.xpose.msra.mxu0 0.0
  %484 = vmatprep.subr.mxu0 0.0
  %485 = vmatpush1.xpose.msra.mxu0 0.0
  %486 = vmatprep.subr.mxu0 0.0
  %487 = vmatpush1.xpose.msra.mxu0 0.0
  %488 = vmatprep.subr.mxu0 0.0
  %489 = vmatpush1.xpose.msra.mxu0 0.0
  %490 = vmatprep.subr.mxu0 0.0
  %491 = vmatpush1.xpose.msra.mxu0 0.0
  %492 = vmatprep.subr.mxu0 0.0
  %493 = vmatpush1.xpose.msra.mxu0 0.0
  %494 = vmatprep.subr.mxu0 0.0
  %495 = vmatpush1.xpose.msra.mxu0 0.0
  %496 = vmatprep.subr.mxu0 0.0
  %497 = vmatpush1.xpose.msra.mxu0 0.0
  %498 = vmatprep.subr.mxu0 0.0
  %499 = vmatpush1.xpose.msra.mxu0 0.0
  %500 = vmatprep.subr.mxu0 0.0
  %501 = vmatpush1.xpose.msra.mxu0 0.0
  %502 = vmatprep.subr.mxu0 0.0
  %503 = vmatpush1.xpose.msra.mxu0 0.0
  %504 = vmatprep.subr.mxu0 0.0
  %505 = vmatpush1.xpose.msra.mxu0 0.0
  %506 = vmatprep.subr.mxu0 0.0
  %507 = vmatpush1.xpose.msra.mxu0 0.0
  %508 = vmatprep.subr.mxu0 0.0
  %509 = vmatpush1.xpose.msra.mxu0 %v476
  %510 = vmatprep.subr.mxu0 0.0
  %511 = vmatpush2.xpose.msra.mxu0 0.0
  %512 = vmatprep.subr.mxu0 0.0
  %513 = vmatpush2.xpose.msra.mxu0 0.0
  %514 = vmatprep.subr.mxu0 0.0
  %515 = vmatpush2.xpose.msra.mxu0 0.0
  %516 = vmatprep.subr.mxu0 0.0
  %517 = vmatpush2.xpose.msra.mxu0 0.0
  %518 = vmatprep.subr.mxu0 0.0
  %519 = vmatpush2.xpose.msra.mxu0 0.0
  %520 = vmatprep.subr.mxu0 0.0
  %521 = vmatpush2.xpose.msra.mxu0 0.0
  %522 = vmatprep.subr.mxu0 0.0
  %523 = vmatpush2.xpose.msra.mxu0 0.0
  %524 = vmatprep.subr.mxu0 0.0
  %525 = vmatpush2.xpose.msra.mxu0 0.0
  %526 = vmatprep.subr.mxu0 0.0
  %527 = vmatpush2.xpose.msra.mxu0 0.0
  %528 = vmatprep.subr.mxu0 0.0
  %529 = vmatpush2.xpose.msra.mxu0 0.0
  %530 = vmatprep.subr.mxu0 0.0
  %531 = vmatpush2.xpose.msra.mxu0 0.0
  %532 = vmatprep.subr.mxu0 0.0
  %533 = vmatpush2.xpose.msra.mxu0 0.0
  %534 = vmatprep.subr.mxu0 0.0
  %535 = vmatpush2.xpose.msra.mxu0 0.0
  %536 = vmatprep.subr.mxu0 0.0
  %537 = vmatpush2.xpose.msra.mxu0 0.0
  %538 = vmatprep.subr.mxu0 0.0
  %539 = vmatpush2.xpose.msra.mxu0 0.0
  %540 = vmatprep.subr.mxu0 0.0
  %541 = vmatpush2.xpose.msra.mxu0 0.0
  %542 = vmatprep.mubr.f32.mxu0 0.0
  %543 = vmatmul.mubr.f32.gmra.mxu0 %v474
  %v544 = vpop.f32.mrf.mxu0
  %v545 = vadd.f32 %v132, %v544
  %v546 = vpop.f32.mrf.mxu0
  %547 = vdwg.mxu0
  %548 = vrot.lane.b32.xlu0 %v124, 120
  %v549 = vpop.permute.xlu0 %548
  %550 = vrot.lane.b32.xlu0 %v124, 88
  %v551 = vpop.permute.xlu0 %550
  %v552 = vsel %vm142, %v549, 0
  %v554 = vsel %vm142, %v551, 0
  %556 = vmatprep.subr.mxu0 0.0
  %557 = vmatpush1.xpose.msra.mxu0 0.0
  %558 = vmatprep.subr.mxu0 0.0
  %559 = vmatpush1.xpose.msra.mxu0 0.0
  %560 = vmatprep.subr.mxu0 0.0
  %561 = vmatpush1.xpose.msra.mxu0 0.0
  %562 = vmatprep.subr.mxu0 0.0
  %563 = vmatpush1.xpose.msra.mxu0 0.0
  %564 = vmatprep.subr.mxu0 0.0
  %565 = vmatpush1.xpose.msra.mxu0 0.0
  %566 = vmatprep.subr.mxu0 0.0
  %567 = vmatpush1.xpose.msra.mxu0 0.0
  %568 = vmatprep.subr.mxu0 0.0
  %569 = vmatpush1.xpose.msra.mxu0 0.0
  %570 = vmatprep.subr.mxu0 0.0
  %571 = vmatpush1.xpose.msra.mxu0 0.0
  %572 = vmatprep.subr.mxu0 0.0
  %573 = vmatpush1.xpose.msra.mxu0 0.0
  %574 = vmatprep.subr.mxu0 0.0
  %575 = vmatpush1.xpose.msra.mxu0 0.0
  %576 = vmatprep.subr.mxu0 0.0
  %577 = vmatpush1.xpose.msra.mxu0 0.0
  %578 = vmatprep.subr.mxu0 0.0
  %579 = vmatpush1.xpose.msra.mxu0 0.0
  %580 = vmatprep.subr.mxu0 0.0
  %581 = vmatpush1.xpose.msra.mxu0 0.0
  %582 = vmatprep.subr.mxu0 0.0
  %583 = vmatpush1.xpose.msra.mxu0 0.0
  %584 = vmatprep.subr.mxu0 0.0
  %585 = vmatpush1.xpose.msra.mxu0 0.0
  %586 = vmatprep.subr.mxu0 0.0
  %587 = vmatpush1.xpose.msra.mxu0 %v554
  %588 = vmatprep.subr.mxu0 0.0
  %589 = vmatpush2.xpose.msra.mxu0 0.0
  %590 = vmatprep.subr.mxu0 0.0
  %591 = vmatpush2.xpose.msra.mxu0 0.0
  %592 = vmatprep.subr.mxu0 0.0
  %593 = vmatpush2.xpose.msra.mxu0 0.0
  %594 = vmatprep.subr.mxu0 0.0
  %595 = vmatpush2.xpose.msra.mxu0 0.0
  %596 = vmatprep.subr.mxu0 0.0
  %597 = vmatpush2.xpose.msra.mxu0 0.0
  %598 = vmatprep.subr.mxu0 0.0
  %599 = vmatpush2.xpose.msra.mxu0 0.0
  %600 = vmatprep.subr.mxu0 0.0
  %601 = vmatpush2.xpose.msra.mxu0 0.0
  %602 = vmatprep.subr.mxu0 0.0
  %603 = vmatpush2.xpose.msra.mxu0 0.0
  %604 = vmatprep.subr.mxu0 0.0
  %605 = vmatpush2.xpose.msra.mxu0 0.0
  %606 = vmatprep.subr.mxu0 0.0
  %607 = vmatpush2.xpose.msra.mxu0 0.0
  %608 = vmatprep.subr.mxu0 0.0
  %609 = vmatpush2.xpose.msra.mxu0 0.0
  %610 = vmatprep.subr.mxu0 0.0
  %611 = vmatpush2.xpose.msra.mxu0 0.0
  %612 = vmatprep.subr.mxu0 0.0
  %613 = vmatpush2.xpose.msra.mxu0 0.0
  %614 = vmatprep.subr.mxu0 0.0
  %615 = vmatpush2.xpose.msra.mxu0 0.0
  %616 = vmatprep.subr.mxu0 0.0
  %617 = vmatpush2.xpose.msra.mxu0 0.0
  %618 = vmatprep.subr.mxu0 0.0
  %619 = vmatpush2.xpose.msra.mxu0 0.0
  %620 = vmatprep.mubr.f32.mxu0 0.0
  %621 = vmatmul.mubr.f32.gmra.mxu0 %v552
  %v622 = vpop.f32.mrf.mxu0
  %v623 = vadd.f32 %v136, %v622
  %v624 = vpop.f32.mrf.mxu0
  %625 = vdwg.mxu0
  %v626 = vsel %vm142, %v545, -inf
  %627 = vmax.xlane.f32.xlu0 %v626
  %v628 = vpop.xlane.xlu0 %627
  %v629 = vsel %vm142, %v623, -inf
  %630 = vmax.xlane.f32.xlu0 %v629
  %v631 = vpop.xlane.xlu0 %630
  %v632 = vsub.f32 %v545, %v628
  %v633 = vsub.f32 %v623, %v631
  %v634 = vmul.f32 %v632, 1.442695
  %v635 = vpow.pop %v634
  %v636 = vmul.f32 %v633, 1.442695
  %v637 = vpow.pop %v636
  %v638 = vsel %vm142, %v635, 0.0
  %639 = vadd.xlane.f32.xlu0 %v638
  %v640 = vpop.xlane.xlu0 %639
  %v641 = vsel %vm142, %v637, 0.0
  %642 = vadd.xlane.f32.xlu0 %v641
  %v643 = vpop.xlane.xlu0 %642
  %v644 = vrcp.pop %v640
  %v645 = vrcp.pop %v643
  %v646 = vmul.f32 %v635, %v644
  %v647 = vmul.f32 %v637, %v645
  %648 = vrot.lane.b32.xlu0 %v119, 56
  %v649 = vpop.permute.xlu0 %648
  %v652 = vsel %vm142, %v646, 0
  %654 = vmatprep.subr.mxu0 0.0
  %655 = vmatpush1.msra.mxu0 0.0
  %656 = vmatprep.subr.mxu0 0.0
  %657 = vmatpush1.msra.mxu0 0.0
  %658 = vmatprep.subr.mxu0 0.0
  %659 = vmatpush1.msra.mxu0 0.0
  %660 = vmatprep.subr.mxu0 0.0
  %661 = vmatpush1.msra.mxu0 0.0
  %662 = vmatprep.subr.mxu0 0.0
  %663 = vmatpush1.msra.mxu0 0.0
  %664 = vmatprep.subr.mxu0 0.0
  %665 = vmatpush1.msra.mxu0 0.0
  %666 = vmatprep.subr.mxu0 0.0
  %667 = vmatpush1.msra.mxu0 0.0
  %668 = vmatprep.subr.mxu0 0.0
  %669 = vmatpush1.msra.mxu0 0.0
  %670 = vmatprep.subr.mxu0 0.0
  %671 = vmatpush1.msra.mxu0 0.0
  %672 = vmatprep.subr.mxu0 0.0
  %673 = vmatpush1.msra.mxu0 0.0
  %674 = vmatprep.subr.mxu0 0.0
  %675 = vmatpush1.msra.mxu0 0.0
  %676 = vmatprep.subr.mxu0 0.0
  %677 = vmatpush1.msra.mxu0 0.0
  %678 = vmatprep.subr.mxu0 0.0
  %679 = vmatpush1.msra.mxu0 0.0
  %680 = vmatprep.subr.mxu0 0.0
  %681 = vmatpush1.msra.mxu0 0.0
  %682 = vmatprep.subr.mxu0 0.0
  %683 = vmatpush1.msra.mxu0 0.0
  %684 = vmatprep.subr.mxu0 0.0
  %685 = vmatpush1.msra.mxu0 %v649
  %686 = vmatprep.subr.mxu0 0.0
  %687 = vmatpush2.msra.mxu0 0.0
  %688 = vmatprep.subr.mxu0 0.0
  %689 = vmatpush2.msra.mxu0 0.0
  %690 = vmatprep.subr.mxu0 0.0
  %691 = vmatpush2.msra.mxu0 0.0
  %692 = vmatprep.subr.mxu0 0.0
  %693 = vmatpush2.msra.mxu0 0.0
  %694 = vmatprep.subr.mxu0 0.0
  %695 = vmatpush2.msra.mxu0 0.0
  %696 = vmatprep.subr.mxu0 0.0
  %697 = vmatpush2.msra.mxu0 0.0
  %698 = vmatprep.subr.mxu0 0.0
  %699 = vmatpush2.msra.mxu0 0.0
  %700 = vmatprep.subr.mxu0 0.0
  %701 = vmatpush2.msra.mxu0 0.0
  %702 = vmatprep.subr.mxu0 0.0
  %703 = vmatpush2.msra.mxu0 0.0
  %704 = vmatprep.subr.mxu0 0.0
  %705 = vmatpush2.msra.mxu0 0.0
  %706 = vmatprep.subr.mxu0 0.0
  %707 = vmatpush2.msra.mxu0 0.0
  %708 = vmatprep.subr.mxu0 0.0
  %709 = vmatpush2.msra.mxu0 0.0
  %710 = vmatprep.subr.mxu0 0.0
  %711 = vmatpush2.msra.mxu0 0.0
  %712 = vmatprep.subr.mxu0 0.0
  %713 = vmatpush2.msra.mxu0 0.0
  %714 = vmatprep.subr.mxu0 0.0
  %715 = vmatpush2.msra.mxu0 0.0
  %716 = vmatprep.subr.mxu0 0.0
  %717 = vmatpush2.msra.mxu0 0.0
  %718 = vmatprep.mubr.f32.mxu0 0.0
  %719 = vmatmul.mubr.f32.gmra.mxu0 %v652
  %v720 = vpop.f32.mrf.mxu0
  %v721 = vadd.f32 0.0, %v720
  %v722 = vpop.f32.mrf.mxu0
  %723 = vdwg.mxu0
  %724 = vrot.lane.b32.xlu0 %v124, 56
  %v725 = vpop.permute.xlu0 %724
  %v728 = vsel %vm142, %v647, 0
  %730 = vmatprep.subr.mxu0 0.0
  %731 = vmatpush1.msra.mxu0 0.0
  %732 = vmatprep.subr.mxu0 0.0
  %733 = vmatpush1.msra.mxu0 0.0
  %734 = vmatprep.subr.mxu0 0.0
  %735 = vmatpush1.msra.mxu0 0.0
  %736 = vmatprep.subr.mxu0 0.0
  %737 = vmatpush1.msra.mxu0 0.0
  %738 = vmatprep.subr.mxu0 0.0
  %739 = vmatpush1.msra.mxu0 0.0
  %740 = vmatprep.subr.mxu0 0.0
  %741 = vmatpush1.msra.mxu0 0.0
  %742 = vmatprep.subr.mxu0 0.0
  %743 = vmatpush1.msra.mxu0 0.0
  %744 = vmatprep.subr.mxu0 0.0
  %745 = vmatpush1.msra.mxu0 0.0
  %746 = vmatprep.subr.mxu0 0.0
  %747 = vmatpush1.msra.mxu0 0.0
  %748 = vmatprep.subr.mxu0 0.0
  %749 = vmatpush1.msra.mxu0 0.0
  %750 = vmatprep.subr.mxu0 0.0
  %751 = vmatpush1.msra.mxu0 0.0
  %752 = vmatprep.subr.mxu0 0.0
  %753 = vmatpush1.msra.mxu0 0.0
  %754 = vmatprep.subr.mxu0 0.0
  %755 = vmatpush1.msra.mxu0 0.0
  %756 = vmatprep.subr.mxu0 0.0
  %757 = vmatpush1.msra.mxu0 0.0
  %758 = vmatprep.subr.mxu0 0.0
  %759 = vmatpush1.msra.mxu0 0.0
  %760 = vmatprep.subr.mxu0 0.0
  %761 = vmatpush1.msra.mxu0 %v725
  %762 = vmatprep.subr.mxu0 0.0
  %763 = vmatpush2.msra.mxu0 0.0
  %764 = vmatprep.subr.mxu0 0.0
  %765 = vmatpush2.msra.mxu0 0.0
  %766 = vmatprep.subr.mxu0 0.0
  %767 = vmatpush2.msra.mxu0 0.0
  %768 = vmatprep.subr.mxu0 0.0
  %769 = vmatpush2.msra.mxu0 0.0
  %770 = vmatprep.subr.mxu0 0.0
  %771 = vmatpush2.msra.mxu0 0.0
  %772 = vmatprep.subr.mxu0 0.0
  %773 = vmatpush2.msra.mxu0 0.0
  %774 = vmatprep.subr.mxu0 0.0
  %775 = vmatpush2.msra.mxu0 0.0
  %776 = vmatprep.subr.mxu0 0.0
  %777 = vmatpush2.msra.mxu0 0.0
  %778 = vmatprep.subr.mxu0 0.0
  %779 = vmatpush2.msra.mxu0 0.0
  %780 = vmatprep.subr.mxu0 0.0
  %781 = vmatpush2.msra.mxu0 0.0
  %782 = vmatprep.subr.mxu0 0.0
  %783 = vmatpush2.msra.mxu0 0.0
  %784 = vmatprep.subr.mxu0 0.0
  %785 = vmatpush2.msra.mxu0 0.0
  %786 = vmatprep.subr.mxu0 0.0
  %787 = vmatpush2.msra.mxu0 0.0
  %788 = vmatprep.subr.mxu0 0.0
  %789 = vmatpush2.msra.mxu0 0.0
  %790 = vmatprep.subr.mxu0 0.0
  %791 = vmatpush2.msra.mxu0 0.0
  %792 = vmatprep.subr.mxu0 0.0
  %793 = vmatpush2.msra.mxu0 0.0
  %794 = vmatprep.mubr.f32.mxu0 0.0
  %795 = vmatmul.mubr.f32.gmra.mxu0 %v728
  %v796 = vpop.f32.mrf.mxu0
  %v797 = vadd.f32 0.0, %v796
  %v798 = vpop.f32.mrf.mxu0
  %799 = vdwg.mxu0
  %802 = vrot.lane.b32.xlu0 %v721, 8
  %v803 = vpop.permute.xlu0 %802
  %804 = vrot.lane.b32.xlu0 %v797, 8
  %v805 = vpop.permute.xlu0 %804
  %vm808 = vcmask 130112
  %809 = vst.msk [vmem:[#allocation2] sm:$0xff] %vm808, %v803
  %810 = vst.msk [vmem:[#allocation2 + $0x8] sm:$0xff] %vm808, %v805
  %811 = vrot.lane.b32.xlu0 %v119, 112
  %v812 = vpop.permute.xlu0 %811
  %813 = vrot.lane.b32.xlu0 %v119, 80
  %v814 = vpop.permute.xlu0 %813
  %v815 = vsel %vm142, %v812, 0
  %v817 = vsel %vm142, %v814, 0
  %819 = vmatprep.subr.mxu0 0.0
  %820 = vmatpush1.xpose.msra.mxu0 0.0
  %821 = vmatprep.subr.mxu0 0.0
  %822 = vmatpush1.xpose.msra.mxu0 0.0
  %823 = vmatprep.subr.mxu0 0.0
  %824 = vmatpush1.xpose.msra.mxu0 0.0
  %825 = vmatprep.subr.mxu0 0.0
  %826 = vmatpush1.xpose.msra.mxu0 0.0
  %827 = vmatprep.subr.mxu0 0.0
  %828 = vmatpush1.xpose.msra.mxu0 0.0
  %829 = vmatprep.subr.mxu0 0.0
  %830 = vmatpush1.xpose.msra.mxu0 0.0
  %831 = vmatprep.subr.mxu0 0.0
  %832 = vmatpush1.xpose.msra.mxu0 0.0
  %833 = vmatprep.subr.mxu0 0.0
  %834 = vmatpush1.xpose.msra.mxu0 0.0
  %835 = vmatprep.subr.mxu0 0.0
  %836 = vmatpush1.xpose.msra.mxu0 0.0
  %837 = vmatprep.subr.mxu0 0.0
  %838 = vmatpush1.xpose.msra.mxu0 0.0
  %839 = vmatprep.subr.mxu0 0.0
  %840 = vmatpush1.xpose.msra.mxu0 0.0
  %841 = vmatprep.subr.mxu0 0.0
  %842 = vmatpush1.xpose.msra.mxu0 0.0
  %843 = vmatprep.subr.mxu0 0.0
  %844 = vmatpush1.xpose.msra.mxu0 0.0
  %845 = vmatprep.subr.mxu0 0.0
  %846 = vmatpush1.xpose.msra.mxu0 0.0
  %847 = vmatprep.subr.mxu0 0.0
  %848 = vmatpush1.xpose.msra.mxu0 0.0
  %849 = vmatprep.subr.mxu0 0.0
  %850 = vmatpush1.xpose.msra.mxu0 %v817
  %851 = vmatprep.subr.mxu0 0.0
  %852 = vmatpush2.xpose.msra.mxu0 0.0
  %853 = vmatprep.subr.mxu0 0.0
  %854 = vmatpush2.xpose.msra.mxu0 0.0
  %855 = vmatprep.subr.mxu0 0.0
  %856 = vmatpush2.xpose.msra.mxu0 0.0
  %857 = vmatprep.subr.mxu0 0.0
  %858 = vmatpush2.xpose.msra.mxu0 0.0
  %859 = vmatprep.subr.mxu0 0.0
  %860 = vmatpush2.xpose.msra.mxu0 0.0
  %861 = vmatprep.subr.mxu0 0.0
  %862 = vmatpush2.xpose.msra.mxu0 0.0
  %863 = vmatprep.subr.mxu0 0.0
  %864 = vmatpush2.xpose.msra.mxu0 0.0
  %865 = vmatprep.subr.mxu0 0.0
  %866 = vmatpush2.xpose.msra.mxu0 0.0
  %867 = vmatprep.subr.mxu0 0.0
  %868 = vmatpush2.xpose.msra.mxu0 0.0
  %869 = vmatprep.subr.mxu0 0.0
  %870 = vmatpush2.xpose.msra.mxu0 0.0
  %871 = vmatprep.subr.mxu0 0.0
  %872 = vmatpush2.xpose.msra.mxu0 0.0
  %873 = vmatprep.subr.mxu0 0.0
  %874 = vmatpush2.xpose.msra.mxu0 0.0
  %875 = vmatprep.subr.mxu0 0.0
  %876 = vmatpush2.xpose.msra.mxu0 0.0
  %877 = vmatprep.subr.mxu0 0.0
  %878 = vmatpush2.xpose.msra.mxu0 0.0
  %879 = vmatprep.subr.mxu0 0.0
  %880 = vmatpush2.xpose.msra.mxu0 0.0
  %881 = vmatprep.subr.mxu0 0.0
  %882 = vmatpush2.xpose.msra.mxu0 0.0
  %883 = vmatprep.mubr.f32.mxu0 0.0
  %884 = vmatmul.mubr.f32.gmra.mxu0 %v815
  %v885 = vpop.f32.mrf.mxu0
  %v886 = vadd.f32 %v132, %v885
  %v887 = vpop.f32.mrf.mxu0
  %888 = vdwg.mxu0
  %889 = vrot.lane.b32.xlu0 %v124, 112
  %v890 = vpop.permute.xlu0 %889
  %891 = vrot.lane.b32.xlu0 %v124, 80
  %v892 = vpop.permute.xlu0 %891
  %v893 = vsel %vm142, %v890, 0
  %v895 = vsel %vm142, %v892, 0
  %897 = vmatprep.subr.mxu0 0.0
  %898 = vmatpush1.xpose.msra.mxu0 0.0
  %899 = vmatprep.subr.mxu0 0.0
  %900 = vmatpush1.xpose.msra.mxu0 0.0
  %901 = vmatprep.subr.mxu0 0.0
  %902 = vmatpush1.xpose.msra.mxu0 0.0
  %903 = vmatprep.subr.mxu0 0.0
  %904 = vmatpush1.xpose.msra.mxu0 0.0
  %905 = vmatprep.subr.mxu0 0.0
  %906 = vmatpush1.xpose.msra.mxu0 0.0
  %907 = vmatprep.subr.mxu0 0.0
  %908 = vmatpush1.xpose.msra.mxu0 0.0
  %909 = vmatprep.subr.mxu0 0.0
  %910 = vmatpush1.xpose.msra.mxu0 0.0
  %911 = vmatprep.subr.mxu0 0.0
  %912 = vmatpush1.xpose.msra.mxu0 0.0
  %913 = vmatprep.subr.mxu0 0.0
  %914 = vmatpush1.xpose.msra.mxu0 0.0
  %915 = vmatprep.subr.mxu0 0.0
  %916 = vmatpush1.xpose.msra.mxu0 0.0
  %917 = vmatprep.subr.mxu0 0.0
  %918 = vmatpush1.xpose.msra.mxu0 0.0
  %919 = vmatprep.subr.mxu0 0.0
  %920 = vmatpush1.xpose.msra.mxu0 0.0
  %921 = vmatprep.subr.mxu0 0.0
  %922 = vmatpush1.xpose.msra.mxu0 0.0
  %923 = vmatprep.subr.mxu0 0.0
  %924 = vmatpush1.xpose.msra.mxu0 0.0
  %925 = vmatprep.subr.mxu0 0.0
  %926 = vmatpush1.xpose.msra.mxu0 0.0
  %927 = vmatprep.subr.mxu0 0.0
  %928 = vmatpush1.xpose.msra.mxu0 %v895
  %929 = vmatprep.subr.mxu0 0.0
  %930 = vmatpush2.xpose.msra.mxu0 0.0
  %931 = vmatprep.subr.mxu0 0.0
  %932 = vmatpush2.xpose.msra.mxu0 0.0
  %933 = vmatprep.subr.mxu0 0.0
  %934 = vmatpush2.xpose.msra.mxu0 0.0
  %935 = vmatprep.subr.mxu0 0.0
  %936 = vmatpush2.xpose.msra.mxu0 0.0
  %937 = vmatprep.subr.mxu0 0.0
  %938 = vmatpush2.xpose.msra.mxu0 0.0
  %939 = vmatprep.subr.mxu0 0.0
  %940 = vmatpush2.xpose.msra.mxu0 0.0
  %941 = vmatprep.subr.mxu0 0.0
  %942 = vmatpush2.xpose.msra.mxu0 0.0
  %943 = vmatprep.subr.mxu0 0.0
  %944 = vmatpush2.xpose.msra.mxu0 0.0
  %945 = vmatprep.subr.mxu0 0.0
  %946 = vmatpush2.xpose.msra.mxu0 0.0
  %947 = vmatprep.subr.mxu0 0.0
  %948 = vmatpush2.xpose.msra.mxu0 0.0
  %949 = vmatprep.subr.mxu0 0.0
  %950 = vmatpush2.xpose.msra.mxu0 0.0
  %951 = vmatprep.subr.mxu0 0.0
  %952 = vmatpush2.xpose.msra.mxu0 0.0
  %953 = vmatprep.subr.mxu0 0.0
  %954 = vmatpush2.xpose.msra.mxu0 0.0
  %955 = vmatprep.subr.mxu0 0.0
  %956 = vmatpush2.xpose.msra.mxu0 0.0
  %957 = vmatprep.subr.mxu0 0.0
  %958 = vmatpush2.xpose.msra.mxu0 0.0
  %959 = vmatprep.subr.mxu0 0.0
  %960 = vmatpush2.xpose.msra.mxu0 0.0
  %961 = vmatprep.mubr.f32.mxu0 0.0
  %962 = vmatmul.mubr.f32.gmra.mxu0 %v893
  %v963 = vpop.f32.mrf.mxu0
  %v964 = vadd.f32 %v136, %v963
  %v965 = vpop.f32.mrf.mxu0
  %966 = vdwg.mxu0
  %v967 = vsel %vm142, %v886, -inf
  %968 = vmax.xlane.f32.xlu0 %v967
  %v969 = vpop.xlane.xlu0 %968
  %v970 = vsel %vm142, %v964, -inf
  %971 = vmax.xlane.f32.xlu0 %v970
  %v972 = vpop.xlane.xlu0 %971
  %v973 = vsub.f32 %v886, %v969
  %v974 = vsub.f32 %v964, %v972
  %v975 = vmul.f32 %v973, 1.442695
  %v976 = vpow.pop %v975
  %v977 = vmul.f32 %v974, 1.442695
  %v978 = vpow.pop %v977
  %v979 = vsel %vm142, %v976, 0.0
  %980 = vadd.xlane.f32.xlu0 %v979
  %v981 = vpop.xlane.xlu0 %980
  %v982 = vsel %vm142, %v978, 0.0
  %983 = vadd.xlane.f32.xlu0 %v982
  %v984 = vpop.xlane.xlu0 %983
  %v985 = vrcp.pop %v981
  %v986 = vrcp.pop %v984
  %v987 = vmul.f32 %v976, %v985
  %v988 = vmul.f32 %v978, %v986
  %989 = vrot.lane.b32.xlu0 %v119, 48
  %v990 = vpop.permute.xlu0 %989
  %v993 = vsel %vm142, %v987, 0
  %995 = vmatprep.subr.mxu0 0.0
  %996 = vmatpush1.msra.mxu0 0.0
  %997 = vmatprep.subr.mxu0 0.0
  %998 = vmatpush1.msra.mxu0 0.0
  %999 = vmatprep.subr.mxu0 0.0
  %1000 = vmatpush1.msra.mxu0 0.0
  %1001 = vmatprep.subr.mxu0 0.0
  %1002 = vmatpush1.msra.mxu0 0.0
  %1003 = vmatprep.subr.mxu0 0.0
  %1004 = vmatpush1.msra.mxu0 0.0
  %1005 = vmatprep.subr.mxu0 0.0
  %1006 = vmatpush1.msra.mxu0 0.0
  %1007 = vmatprep.subr.mxu0 0.0
  %1008 = vmatpush1.msra.mxu0 0.0
  %1009 = vmatprep.subr.mxu0 0.0
  %1010 = vmatpush1.msra.mxu0 0.0
  %1011 = vmatprep.subr.mxu0 0.0
  %1012 = vmatpush1.msra.mxu0 0.0
  %1013 = vmatprep.subr.mxu0 0.0
  %1014 = vmatpush1.msra.mxu0 0.0
  %1015 = vmatprep.subr.mxu0 0.0
  %1016 = vmatpush1.msra.mxu0 0.0
  %1017 = vmatprep.subr.mxu0 0.0
  %1018 = vmatpush1.msra.mxu0 0.0
  %1019 = vmatprep.subr.mxu0 0.0
  %1020 = vmatpush1.msra.mxu0 0.0
  %1021 = vmatprep.subr.mxu0 0.0
  %1022 = vmatpush1.msra.mxu0 0.0
  %1023 = vmatprep.subr.mxu0 0.0
  %1024 = vmatpush1.msra.mxu0 0.0
  %1025 = vmatprep.subr.mxu0 0.0
  %1026 = vmatpush1.msra.mxu0 %v990
  %1027 = vmatprep.subr.mxu0 0.0
  %1028 = vmatpush2.msra.mxu0 0.0
  %1029 = vmatprep.subr.mxu0 0.0
  %1030 = vmatpush2.msra.mxu0 0.0
  %1031 = vmatprep.subr.mxu0 0.0
  %1032 = vmatpush2.msra.mxu0 0.0
  %1033 = vmatprep.subr.mxu0 0.0
  %1034 = vmatpush2.msra.mxu0 0.0
  %1035 = vmatprep.subr.mxu0 0.0
  %1036 = vmatpush2.msra.mxu0 0.0
  %1037 = vmatprep.subr.mxu0 0.0
  %1038 = vmatpush2.msra.mxu0 0.0
  %1039 = vmatprep.subr.mxu0 0.0
  %1040 = vmatpush2.msra.mxu0 0.0
  %1041 = vmatprep.subr.mxu0 0.0
  %1042 = vmatpush2.msra.mxu0 0.0
  %1043 = vmatprep.subr.mxu0 0.0
  %1044 = vmatpush2.msra.mxu0 0.0
  %1045 = vmatprep.subr.mxu0 0.0
  %1046 = vmatpush2.msra.mxu0 0.0
  %1047 = vmatprep.subr.mxu0 0.0
  %1048 = vmatpush2.msra.mxu0 0.0
  %1049 = vmatprep.subr.mxu0 0.0
  %1050 = vmatpush2.msra.mxu0 0.0
  %1051 = vmatprep.subr.mxu0 0.0
  %1052 = vmatpush2.msra.mxu0 0.0
  %1053 = vmatprep.subr.mxu0 0.0
  %1054 = vmatpush2.msra.mxu0 0.0
  %1055 = vmatprep.subr.mxu0 0.0
  %1056 = vmatpush2.msra.mxu0 0.0
  %1057 = vmatprep.subr.mxu0 0.0
  %1058 = vmatpush2.msra.mxu0 0.0
  %1059 = vmatprep.mubr.f32.mxu0 0.0
  %1060 = vmatmul.mubr.f32.gmra.mxu0 %v993
  %v1061 = vpop.f32.mrf.mxu0
  %v1062 = vadd.f32 0.0, %v1061
  %v1063 = vpop.f32.mrf.mxu0
  %1064 = vdwg.mxu0
  %1065 = vrot.lane.b32.xlu0 %v124, 48
  %v1066 = vpop.permute.xlu0 %1065
  %v1069 = vsel %vm142, %v988, 0
  %1071 = vmatprep.subr.mxu0 0.0
  %1072 = vmatpush1.msra.mxu0 0.0
  %1073 = vmatprep.subr.mxu0 0.0
  %1074 = vmatpush1.msra.mxu0 0.0
  %1075 = vmatprep.subr.mxu0 0.0
  %1076 = vmatpush1.msra.mxu0 0.0
  %1077 = vmatprep.subr.mxu0 0.0
  %1078 = vmatpush1.msra.mxu0 0.0
  %1079 = vmatprep.subr.mxu0 0.0
  %1080 = vmatpush1.msra.mxu0 0.0
  %1081 = vmatprep.subr.mxu0 0.0
  %1082 = vmatpush1.msra.mxu0 0.0
  %1083 = vmatprep.subr.mxu0 0.0
  %1084 = vmatpush1.msra.mxu0 0.0
  %1085 = vmatprep.subr.mxu0 0.0
  %1086 = vmatpush1.msra.mxu0 0.0
  %1087 = vmatprep.subr.mxu0 0.0
  %1088 = vmatpush1.msra.mxu0 0.0
  %1089 = vmatprep.subr.mxu0 0.0
  %1090 = vmatpush1.msra.mxu0 0.0
  %1091 = vmatprep.subr.mxu0 0.0
  %1092 = vmatpush1.msra.mxu0 0.0
  %1093 = vmatprep.subr.mxu0 0.0
  %1094 = vmatpush1.msra.mxu0 0.0
  %1095 = vmatprep.subr.mxu0 0.0
  %1096 = vmatpush1.msra.mxu0 0.0
  %1097 = vmatprep.subr.mxu0 0.0
  %1098 = vmatpush1.msra.mxu0 0.0
  %1099 = vmatprep.subr.mxu0 0.0
  %1100 = vmatpush1.msra.mxu0 0.0
  %1101 = vmatprep.subr.mxu0 0.0
  %1102 = vmatpush1.msra.mxu0 %v1066
  %1103 = vmatprep.subr.mxu0 0.0
  %1104 = vmatpush2.msra.mxu0 0.0
  %1105 = vmatprep.subr.mxu0 0.0
  %1106 = vmatpush2.msra.mxu0 0.0
  %1107 = vmatprep.subr.mxu0 0.0
  %1108 = vmatpush2.msra.mxu0 0.0
  %1109 = vmatprep.subr.mxu0 0.0
  %1110 = vmatpush2.msra.mxu0 0.0
  %1111 = vmatprep.subr.mxu0 0.0
  %1112 = vmatpush2.msra.mxu0 0.0
  %1113 = vmatprep.subr.mxu0 0.0
  %1114 = vmatpush2.msra.mxu0 0.0
  %1115 = vmatprep.subr.mxu0 0.0
  %1116 = vmatpush2.msra.mxu0 0.0
  %1117 = vmatprep.subr.mxu0 0.0
  %1118 = vmatpush2.msra.mxu0 0.0
  %1119 = vmatprep.subr.mxu0 0.0
  %1120 = vmatpush2.msra.mxu0 0.0
  %1121 = vmatprep.subr.mxu0 0.0
  %1122 = vmatpush2.msra.mxu0 0.0
  %1123 = vmatprep.subr.mxu0 0.0
  %1124 = vmatpush2.msra.mxu0 0.0
  %1125 = vmatprep.subr.mxu0 0.0
  %1126 = vmatpush2.msra.mxu0 0.0
  %1127 = vmatprep.subr.mxu0 0.0
  %1128 = vmatpush2.msra.mxu0 0.0
  %1129 = vmatprep.subr.mxu0 0.0
  %1130 = vmatpush2.msra.mxu0 0.0
  %1131 = vmatprep.subr.mxu0 0.0
  %1132 = vmatpush2.msra.mxu0 0.0
  %1133 = vmatprep.subr.mxu0 0.0
  %1134 = vmatpush2.msra.mxu0 0.0
  %1135 = vmatprep.mubr.f32.mxu0 0.0
  %1136 = vmatmul.mubr.f32.gmra.mxu0 %v1069
  %v1137 = vpop.f32.mrf.mxu0
  %v1138 = vadd.f32 0.0, %v1137
  %v1139 = vpop.f32.mrf.mxu0
  %1140 = vdwg.mxu0
  %1143 = vrot.lane.b32.xlu0 %v1062, 16
  %v1144 = vpop.permute.xlu0 %1143
  %1145 = vrot.lane.b32.xlu0 %v1138, 16
  %v1146 = vpop.permute.xlu0 %1145
  %vm1149 = vcmask 195712
  %1150 = vst.msk [vmem:[#allocation2] sm:$0xff] %vm1149, %v1144
  %1151 = vst.msk [vmem:[#allocation2 + $0x8] sm:$0xff] %vm1149, %v1146
  %1152 = vrot.lane.b32.xlu0 %v119, 104
  %v1153 = vpop.permute.xlu0 %1152
  %1154 = vrot.lane.b32.xlu0 %v119, 72
  %v1155 = vpop.permute.xlu0 %1154
  %v1156 = vsel %vm142, %v1153, 0
  %v1158 = vsel %vm142, %v1155, 0
  %1160 = vmatprep.subr.mxu0 0.0
  %1161 = vmatpush1.xpose.msra.mxu0 0.0
  %1162 = vmatprep.subr.mxu0 0.0
  %1163 = vmatpush1.xpose.msra.mxu0 0.0
  %1164 = vmatprep.subr.mxu0 0.0
  %1165 = vmatpush1.xpose.msra.mxu0 0.0
  %1166 = vmatprep.subr.mxu0 0.0
  %1167 = vmatpush1.xpose.msra.mxu0 0.0
  %1168 = vmatprep.subr.mxu0 0.0
  %1169 = vmatpush1.xpose.msra.mxu0 0.0
  %1170 = vmatprep.subr.mxu0 0.0
  %1171 = vmatpush1.xpose.msra.mxu0 0.0
  %1172 = vmatprep.subr.mxu0 0.0
  %1173 = vmatpush1.xpose.msra.mxu0 0.0
  %1174 = vmatprep.subr.mxu0 0.0
  %1175 = vmatpush1.xpose.msra.mxu0 0.0
  %1176 = vmatprep.subr.mxu0 0.0
  %1177 = vmatpush1.xpose.msra.mxu0 0.0
  %1178 = vmatprep.subr.mxu0 0.0
  %1179 = vmatpush1.xpose.msra.mxu0 0.0
  %1180 = vmatprep.subr.mxu0 0.0
  %1181 = vmatpush1.xpose.msra.mxu0 0.0
  %1182 = vmatprep.subr.mxu0 0.0
  %1183 = vmatpush1.xpose.msra.mxu0 0.0
  %1184 = vmatprep.subr.mxu0 0.0
  %1185 = vmatpush1.xpose.msra.mxu0 0.0
  %1186 = vmatprep.subr.mxu0 0.0
  %1187 = vmatpush1.xpose.msra.mxu0 0.0
  %1188 = vmatprep.subr.mxu0 0.0
  %1189 = vmatpush1.xpose.msra.mxu0 0.0
  %1190 = vmatprep.subr.mxu0 0.0
  %1191 = vmatpush1.xpose.msra.mxu0 %v1158
  %1192 = vmatprep.subr.mxu0 0.0
  %1193 = vmatpush2.xpose.msra.mxu0 0.0
  %1194 = vmatprep.subr.mxu0 0.0
  %1195 = vmatpush2.xpose.msra.mxu0 0.0
  %1196 = vmatprep.subr.mxu0 0.0
  %1197 = vmatpush2.xpose.msra.mxu0 0.0
  %1198 = vmatprep.subr.mxu0 0.0
  %1199 = vmatpush2.xpose.msra.mxu0 0.0
  %1200 = vmatprep.subr.mxu0 0.0
  %1201 = vmatpush2.xpose.msra.mxu0 0.0
  %1202 = vmatprep.subr.mxu0 0.0
  %1203 = vmatpush2.xpose.msra.mxu0 0.0
  %1204 = vmatprep.subr.mxu0 0.0
  %1205 = vmatpush2.xpose.msra.mxu0 0.0
  %1206 = vmatprep.subr.mxu0 0.0
  %1207 = vmatpush2.xpose.msra.mxu0 0.0
  %1208 = vmatprep.subr.mxu0 0.0
  %1209 = vmatpush2.xpose.msra.mxu0 0.0
  %1210 = vmatprep.subr.mxu0 0.0
  %1211 = vmatpush2.xpose.msra.mxu0 0.0
  %1212 = vmatprep.subr.mxu0 0.0
  %1213 = vmatpush2.xpose.msra.mxu0 0.0
  %1214 = vmatprep.subr.mxu0 0.0
  %1215 = vmatpush2.xpose.msra.mxu0 0.0
  %1216 = vmatprep.subr.mxu0 0.0
  %1217 = vmatpush2.xpose.msra.mxu0 0.0
  %1218 = vmatprep.subr.mxu0 0.0
  %1219 = vmatpush2.xpose.msra.mxu0 0.0
  %1220 = vmatprep.subr.mxu0 0.0
  %1221 = vmatpush2.xpose.msra.mxu0 0.0
  %1222 = vmatprep.subr.mxu0 0.0
  %1223 = vmatpush2.xpose.msra.mxu0 0.0
  %1224 = vmatprep.mubr.f32.mxu0 0.0
  %1225 = vmatmul.mubr.f32.gmra.mxu0 %v1156
  %v1226 = vpop.f32.mrf.mxu0
  %v1227 = vadd.f32 %v132, %v1226
  %v1228 = vpop.f32.mrf.mxu0
  %1229 = vdwg.mxu0
  %1230 = vrot.lane.b32.xlu0 %v124, 104
  %v1231 = vpop.permute.xlu0 %1230
  %1232 = vrot.lane.b32.xlu0 %v124, 72
  %v1233 = vpop.permute.xlu0 %1232
  %v1234 = vsel %vm142, %v1231, 0
  %v1236 = vsel %vm142, %v1233, 0
  %1238 = vmatprep.subr.mxu0 0.0
  %1239 = vmatpush1.xpose.msra.mxu0 0.0
  %1240 = vmatprep.subr.mxu0 0.0
  %1241 = vmatpush1.xpose.msra.mxu0 0.0
  %1242 = vmatprep.subr.mxu0 0.0
  %1243 = vmatpush1.xpose.msra.mxu0 0.0
  %1244 = vmatprep.subr.mxu0 0.0
  %1245 = vmatpush1.xpose.msra.mxu0 0.0
  %1246 = vmatprep.subr.mxu0 0.0
  %1247 = vmatpush1.xpose.msra.mxu0 0.0
  %1248 = vmatprep.subr.mxu0 0.0
  %1249 = vmatpush1.xpose.msra.mxu0 0.0
  %1250 = vmatprep.subr.mxu0 0.0
  %1251 = vmatpush1.xpose.msra.mxu0 0.0
  %1252 = vmatprep.subr.mxu0 0.0
  %1253 = vmatpush1.xpose.msra.mxu0 0.0
  %1254 = vmatprep.subr.mxu0 0.0
  %1255 = vmatpush1.xpose.msra.mxu0 0.0
  %1256 = vmatprep.subr.mxu0 0.0
  %1257 = vmatpush1.xpose.msra.mxu0 0.0
  %1258 = vmatprep.subr.mxu0 0.0
  %1259 = vmatpush1.xpose.msra.mxu0 0.0
  %1260 = vmatprep.subr.mxu0 0.0
  %1261 = vmatpush1.xpose.msra.mxu0 0.0
  %1262 = vmatprep.subr.mxu0 0.0
  %1263 = vmatpush1.xpose.msra.mxu0 0.0
  %1264 = vmatprep.subr.mxu0 0.0
  %1265 = vmatpush1.xpose.msra.mxu0 0.0
  %1266 = vmatprep.subr.mxu0 0.0
  %1267 = vmatpush1.xpose.msra.mxu0 0.0
  %1268 = vmatprep.subr.mxu0 0.0
  %1269 = vmatpush1.xpose.msra.mxu0 %v1236
  %1270 = vmatprep.subr.mxu0 0.0
  %1271 = vmatpush2.xpose.msra.mxu0 0.0
  %1272 = vmatprep.subr.mxu0 0.0
  %1273 = vmatpush2.xpose.msra.mxu0 0.0
  %1274 = vmatprep.subr.mxu0 0.0
  %1275 = vmatpush2.xpose.msra.mxu0 0.0
  %1276 = vmatprep.subr.mxu0 0.0
  %1277 = vmatpush2.xpose.msra.mxu0 0.0
  %1278 = vmatprep.subr.mxu0 0.0
  %1279 = vmatpush2.xpose.msra.mxu0 0.0
  %1280 = vmatprep.subr.mxu0 0.0
  %1281 = vmatpush2.xpose.msra.mxu0 0.0
  %1282 = vmatprep.subr.mxu0 0.0
  %1283 = vmatpush2.xpose.msra.mxu0 0.0
  %1284 = vmatprep.subr.mxu0 0.0
  %1285 = vmatpush2.xpose.msra.mxu0 0.0
  %1286 = vmatprep.subr.mxu0 0.0
  %1287 = vmatpush2.xpose.msra.mxu0 0.0
  %1288 = vmatprep.subr.mxu0 0.0
  %1289 = vmatpush2.xpose.msra.mxu0 0.0
  %1290 = vmatprep.subr.mxu0 0.0
  %1291 = vmatpush2.xpose.msra.mxu0 0.0
  %1292 = vmatprep.subr.mxu0 0.0
  %1293 = vmatpush2.xpose.msra.mxu0 0.0
  %1294 = vmatprep.subr.mxu0 0.0
  %1295 = vmatpush2.xpose.msra.mxu0 0.0
  %1296 = vmatprep.subr.mxu0 0.0
  %1297 = vmatpush2.xpose.msra.mxu0 0.0
  %1298 = vmatprep.subr.mxu0 0.0
  %1299 = vmatpush2.xpose.msra.mxu0 0.0
  %1300 = vmatprep.subr.mxu0 0.0
  %1301 = vmatpush2.xpose.msra.mxu0 0.0
  %1302 = vmatprep.mubr.f32.mxu0 0.0
  %1303 = vmatmul.mubr.f32.gmra.mxu0 %v1234
  %v1304 = vpop.f32.mrf.mxu0
  %v1305 = vadd.f32 %v136, %v1304
  %v1306 = vpop.f32.mrf.mxu0
  %1307 = vdwg.mxu0
  %v1308 = vsel %vm142, %v1227, -inf
  %1309 = vmax.xlane.f32.xlu0 %v1308
  %v1310 = vpop.xlane.xlu0 %1309
  %v1311 = vsel %vm142, %v1305, -inf
  %1312 = vmax.xlane.f32.xlu0 %v1311
  %v1313 = vpop.xlane.xlu0 %1312
  %v1314 = vsub.f32 %v1227, %v1310
  %v1315 = vsub.f32 %v1305, %v1313
  %v1316 = vmul.f32 %v1314, 1.442695
  %v1317 = vpow.pop %v1316
  %v1318 = vmul.f32 %v1315, 1.442695
  %v1319 = vpow.pop %v1318
  %v1320 = vsel %vm142, %v1317, 0.0
  %1321 = vadd.xlane.f32.xlu0 %v1320
  %v1322 = vpop.xlane.xlu0 %1321
  %v1323 = vsel %vm142, %v1319, 0.0
  %1324 = vadd.xlane.f32.xlu0 %v1323
  %v1325 = vpop.xlane.xlu0 %1324
  %v1326 = vrcp.pop %v1322
  %v1327 = vrcp.pop %v1325
  %v1328 = vmul.f32 %v1317, %v1326
  %v1329 = vmul.f32 %v1319, %v1327
  %1330 = vrot.lane.b32.xlu0 %v119, 40
  %v1331 = vpop.permute.xlu0 %1330
  %v1334 = vsel %vm142, %v1328, 0
  %1336 = vmatprep.subr.mxu0 0.0
  %1337 = vmatpush1.msra.mxu0 0.0
  %1338 = vmatprep.subr.mxu0 0.0
  %1339 = vmatpush1.msra.mxu0 0.0
  %1340 = vmatprep.subr.mxu0 0.0
  %1341 = vmatpush1.msra.mxu0 0.0
  %1342 = vmatprep.subr.mxu0 0.0
  %1343 = vmatpush1.msra.mxu0 0.0
  %1344 = vmatprep.subr.mxu0 0.0
  %1345 = vmatpush1.msra.mxu0 0.0
  %1346 = vmatprep.subr.mxu0 0.0
  %1347 = vmatpush1.msra.mxu0 0.0
  %1348 = vmatprep.subr.mxu0 0.0
  %1349 = vmatpush1.msra.mxu0 0.0
  %1350 = vmatprep.subr.mxu0 0.0
  %1351 = vmatpush1.msra.mxu0 0.0
  %1352 = vmatprep.subr.mxu0 0.0
  %1353 = vmatpush1.msra.mxu0 0.0
  %1354 = vmatprep.subr.mxu0 0.0
  %1355 = vmatpush1.msra.mxu0 0.0
  %1356 = vmatprep.subr.mxu0 0.0
  %1357 = vmatpush1.msra.mxu0 0.0
  %1358 = vmatprep.subr.mxu0 0.0
  %1359 = vmatpush1.msra.mxu0 0.0
  %1360 = vmatprep.subr.mxu0 0.0
  %1361 = vmatpush1.msra.mxu0 0.0
  %1362 = vmatprep.subr.mxu0 0.0
  %1363 = vmatpush1.msra.mxu0 0.0
  %1364 = vmatprep.subr.mxu0 0.0
  %1365 = vmatpush1.msra.mxu0 0.0
  %1366 = vmatprep.subr.mxu0 0.0
  %1367 = vmatpush1.msra.mxu0 %v1331
  %1368 = vmatprep.subr.mxu0 0.0
  %1369 = vmatpush2.msra.mxu0 0.0
  %1370 = vmatprep.subr.mxu0 0.0
  %1371 = vmatpush2.msra.mxu0 0.0
  %1372 = vmatprep.subr.mxu0 0.0
  %1373 = vmatpush2.msra.mxu0 0.0
  %1374 = vmatprep.subr.mxu0 0.0
  %1375 = vmatpush2.msra.mxu0 0.0
  %1376 = vmatprep.subr.mxu0 0.0
  %1377 = vmatpush2.msra.mxu0 0.0
  %1378 = vmatprep.subr.mxu0 0.0
  %1379 = vmatpush2.msra.mxu0 0.0
  %1380 = vmatprep.subr.mxu0 0.0
  %1381 = vmatpush2.msra.mxu0 0.0
  %1382 = vmatprep.subr.mxu0 0.0
  %1383 = vmatpush2.msra.mxu0 0.0
  %1384 = vmatprep.subr.mxu0 0.0
  %1385 = vmatpush2.msra.mxu0 0.0
  %1386 = vmatprep.subr.mxu0 0.0
  %1387 = vmatpush2.msra.mxu0 0.0
  %1388 = vmatprep.subr.mxu0 0.0
  %1389 = vmatpush2.msra.mxu0 0.0
  %1390 = vmatprep.subr.mxu0 0.0
  %1391 = vmatpush2.msra.mxu0 0.0
  %1392 = vmatprep.subr.mxu0 0.0
  %1393 = vmatpush2.msra.mxu0 0.0
  %1394 = vmatprep.subr.mxu0 0.0
  %1395 = vmatpush2.msra.mxu0 0.0
  %1396 = vmatprep.subr.mxu0 0.0
  %1397 = vmatpush2.msra.mxu0 0.0
  %1398 = vmatprep.subr.mxu0 0.0
  %1399 = vmatpush2.msra.mxu0 0.0
  %1400 = vmatprep.mubr.f32.mxu0 0.0
  %1401 = vmatmul.mubr.f32.gmra.mxu0 %v1334
  %v1402 = vpop.f32.mrf.mxu0
  %v1403 = vadd.f32 0.0, %v1402
  %v1404 = vpop.f32.mrf.mxu0
  %1405 = vdwg.mxu0
  %1406 = vrot.lane.b32.xlu0 %v124, 40
  %v1407 = vpop.permute.xlu0 %1406
  %v1410 = vsel %vm142, %v1329, 0
  %1412 = vmatprep.subr.mxu0 0.0
  %1413 = vmatpush1.msra.mxu0 0.0
  %1414 = vmatprep.subr.mxu0 0.0
  %1415 = vmatpush1.msra.mxu0 0.0
  %1416 = vmatprep.subr.mxu0 0.0
  %1417 = vmatpush1.msra.mxu0 0.0
  %1418 = vmatprep.subr.mxu0 0.0
  %1419 = vmatpush1.msra.mxu0 0.0
  %1420 = vmatprep.subr.mxu0 0.0
  %1421 = vmatpush1.msra.mxu0 0.0
  %1422 = vmatprep.subr.mxu0 0.0
  %1423 = vmatpush1.msra.mxu0 0.0
  %1424 = vmatprep.subr.mxu0 0.0
  %1425 = vmatpush1.msra.mxu0 0.0
  %1426 = vmatprep.subr.mxu0 0.0
  %1427 = vmatpush1.msra.mxu0 0.0
  %1428 = vmatprep.subr.mxu0 0.0
  %1429 = vmatpush1.msra.mxu0 0.0
  %1430 = vmatprep.subr.mxu0 0.0
  %1431 = vmatpush1.msra.mxu0 0.0
  %1432 = vmatprep.subr.mxu0 0.0
  %1433 = vmatpush1.msra.mxu0 0.0
  %1434 = vmatprep.subr.mxu0 0.0
  %1435 = vmatpush1.msra.mxu0 0.0
  %1436 = vmatprep.subr.mxu0 0.0
  %1437 = vmatpush1.msra.mxu0 0.0
  %1438 = vmatprep.subr.mxu0 0.0
  %1439 = vmatpush1.msra.mxu0 0.0
  %1440 = vmatprep.subr.mxu0 0.0
  %1441 = vmatpush1.msra.mxu0 0.0
  %1442 = vmatprep.subr.mxu0 0.0
  %1443 = vmatpush1.msra.mxu0 %v1407
  %1444 = vmatprep.subr.mxu0 0.0
  %1445 = vmatpush2.msra.mxu0 0.0
  %1446 = vmatprep.subr.mxu0 0.0
  %1447 = vmatpush2.msra.mxu0 0.0
  %1448 = vmatprep.subr.mxu0 0.0
  %1449 = vmatpush2.msra.mxu0 0.0
  %1450 = vmatprep.subr.mxu0 0.0
  %1451 = vmatpush2.msra.mxu0 0.0
  %1452 = vmatprep.subr.mxu0 0.0
  %1453 = vmatpush2.msra.mxu0 0.0
  %1454 = vmatprep.subr.mxu0 0.0
  %1455 = vmatpush2.msra.mxu0 0.0
  %1456 = vmatprep.subr.mxu0 0.0
  %1457 = vmatpush2.msra.mxu0 0.0
  %1458 = vmatprep.subr.mxu0 0.0
  %1459 = vmatpush2.msra.mxu0 0.0
  %1460 = vmatprep.subr.mxu0 0.0
  %1461 = vmatpush2.msra.mxu0 0.0
  %1462 = vmatprep.subr.mxu0 0.0
  %1463 = vmatpush2.msra.mxu0 0.0
  %1464 = vmatprep.subr.mxu0 0.0
  %1465 = vmatpush2.msra.mxu0 0.0
  %1466 = vmatprep.subr.mxu0 0.0
  %1467 = vmatpush2.msra.mxu0 0.0
  %1468 = vmatprep.subr.mxu0 0.0
  %1469 = vmatpush2.msra.mxu0 0.0
  %1470 = vmatprep.subr.mxu0 0.0
  %1471 = vmatpush2.msra.mxu0 0.0
  %1472 = vmatprep.subr.mxu0 0.0
  %1473 = vmatpush2.msra.mxu0 0.0
  %1474 = vmatprep.subr.mxu0 0.0
  %1475 = vmatpush2.msra.mxu0 0.0
  %1476 = vmatprep.mubr.f32.mxu0 0.0
  %1477 = vmatmul.mubr.f32.gmra.mxu0 %v1410
  %v1478 = vpop.f32.mrf.mxu0
  %v1479 = vadd.f32 0.0, %v1478
  %v1480 = vpop.f32.mrf.mxu0
  %1481 = vdwg.mxu0
  %1484 = vrot.lane.b32.xlu0 %v1403, 24
  %v1485 = vpop.permute.xlu0 %1484
  %1486 = vrot.lane.b32.xlu0 %v1479, 24
  %v1487 = vpop.permute.xlu0 %1486
  %vm1490 = vcmask 261312
  %1491 = vst.msk [vmem:[#allocation2] sm:$0xff] %vm1490, %v1485
  %1492 = vst.msk [vmem:[#allocation2 + $0x8] sm:$0xff] %vm1490, %v1487
  %v1493 = vld [vmem:[#allocation2] sm:$0xff]
  %v1494 = vld [vmem:[#allocation2 + $0x8] sm:$0xff]
  %v1495 = vld [vmem:[%s3] sm:$0xff]
  %v1496 = vld [vmem:[%s3 + $0x8] sm:$0xff]
  %v1497 = vld [vmem:[%s3 + $0x10] sm:$0xff]
  %v1498 = vld [vmem:[%s3 + $0x18] sm:$0xff]
  %v1499 = vlaneseq
  %v1500 = vshrl.u32 %v1499, 7
  %v1501 = vsub.s32 1, %v1500
  %v1502 = vrot.slane %v36, %v1501
  %v1504 = vsel %vm45, %v1493, 0
  %v1507 = vsel %vm45, %v1494, 0
  %1509 = vmatprep.subr.mxu0 0.0
  %1510 = vmatpush1.msra.mxu0 0.0
  %1511 = vmatprep.subr.mxu0 0.0
  %1512 = vmatpush1.msra.mxu0 0.0
  %1513 = vmatprep.subr.mxu0 0.0
  %1514 = vmatpush1.msra.mxu0 0.0
  %1515 = vmatprep.subr.mxu0 0.0
  %1516 = vmatpush1.msra.mxu0 0.0
  %1517 = vmatprep.subr.mxu0 0.0
  %1518 = vmatpush1.msra.mxu0 0.0
  %1519 = vmatprep.subr.mxu0 0.0
  %1520 = vmatpush1.msra.mxu0 0.0
  %1521 = vmatprep.subr.mxu0 0.0
  %1522 = vmatpush1.msra.mxu0 0.0
  %1523 = vmatprep.subr.mxu0 0.0
  %1524 = vmatpush1.msra.mxu0 0.0
  %1525 = vmatprep.subr.mxu0 0.0
  %1526 = vmatpush1.msra.mxu0 0.0
  %1527 = vmatprep.subr.mxu0 0.0
  %1528 = vmatpush1.msra.mxu0 0.0
  %1529 = vmatprep.subr.mxu0 0.0
  %1530 = vmatpush1.msra.mxu0 0.0
  %1531 = vmatprep.subr.mxu0 0.0
  %1532 = vmatpush1.msra.mxu0 0.0
  %1533 = vmatprep.subr.mxu0 0.0
  %1534 = vmatpush1.msra.mxu0 %v1498
  %1535 = vmatprep.subr.mxu0 0.0
  %1536 = vmatpush1.msra.mxu0 %v1497
  %1537 = vmatprep.subr.mxu0 0.0
  %1538 = vmatpush1.msra.mxu0 %v1496
  %1539 = vmatprep.subr.mxu0 0.0
  %1540 = vmatpush1.msra.mxu0 %v1495
  %1541 = vmatprep.subr.mxu0 0.0
  %1542 = vmatpush2.msra.mxu0 0.0
  %1543 = vmatprep.subr.mxu0 0.0
  %1544 = vmatpush2.msra.mxu0 0.0
  %1545 = vmatprep.subr.mxu0 0.0
  %1546 = vmatpush2.msra.mxu0 0.0
  %1547 = vmatprep.subr.mxu0 0.0
  %1548 = vmatpush2.msra.mxu0 0.0
  %1549 = vmatprep.subr.mxu0 0.0
  %1550 = vmatpush2.msra.mxu0 0.0
  %1551 = vmatprep.subr.mxu0 0.0
  %1552 = vmatpush2.msra.mxu0 0.0
  %1553 = vmatprep.subr.mxu0 0.0
  %1554 = vmatpush2.msra.mxu0 0.0
  %1555 = vmatprep.subr.mxu0 0.0
  %1556 = vmatpush2.msra.mxu0 0.0
  %1557 = vmatprep.subr.mxu0 0.0
  %1558 = vmatpush2.msra.mxu0 0.0
  %1559 = vmatprep.subr.mxu0 0.0
  %1560 = vmatpush2.msra.mxu0 0.0
  %1561 = vmatprep.subr.mxu0 0.0
  %1562 = vmatpush2.msra.mxu0 0.0
  %1563 = vmatprep.subr.mxu0 0.0
  %1564 = vmatpush2.msra.mxu0 0.0
  %1565 = vmatprep.subr.mxu0 0.0
  %1566 = vmatpush2.msra.mxu0 0.0
  %1567 = vmatprep.subr.mxu0 0.0
  %1568 = vmatpush2.msra.mxu0 0.0
  %1569 = vmatprep.subr.mxu0 0.0
  %1570 = vmatpush2.msra.mxu0 0.0
  %1571 = vmatprep.subr.mxu0 0.0
  %1572 = vmatpush2.msra.mxu0 0.0
  %1573 = vmatprep.mubr.f32.mxu0 0.0
  %1574 = vmatmul.mubr.f32.gmra.mxu0 %v1504
  %v1575 = vpop.f32.mrf.mxu0
  %v1576 = vadd.f32 %v1502, %v1575
  %v1577 = vpop.f32.mrf.mxu0
  %1578 = vmatprep.mubr.f32.mxu0 0.0
  %1579 = vmatmul.mubr.f32.gmra.mxu0 %v1507
  %v1580 = vpop.f32.mrf.mxu0
  %v1581 = vadd.f32 %v1502, %v1580
  %v1582 = vpop.f32.mrf.mxu0
  %1583 = vdwg.mxu0
  %v1584 = vadd.f32 %v1576, %v34
  %v1585 = vadd.f32 %v1581, %v35
  %v1586 = vsel %vm45, %v1584, 0.0
  %1587 = vadd.xlane.f32.xlu0 %v1586
  %v1588 = vpop.xlane.xlu0 %1587
  %v1589 = vsel %vm45, %v1585, 0.0
  %1590 = vadd.xlane.f32.xlu0 %v1589
  %v1591 = vpop.xlane.xlu0 %1590
  %v1592 = vrcp.pop 32.0
  %v1593 = vmul.f32 %v1588, %v1592
  %v1594 = vmul.f32 %v1591, %v1592
  %v1595 = vsub.f32 %v1584, %v1593
  %v1596 = vsub.f32 %v1585, %v1594
  %v1597 = vmul.f32 %v1595, %v1595
  %v1598 = vmul.f32 %v1596, %v1596
  %v1599 = vsel %vm45, %v1597, 0.0
  %1600 = vadd.xlane.f32.xlu0 %v1599
  %v1601 = vpop.xlane.xlu0 %1600
  %v1602 = vsel %vm45, %v1598, 0.0
  %1603 = vadd.xlane.f32.xlu0 %v1602
  %v1604 = vpop.xlane.xlu0 %1603
  %v1605 = vmul.f32 %v1601, %v1592
  %v1606 = vmul.f32 %v1604, %v1592
  %v1607 = vadd.f32 %v1605, 1e-12
  %v1608 = vadd.f32 %v1606, 1e-12
  %v1609 = vrsqrt.pop %v1607
  %v1610 = vrsqrt.pop %v1608
  %v1611 = vmul.f32 %v1595, %v1609
  %v1612 = vmul.f32 %v1596, %v1610
  %v1613 = vlaneseq
  %v1614 = vshrl.u32 %v1613, 7
  %v1615 = vsub.s32 2, %v1614
  %v1616 = vrot.slane %v36, %v1615
  %v1617 = vmul.f32 %v1611, %v1616
  %v1618 = vmul.f32 %v1612, %v1616
  %v1619 = vlaneseq
  %v1620 = vshrl.u32 %v1619, 7
  %v1621 = vsub.s32 3, %v1620
  %v1622 = vrot.slane %v36, %v1621
  %v1623 = vadd.f32 %v1617, %v1622
  %v1624 = vadd.f32 %v1618, %v1622
  %v1625 = vld [vmem:[%s4] sm:$0xff]
  %v1626 = vld [vmem:[%s4 + $0x8] sm:$0xff]
  %v1627 = vld [vmem:[%s4 + $0x10] sm:$0xff]
  %v1628 = vld [vmem:[%s4 + $0x18] sm:$0xff]
  %v1629 = vlaneseq
  %v1630 = vshrl.u32 %v1629, 7
  %v1631 = vsub.s32 4, %v1630
  %v1632 = vrot.slane %v36, %v1631
  %v1634 = vsel %vm45, %v1623, 0
  %v1637 = vsel %vm45, %v1624, 0
  %1639 = vmatprep.subr.mxu0 0.0
  %1640 = vmatpush1.msra.mxu0 0.0
  %1641 = vmatprep.subr.mxu0 0.0
  %1642 = vmatpush1.msra.mxu0 0.0
  %1643 = vmatprep.subr.mxu0 0.0
  %1644 = vmatpush1.msra.mxu0 0.0
  %1645 = vmatprep.subr.mxu0 0.0
  %1646 = vmatpush1.msra.mxu0 0.0
  %1647 = vmatprep.subr.mxu0 0.0
  %1648 = vmatpush1.msra.mxu0 0.0
  %1649 = vmatprep.subr.mxu0 0.0
  %1650 = vmatpush1.msra.mxu0 0.0
  %1651 = vmatprep.subr.mxu0 0.0
  %1652 = vmatpush1.msra.mxu0 0.0
  %1653 = vmatprep.subr.mxu0 0.0
  %1654 = vmatpush1.msra.mxu0 0.0
  %1655 = vmatprep.subr.mxu0 0.0
  %1656 = vmatpush1.msra.mxu0 0.0
  %1657 = vmatprep.subr.mxu0 0.0
  %1658 = vmatpush1.msra.mxu0 0.0
  %1659 = vmatprep.subr.mxu0 0.0
  %1660 = vmatpush1.msra.mxu0 0.0
  %1661 = vmatprep.subr.mxu0 0.0
  %1662 = vmatpush1.msra.mxu0 0.0
  %1663 = vmatprep.subr.mxu0 0.0
  %1664 = vmatpush1.msra.mxu0 %v1628
  %1665 = vmatprep.subr.mxu0 0.0
  %1666 = vmatpush1.msra.mxu0 %v1627
  %1667 = vmatprep.subr.mxu0 0.0
  %1668 = vmatpush1.msra.mxu0 %v1626
  %1669 = vmatprep.subr.mxu0 0.0
  %1670 = vmatpush1.msra.mxu0 %v1625
  %1671 = vmatprep.subr.mxu0 0.0
  %1672 = vmatpush2.msra.mxu0 0.0
  %1673 = vmatprep.subr.mxu0 0.0
  %1674 = vmatpush2.msra.mxu0 0.0
  %1675 = vmatprep.subr.mxu0 0.0
  %1676 = vmatpush2.msra.mxu0 0.0
  %1677 = vmatprep.subr.mxu0 0.0
  %1678 = vmatpush2.msra.mxu0 0.0
  %1679 = vmatprep.subr.mxu0 0.0
  %1680 = vmatpush2.msra.mxu0 0.0
  %1681 = vmatprep.subr.mxu0 0.0
  %1682 = vmatpush2.msra.mxu0 0.0
  %1683 = vmatprep.subr.mxu0 0.0
  %1684 = vmatpush2.msra.mxu0 0.0
  %1685 = vmatprep.subr.mxu0 0.0
  %1686 = vmatpush2.msra.mxu0 0.0
  %1687 = vmatprep.subr.mxu0 0.0
  %1688 = vmatpush2.msra.mxu0 0.0
  %1689 = vmatprep.subr.mxu0 0.0
  %1690 = vmatpush2.msra.mxu0 0.0
  %1691 = vmatprep.subr.mxu0 0.0
  %1692 = vmatpush2.msra.mxu0 0.0
  %1693 = vmatprep.subr.mxu0 0.0
  %1694 = vmatpush2.msra.mxu0 0.0
  %1695 = vmatprep.subr.mxu0 0.0
  %1696 = vmatpush2.msra.mxu0 0.0
  %1697 = vmatprep.subr.mxu0 0.0
  %1698 = vmatpush2.msra.mxu0 0.0
  %1699 = vmatprep.subr.mxu0 0.0
  %1700 = vmatpush2.msra.mxu0 0.0
  %1701 = vmatprep.subr.mxu0 0.0
  %1702 = vmatpush2.msra.mxu0 0.0
  %1703 = vmatprep.mubr.f32.mxu0 0.0
  %1704 = vmatmul.mubr.f32.gmra.mxu0 %v1634
  %v1705 = vpop.f32.mrf.mxu0
  %v1706 = vadd.f32 %v1632, %v1705
  %v1707 = vpop.f32.mrf.mxu0
  %1708 = vmatprep.mubr.f32.mxu0 0.0
  %1709 = vmatmul.mubr.f32.gmra.mxu0 %v1637
  %v1710 = vpop.f32.mrf.mxu0
  %v1711 = vadd.f32 %v1632, %v1710
  %v1712 = vpop.f32.mrf.mxu0
  %1713 = vdwg.mxu0
  %v1714 = vmul.f32 %v1706, 0.5
  %v1715 = vmul.f32 %v1711, 0.5
  %v1716 = vmul.f32 %v1706, 0.044715
  %v1717 = vmul.f32 %v1711, 0.044715
  %v1718 = vmul.f32 %v1716, %v1706
  %v1719 = vmul.f32 %v1717, %v1711
  %v1720 = vmul.f32 %v1718, %v1706
  %v1721 = vmul.f32 %v1719, %v1711
  %v1722 = vadd.f32 %v1706, %v1720
  %v1723 = vadd.f32 %v1711, %v1721
  %v1724 = vmul.f32 %v1722, 0.7978846
  %v1725 = vmul.f32 %v1723, 0.7978846
  %v1726 = vtanh.pop %v1724
  %v1727 = vtanh.pop %v1725
  %v1728 = vadd.f32 %v1726, 1.0
  %v1729 = vadd.f32 %v1727, 1.0
  %v1730 = vmul.f32 %v1714, %v1728
  %v1731 = vmul.f32 %v1715, %v1729
  %v1732 = vld [vmem:[%s5] sm:$0xff]
  %v1733 = vld [vmem:[%s5 + $0x8] sm:$0xff]
  %v1734 = vld [vmem:[%s5 + $0x10] sm:$0xff]
  %v1735 = vld [vmem:[%s5 + $0x18] sm:$0xff]
  %v1736 = vld [vmem:[%s5 + $0x20] sm:$0xff]
  %v1737 = vld [vmem:[%s5 + $0x28] sm:$0xff]
  %v1738 = vld [vmem:[%s5 + $0x30] sm:$0xff]
  %v1739 = vld [vmem:[%s5 + $0x38] sm:$0xff]
  %v1740 = vlaneseq
  %v1741 = vshrl.u32 %v1740, 7
  %v1742 = vsub.s32 5, %v1741
  %v1743 = vrot.slane %v36, %v1742
  %vm1744 = vcmask 523264
  %v1746 = vsel %vm1744, %v1730, 0
  %v1749 = vsel %vm1744, %v1731, 0
  %1751 = vmatprep.subr.mxu0 0.0
  %1752 = vmatpush1.msra.mxu0 0.0
  %1753 = vmatprep.subr.mxu0 0.0
  %1754 = vmatpush1.msra.mxu0 0.0
  %1755 = vmatprep.subr.mxu0 0.0
  %1756 = vmatpush1.msra.mxu0 0.0
  %1757 = vmatprep.subr.mxu0 0.0
  %1758 = vmatpush1.msra.mxu0 0.0
  %1759 = vmatprep.subr.mxu0 0.0
  %1760 = vmatpush1.msra.mxu0 0.0
  %1761 = vmatprep.subr.mxu0 0.0
  %1762 = vmatpush1.msra.mxu0 0.0
  %1763 = vmatprep.subr.mxu0 0.0
  %1764 = vmatpush1.msra.mxu0 0.0
  %1765 = vmatprep.subr.mxu0 0.0
  %1766 = vmatpush1.msra.mxu0 0.0
  %1767 = vmatprep.subr.mxu0 0.0
  %1768 = vmatpush1.msra.mxu0 %v1739
  %1769 = vmatprep.subr.mxu0 0.0
  %1770 = vmatpush1.msra.mxu0 %v1738
  %1771 = vmatprep.subr.mxu0 0.0
  %1772 = vmatpush1.msra.mxu0 %v1737
  %1773 = vmatprep.subr.mxu0 0.0
  %1774 = vmatpush1.msra.mxu0 %v1736
  %1775 = vmatprep.subr.mxu0 0.0
  %1776 = vmatpush1.msra.mxu0 %v1735
  %1777 = vmatprep.subr.mxu0 0.0
  %1778 = vmatpush1.msra.mxu0 %v1734
  %1779 = vmatprep.subr.mxu0 0.0
  %1780 = vmatpush1.msra.mxu0 %v1733
  %1781 = vmatprep.subr.mxu0 0.0
  %1782 = vmatpush1.msra.mxu0 %v1732
  %1783 = vmatprep.subr.mxu0 0.0
  %1784 = vmatpush2.msra.mxu0 0.0
  %1785 = vmatprep.subr.mxu0 0.0
  %1786 = vmatpush2.msra.mxu0 0.0
  %1787 = vmatprep.subr.mxu0 0.0
  %1788 = vmatpush2.msra.mxu0 0.0
  %1789 = vmatprep.subr.mxu0 0.0
  %1790 = vmatpush2.msra.mxu0 0.0
  %1791 = vmatprep.subr.mxu0 0.0
  %1792 = vmatpush2.msra.mxu0 0.0
  %1793 = vmatprep.subr.mxu0 0.0
  %1794 = vmatpush2.msra.mxu0 0.0
  %1795 = vmatprep.subr.mxu0 0.0
  %1796 = vmatpush2.msra.mxu0 0.0
  %1797 = vmatprep.subr.mxu0 0.0
  %1798 = vmatpush2.msra.mxu0 0.0
  %1799 = vmatprep.subr.mxu0 0.0
  %1800 = vmatpush2.msra.mxu0 0.0
  %1801 = vmatprep.subr.mxu0 0.0
  %1802 = vmatpush2.msra.mxu0 0.0
  %1803 = vmatprep.subr.mxu0 0.0
  %1804 = vmatpush2.msra.mxu0 0.0
  %1805 = vmatprep.subr.mxu0 0.0
  %1806 = vmatpush2.msra.mxu0 0.0
  %1807 = vmatprep.subr.mxu0 0.0
  %1808 = vmatpush2.msra.mxu0 0.0
  %1809 = vmatprep.subr.mxu0 0.0
  %1810 = vmatpush2.msra.mxu0 0.0
  %1811 = vmatprep.subr.mxu0 0.0
  %1812 = vmatpush2.msra.mxu0 0.0
  %1813 = vmatprep.subr.mxu0 0.0
  %1814 = vmatpush2.msra.mxu0 0.0
  %1815 = vmatprep.mubr.f32.mxu0 0.0
  %1816 = vmatmul.mubr.f32.gmra.mxu0 %v1746
  %v1817 = vpop.f32.mrf.mxu0
  %v1818 = vadd.f32 %v1743, %v1817
  %v1819 = vpop.f32.mrf.mxu0
  %1820 = vmatprep.mubr.f32.mxu0 0.0
  %1821 = vmatmul.mubr.f32.gmra.mxu0 %v1749
  %v1822 = vpop.f32.mrf.mxu0
  %v1823 = vadd.f32 %v1743, %v1822
  %v1824 = vpop.f32.mrf.mxu0
  %1825 = vdwg.mxu0
  %v1826 = vadd.f32 %v1818, %v1623
  %v1827 = vadd.f32 %v1823, %v1624
  %v1828 = vsel %vm45, %v1826, 0.0
  %1829 = vadd.xlane.f32.xlu0 %v1828
  %v1830 = vpop.xlane.xlu0 %1829
  %v1831 = vsel %vm45, %v1827, 0.0
  %1832 = vadd.xlane.f32.xlu0 %v1831
  %v1833 = vpop.xlane.xlu0 %1832
  %v1834 = vmul.f32 %v1830, %v1592
  %v1835 = vmul.f32 %v1833, %v1592
  %v1836 = vsub.f32 %v1826, %v1834
  %v1837 = vsub.f32 %v1827, %v1835
  %v1838 = vmul.f32 %v1836, %v1836
  %v1839 = vmul.f32 %v1837, %v1837
  %v1840 = vsel %vm45, %v1838, 0.0
  %1841 = vadd.xlane.f32.xlu0 %v1840
  %v1842 = vpop.xlane.xlu0 %1841
  %v1843 = vsel %vm45, %v1839, 0.0
  %1844 = vadd.xlane.f32.xlu0 %v1843
  %v1845 = vpop.xlane.xlu0 %1844
  %v1846 = vmul.f32 %v1842, %v1592
  %v1847 = vmul.f32 %v1845, %v1592
  %v1848 = vadd.f32 %v1846, 1e-12
  %v1849 = vadd.f32 %v1847, 1e-12
  %v1850 = vrsqrt.pop %v1848
  %v1851 = vrsqrt.pop %v1849
  %v1852 = vmul.f32 %v1836, %v1850
  %v1853 = vmul.f32 %v1837, %v1851
  %v1854 = vlaneseq
  %v1855 = vshrl.u32 %v1854, 7
  %v1856 = vsub.s32 6, %v1855
  %v1857 = vrot.slane %v36, %v1856
  %v1858 = vmul.f32 %v1852, %v1857
  %v1859 = vmul.f32 %v1853, %v1857
  %v1860 = vlaneseq
  %v1861 = vshrl.u32 %v1860, 7
  %v1862 = vsub.s32 7, %v1861
  %v1863 = vrot.slane %v36, %v1862
  %v1864 = vadd.f32 %v1858, %v1863
  %v1865 = vadd.f32 %v1859, %v1863
  %v1866 = vadd.f32 %v1864, 0.0
  %v1867 = vadd.f32 %v1865, 0.0
  %s1868 = scalar_lea.vmem %s0, 16
  %v1869 = vld [vmem:[%s1868] sm:$0xff]
  %v1870 = vld [vmem:[%s1868 + $0x8] sm:$0xff]
  %s1871 = scalar_lea.vmem %s6, 8
  %v1872 = vld [vmem:[%s1871] sm:$0xff]
  %s1873 = scalar_lea.vmem %s2, 32
  %v1874 = vld [vmem:[%s1873] sm:$0xff]
  %v1875 = vld [vmem:[%s1873 + $0x8] sm:$0xff]
  %v1876 = vld [vmem:[%s1873 + $0x10] sm:$0xff]
  %v1877 = vld [vmem:[%s1873 + $0x18] sm:$0xff]
  %v1878 = vlaneseq
  %v1879 = vshrl.u32 %v1878, 7
  %v1880 = vsub.s32 0, %v1879
  %v1881 = vrot.slane %v1872, %v1880
  %v1883 = vsel %vm45, %v1869, 0
  %v1886 = vsel %vm45, %v1870, 0
  %1888 = vmatprep.subr.mxu0 0.0
  %1889 = vmatpush1.msra.mxu0 0.0
  %1890 = vmatprep.subr.mxu0 0.0
  %1891 = vmatpush1.msra.mxu0 0.0
  %1892 = vmatprep.subr.mxu0 0.0
  %1893 = vmatpush1.msra.mxu0 0.0
  %1894 = vmatprep.subr.mxu0 0.0
  %1895 = vmatpush1.msra.mxu0 0.0
  %1896 = vmatprep.subr.mxu0 0.0
  %1897 = vmatpush1.msra.mxu0 0.0
  %1898 = vmatprep.subr.mxu0 0.0
  %1899 = vmatpush1.msra.mxu0 0.0
  %1900 = vmatprep.subr.mxu0 0.0
  %1901 = vmatpush1.msra.mxu0 0.0
  %1902 = vmatprep.subr.mxu0 0.0
  %1903 = vmatpush1.msra.mxu0 0.0
  %1904 = vmatprep.subr.mxu0 0.0
  %1905 = vmatpush1.msra.mxu0 0.0
  %1906 = vmatprep.subr.mxu0 0.0
  %1907 = vmatpush1.msra.mxu0 0.0
  %1908 = vmatprep.subr.mxu0 0.0
  %1909 = vmatpush1.msra.mxu0 0.0
  %1910 = vmatprep.subr.mxu0 0.0
  %1911 = vmatpush1.msra.mxu0 0.0
  %1912 = vmatprep.subr.mxu0 0.0
  %1913 = vmatpush1.msra.mxu0 %v1877
  %1914 = vmatprep.subr.mxu0 0.0
  %1915 = vmatpush1.msra.mxu0 %v1876
  %1916 = vmatprep.subr.mxu0 0.0
  %1917 = vmatpush1.msra.mxu0 %v1875
  %1918 = vmatprep.subr.mxu0 0.0
  %1919 = vmatpush1.msra.mxu0 %v1874
  %1920 = vmatprep.subr.mxu0 0.0
  %1921 = vmatpush2.msra.mxu0 0.0
  %1922 = vmatprep.subr.mxu0 0.0
  %1923 = vmatpush2.msra.mxu0 0.0
  %1924 = vmatprep.subr.mxu0 0.0
  %1925 = vmatpush2.msra.mxu0 0.0
  %1926 = vmatprep.subr.mxu0 0.0
  %1927 = vmatpush2.msra.mxu0 0.0
  %1928 = vmatprep.subr.mxu0 0.0
  %1929 = vmatpush2.msra.mxu0 0.0
  %1930 = vmatprep.subr.mxu0 0.0
  %1931 = vmatpush2.msra.mxu0 0.0
  %1932 = vmatprep.subr.mxu0 0.0
  %1933 = vmatpush2.msra.mxu0 0.0
  %1934 = vmatprep.subr.mxu0 0.0
  %1935 = vmatpush2.msra.mxu0 0.0
  %1936 = vmatprep.subr.mxu0 0.0
  %1937 = vmatpush2.msra.mxu0 0.0
  %1938 = vmatprep.subr.mxu0 0.0
  %1939 = vmatpush2.msra.mxu0 0.0
  %1940 = vmatprep.subr.mxu0 0.0
  %1941 = vmatpush2.msra.mxu0 0.0
  %1942 = vmatprep.subr.mxu0 0.0
  %1943 = vmatpush2.msra.mxu0 0.0
  %1944 = vmatprep.subr.mxu0 0.0
  %1945 = vmatpush2.msra.mxu0 0.0
  %1946 = vmatprep.subr.mxu0 0.0
  %1947 = vmatpush2.msra.mxu0 0.0
  %1948 = vmatprep.subr.mxu0 0.0
  %1949 = vmatpush2.msra.mxu0 0.0
  %1950 = vmatprep.subr.mxu0 0.0
  %1951 = vmatpush2.msra.mxu0 0.0
  %1952 = vmatprep.mubr.f32.mxu0 0.0
  %1953 = vmatmul.mubr.f32.gmra.mxu0 %v1883
  %v1954 = vpop.f32.mrf.mxu0
  %v1955 = vadd.f32 %v1881, %v1954
  %v1956 = vpop.f32.mrf.mxu0
  %1957 = vmatprep.mubr.f32.mxu0 0.0
  %1958 = vmatmul.mubr.f32.gmra.mxu0 %v1886
  %v1959 = vpop.f32.mrf.mxu0
  %v1960 = vadd.f32 %v1881, %v1959
  %v1961 = vpop.f32.mrf.mxu0
  %1962 = vdwg.mxu0
  %1964 = vrot.lane.b32.xlu0 %v1955, 96
  %v1965 = vpop.permute.xlu0 %1964
  %v1966 = vsel %vm142, %v1955, 0
  %v1968 = vsel %vm142, %v1965, 0
  %1970 = vmatprep.subr.mxu0 0.0
  %1971 = vmatpush1.xpose.msra.mxu0 0.0
  %1972 = vmatprep.subr.mxu0 0.0
  %1973 = vmatpush1.xpose.msra.mxu0 0.0
  %1974 = vmatprep.subr.mxu0 0.0
  %1975 = vmatpush1.xpose.msra.mxu0 0.0
  %1976 = vmatprep.subr.mxu0 0.0
  %1977 = vmatpush1.xpose.msra.mxu0 0.0
  %1978 = vmatprep.subr.mxu0 0.0
  %1979 = vmatpush1.xpose.msra.mxu0 0.0
  %1980 = vmatprep.subr.mxu0 0.0
  %1981 = vmatpush1.xpose.msra.mxu0 0.0
  %1982 = vmatprep.subr.mxu0 0.0
  %1983 = vmatpush1.xpose.msra.mxu0 0.0
  %1984 = vmatprep.subr.mxu0 0.0
  %1985 = vmatpush1.xpose.msra.mxu0 0.0
  %1986 = vmatprep.subr.mxu0 0.0
  %1987 = vmatpush1.xpose.msra.mxu0 0.0
  %1988 = vmatprep.subr.mxu0 0.0
  %1989 = vmatpush1.xpose.msra.mxu0 0.0
  %1990 = vmatprep.subr.mxu0 0.0
  %1991 = vmatpush1.xpose.msra.mxu0 0.0
  %1992 = vmatprep.subr.mxu0 0.0
  %1993 = vmatpush1.xpose.msra.mxu0 0.0
  %1994 = vmatprep.subr.mxu0 0.0
  %1995 = vmatpush1.xpose.msra.mxu0 0.0
  %1996 = vmatprep.subr.mxu0 0.0
  %1997 = vmatpush1.xpose.msra.mxu0 0.0
  %1998 = vmatprep.subr.mxu0 0.0
  %1999 = vmatpush1.xpose.msra.mxu0 0.0
  %2000 = vmatprep.subr.mxu0 0.0
  %2001 = vmatpush1.xpose.msra.mxu0 %v1968
  %2002 = vmatprep.subr.mxu0 0.0
  %2003 = vmatpush2.xpose.msra.mxu0 0.0
  %2004 = vmatprep.subr.mxu0 0.0
  %2005 = vmatpush2.xpose.msra.mxu0 0.0
  %2006 = vmatprep.subr.mxu0 0.0
  %2007 = vmatpush2.xpose.msra.mxu0 0.0
  %2008 = vmatprep.subr.mxu0 0.0
  %2009 = vmatpush2.xpose.msra.mxu0 0.0
  %2010 = vmatprep.subr.mxu0 0.0
  %2011 = vmatpush2.xpose.msra.mxu0 0.0
  %2012 = vmatprep.subr.mxu0 0.0
  %2013 = vmatpush2.xpose.msra.mxu0 0.0
  %2014 = vmatprep.subr.mxu0 0.0
  %2015 = vmatpush2.xpose.msra.mxu0 0.0
  %2016 = vmatprep.subr.mxu0 0.0
  %2017 = vmatpush2.xpose.msra.mxu0 0.0
  %2018 = vmatprep.subr.mxu0 0.0
  %2019 = vmatpush2.xpose.msra.mxu0 0.0
  %2020 = vmatprep.subr.mxu0 0.0
  %2021 = vmatpush2.xpose.msra.mxu0 0.0
  %2022 = vmatprep.subr.mxu0 0.0
  %2023 = vmatpush2.xpose.msra.mxu0 0.0
  %2024 = vmatprep.subr.mxu0 0.0
  %2025 = vmatpush2.xpose.msra.mxu0 0.0
  %2026 = vmatprep.subr.mxu0 0.0
  %2027 = vmatpush2.xpose.msra.mxu0 0.0
  %2028 = vmatprep.subr.mxu0 0.0
  %2029 = vmatpush2.xpose.msra.mxu0 0.0
  %2030 = vmatprep.subr.mxu0 0.0
  %2031 = vmatpush2.xpose.msra.mxu0 0.0
  %2032 = vmatprep.subr.mxu0 0.0
  %2033 = vmatpush2.xpose.msra.mxu0 0.0
  %2034 = vmatprep.mubr.f32.mxu0 0.0
  %2035 = vmatmul.mubr.f32.gmra.mxu0 %v1966
  %v2036 = vpop.f32.mrf.mxu0
  %v2037 = vadd.f32 %v132, %v2036
  %v2038 = vpop.f32.mrf.mxu0
  %2039 = vdwg.mxu0
  %2041 = vrot.lane.b32.xlu0 %v1960, 96
  %v2042 = vpop.permute.xlu0 %2041
  %v2043 = vsel %vm142, %v1960, 0
  %v2045 = vsel %vm142, %v2042, 0
  %2047 = vmatprep.subr.mxu0 0.0
  %2048 = vmatpush1.xpose.msra.mxu0 0.0
  %2049 = vmatprep.subr.mxu0 0.0
  %2050 = vmatpush1.xpose.msra.mxu0 0.0
  %2051 = vmatprep.subr.mxu0 0.0
  %2052 = vmatpush1.xpose.msra.mxu0 0.0
  %2053 = vmatprep.subr.mxu0 0.0
  %2054 = vmatpush1.xpose.msra.mxu0 0.0
  %2055 = vmatprep.subr.mxu0 0.0
  %2056 = vmatpush1.xpose.msra.mxu0 0.0
  %2057 = vmatprep.subr.mxu0 0.0
  %2058 = vmatpush1.xpose.msra.mxu0 0.0
  %2059 = vmatprep.subr.mxu0 0.0
  %2060 = vmatpush1.xpose.msra.mxu0 0.0
  %2061 = vmatprep.subr.mxu0 0.0
  %2062 = vmatpush1.xpose.msra.mxu0 0.0
  %2063 = vmatprep.subr.mxu0 0.0
  %2064 = vmatpush1.xpose.msra.mxu0 0.0
  %2065 = vmatprep.subr.mxu0 0.0
  %2066 = vmatpush1.xpose.msra.mxu0 0.0
  %2067 = vmatprep.subr.mxu0 0.0
  %2068 = vmatpush1.xpose.msra.mxu0 0.0
  %2069 = vmatprep.subr.mxu0 0.0
  %2070 = vmatpush1.xpose.msra.mxu0 0.0
  %2071 = vmatprep.subr.mxu0 0.0
  %2072 = vmatpush1.xpose.msra.mxu0 0.0
  %2073 = vmatprep.subr.mxu0 0.0
  %2074 = vmatpush1.xpose.msra.mxu0 0.0
  %2075 = vmatprep.subr.mxu0 0.0
  %2076 = vmatpush1.xpose.msra.mxu0 0.0
  %2077 = vmatprep.subr.mxu0 0.0
  %2078 = vmatpush1.xpose.msra.mxu0 %v2045
  %2079 = vmatprep.subr.mxu0 0.0
  %2080 = vmatpush2.xpose.msra.mxu0 0.0
  %2081 = vmatprep.subr.mxu0 0.0
  %2082 = vmatpush2.xpose.msra.mxu0 0.0
  %2083 = vmatprep.subr.mxu0 0.0
  %2084 = vmatpush2.xpose.msra.mxu0 0.0
  %2085 = vmatprep.subr.mxu0 0.0
  %2086 = vmatpush2.xpose.msra.mxu0 0.0
  %2087 = vmatprep.subr.mxu0 0.0
  %2088 = vmatpush2.xpose.msra.mxu0 0.0
  %2089 = vmatprep.subr.mxu0 0.0
  %2090 = vmatpush2.xpose.msra.mxu0 0.0
  %2091 = vmatprep.subr.mxu0 0.0
  %2092 = vmatpush2.xpose.msra.mxu0 0.0
  %2093 = vmatprep.subr.mxu0 0.0
  %2094 = vmatpush2.xpose.msra.mxu0 0.0
  %2095 = vmatprep.subr.mxu0 0.0
  %2096 = vmatpush2.xpose.msra.mxu0 0.0
  %2097 = vmatprep.subr.mxu0 0.0
  %2098 = vmatpush2.xpose.msra.mxu0 0.0
  %2099 = vmatprep.subr.mxu0 0.0
  %2100 = vmatpush2.xpose.msra.mxu0 0.0
  %2101 = vmatprep.subr.mxu0 0.0
  %2102 = vmatpush2.xpose.msra.mxu0 0.0
  %2103 = vmatprep.subr.mxu0 0.0
  %2104 = vmatpush2.xpose.msra.mxu0 0.0
  %2105 = vmatprep.subr.mxu0 0.0
  %2106 = vmatpush2.xpose.msra.mxu0 0.0
  %2107 = vmatprep.subr.mxu0 0.0
  %2108 = vmatpush2.xpose.msra.mxu0 0.0
  %2109 = vmatprep.subr.mxu0 0.0
  %2110 = vmatpush2.xpose.msra.mxu0 0.0
  %2111 = vmatprep.mubr.f32.mxu0 0.0
  %2112 = vmatmul.mubr.f32.gmra.mxu0 %v2043
  %v2113 = vpop.f32.mrf.mxu0
  %v2114 = vadd.f32 %v136, %v2113
  %v2115 = vpop.f32.mrf.mxu0
  %2116 = vdwg.mxu0
  %v2117 = vsel %vm142, %v2037, -inf
  %2118 = vmax.xlane.f32.xlu0 %v2117
  %v2119 = vpop.xlane.xlu0 %2118
  %v2120 = vsel %vm142, %v2114, -inf
  %2121 = vmax.xlane.f32.xlu0 %v2120
  %v2122 = vpop.xlane.xlu0 %2121
  %v2123 = vsub.f32 %v2037, %v2119
  %v2124 = vsub.f32 %v2114, %v2122
  %v2125 = vmul.f32 %v2123, 1.442695
  %v2126 = vpow.pop %v2125
  %v2127 = vmul.f32 %v2124, 1.442695
  %v2128 = vpow.pop %v2127
  %v2129 = vsel %vm142, %v2126, 0.0
  %2130 = vadd.xlane.f32.xlu0 %v2129
  %v2131 = vpop.xlane.xlu0 %2130
  %v2132 = vsel %vm142, %v2128, 0.0
  %2133 = vadd.xlane.f32.xlu0 %v2132
  %v2134 = vpop.xlane.xlu0 %2133
  %v2135 = vrcp.pop %v2131
  %v2136 = vrcp.pop %v2134
  %v2137 = vmul.f32 %v2126, %v2135
  %v2138 = vmul.f32 %v2128, %v2136
  %2139 = vrot.lane.b32.xlu0 %v1955, 64
  %v2140 = vpop.permute.xlu0 %2139
  %v2143 = vsel %vm142, %v2137, 0
  %2145 = vmatprep.subr.mxu0 0.0
  %2146 = vmatpush1.msra.mxu0 0.0
  %2147 = vmatprep.subr.mxu0 0.0
  %2148 = vmatpush1.msra.mxu0 0.0
  %2149 = vmatprep.subr.mxu0 0.0
  %2150 = vmatpush1.msra.mxu0 0.0
  %2151 = vmatprep.subr.mxu0 0.0
  %2152 = vmatpush1.msra.mxu0 0.0
  %2153 = vmatprep.subr.mxu0 0.0
  %2154 = vmatpush1.msra.mxu0 0.0
  %2155 = vmatprep.subr.mxu0 0.0
  %2156 = vmatpush1.msra.mxu0 0.0
  %2157 = vmatprep.subr.mxu0 0.0
  %2158 = vmatpush1.msra.mxu0 0.0
  %2159 = vmatprep.subr.mxu0 0.0
  %2160 = vmatpush1.msra.mxu0 0.0
  %2161 = vmatprep.subr.mxu0 0.0
  %2162 = vmatpush1.msra.mxu0 0.0
  %2163 = vmatprep.subr.mxu0 0.0
  %2164 = vmatpush1.msra.mxu0 0.0
  %2165 = vmatprep.subr.mxu0 0.0
  %2166 = vmatpush1.msra.mxu0 0.0
  %2167 = vmatprep.subr.mxu0 0.0
  %2168 = vmatpush1.msra.mxu0 0.0
  %2169 = vmatprep.subr.mxu0 0.0
  %2170 = vmatpush1.msra.mxu0 0.0
  %2171 = vmatprep.subr.mxu0 0.0
  %2172 = vmatpush1.msra.mxu0 0.0
  %2173 = vmatprep.subr.mxu0 0.0
  %2174 = vmatpush1.msra.mxu0 0.0
  %2175 = vmatprep.subr.mxu0 0.0
  %2176 = vmatpush1.msra.mxu0 %v2140
  %2177 = vmatprep.subr.mxu0 0.0
  %2178 = vmatpush2.msra.mxu0 0.0
  %2179 = vmatprep.subr.mxu0 0.0
  %2180 = vmatpush2.msra.mxu0 0.0
  %2181 = vmatprep.subr.mxu0 0.0
  %2182 = vmatpush2.msra.mxu0 0.0
  %2183 = vmatprep.subr.mxu0 0.0
  %2184 = vmatpush2.msra.mxu0 0.0
  %2185 = vmatprep.subr.mxu0 0.0
  %2186 = vmatpush2.msra.mxu0 0.0
  %2187 = vmatprep.subr.mxu0 0.0
  %2188 = vmatpush2.msra.mxu0 0.0
  %2189 = vmatprep.subr.mxu0 0.0
  %2190 = vmatpush2.msra.mxu0 0.0
  %2191 = vmatprep.subr.mxu0 0.0
  %2192 = vmatpush2.msra.mxu0 0.0
  %2193 = vmatprep.subr.mxu0 0.0
  %2194 = vmatpush2.msra.mxu0 0.0
  %2195 = vmatprep.subr.mxu0 0.0
  %2196 = vmatpush2.msra.mxu0 0.0
  %2197 = vmatprep.subr.mxu0 0.0
  %2198 = vmatpush2.msra.mxu0 0.0
  %2199 = vmatprep.subr.mxu0 0.0
  %2200 = vmatpush2.msra.mxu0 0.0
  %2201 = vmatprep.subr.mxu0 0.0
  %2202 = vmatpush2.msra.mxu0 0.0
  %2203 = vmatprep.subr.mxu0 0.0
  %2204 = vmatpush2.msra.mxu0 0.0
  %2205 = vmatprep.subr.mxu0 0.0
  %2206 = vmatpush2.msra.mxu0 0.0
  %2207 = vmatprep.subr.mxu0 0.0
  %2208 = vmatpush2.msra.mxu0 0.0
  %2209 = vmatprep.mubr.f32.mxu0 0.0
  %2210 = vmatmul.mubr.f32.gmra.mxu0 %v2143
  %v2211 = vpop.f32.mrf.mxu0
  %v2212 = vadd.f32 0.0, %v2211
  %v2213 = vpop.f32.mrf.mxu0
  %2214 = vdwg.mxu0
  %2215 = vrot.lane.b32.xlu0 %v1960, 64
  %v2216 = vpop.permute.xlu0 %2215
  %v2219 = vsel %vm142, %v2138, 0
  %2221 = vmatprep.subr.mxu0 0.0
  %2222 = vmatpush1.msra.mxu0 0.0
  %2223 = vmatprep.subr.mxu0 0.0
  %2224 = vmatpush1.msra.mxu0 0.0
  %2225 = vmatprep.subr.mxu0 0.0
  %2226 = vmatpush1.msra.mxu0 0.0
  %2227 = vmatprep.subr.mxu0 0.0
  %2228 = vmatpush1.msra.mxu0 0.0
  %2229 = vmatprep.subr.mxu0 0.0
  %2230 = vmatpush1.msra.mxu0 0.0
  %2231 = vmatprep.subr.mxu0 0.0
  %2232 = vmatpush1.msra.mxu0 0.0
  %2233 = vmatprep.subr.mxu0 0.0
  %2234 = vmatpush1.msra.mxu0 0.0
  %2235 = vmatprep.subr.mxu0 0.0
  %2236 = vmatpush1.msra.mxu0 0.0
  %2237 = vmatprep.subr.mxu0 0.0
  %2238 = vmatpush1.msra.mxu0 0.0
  %2239 = vmatprep.subr.mxu0 0.0
  %2240 = vmatpush1.msra.mxu0 0.0
  %2241 = vmatprep.subr.mxu0 0.0
  %2242 = vmatpush1.msra.mxu0 0.0
  %2243 = vmatprep.subr.mxu0 0.0
  %2244 = vmatpush1.msra.mxu0 0.0
  %2245 = vmatprep.subr.mxu0 0.0
  %2246 = vmatpush1.msra.mxu0 0.0
  %2247 = vmatprep.subr.mxu0 0.0
  %2248 = vmatpush1.msra.mxu0 0.0
  %2249 = vmatprep.subr.mxu0 0.0
  %2250 = vmatpush1.msra.mxu0 0.0
  %2251 = vmatprep.subr.mxu0 0.0
  %2252 = vmatpush1.msra.mxu0 %v2216
  %2253 = vmatprep.subr.mxu0 0.0
  %2254 = vmatpush2.msra.mxu0 0.0
  %2255 = vmatprep.subr.mxu0 0.0
  %2256 = vmatpush2.msra.mxu0 0.0
  %2257 = vmatprep.subr.mxu0 0.0
  %2258 = vmatpush2.msra.mxu0 0.0
  %2259 = vmatprep.subr.mxu0 0.0
  %2260 = vmatpush2.msra.mxu0 0.0
  %2261 = vmatprep.subr.mxu0 0.0
  %2262 = vmatpush2.msra.mxu0 0.0
  %2263 = vmatprep.subr.mxu0 0.0
  %2264 = vmatpush2.msra.mxu0 0.0
  %2265 = vmatprep.subr.mxu0 0.0
  %2266 = vmatpush2.msra.mxu0 0.0
  %2267 = vmatprep.subr.mxu0 0.0
  %2268 = vmatpush2.msra.mxu0 0.0
  %2269 = vmatprep.subr.mxu0 0.0
  %2270 = vmatpush2.msra.mxu0 0.0
  %2271 = vmatprep.subr.mxu0 0.0
  %2272 = vmatpush2.msra.mxu0 0.0
  %2273 = vmatprep.subr.mxu0 0.0
  %2274 = vmatpush2.msra.mxu0 0.0
  %2275 = vmatprep.subr.mxu0 0.0
  %2276 = vmatpush2.msra.mxu0 0.0
  %2277 = vmatprep.subr.mxu0 0.0
  %2278 = vmatpush2.msra.mxu0 0.0
  %2279 = vmatprep.subr.mxu0 0.0
  %2280 = vmatpush2.msra.mxu0 0.0
  %2281 = vmatprep.subr.mxu0 0.0
  %2282 = vmatpush2.msra.mxu0 0.0
  %2283 = vmatprep.subr.mxu0 0.0
  %2284 = vmatpush2.msra.mxu0 0.0
  %2285 = vmatprep.mubr.f32.mxu0 0.0
  %2286 = vmatmul.mubr.f32.gmra.mxu0 %v2219
  %v2287 = vpop.f32.mrf.mxu0
  %v2288 = vadd.f32 0.0, %v2287
  %v2289 = vpop.f32.mrf.mxu0
  %2290 = vdwg.mxu0
  %2291 = vst.msk [vmem:[#allocation2] sm:$0xff] %vm142, %v2212
  %2292 = vst.msk [vmem:[#allocation2 + $0x8] sm:$0xff] %vm142, %v2288
  %2293 = vrot.lane.b32.xlu0 %v1955, 120
  %v2294 = vpop.permute.xlu0 %2293
  %2295 = vrot.lane.b32.xlu0 %v1955, 88
  %v2296 = vpop.permute.xlu0 %2295
  %v2297 = vsel %vm142, %v2294, 0
  %v2299 = vsel %vm142, %v2296, 0
  %2301 = vmatprep.subr.mxu0 0.0
  %2302 = vmatpush1.xpose.msra.mxu0 0.0
  %2303 = vmatprep.subr.mxu0 0.0
  %2304 = vmatpush1.xpose.msra.mxu0 0.0
  %2305 = vmatprep.subr.mxu0 0.0
  %2306 = vmatpush1.xpose.msra.mxu0 0.0
  %2307 = vmatprep.subr.mxu0 0.0
  %2308 = vmatpush1.xpose.msra.mxu0 0.0
  %2309 = vmatprep.subr.mxu0 0.0
  %2310 = vmatpush1.xpose.msra.mxu0 0.0
  %2311 = vmatprep.subr.mxu0 0.0
  %2312 = vmatpush1.xpose.msra.mxu0 0.0
  %2313 = vmatprep.subr.mxu0 0.0
  %2314 = vmatpush1.xpose.msra.mxu0 0.0
  %2315 = vmatprep.subr.mxu0 0.0
  %2316 = vmatpush1.xpose.msra.mxu0 0.0
  %2317 = vmatprep.subr.mxu0 0.0
  %2318 = vmatpush1.xpose.msra.mxu0 0.0
  %2319 = vmatprep.subr.mxu0 0.0
  %2320 = vmatpush1.xpose.msra.mxu0 0.0
  %2321 = vmatprep.subr.mxu0 0.0
  %2322 = vmatpush1.xpose.msra.mxu0 0.0
  %2323 = vmatprep.subr.mxu0 0.0
  %2324 = vmatpush1.xpose.msra.mxu0 0.0
  %2325 = vmatprep.subr.mxu0 0.0
  %2326 = vmatpush1.xpose.msra.mxu0 0.0
  %2327 = vmatprep.subr.mxu0 0.0
  %2328 = vmatpush1.xpose.msra.mxu0 0.0
  %2329 = vmatprep.subr.mxu0 0.0
  %2330 = vmatpush1.xpose.msra.mxu0 0.0
  %2331 = vmatprep.subr.mxu0 0.0
  %2332 = vmatpush1.xpose.msra.mxu0 %v2299
  %2333 = vmatprep.subr.mxu0 0.0
  %2334 = vmatpush2.xpose.msra.mxu0 0.0
  %2335 = vmatprep.subr.mxu0 0.0
  %2336 = vmatpush2.xpose.msra.mxu0 0.0
  %2337 = vmatprep.subr.mxu0 0.0
  %2338 = vmatpush2.xpose.msra.mxu0 0.0
  %2339 = vmatprep.subr.mxu0 0.0
  %2340 = vmatpush2.xpose.msra.mxu0 0.0
  %2341 = vmatprep.subr.mxu0 0.0
  %2342 = vmatpush2.xpose.msra.mxu0 0.0
  %2343 = vmatprep.subr.mxu0 0.0
  %2344 = vmatpush2.xpose.msra.mxu0 0.0
  %2345 = vmatprep.subr.mxu0 0.0
  %2346 = vmatpush2.xpose.msra.mxu0 0.0
  %2347 = vmatprep.subr.mxu0 0.0
  %2348 = vmatpush2.xpose.msra.mxu0 0.0
  %2349 = vmatprep.subr.mxu0 0.0
  %2350 = vmatpush2.xpose.msra.mxu0 0.0
  %2351 = vmatprep.subr.mxu0 0.0
  %2352 = vmatpush2.xpose.msra.mxu0 0.0
  %2353 = vmatprep.subr.mxu0 0.0
  %2354 = vmatpush2.xpose.msra.mxu0 0.0
  %2355 = vmatprep.subr.mxu0 0.0
  %2356 = vmatpush2.xpose.msra.mxu0 0.0
  %2357 = vmatprep.subr.mxu0 0.0
  %2358 = vmatpush2.xpose.msra.mxu0 0.0
  %2359 = vmatprep.subr.mxu0 0.0
  %2360 = vmatpush2.xpose.msra.mxu0 0.0
  %2361 = vmatprep.subr.mxu0 0.0
  %2362 = vmatpush2.xpose.msra.mxu0 0.0
  %2363 = vmatprep.subr.mxu0 0.0
  %2364 = vmatpush2.xpose.msra.mxu0 0.0
  %2365 = vmatprep.mubr.f32.mxu0 0.0
  %2366 = vmatmul.mubr.f32.gmra.mxu0 %v2297
  %v2367 = vpop.f32.mrf.mxu0
  %v2368 = vadd.f32 %v132, %v2367
  %v2369 = vpop.f32.mrf.mxu0
  %2370 = vdwg.mxu0
  %2371 = vrot.lane.b32.xlu0 %v1960, 120
  %v2372 = vpop.permute.xlu0 %2371
  %2373 = vrot.lane.b32.xlu0 %v1960, 88
  %v2374 = vpop.permute.xlu0 %2373
  %v2375 = vsel %vm142, %v2372, 0
  %v2377 = vsel %vm142, %v2374, 0
  %2379 = vmatprep.subr.mxu0 0.0
  %2380 = vmatpush1.xpose.msra.mxu0 0.0
  %2381 = vmatprep.subr.mxu0 0.0
  %2382 = vmatpush1.xpose.msra.mxu0 0.0
  %2383 = vmatprep.subr.mxu0 0.0
  %2384 = vmatpush1.xpose.msra.mxu0 0.0
  %2385 = vmatprep.subr.mxu0 0.0
  %2386 = vmatpush1.xpose.msra.mxu0 0.0
  %2387 = vmatprep.subr.mxu0 0.0
  %2388 = vmatpush1.xpose.msra.mxu0 0.0
  %2389 = vmatprep.subr.mxu0 0.0
  %2390 = vmatpush1.xpose.msra.mxu0 0.0
  %2391 = vmatprep.subr.mxu0 0.0
  %2392 = vmatpush1.xpose.msra.mxu0 0.0
  %2393 = vmatprep.subr.mxu0 0.0
  %2394 = vmatpush1.xpose.msra.mxu0 0.0
  %2395 = vmatprep.subr.mxu0 0.0
  %2396 = vmatpush1.xpose.msra.mxu0 0.0
  %2397 = vmatprep.subr.mxu0 0.0
  %2398 = vmatpush1.xpose.msra.mxu0 0.0
  %2399 = vmatprep.subr.mxu0 0.0
  %2400 = vmatpush1.xpose.msra.mxu0 0.0
  %2401 = vmatprep.subr.mxu0 0.0
  %2402 = vmatpush1.xpose.msra.mxu0 0.0
  %2403 = vmatprep.subr.mxu0 0.0
  %2404 = vmatpush1.xpose.msra.mxu0 0.0
  %2405 = vmatprep.subr.mxu0 0.0
  %2406 = vmatpush1.xpose.msra.mxu0 0.0
  %2407 = vmatprep.subr.mxu0 0.0
  %2408 = vmatpush1.xpose.msra.mxu0 0.0
  %2409 = vmatprep.subr.mxu0 0.0
  %2410 = vmatpush1.xpose.msra.mxu0 %v2377
  %2411 = vmatprep.subr.mxu0 0.0
  %2412 = vmatpush2.xpose.msra.mxu0 0.0
  %2413 = vmatprep.subr.mxu0 0.0
  %2414 = vmatpush2.xpose.msra.mxu0 0.0
  %2415 = vmatprep.subr.mxu0 0.0
  %2416 = vmatpush2.xpose.msra.mxu0 0.0
  %2417 = vmatprep.subr.mxu0 0.0
  %2418 = vmatpush2.xpose.msra.mxu0 0.0
  %2419 = vmatprep.subr.mxu0 0.0
  %2420 = vmatpush2.xpose.msra.mxu0 0.0
  %2421 = vmatprep.subr.mxu0 0.0
  %2422 = vmatpush2.xpose.msra.mxu0 0.0
  %2423 = vmatprep.subr.mxu0 0.0
  %2424 = vmatpush2.xpose.msra.mxu0 0.0
  %2425 = vmatprep.subr.mxu0 0.0
  %2426 = vmatpush2.xpose.msra.mxu0 0.0
  %2427 = vmatprep.subr.mxu0 0.0
  %2428 = vmatpush2.xpose.msra.mxu0 0.0
  %2429 = vmatprep.subr.mxu0 0.0
  %2430 = vmatpush2.xpose.msra.mxu0 0.0
  %2431 = vmatprep.subr.mxu0 0.0
  %2432 = vmatpush2.xpose.msra.mxu0 0.0
  %2433 = vmatprep.subr.mxu0 0.0
  %2434 = vmatpush2.xpose.msra.mxu0 0.0
  %2435 = vmatprep.subr.mxu0 0.0
  %2436 = vmatpush2.xpose.msra.mxu0 0.0
  %2437 = vmatprep.subr.mxu0 0.0
  %2438 = vmatpush2.xpose.msra.mxu0 0.0
  %2439 = vmatprep.subr.mxu0 0.0
  %2440 = vmatpush2.xpose.msra.mxu0 0.0
  %2441 = vmatprep.subr.mxu0 0.0
  %2442 = vmatpush2.xpose.msra.mxu0 0.0
  %2443 = vmatprep.mubr.f32.mxu0 0.0
  %2444 = vmatmul.mubr.f32.gmra.mxu0 %v2375
  %v2445 = vpop.f32.mrf.mxu0
  %v2446 = vadd.f32 %v136, %v2445
  %v2447 = vpop.f32.mrf.mxu0
  %2448 = vdwg.mxu0
  %v2449 = vsel %vm142, %v2368, -inf
  %2450 = vmax.xlane.f32.xlu0 %v2449
  %v2451 = vpop.xlane.xlu0 %2450
  %v2452 = vsel %vm142, %v2446, -inf
  %2453 = vmax.xlane.f32.xlu0 %v2452
  %v2454 = vpop.xlane.xlu0 %2453
  %v2455 = vsub.f32 %v2368, %v2451
  %v2456 = vsub.f32 %v2446, %v2454
  %v2457 = vmul.f32 %v2455, 1.442695
  %v2458 = vpow.pop %v2457
  %v2459 = vmul.f32 %v2456, 1.442695
  %v2460 = vpow.pop %v2459
  %v2461 = vsel %vm142, %v2458, 0.0
  %2462 = vadd.xlane.f32.xlu0 %v2461
  %v2463 = vpop.xlane.xlu0 %2462
  %v2464 = vsel %vm142, %v2460, 0.0
  %2465 = vadd.xlane.f32.xlu0 %v2464
  %v2466 = vpop.xlane.xlu0 %2465
  %v2467 = vrcp.pop %v2463
  %v2468 = vrcp.pop %v2466
  %v2469 = vmul.f32 %v2458, %v2467
  %v2470 = vmul.f32 %v2460, %v2468
  %2471 = vrot.lane.b32.xlu0 %v1955, 56
  %v2472 = vpop.permute.xlu0 %2471
  %v2475 = vsel %vm142, %v2469, 0
  %2477 = vmatprep.subr.mxu0 0.0
  %2478 = vmatpush1.msra.mxu0 0.0
  %2479 = vmatprep.subr.mxu0 0.0
  %2480 = vmatpush1.msra.mxu0 0.0
  %2481 = vmatprep.subr.mxu0 0.0
  %2482 = vmatpush1.msra.mxu0 0.0
  %2483 = vmatprep.subr.mxu0 0.0
  %2484 = vmatpush1.msra.mxu0 0.0
  %2485 = vmatprep.subr.mxu0 0.0
  %2486 = vmatpush1.msra.mxu0 0.0
  %2487 = vmatprep.subr.mxu0 0.0
  %2488 = vmatpush1.msra.mxu0 0.0
  %2489 = vmatprep.subr.mxu0 0.0
  %2490 = vmatpush1.msra.mxu0 0.0
  %2491 = vmatprep.subr.mxu0 0.0
  %2492 = vmatpush1.msra.mxu0 0.0
  %2493 = vmatprep.subr.mxu0 0.0
  %2494 = vmatpush1.msra.mxu0 0.0
  %2495 = vmatprep.subr.mxu0 0.0
  %2496 = vmatpush1.msra.mxu0 0.0
  %2497 = vmatprep.subr.mxu0 0.0
  %2498 = vmatpush1.msra.mxu0 0.0
  %2499 = vmatprep.subr.mxu0 0.0
  %2500 = vmatpush1.msra.mxu0 0.0
  %2501 = vmatprep.subr.mxu0 0.0
  %2502 = vmatpush1.msra.mxu0 0.0
  %2503 = vmatprep.subr.mxu0 0.0
  %2504 = vmatpush1.msra.mxu0 0.0
  %2505 = vmatprep.subr.mxu0 0.0
  %2506 = vmatpush1.msra.mxu0 0.0
  %2507 = vmatprep.subr.mxu0 0.0
  %2508 = vmatpush1.msra.mxu0 %v2472
  %2509 = vmatprep.subr.mxu0 0.0
  %2510 = vmatpush2.msra.mxu0 0.0
  %2511 = vmatprep.subr.mxu0 0.0
  %2512 = vmatpush2.msra.mxu0 0.0
  %2513 = vmatprep.subr.mxu0 0.0
  %2514 = vmatpush2.msra.mxu0 0.0
  %2515 = vmatprep.subr.mxu0 0.0
  %2516 = vmatpush2.msra.mxu0 0.0
  %2517 = vmatprep.subr.mxu0 0.0
  %2518 = vmatpush2.msra.mxu0 0.0
  %2519 = vmatprep.subr.mxu0 0.0
  %2520 = vmatpush2.msra.mxu0 0.0
  %2521 = vmatprep.subr.mxu0 0.0
  %2522 = vmatpush2.msra.mxu0 0.0
  %2523 = vmatprep.subr.mxu0 0.0
  %2524 = vmatpush2.msra.mxu0 0.0
  %2525 = vmatprep.subr.mxu0 0.0
  %2526 = vmatpush2.msra.mxu0 0.0
  %2527 = vmatprep.subr.mxu0 0.0
  %2528 = vmatpush2.msra.mxu0 0.0
  %2529 = vmatprep.subr.mxu0 0.0
  %2530 = vmatpush2.msra.mxu0 0.0
  %2531 = vmatprep.subr.mxu0 0.0
  %2532 = vmatpush2.msra.mxu0 0.0
  %2533 = vmatprep.subr.mxu0 0.0
  %2534 = vmatpush2.msra.mxu0 0.0
  %2535 = vmatprep.subr.mxu0 0.0
  %2536 = vmatpush2.msra.mxu0 0.0
  %2537 = vmatprep.subr.mxu0 0.0
  %2538 = vmatpush2.msra.mxu0 0.0
  %2539 = vmatprep.subr.mxu0 0.0
  %2540 = vmatpush2.msra.mxu0 0.0
  %2541 = vmatprep.mubr.f32.mxu0 0.0
  %2542 = vmatmul.mubr.f32.gmra.mxu0 %v2475
  %v2543 = vpop.f32.mrf.mxu0
  %v2544 = vadd.f32 0.0, %v2543
  %v2545 = vpop.f32.mrf.mxu0
  %2546 = vdwg.mxu0
  %2547 = vrot.lane.b32.xlu0 %v1960, 56
  %v2548 = vpop.permute.xlu0 %2547
  %v2551 = vsel %vm142, %v2470, 0
  %2553 = vmatprep.subr.mxu0 0.0
  %2554 = vmatpush1.msra.mxu0 0.0
  %2555 = vmatprep.subr.mxu0 0.0
  %2556 = vmatpush1.msra.mxu0 0.0
  %2557 = vmatprep.subr.mxu0 0.0
  %2558 = vmatpush1.msra.mxu0 0.0
  %2559 = vmatprep.subr.mxu0 0.0
  %2560 = vmatpush1.msra.mxu0 0.0
  %2561 = vmatprep.subr.mxu0 0.0
  %2562 = vmatpush1.msra.mxu0 0.0
  %2563 = vmatprep.subr.mxu0 0.0
  %2564 = vmatpush1.msra.mxu0 0.0
  %2565 = vmatprep.subr.mxu0 0.0
  %2566 = vmatpush1.msra.mxu0 0.0
  %2567 = vmatprep.subr.mxu0 0.0
  %2568 = vmatpush1.msra.mxu0 0.0
  %2569 = vmatprep.subr.mxu0 0.0
  %2570 = vmatpush1.msra.mxu0 0.0
  %2571 = vmatprep.subr.mxu0 0.0
  %2572 = vmatpush1.msra.mxu0 0.0
  %2573 = vmatprep.subr.mxu0 0.0
  %2574 = vmatpush1.msra.mxu0 0.0
  %2575 = vmatprep.subr.mxu0 0.0
  %2576 = vmatpush1.msra.mxu0 0.0
  %2577 = vmatprep.subr.mxu0 0.0
  %2578 = vmatpush1.msra.mxu0 0.0
  %2579 = vmatprep.subr.mxu0 0.0
  %2580 = vmatpush1.msra.mxu0 0.0
  %2581 = vmatprep.subr.mxu0 0.0
  %2582 = vmatpush1.msra.mxu0 0.0
  %2583 = vmatprep.subr.mxu0 0.0
  %2584 = vmatpush1.msra.mxu0 %v2548
  %2585 = vmatprep.subr.mxu0 0.0
  %2586 = vmatpush2.msra.mxu0 0.0
  %2587 = vmatprep.subr.mxu0 0.0
  %2588 = vmatpush2.msra.mxu0 0.0
  %2589 = vmatprep.subr.mxu0 0.0
  %2590 = vmatpush2.msra.mxu0 0.0
  %2591 = vmatprep.subr.mxu0 0.0
  %2592 = vmatpush2.msra.mxu0 0.0
  %2593 = vmatprep.subr.mxu0 0.0
  %2594 = vmatpush2.msra.mxu0 0.0
  %2595 = vmatprep.subr.mxu0 0.0
  %2596 = vmatpush2.msra.mxu0 0.0
  %2597 = vmatprep.subr.mxu0 0.0
  %2598 = vmatpush2.msra.mxu0 0.0
  %2599 = vmatprep.subr.mxu0 0.0
  %2600 = vmatpush2.msra.mxu0 0.0
  %2601 = vmatprep.subr.mxu0 0.0
  %2602 = vmatpush2.msra.mxu0 0.0
  %2603 = vmatprep.subr.mxu0 0.0
  %2604 = vmatpush2.msra.mxu0 0.0
  %2605 = vmatprep.subr.mxu0 0.0
  %2606 = vmatpush2.msra.mxu0 0.0
  %2607 = vmatprep.subr.mxu0 0.0
  %2608 = vmatpush2.msra.mxu0 0.0
  %2609 = vmatprep.subr.mxu0 0.0
  %2610 = vmatpush2.msra.mxu0 0.0
  %2611 = vmatprep.subr.mxu0 0.0
  %2612 = vmatpush2.msra.mxu0 0.0
  %2613 = vmatprep.subr.mxu0 0.0
  %2614 = vmatpush2.msra.mxu0 0.0
  %2615 = vmatprep.subr.mxu0 0.0
  %2616 = vmatpush2.msra.mxu0 0.0
  %2617 = vmatprep.mubr.f32.mxu0 0.0
  %2618 = vmatmul.mubr.f32.gmra.mxu0 %v2551
  %v2619 = vpop.f32.mrf.mxu0
  %v2620 = vadd.f32 0.0, %v2619
  %v2621 = vpop.f32.mrf.mxu0
  %2622 = vdwg.mxu0
  %2625 = vrot.lane.b32.xlu0 %v2544, 8
  %v2626 = vpop.permute.xlu0 %2625
  %2627 = vrot.lane.b32.xlu0 %v2620, 8
  %v2628 = vpop.permute.xlu0 %2627
  %2631 = vst.msk [vmem:[#allocation2] sm:$0xff] %vm808, %v2626
  %2632 = vst.msk [vmem:[#allocation2 + $0x8] sm:$0xff] %vm808, %v2628
  %2633 = vrot.lane.b32.xlu0 %v1955, 112
  %v2634 = vpop.permute.xlu0 %2633
  %2635 = vrot.lane.b32.xlu0 %v1955, 80
  %v2636 = vpop.permute.xlu0 %2635
  %v2637 = vsel %vm142, %v2634, 0
  %v2639 = vsel %vm142, %v2636, 0
  %2641 = vmatprep.subr.mxu0 0.0
  %2642 = vmatpush1.xpose.msra.mxu0 0.0
  %2643 = vmatprep.subr.mxu0 0.0
  %2644 = vmatpush1.xpose.msra.mxu0 0.0
  %2645 = vmatprep.subr.mxu0 0.0
  %2646 = vmatpush1.xpose.msra.mxu0 0.0
  %2647 = vmatprep.subr.mxu0 0.0
  %2648 = vmatpush1.xpose.msra.mxu0 0.0
  %2649 = vmatprep.subr.mxu0 0.0
  %2650 = vmatpush1.xpose.msra.mxu0 0.0
  %2651 = vmatprep.subr.mxu0 0.0
  %2652 = vmatpush1.xpose.msra.mxu0 0.0
  %2653 = vmatprep.subr.mxu0 0.0
  %2654 = vmatpush1.xpose.msra.mxu0 0.0
  %2655 = vmatprep.subr.mxu0 0.0
  %2656 = vmatpush1.xpose.msra.mxu0 0.0
  %2657 = vmatprep.subr.mxu0 0.0
  %2658 = vmatpush1.xpose.msra.mxu0 0.0
  %2659 = vmatprep.subr.mxu0 0.0
  %2660 = vmatpush1.xpose.msra.mxu0 0.0
  %2661 = vmatprep.subr.mxu0 0.0
  %2662 = vmatpush1.xpose.msra.mxu0 0.0
  %2663 = vmatprep.subr.mxu0 0.0
  %2664 = vmatpush1.xpose.msra.mxu0 0.0
  %2665 = vmatprep.subr.mxu0 0.0
  %2666 = vmatpush1.xpose.msra.mxu0 0.0
  %2667 = vmatprep.subr.mxu0 0.0
  %2668 = vmatpush1.xpose.msra.mxu0 0.0
  %2669 = vmatprep.subr.mxu0 0.0
  %2670 = vmatpush1.xpose.msra.mxu0 0.0
  %2671 = vmatprep.subr.mxu0 0.0
  %2672 = vmatpush1.xpose.msra.mxu0 %v2639
  %2673 = vmatprep.subr.mxu0 0.0
  %2674 = vmatpush2.xpose.msra.mxu0 0.0
  %2675 = vmatprep.subr.mxu0 0.0
  %2676 = vmatpush2.xpose.msra.mxu0 0.0
  %2677 = vmatprep.subr.mxu0 0.0
  %2678 = vmatpush2.xpose.msra.mxu0 0.0
  %2679 = vmatprep.subr.mxu0 0.0
  %2680 = vmatpush2.xpose.msra.mxu0 0.0
  %2681 = vmatprep.subr.mxu0 0.0
  %2682 = vmatpush2.xpose.msra.mxu0 0.0
  %2683 = vmatprep.subr.mxu0 0.0
  %2684 = vmatpush2.xpose.msra.mxu0 0.0
  %2685 = vmatprep.subr.mxu0 0.0
  %2686 = vmatpush2.xpose.msra.mxu0 0.0
  %2687 = vmatprep.subr.mxu0 0.0
  %2688 = vmatpush2.xpose.msra.mxu0 0.0
  %2689 = vmatprep.subr.mxu0 0.0
  %2690 = vmatpush2.xpose.msra.mxu0 0.0
  %2691 = vmatprep.subr.mxu0 0.0
  %2692 = vmatpush2.xpose.msra.mxu0 0.0
  %2693 = vmatprep.subr.mxu0 0.0
  %2694 = vmatpush2.xpose.msra.mxu0 0.0
  %2695 = vmatprep.subr.mxu0 0.0
  %2696 = vmatpush2.xpose.msra.mxu0 0.0
  %2697 = vmatprep.subr.mxu0 0.0
  %2698 = vmatpush2.xpose.msra.mxu0 0.0
  %2699 = vmatprep.subr.mxu0 0.0
  %2700 = vmatpush2.xpose.msra.mxu0 0.0
  %2701 = vmatprep.subr.mxu0 0.0
  %2702 = vmatpush2.xpose.msra.mxu0 0.0
  %2703 = vmatprep.subr.mxu0 0.0
  %2704 = vmatpush2.xpose.msra.mxu0 0.0
  %2705 = vmatprep.mubr.f32.mxu0 0.0
  %2706 = vmatmul.mubr.f32.gmra.mxu0 %v2637
  %v2707 = vpop.f32.mrf.mxu0
  %v2708 = vadd.f32 %v132, %v2707
  %v2709 = vpop.f32.mrf.mxu0
  %2710 = vdwg.mxu0
  %2711 = vrot.lane.b32.xlu0 %v1960, 112
  %v2712 = vpop.permute.xlu0 %2711
  %2713 = vrot.lane.b32.xlu0 %v1960, 80
  %v2714 = vpop.permute.xlu0 %2713
  %v2715 = vsel %vm142, %v2712, 0
  %v2717 = vsel %vm142, %v2714, 0
  %2719 = vmatprep.subr.mxu0 0.0
  %2720 = vmatpush1.xpose.msra.mxu0 0.0
  %2721 = vmatprep.subr.mxu0 0.0
  %2722 = vmatpush1.xpose.msra.mxu0 0.0
  %2723 = vmatprep.subr.mxu0 0.0
  %2724 = vmatpush1.xpose.msra.mxu0 0.0
  %2725 = vmatprep.subr.mxu0 0.0
  %2726 = vmatpush1.xpose.msra.mxu0 0.0
  %2727 = vmatprep.subr.mxu0 0.0
  %2728 = vmatpush1.xpose.msra.mxu0 0.0
  %2729 = vmatprep.subr.mxu0 0.0
  %2730 = vmatpush1.xpose.msra.mxu0 0.0
  %2731 = vmatprep.subr.mxu0 0.0
  %2732 = vmatpush1.xpose.msra.mxu0 0.0
  %2733 = vmatprep.subr.mxu0 0.0
  %2734 = vmatpush1.xpose.msra.mxu0 0.0
  %2735 = vmatprep.subr.mxu0 0.0
  %2736 = vmatpush1.xpose.msra.mxu0 0.0
  %2737 = vmatprep.subr.mxu0 0.0
  %2738 = vmatpush1.xpose.msra.mxu0 0.0
  %2739 = vmatprep.subr.mxu0 0.0
  %2740 = vmatpush1.xpose.msra.mxu0 0.0
  %2741 = vmatprep.subr.mxu0 0.0
  %2742 = vmatpush1.xpose.msra.mxu0 0.0
  %2743 = vmatprep.subr.mxu0 0.0
  %2744 = vmatpush1.xpose.msra.mxu0 0.0
  %2745 = vmatprep.subr.mxu0 0.0
  %2746 = vmatpush1.xpose.msra.mxu0 0.0
  %2747 = vmatprep.subr.mxu0 0.0
  %2748 = vmatpush1.xpose.msra.mxu0 0.0
  %2749 = vmatprep.subr.mxu0 0.0
  %2750 = vmatpush1.xpose.msra.mxu0 %v2717
  %2751 = vmatprep.subr.mxu0 0.0
  %2752 = vmatpush2.xpose.msra.mxu0 0.0
  %2753 = vmatprep.subr.mxu0 0.0
  %2754 = vmatpush2.xpose.msra.mxu0 0.0
  %2755 = vmatprep.subr.mxu0 0.0
  %2756 = vmatpush2.xpose.msra.mxu0 0.0
  %2757 = vmatprep.subr.mxu0 0.0
  %2758 = vmatpush2.xpose.msra.mxu0 0.0
  %2759 = vmatprep.subr.mxu0 0.0
  %2760 = vmatpush2.xpose.msra.mxu0 0.0
  %2761 = vmatprep.subr.mxu0 0.0
  %2762 = vmatpush2.xpose.msra.mxu0 0.0
  %2763 = vmatprep.subr.mxu0 0.0
  %2764 = vmatpush2.xpose.msra.mxu0 0.0
  %2765 = vmatprep.subr.mxu0 0.0
  %2766 = vmatpush2.xpose.msra.mxu0 0.0
  %2767 = vmatprep.subr.mxu0 0.0
  %2768 = vmatpush2.xpose.msra.mxu0 0.0
  %2769 = vmatprep.subr.mxu0 0.0
  %2770 = vmatpush2.xpose.msra.mxu0 0.0
  %2771 = vmatprep.subr.mxu0 0.0
  %2772 = vmatpush2.xpose.msra.mxu0 0.0
  %2773 = vmatprep.subr.mxu0 0.0
  %2774 = vmatpush2.xpose.msra.mxu0 0.0
  %2775 = vmatprep.subr.mxu0 0.0
  %2776 = vmatpush2.xpose.msra.mxu0 0.0
  %2777 = vmatprep.subr.mxu0 0.0
  %2778 = vmatpush2.xpose.msra.mxu0 0.0
  %2779 = vmatprep.subr.mxu0 0.0
  %2780 = vmatpush2.xpose.msra.mxu0 0.0
  %2781 = vmatprep.subr.mxu0 0.0
  %2782 = vmatpush2.xpose.msra.mxu0 0.0
  %2783 = vmatprep.mubr.f32.mxu0 0.0
  %2784 = vmatmul.mubr.f32.gmra.mxu0 %v2715
  %v2785 = vpop.f32.mrf.mxu0
  %v2786 = vadd.f32 %v136, %v2785
  %v2787 = vpop.f32.mrf.mxu0
  %2788 = vdwg.mxu0
  %v2789 = vsel %vm142, %v2708, -inf
  %2790 = vmax.xlane.f32.xlu0 %v2789
  %v2791 = vpop.xlane.xlu0 %2790
  %v2792 = vsel %vm142, %v2786, -inf
  %2793 = vmax.xlane.f32.xlu0 %v2792
  %v2794 = vpop.xlane.xlu0 %2793
  %v2795 = vsub.f32 %v2708, %v2791
  %v2796 = vsub.f32 %v2786, %v2794
  %v2797 = vmul.f32 %v2795, 1.442695
  %v2798 = vpow.pop %v2797
  %v2799 = vmul.f32 %v2796, 1.442695
  %v2800 = vpow.pop %v2799
  %v2801 = vsel %vm142, %v2798, 0.0
  %2802 = vadd.xlane.f32.xlu0 %v2801
  %v2803 = vpop.xlane.xlu0 %2802
  %v2804 = vsel %vm142, %v2800, 0.0
  %2805 = vadd.xlane.f32.xlu0 %v2804
  %v2806 = vpop.xlane.xlu0 %2805
  %v2807 = vrcp.pop %v2803
  %v2808 = vrcp.pop %v2806
  %v2809 = vmul.f32 %v2798, %v2807
  %v2810 = vmul.f32 %v2800, %v2808
  %2811 = vrot.lane.b32.xlu0 %v1955, 48
  %v2812 = vpop.permute.xlu0 %2811
  %v2815 = vsel %vm142, %v2809, 0
  %2817 = vmatprep.subr.mxu0 0.0
  %2818 = vmatpush1.msra.mxu0 0.0
  %2819 = vmatprep.subr.mxu0 0.0
  %2820 = vmatpush1.msra.mxu0 0.0
  %2821 = vmatprep.subr.mxu0 0.0
  %2822 = vmatpush1.msra.mxu0 0.0
  %2823 = vmatprep.subr.mxu0 0.0
  %2824 = vmatpush1.msra.mxu0 0.0
  %2825 = vmatprep.subr.mxu0 0.0
  %2826 = vmatpush1.msra.mxu0 0.0
  %2827 = vmatprep.subr.mxu0 0.0
  %2828 = vmatpush1.msra.mxu0 0.0
  %2829 = vmatprep.subr.mxu0 0.0
  %2830 = vmatpush1.msra.mxu0 0.0
  %2831 = vmatprep.subr.mxu0 0.0
  %2832 = vmatpush1.msra.mxu0 0.0
  %2833 = vmatprep.subr.mxu0 0.0
  %2834 = vmatpush1.msra.mxu0 0.0
  %2835 = vmatprep.subr.mxu0 0.0
  %2836 = vmatpush1.msra.mxu0 0.0
  %2837 = vmatprep.subr.mxu0 0.0
  %2838 = vmatpush1.msra.mxu0 0.0
  %2839 = vmatprep.subr.mxu0 0.0
  %2840 = vmatpush1.msra.mxu0 0.0
  %2841 = vmatprep.subr.mxu0 0.0
  %2842 = vmatpush1.msra.mxu0 0.0
  %2843 = vmatprep.subr.mxu0 0.0
  %2844 = vmatpush1.msra.mxu0 0.0
  %2845 = vmatprep.subr.mxu0 0.0
  %2846 = vmatpush1.msra.mxu0 0.0
  %2847 = vmatprep.subr.mxu0 0.0
  %2848 = vmatpush1.msra.mxu0 %v2812
  %2849 = vmatprep.subr.mxu0 0.0
  %2850 = vmatpush2.msra.mxu0 0.0
  %2851 = vmatprep.subr.mxu0 0.0
  %2852 = vmatpush2.msra.mxu0 0.0
  %2853 = vmatprep.subr.mxu0 0.0
  %2854 = vmatpush2.msra.mxu0 0.0
  %2855 = vmatprep.subr.mxu0 0.0
  %2856 = vmatpush2.msra.mxu0 0.0
  %2857 = vmatprep.subr.mxu0 0.0
  %2858 = vmatpush2.msra.mxu0 0.0
  %2859 = vmatprep.subr.mxu0 0.0
  %2860 = vmatpush2.msra.mxu0 0.0
  %2861 = vmatprep.subr.mxu0 0.0
  %2862 = vmatpush2.msra.mxu0 0.0
  %2863 = vmatprep.subr.mxu0 0.0
  %2864 = vmatpush2.msra.mxu0 0.0
  %2865 = vmatprep.subr.mxu0 0.0
  %2866 = vmatpush2.msra.mxu0 0.0
  %2867 = vmatprep.subr.mxu0 0.0
  %2868 = vmatpush2.msra.mxu0 0.0
  %2869 = vmatprep.subr.mxu0 0.0
  %2870 = vmatpush2.msra.mxu0 0.0
  %2871 = vmatprep.subr.mxu0 0.0
  %2872 = vmatpush2.msra.mxu0 0.0
  %2873 = vmatprep.subr.mxu0 0.0
  %2874 = vmatpush2.msra.mxu0 0.0
  %2875 = vmatprep.subr.mxu0 0.0
  %2876 = vmatpush2.msra.mxu0 0.0
  %2877 = vmatprep.subr.mxu0 0.0
  %2878 = vmatpush2.msra.mxu0 0.0
  %2879 = vmatprep.subr.mxu0 0.0
  %2880 = vmatpush2.msra.mxu0 0.0
  %2881 = vmatprep.mubr.f32.mxu0 0.0
  %2882 = vmatmul.mubr.f32.gmra.mxu0 %v2815
  %v2883 = vpop.f32.mrf.mxu0
  %v2884 = vadd.f32 0.0, %v2883
  %v2885 = vpop.f32.mrf.mxu0
  %2886 = vdwg.mxu0
  %2887 = vrot.lane.b32.xlu0 %v1960, 48
  %v2888 = vpop.permute.xlu0 %2887
  %v2891 = vsel %vm142, %v2810, 0
  %2893 = vmatprep.subr.mxu0 0.0
  %2894 = vmatpush1.msra.mxu0 0.0
  %2895 = vmatprep.subr.mxu0 0.0
  %2896 = vmatpush1.msra.mxu0 0.0
  %2897 = vmatprep.subr.mxu0 0.0
  %2898 = vmatpush1.msra.mxu0 0.0
  %2899 = vmatprep.subr.mxu0 0.0
  %2900 = vmatpush1.msra.mxu0 0.0
  %2901 = vmatprep.subr.mxu0 0.0
  %2902 = vmatpush1.msra.mxu0 0.0
  %2903 = vmatprep.subr.mxu0 0.0
  %2904 = vmatpush1.msra.mxu0 0.0
  %2905 = vmatprep.subr.mxu0 0.0
  %2906 = vmatpush1.msra.mxu0 0.0
  %2907 = vmatprep.subr.mxu0 0.0
  %2908 = vmatpush1.msra.mxu0 0.0
  %2909 = vmatprep.subr.mxu0 0.0
  %2910 = vmatpush1.msra.mxu0 0.0
  %2911 = vmatprep.subr.mxu0 0.0
  %2912 = vmatpush1.msra.mxu0 0.0
  %2913 = vmatprep.subr.mxu0 0.0
  %2914 = vmatpush1.msra.mxu0 0.0
  %2915 = vmatprep.subr.mxu0 0.0
  %2916 = vmatpush1.msra.mxu0 0.0
  %2917 = vmatprep.subr.mxu0 0.0
  %2918 = vmatpush1.msra.mxu0 0.0
  %2919 = vmatprep.subr.mxu0 0.0
  %2920 = vmatpush1.msra.mxu0 0.0
  %2921 = vmatprep.subr.mxu0 0.0
  %2922 = vmatpush1.msra.mxu0 0.0
  %2923 = vmatprep.subr.mxu0 0.0
  %2924 = vmatpush1.msra.mxu0 %v2888
  %2925 = vmatprep.subr.mxu0 0.0
  %2926 = vmatpush2.msra.mxu0 0.0
  %2927 = vmatprep.subr.mxu0 0.0
  %2928 = vmatpush2.msra.mxu0 0.0
  %2929 = vmatprep.subr.mxu0 0.0
  %2930 = vmatpush2.msra.mxu0 0.0
  %2931 = vmatprep.subr.mxu0 0.0
  %2932 = vmatpush2.msra.mxu0 0.0
  %2933 = vmatprep.subr.mxu0 0.0
  %2934 = vmatpush2.msra.mxu0 0.0
  %2935 = vmatprep.subr.mxu0 0.0
  %2936 = vmatpush2.msra.mxu0 0.0
  %2937 = vmatprep.subr.mxu0 0.0
  %2938 = vmatpush2.msra.mxu0 0.0
  %2939 = vmatprep.subr.mxu0 0.0
  %2940 = vmatpush2.msra.mxu0 0.0
  %2941 = vmatprep.subr.mxu0 0.0
  %2942 = vmatpush2.msra.mxu0 0.0
  %2943 = vmatprep.subr.mxu0 0.0
  %2944 = vmatpush2.msra.mxu0 0.0
  %2945 = vmatprep.subr.mxu0 0.0
  %2946 = vmatpush2.msra.mxu0 0.0
  %2947 = vmatprep.subr.mxu0 0.0
  %2948 = vmatpush2.msra.mxu0 0.0
  %2949 = vmatprep.subr.mxu0 0.0
  %2950 = vmatpush2.msra.mxu0 0.0
  %2951 = vmatprep.subr.mxu0 0.0
  %2952 = vmatpush2.msra.mxu0 0.0
  %2953 = vmatprep.subr.mxu0 0.0
  %2954 = vmatpush2.msra.mxu0 0.0
  %2955 = vmatprep.subr.mxu0 0.0
  %2956 = vmatpush2.msra.mxu0 0.0
  %2957 = vmatprep.mubr.f32.mxu0 0.0
  %2958 = vmatmul.mubr.f32.gmra.mxu0 %v2891
  %v2959 = vpop.f32.mrf.mxu0
  %v2960 = vadd.f32 0.0, %v2959
  %v2961 = vpop.f32.mrf.mxu0
  %2962 = vdwg.mxu0
  %2965 = vrot.lane.b32.xlu0 %v2884, 16
  %v2966 = vpop.permute.xlu0 %2965
  %2967 = vrot.lane.b32.xlu0 %v2960, 16
  %v2968 = vpop.permute.xlu0 %2967
  %2971 = vst.msk [vmem:[#allocation2] sm:$0xff] %vm1149, %v2966
  %2972 = vst.msk [vmem:[#allocation2 + $0x8] sm:$0xff] %vm1149, %v2968
  %2973 = vrot.lane.b32.xlu0 %v1955, 104
  %v2974 = vpop.permute.xlu0 %2973
  %2975 = vrot.lane.b32.xlu0 %v1955, 72
  %v2976 = vpop.permute.xlu0 %2975
  %v2977 = vsel %vm142, %v2974, 0
  %v2979 = vsel %vm142, %v2976, 0
  %2981 = vmatprep.subr.mxu0 0.0
  %2982 = vmatpush1.xpose.msra.mxu0 0.0
  %2983 = vmatprep.subr.mxu0 0.0
  %2984 = vmatpush1.xpose.msra.mxu0 0.0
  %2985 = vmatprep.subr.mxu0 0.0
  %2986 = vmatpush1.xpose.msra.mxu0 0.0
  %2987 = vmatprep.subr.mxu0 0.0
  %2988 = vmatpush1.xpose.msra.mxu0 0.0
  %2989 = vmatprep.subr.mxu0 0.0
  %2990 = vmatpush1.xpose.msra.mxu0 0.0
  %2991 = vmatprep.subr.mxu0 0.0
  %2992 = vmatpush1.xpose.msra.mxu0 0.0
  %2993 = vmatprep.subr.mxu0 0.0
  %2994 = vmatpush1.xpose.msra.mxu0 0.0
  %2995 = vmatprep.subr.mxu0 0.0
  %2996 = vmatpush1.xpose.msra.mxu0 0.0
  %2997 = vmatprep.subr.mxu0 0.0
  %2998 = vmatpush1.xpose.msra.mxu0 0.0
  %2999 = vmatprep.subr.mxu0 0.0
  %3000 = vmatpush1.xpose.msra.mxu0 0.0
  %3001 = vmatprep.subr.mxu0 0.0
  %3002 = vmatpush1.xpose.msra.mxu0 0.0
  %3003 = vmatprep.subr.mxu0 0.0
  %3004 = vmatpush1.xpose.msra.mxu0 0.0
  %3005 = vmatprep.subr.mxu0 0.0
  %3006 = vmatpush1.xpose.msra.mxu0 0.0
  %3007 = vmatprep.subr.mxu0 0.0
  %3008 = vmatpush1.xpose.msra.mxu0 0.0
  %3009 = vmatprep.subr.mxu0 0.0
  %3010 = vmatpush1.xpose.msra.mxu0 0.0
  %3011 = vmatprep.subr.mxu0 0.0
  %3012 = vmatpush1.xpose.msra.mxu0 %v2979
  %3013 = vmatprep.subr.mxu0 0.0
  %3014 = vmatpush2.xpose.msra.mxu0 0.0
  %3015 = vmatprep.subr.mxu0 0.0
  %3016 = vmatpush2.xpose.msra.mxu0 0.0
  %3017 = vmatprep.subr.mxu0 0.0
  %3018 = vmatpush2.xpose.msra.mxu0 0.0
  %3019 = vmatprep.subr.mxu0 0.0
  %3020 = vmatpush2.xpose.msra.mxu0 0.0
  %3021 = vmatprep.subr.mxu0 0.0
  %3022 = vmatpush2.xpose.msra.mxu0 0.0
  %3023 = vmatprep.subr.mxu0 0.0
  %3024 = vmatpush2.xpose.msra.mxu0 0.0
  %3025 = vmatprep.subr.mxu0 0.0
  %3026 = vmatpush2.xpose.msra.mxu0 0.0
  %3027 = vmatprep.subr.mxu0 0.0
  %3028 = vmatpush2.xpose.msra.mxu0 0.0
  %3029 = vmatprep.subr.mxu0 0.0
  %3030 = vmatpush2.xpose.msra.mxu0 0.0
  %3031 = vmatprep.subr.mxu0 0.0
  %3032 = vmatpush2.xpose.msra.mxu0 0.0
  %3033 = vmatprep.subr.mxu0 0.0
  %3034 = vmatpush2.xpose.msra.mxu0 0.0
  %3035 = vmatprep.subr.mxu0 0.0
  %3036 = vmatpush2.xpose.msra.mxu0 0.0
  %3037 = vmatprep.subr.mxu0 0.0
  %3038 = vmatpush2.xpose.msra.mxu0 0.0
  %3039 = vmatprep.subr.mxu0 0.0
  %3040 = vmatpush2.xpose.msra.mxu0 0.0
  %3041 = vmatprep.subr.mxu0 0.0
  %3042 = vmatpush2.xpose.msra.mxu0 0.0
  %3043 = vmatprep.subr.mxu0 0.0
  %3044 = vmatpush2.xpose.msra.mxu0 0.0
  %3045 = vmatprep.mubr.f32.mxu0 0.0
  %3046 = vmatmul.mubr.f32.gmra.mxu0 %v2977
  %v3047 = vpop.f32.mrf.mxu0
  %v3048 = vadd.f32 %v132, %v3047
  %v3049 = vpop.f32.mrf.mxu0
  %3050 = vdwg.mxu0
  %3051 = vrot.lane.b32.xlu0 %v1960, 104
  %v3052 = vpop.permute.xlu0 %3051
  %3053 = vrot.lane.b32.xlu0 %v1960, 72
  %v3054 = vpop.permute.xlu0 %3053
  %v3055 = vsel %vm142, %v3052, 0
  %v3057 = vsel %vm142, %v3054, 0
  %3059 = vmatprep.subr.mxu0 0.0
  %3060 = vmatpush1.xpose.msra.mxu0 0.0
  %3061 = vmatprep.subr.mxu0 0.0
  %3062 = vmatpush1.xpose.msra.mxu0 0.0
  %3063 = vmatprep.subr.mxu0 0.0
  %3064 = vmatpush1.xpose.msra.mxu0 0.0
  %3065 = vmatprep.subr.mxu0 0.0
  %3066 = vmatpush1.xpose.msra.mxu0 0.0
  %3067 = vmatprep.subr.mxu0 0.0
  %3068 = vmatpush1.xpose.msra.mxu0 0.0
  %3069 = vmatprep.subr.mxu0 0.0
  %3070 = vmatpush1.xpose.msra.mxu0 0.0
  %3071 = vmatprep.subr.mxu0 0.0
  %3072 = vmatpush1.xpose.msra.mxu0 0.0
  %3073 = vmatprep.subr.mxu0 0.0
  %3074 = vmatpush1.xpose.msra.mxu0 0.0
  %3075 = vmatprep.subr.mxu0 0.0
  %3076 = vmatpush1.xpose.msra.mxu0 0.0
  %3077 = vmatprep.subr.mxu0 0.0
  %3078 = vmatpush1.xpose.msra.mxu0 0.0
  %3079 = vmatprep.subr.mxu0 0.0
  %3080 = vmatpush1.xpose.msra.mxu0 0.0
  %3081 = vmatprep.subr.mxu0 0.0
  %3082 = vmatpush1.xpose.msra.mxu0 0.0
  %3083 = vmatprep.subr.mxu0 0.0
  %3084 = vmatpush1.xpose.msra.mxu0 0.0
  %3085 = vmatprep.subr.mxu0 0.0
  %3086 = vmatpush1.xpose.msra.mxu0 0.0
  %3087 = vmatprep.subr.mxu0 0.0
  %3088 = vmatpush1.xpose.msra.mxu0 0.0
  %3089 = vmatprep.subr.mxu0 0.0
  %3090 = vmatpush1.xpose.msra.mxu0 %v3057
  %3091 = vmatprep.subr.mxu0 0.0
  %3092 = vmatpush2.xpose.msra.mxu0 0.0
  %3093 = vmatprep.subr.mxu0 0.0
  %3094 = vmatpush2.xpose.msra.mxu0 0.0
  %3095 = vmatprep.subr.mxu0 0.0
  %3096 = vmatpush2.xpose.msra.mxu0 0.0
  %3097 = vmatprep.subr.mxu0 0.0
  %3098 = vmatpush2.xpose.msra.mxu0 0.0
  %3099 = vmatprep.subr.mxu0 0.0
  %3100 = vmatpush2.xpose.msra.mxu0 0.0
  %3101 = vmatprep.subr.mxu0 0.0
  %3102 = vmatpush2.xpose.msra.mxu0 0.0
  %3103 = vmatprep.subr.mxu0 0.0
  %3104 = vmatpush2.xpose.msra.mxu0 0.0
  %3105 = vmatprep.subr.mxu0 0.0
  %3106 = vmatpush2.xpose.msra.mxu0 0.0
  %3107 = vmatprep.subr.mxu0 0.0
  %3108 = vmatpush2.xpose.msra.mxu0 0.0
  %3109 = vmatprep.subr.mxu0 0.0
  %3110 = vmatpush2.xpose.msra.mxu0 0.0
  %3111 = vmatprep.subr.mxu0 0.0
  %3112 = vmatpush2.xpose.msra.mxu0 0.0
  %3113 = vmatprep.subr.mxu0 0.0
  %3114 = vmatpush2.xpose.msra.mxu0 0.0
  %3115 = vmatprep.subr.mxu0 0.0
  %3116 = vmatpush2.xpose.msra.mxu0 0.0
  %3117 = vmatprep.subr.mxu0 0.0
  %3118 = vmatpush2.xpose.msra.mxu0 0.0
  %3119 = vmatprep.subr.mxu0 0.0
  %3120 = vmatpush2.xpose.msra.mxu0 0.0
  %3121 = vmatprep.subr.mxu0 0.0
  %3122 = vmatpush2.xpose.msra.mxu0 0.0
  %3123 = vmatprep.mubr.f32.mxu0 0.0
  %3124 = vmatmul.mubr.f32.gmra.mxu0 %v3055
  %v3125 = vpop.f32.mrf.mxu0
  %v3126 = vadd.f32 %v136, %v3125
  %v3127 = vpop.f32.mrf.mxu0
  %3128 = vdwg.mxu0
  %v3129 = vsel %vm142, %v3048, -inf
  %3130 = vmax.xlane.f32.xlu0 %v3129
  %v3131 = vpop.xlane.xlu0 %3130
  %v3132 = vsel %vm142, %v3126, -inf
  %3133 = vmax.xlane.f32.xlu0 %v3132
  %v3134 = vpop.xlane.xlu0 %3133
  %v3135 = vsub.f32 %v3048, %v3131
  %v3136 = vsub.f32 %v3126, %v3134
  %v3137 = vmul.f32 %v3135, 1.442695
  %v3138 = vpow.pop %v3137
  %v3139 = vmul.f32 %v3136, 1.442695
  %v3140 = vpow.pop %v3139
  %v3141 = vsel %vm142, %v3138, 0.0
  %3142 = vadd.xlane.f32.xlu0 %v3141
  %v3143 = vpop.xlane.xlu0 %3142
  %v3144 = vsel %vm142, %v3140, 0.0
  %3145 = vadd.xlane.f32.xlu0 %v3144
  %v3146 = vpop.xlane.xlu0 %3145
  %v3147 = vrcp.pop %v3143
  %v3148 = vrcp.pop %v3146
  %v3149 = vmul.f32 %v3138, %v3147
  %v3150 = vmul.f32 %v3140, %v3148
  %3151 = vrot.lane.b32.xlu0 %v1955, 40
  %v3152 = vpop.permute.xlu0 %3151
  %v3155 = vsel %vm142, %v3149, 0
  %3157 = vmatprep.subr.mxu0 0.0
  %3158 = vmatpush1.msra.mxu0 0.0
  %3159 = vmatprep.subr.mxu0 0.0
  %3160 = vmatpush1.msra.mxu0 0.0
  %3161 = vmatprep.subr.mxu0 0.0
  %3162 = vmatpush1.msra.mxu0 0.0
  %3163 = vmatprep.subr.mxu0 0.0
  %3164 = vmatpush1.msra.mxu0 0.0
  %3165 = vmatprep.subr.mxu0 0.0
  %3166 = vmatpush1.msra.mxu0 0.0
  %3167 = vmatprep.subr.mxu0 0.0
  %3168 = vmatpush1.msra.mxu0 0.0
  %3169 = vmatprep.subr.mxu0 0.0
  %3170 = vmatpush1.msra.mxu0 0.0
  %3171 = vmatprep.subr.mxu0 0.0
  %3172 = vmatpush1.msra.mxu0 0.0
  %3173 = vmatprep.subr.mxu0 0.0
  %3174 = vmatpush1.msra.mxu0 0.0
  %3175 = vmatprep.subr.mxu0 0.0
  %3176 = vmatpush1.msra.mxu0 0.0
  %3177 = vmatprep.subr.mxu0 0.0
  %3178 = vmatpush1.msra.mxu0 0.0
  %3179 = vmatprep.subr.mxu0 0.0
  %3180 = vmatpush1.msra.mxu0 0.0
  %3181 = vmatprep.subr.mxu0 0.0
  %3182 = vmatpush1.msra.mxu0 0.0
  %3183 = vmatprep.subr.mxu0 0.0
  %3184 = vmatpush1.msra.mxu0 0.0
  %3185 = vmatprep.subr.mxu0 0.0
  %3186 = vmatpush1.msra.mxu0 0.0
  %3187 = vmatprep.subr.mxu0 0.0
  %3188 = vmatpush1.msra.mxu0 %v3152
  %3189 = vmatprep.subr.mxu0 0.0
  %3190 = vmatpush2.msra.mxu0 0.0
  %3191 = vmatprep.subr.mxu0 0.0
  %3192 = vmatpush2.msra.mxu0 0.0
  %3193 = vmatprep.subr.mxu0 0.0
  %3194 = vmatpush2.msra.mxu0 0.0
  %3195 = vmatprep.subr.mxu0 0.0
  %3196 = vmatpush2.msra.mxu0 0.0
  %3197 = vmatprep.subr.mxu0 0.0
  %3198 = vmatpush2.msra.mxu0 0.0
  %3199 = vmatprep.subr.mxu0 0.0
  %3200 = vmatpush2.msra.mxu0 0.0
  %3201 = vmatprep.subr.mxu0 0.0
  %3202 = vmatpush2.msra.mxu0 0.0
  %3203 = vmatprep.subr.mxu0 0.0
  %3204 = vmatpush2.msra.mxu0 0.0
  %3205 = vmatprep.subr.mxu0 0.0
  %3206 = vmatpush2.msra.mxu0 0.0
  %3207 = vmatprep.subr.mxu0 0.0
  %3208 = vmatpush2.msra.mxu0 0.0
  %3209 = vmatprep.subr.mxu0 0.0
  %3210 = vmatpush2.msra.mxu0 0.0
  %3211 = vmatprep.subr.mxu0 0.0
  %3212 = vmatpush2.msra.mxu0 0.0
  %3213 = vmatprep.subr.mxu0 0.0
  %3214 = vmatpush2.msra.mxu0 0.0
  %3215 = vmatprep.subr.mxu0 0.0
  %3216 = vmatpush2.msra.mxu0 0.0
  %3217 = vmatprep.subr.mxu0 0.0
  %3218 = vmatpush2.msra.mxu0 0.0
  %3219 = vmatprep.subr.mxu0 0.0
  %3220 = vmatpush2.msra.mxu0 0.0
  %3221 = vmatprep.mubr.f32.mxu0 0.0
  %3222 = vmatmul.mubr.f32.gmra.mxu0 %v3155
  %v3223 = vpop.f32.mrf.mxu0
  %v3224 = vadd.f32 0.0, %v3223
  %v3225 = vpop.f32.mrf.mxu0
  %3226 = vdwg.mxu0
  %3227 = vrot.lane.b32.xlu0 %v1960, 40
  %v3228 = vpop.permute.xlu0 %3227
  %v3231 = vsel %vm142, %v3150, 0
  %3233 = vmatprep.subr.mxu0 0.0
  %3234 = vmatpush1.msra.mxu0 0.0
  %3235 = vmatprep.subr.mxu0 0.0
  %3236 = vmatpush1.msra.mxu0 0.0
  %3237 = vmatprep.subr.mxu0 0.0
  %3238 = vmatpush1.msra.mxu0 0.0
  %3239 = vmatprep.subr.mxu0 0.0
  %3240 = vmatpush1.msra.mxu0 0.0
  %3241 = vmatprep.subr.mxu0 0.0
  %3242 = vmatpush1.msra.mxu0 0.0
  %3243 = vmatprep.subr.mxu0 0.0
  %3244 = vmatpush1.msra.mxu0 0.0
  %3245 = vmatprep.subr.mxu0 0.0
  %3246 = vmatpush1.msra.mxu0 0.0
  %3247 = vmatprep.subr.mxu0 0.0
  %3248 = vmatpush1.msra.mxu0 0.0
  %3249 = vmatprep.subr.mxu0 0.0
  %3250 = vmatpush1.msra.mxu0 0.0
  %3251 = vmatprep.subr.mxu0 0.0
  %3252 = vmatpush1.msra.mxu0 0.0
  %3253 = vmatprep.subr.mxu0 0.0
  %3254 = vmatpush1.msra.mxu0 0.0
  %3255 = vmatprep.subr.mxu0 0.0
  %3256 = vmatpush1.msra.mxu0 0.0
  %3257 = vmatprep.subr.mxu0 0.0
  %3258 = vmatpush1.msra.mxu0 0.0
  %3259 = vmatprep.subr.mxu0 0.0
  %3260 = vmatpush1.msra.mxu0 0.0
  %3261 = vmatprep.subr.mxu0 0.0
  %3262 = vmatpush1.msra.mxu0 0.0
  %3263 = vmatprep.subr.mxu0 0.0
  %3264 = vmatpush1.msra.mxu0 %v3228
  %3265 = vmatprep.subr.mxu0 0.0
  %3266 = vmatpush2.msra.mxu0 0.0
  %3267 = vmatprep.subr.mxu0 0.0
  %3268 = vmatpush2.msra.mxu0 0.0
  %3269 = vmatprep.subr.mxu0 0.0
  %3270 = vmatpush2.msra.mxu0 0.0
  %3271 = vmatprep.subr.mxu0 0.0
  %3272 = vmatpush2.msra.mxu0 0.0
  %3273 = vmatprep.subr.mxu0 0.0
  %3274 = vmatpush2.msra.mxu0 0.0
  %3275 = vmatprep.subr.mxu0 0.0
  %3276 = vmatpush2.msra.mxu0 0.0
  %3277 = vmatprep.subr.mxu0 0.0
  %3278 = vmatpush2.msra.mxu0 0.0
  %3279 = vmatprep.subr.mxu0 0.0
  %3280 = vmatpush2.msra.mxu0 0.0
  %3281 = vmatprep.subr.mxu0 0.0
  %3282 = vmatpush2.msra.mxu0 0.0
  %3283 = vmatprep.subr.mxu0 0.0
  %3284 = vmatpush2.msra.mxu0 0.0
  %3285 = vmatprep.subr.mxu0 0.0
  %3286 = vmatpush2.msra.mxu0 0.0
  %3287 = vmatprep.subr.mxu0 0.0
  %3288 = vmatpush2.msra.mxu0 0.0
  %3289 = vmatprep.subr.mxu0 0.0
  %3290 = vmatpush2.msra.mxu0 0.0
  %3291 = vmatprep.subr.mxu0 0.0
  %3292 = vmatpush2.msra.mxu0 0.0
  %3293 = vmatprep.subr.mxu0 0.0
  %3294 = vmatpush2.msra.mxu0 0.0
  %3295 = vmatprep.subr.mxu0 0.0
  %3296 = vmatpush2.msra.mxu0 0.0
  %3297 = vmatprep.mubr.f32.mxu0 0.0
  %3298 = vmatmul.mubr.f32.gmra.mxu0 %v3231
  %v3299 = vpop.f32.mrf.mxu0
  %v3300 = vadd.f32 0.0, %v3299
  %v3301 = vpop.f32.mrf.mxu0
  %3302 = vdwg.mxu0
  %3305 = vrot.lane.b32.xlu0 %v3224, 24
  %v3306 = vpop.permute.xlu0 %3305
  %3307 = vrot.lane.b32.xlu0 %v3300, 24
  %v3308 = vpop.permute.xlu0 %3307
  %3311 = vst.msk [vmem:[#allocation2] sm:$0xff] %vm1490, %v3306
  %3312 = vst.msk [vmem:[#allocation2 + $0x8] sm:$0xff] %vm1490, %v3308
  %v3313 = vld [vmem:[#allocation2] sm:$0xff]
  %v3314 = vld [vmem:[#allocation2 + $0x8] sm:$0xff]
  %s3315 = scalar_lea.vmem %s3, 32
  %v3316 = vld [vmem:[%s3315] sm:$0xff]
  %v3317 = vld [vmem:[%s3315 + $0x8] sm:$0xff]
  %v3318 = vld [vmem:[%s3315 + $0x10] sm:$0xff]
  %v3319 = vld [vmem:[%s3315 + $0x18] sm:$0xff]
  %v3320 = vlaneseq
  %v3321 = vshrl.u32 %v3320, 7
  %v3322 = vsub.s32 1, %v3321
  %v3323 = vrot.slane %v1872, %v3322
  %v3325 = vsel %vm45, %v3313, 0
  %v3328 = vsel %vm45, %v3314, 0
  %3330 = vmatprep.subr.mxu0 0.0
  %3331 = vmatpush1.msra.mxu0 0.0
  %3332 = vmatprep.subr.mxu0 0.0
  %3333 = vmatpush1.msra.mxu0 0.0
  %3334 = vmatprep.subr.mxu0 0.0
  %3335 = vmatpush1.msra.mxu0 0.0
  %3336 = vmatprep.subr.mxu0 0.0
  %3337 = vmatpush1.msra.mxu0 0.0
  %3338 = vmatprep.subr.mxu0 0.0
  %3339 = vmatpush1.msra.mxu0 0.0
  %3340 = vmatprep.subr.mxu0 0.0
  %3341 = vmatpush1.msra.mxu0 0.0
  %3342 = vmatprep.subr.mxu0 0.0
  %3343 = vmatpush1.msra.mxu0 0.0
  %3344 = vmatprep.subr.mxu0 0.0
  %3345 = vmatpush1.msra.mxu0 0.0
  %3346 = vmatprep.subr.mxu0 0.0
  %3347 = vmatpush1.msra.mxu0 0.0
  %3348 = vmatprep.subr.mxu0 0.0
  %3349 = vmatpush1.msra.mxu0 0.0
  %3350 = vmatprep.subr.mxu0 0.0
  %3351 = vmatpush1.msra.mxu0 0.0
  %3352 = vmatprep.subr.mxu0 0.0
  %3353 = vmatpush1.msra.mxu0 0.0
  %3354 = vmatprep.subr.mxu0 0.0
  %3355 = vmatpush1.msra.mxu0 %v3319
  %3356 = vmatprep.subr.mxu0 0.0
  %3357 = vmatpush1.msra.mxu0 %v3318
  %3358 = vmatprep.subr.mxu0 0.0
  %3359 = vmatpush1.msra.mxu0 %v3317
  %3360 = vmatprep.subr.mxu0 0.0
  %3361 = vmatpush1.msra.mxu0 %v3316
  %3362 = vmatprep.subr.mxu0 0.0
  %3363 = vmatpush2.msra.mxu0 0.0
  %3364 = vmatprep.subr.mxu0 0.0
  %3365 = vmatpush2.msra.mxu0 0.0
  %3366 = vmatprep.subr.mxu0 0.0
  %3367 = vmatpush2.msra.mxu0 0.0
  %3368 = vmatprep.subr.mxu0 0.0
  %3369 = vmatpush2.msra.mxu0 0.0
  %3370 = vmatprep.subr.mxu0 0.0
  %3371 = vmatpush2.msra.mxu0 0.0
  %3372 = vmatprep.subr.mxu0 0.0
  %3373 = vmatpush2.msra.mxu0 0.0
  %3374 = vmatprep.subr.mxu0 0.0
  %3375 = vmatpush2.msra.mxu0 0.0
  %3376 = vmatprep.subr.mxu0 0.0
  %3377 = vmatpush2.msra.mxu0 0.0
  %3378 = vmatprep.subr.mxu0 0.0
  %3379 = vmatpush2.msra.mxu0 0.0
  %3380 = vmatprep.subr.mxu0 0.0
  %3381 = vmatpush2.msra.mxu0 0.0
  %3382 = vmatprep.subr.mxu0 0.0
  %3383 = vmatpush2.msra.mxu0 0.0
  %3384 = vmatprep.subr.mxu0 0.0
  %3385 = vmatpush2.msra.mxu0 0.0
  %3386 = vmatprep.subr.mxu0 0.0
  %3387 = vmatpush2.msra.mxu0 0.0
  %3388 = vmatprep.subr.mxu0 0.0
  %3389 = vmatpush2.msra.mxu0 0.0
  %3390 = vmatprep.subr.mxu0 0.0
  %3391 = vmatpush2.msra.mxu0 0.0
  %3392 = vmatprep.subr.mxu0 0.0
  %3393 = vmatpush2.msra.mxu0 0.0
  %3394 = vmatprep.mubr.f32.mxu0 0.0
  %3395 = vmatmul.mubr.f32.gmra.mxu0 %v3325
  %v3396 = vpop.f32.mrf.mxu0
  %v3397 = vadd.f32 %v3323, %v3396
  %v3398 = vpop.f32.mrf.mxu0
  %3399 = vmatprep.mubr.f32.mxu0 0.0
  %3400 = vmatmul.mubr.f32.gmra.mxu0 %v3328
  %v3401 = vpop.f32.mrf.mxu0
  %v3402 = vadd.f32 %v3323, %v3401
  %v3403 = vpop.f32.mrf.mxu0
  %3404 = vdwg.mxu0
  %v3405 = vadd.f32 %v3397, %v1869
  %v3406 = vadd.f32 %v3402, %v1870
  %v3407 = vsel %vm45, %v3405, 0.0
  %3408 = vadd.xlane.f32.xlu0 %v3407
  %v3409 = vpop.xlane.xlu0 %3408
  %v3410 = vsel %vm45, %v3406, 0.0
  %3411 = vadd.xlane.f32.xlu0 %v3410
  %v3412 = vpop.xlane.xlu0 %3411
  %v3413 = vmul.f32 %v3409, %v1592
  %v3414 = vmul.f32 %v3412, %v1592
  %v3415 = vsub.f32 %v3405, %v3413
  %v3416 = vsub.f32 %v3406, %v3414
  %v3417 = vmul.f32 %v3415, %v3415
  %v3418 = vmul.f32 %v3416, %v3416
  %v3419 = vsel %vm45, %v3417, 0.0
  %3420 = vadd.xlane.f32.xlu0 %v3419
  %v3421 = vpop.xlane.xlu0 %3420
  %v3422 = vsel %vm45, %v3418, 0.0
  %3423 = vadd.xlane.f32.xlu0 %v3422
  %v3424 = vpop.xlane.xlu0 %3423
  %v3425 = vmul.f32 %v3421, %v1592
  %v3426 = vmul.f32 %v3424, %v1592
  %v3427 = vadd.f32 %v3425, 1e-12
  %v3428 = vadd.f32 %v3426, 1e-12
  %v3429 = vrsqrt.pop %v3427
  %v3430 = vrsqrt.pop %v3428
  %v3431 = vmul.f32 %v3415, %v3429
  %v3432 = vmul.f32 %v3416, %v3430
  %v3433 = vlaneseq
  %v3434 = vshrl.u32 %v3433, 7
  %v3435 = vsub.s32 2, %v3434
  %v3436 = vrot.slane %v1872, %v3435
  %v3437 = vmul.f32 %v3431, %v3436
  %v3438 = vmul.f32 %v3432, %v3436
  %v3439 = vlaneseq
  %v3440 = vshrl.u32 %v3439, 7
  %v3441 = vsub.s32 3, %v3440
  %v3442 = vrot.slane %v1872, %v3441
  %v3443 = vadd.f32 %v3437, %v3442
  %v3444 = vadd.f32 %v3438, %v3442
  %s3445 = scalar_lea.vmem %s4, 32
  %v3446 = vld [vmem:[%s3445] sm:$0xff]
  %v3447 = vld [vmem:[%s3445 + $0x8] sm:$0xff]
  %v3448 = vld [vmem:[%s3445 + $0x10] sm:$0xff]
  %v3449 = vld [vmem:[%s3445 + $0x18] sm:$0xff]
  %v3450 = vlaneseq
  %v3451 = vshrl.u32 %v3450, 7
  %v3452 = vsub.s32 4, %v3451
  %v3453 = vrot.slane %v1872, %v3452
  %v3455 = vsel %vm45, %v3443, 0
  %v3458 = vsel %vm45, %v3444, 0
  %3460 = vmatprep.subr.mxu0 0.0
  %3461 = vmatpush1.msra.mxu0 0.0
  %3462 = vmatprep.subr.mxu0 0.0
  %3463 = vmatpush1.msra.mxu0 0.0
  %3464 = vmatprep.subr.mxu0 0.0
  %3465 = vmatpush1.msra.mxu0 0.0
  %3466 = vmatprep.subr.mxu0 0.0
  %3467 = vmatpush1.msra.mxu0 0.0
  %3468 = vmatprep.subr.mxu0 0.0
  %3469 = vmatpush1.msra.mxu0 0.0
  %3470 = vmatprep.subr.mxu0 0.0
  %3471 = vmatpush1.msra.mxu0 0.0
  %3472 = vmatprep.subr.mxu0 0.0
  %3473 = vmatpush1.msra.mxu0 0.0
  %3474 = vmatprep.subr.mxu0 0.0
  %3475 = vmatpush1.msra.mxu0 0.0
  %3476 = vmatprep.subr.mxu0 0.0
  %3477 = vmatpush1.msra.mxu0 0.0
  %3478 = vmatprep.subr.mxu0 0.0
  %3479 = vmatpush1.msra.mxu0 0.0
  %3480 = vmatprep.subr.mxu0 0.0
  %3481 = vmatpush1.msra.mxu0 0.0
  %3482 = vmatprep.subr.mxu0 0.0
  %3483 = vmatpush1.msra.mxu0 0.0
  %3484 = vmatprep.subr.mxu0 0.0
  %3485 = vmatpush1.msra.mxu0 %v3449
  %3486 = vmatprep.subr.mxu0 0.0
  %3487 = vmatpush1.msra.mxu0 %v3448
  %3488 = vmatprep.subr.mxu0 0.0
  %3489 = vmatpush1.msra.mxu0 %v3447
  %3490 = vmatprep.subr.mxu0 0.0
  %3491 = vmatpush1.msra.mxu0 %v3446
  %3492 = vmatprep.subr.mxu0 0.0
  %3493 = vmatpush2.msra.mxu0 0.0
  %3494 = vmatprep.subr.mxu0 0.0
  %3495 = vmatpush2.msra.mxu0 0.0
  %3496 = vmatprep.subr.mxu0 0.0
  %3497 = vmatpush2.msra.mxu0 0.0
  %3498 = vmatprep.subr.mxu0 0.0
  %3499 = vmatpush2.msra.mxu0 0.0
  %3500 = vmatprep.subr.mxu0 0.0
  %3501 = vmatpush2.msra.mxu0 0.0
  %3502 = vmatprep.subr.mxu0 0.0
  %3503 = vmatpush2.msra.mxu0 0.0
  %3504 = vmatprep.subr.mxu0 0.0
  %3505 = vmatpush2.msra.mxu0 0.0
  %3506 = vmatprep.subr.mxu0 0.0
  %3507 = vmatpush2.msra.mxu0 0.0
  %3508 = vmatprep.subr.mxu0 0.0
  %3509 = vmatpush2.msra.mxu0 0.0
  %3510 = vmatprep.subr.mxu0 0.0
  %3511 = vmatpush2.msra.mxu0 0.0
  %3512 = vmatprep.subr.mxu0 0.0
  %3513 = vmatpush2.msra.mxu0 0.0
  %3514 = vmatprep.subr.mxu0 0.0
  %3515 = vmatpush2.msra.mxu0 0.0
  %3516 = vmatprep.subr.mxu0 0.0
  %3517 = vmatpush2.msra.mxu0 0.0
  %3518 = vmatprep.subr.mxu0 0.0
  %3519 = vmatpush2.msra.mxu0 0.0
  %3520 = vmatprep.subr.mxu0 0.0
  %3521 = vmatpush2.msra.mxu0 0.0
  %3522 = vmatprep.subr.mxu0 0.0
  %3523 = vmatpush2.msra.mxu0 0.0
  %3524 = vmatprep.mubr.f32.mxu0 0.0
  %3525 = vmatmul.mubr.f32.gmra.mxu0 %v3455
  %v3526 = vpop.f32.mrf.mxu0
  %v3527 = vadd.f32 %v3453, %v3526
  %v3528 = vpop.f32.mrf.mxu0
  %3529 = vmatprep.mubr.f32.mxu0 0.0
  %3530 = vmatmul.mubr.f32.gmra.mxu0 %v3458
  %v3531 = vpop.f32.mrf.mxu0
  %v3532 = vadd.f32 %v3453, %v3531
  %v3533 = vpop.f32.mrf.mxu0
  %3534 = vdwg.mxu0
  %v3535 = vmul.f32 %v3527, 0.5
  %v3536 = vmul.f32 %v3532, 0.5
  %v3537 = vmul.f32 %v3527, 0.044715
  %v3538 = vmul.f32 %v3532, 0.044715
  %v3539 = vmul.f32 %v3537, %v3527
  %v3540 = vmul.f32 %v3538, %v3532
  %v3541 = vmul.f32 %v3539, %v3527
  %v3542 = vmul.f32 %v3540, %v3532
  %v3543 = vadd.f32 %v3527, %v3541
  %v3544 = vadd.f32 %v3532, %v3542
  %v3545 = vmul.f32 %v3543, 0.7978846
  %v3546 = vmul.f32 %v3544, 0.7978846
  %v3547 = vtanh.pop %v3545
  %v3548 = vtanh.pop %v3546
  %v3549 = vadd.f32 %v3547, 1.0
  %v3550 = vadd.f32 %v3548, 1.0
  %v3551 = vmul.f32 %v3535, %v3549
  %v3552 = vmul.f32 %v3536, %v3550
  %s3553 = scalar_lea.vmem %s5, 64
  %v3554 = vld [vmem:[%s3553] sm:$0xff]
  %v3555 = vld [vmem:[%s3553 + $0x8] sm:$0xff]
  %v3556 = vld [vmem:[%s3553 + $0x10] sm:$0xff]
  %v3557 = vld [vmem:[%s3553 + $0x18] sm:$0xff]
  %v3558 = vld [vmem:[%s3553 + $0x20] sm:$0xff]
  %v3559 = vld [vmem:[%s3553 + $0x28] sm:$0xff]
  %v3560 = vld [vmem:[%s3553 + $0x30] sm:$0xff]
  %v3561 = vld [vmem:[%s3553 + $0x38] sm:$0xff]
  %v3562 = vlaneseq
  %v3563 = vshrl.u32 %v3562, 7
  %v3564 = vsub.s32 5, %v3563
  %v3565 = vrot.slane %v1872, %v3564
  %v3567 = vsel %vm1744, %v3551, 0
  %v3570 = vsel %vm1744, %v3552, 0
  %3572 = vmatprep.subr.mxu0 0.0
  %3573 = vmatpush1.msra.mxu0 0.0
  %3574 = vmatprep.subr.mxu0 0.0
  %3575 = vmatpush1.msra.mxu0 0.0
  %3576 = vmatprep.subr.mxu0 0.0
  %3577 = vmatpush1.msra.mxu0 0.0
  %3578 = vmatprep.subr.mxu0 0.0
  %3579 = vmatpush1.msra.mxu0 0.0
  %3580 = vmatprep.subr.mxu0 0.0
  %3581 = vmatpush1.msra.mxu0 0.0
  %3582 = vmatprep.subr.mxu0 0.0
  %3583 = vmatpush1.msra.mxu0 0.0
  %3584 = vmatprep.subr.mxu0 0.0
  %3585 = vmatpush1.msra.mxu0 0.0
  %3586 = vmatprep.subr.mxu0 0.0
  %3587 = vmatpush1.msra.mxu0 0.0
  %3588 = vmatprep.subr.mxu0 0.0
  %3589 = vmatpush1.msra.mxu0 %v3561
  %3590 = vmatprep.subr.mxu0 0.0
  %3591 = vmatpush1.msra.mxu0 %v3560
  %3592 = vmatprep.subr.mxu0 0.0
  %3593 = vmatpush1.msra.mxu0 %v3559
  %3594 = vmatprep.subr.mxu0 0.0
  %3595 = vmatpush1.msra.mxu0 %v3558
  %3596 = vmatprep.subr.mxu0 0.0
  %3597 = vmatpush1.msra.mxu0 %v3557
  %3598 = vmatprep.subr.mxu0 0.0
  %3599 = vmatpush1.msra.mxu0 %v3556
  %3600 = vmatprep.subr.mxu0 0.0
  %3601 = vmatpush1.msra.mxu0 %v3555
  %3602 = vmatprep.subr.mxu0 0.0
  %3603 = vmatpush1.msra.mxu0 %v3554
  %3604 = vmatprep.subr.mxu0 0.0
  %3605 = vmatpush2.msra.mxu0 0.0
  %3606 = vmatprep.subr.mxu0 0.0
  %3607 = vmatpush2.msra.mxu0 0.0
  %3608 = vmatprep.subr.mxu0 0.0
  %3609 = vmatpush2.msra.mxu0 0.0
  %3610 = vmatprep.subr.mxu0 0.0
  %3611 = vmatpush2.msra.mxu0 0.0
  %3612 = vmatprep.subr.mxu0 0.0
  %3613 = vmatpush2.msra.mxu0 0.0
  %3614 = vmatprep.subr.mxu0 0.0
  %3615 = vmatpush2.msra.mxu0 0.0
  %3616 = vmatprep.subr.mxu0 0.0
  %3617 = vmatpush2.msra.mxu0 0.0
  %3618 = vmatprep.subr.mxu0 0.0
  %3619 = vmatpush2.msra.mxu0 0.0
  %3620 = vmatprep.subr.mxu0 0.0
  %3621 = vmatpush2.msra.mxu0 0.0
  %3622 = vmatprep.subr.mxu0 0.0
  %3623 = vmatpush2.msra.mxu0 0.0
  %3624 = vmatprep.subr.mxu0 0.0
  %3625 = vmatpush2.msra.mxu0 0.0
  %3626 = vmatprep.subr.mxu0 0.0
  %3627 = vmatpush2.msra.mxu0 0.0
  %3628 = vmatprep.subr.mxu0 0.0
  %3629 = vmatpush2.msra.mxu0 0.0
  %3630 = vmatprep.subr.mxu0 0.0
  %3631 = vmatpush2.msra.mxu0 0.0
  %3632 = vmatprep.subr.mxu0 0.0
  %3633 = vmatpush2.msra.mxu0 0.0
  %3634 = vmatprep.subr.mxu0 0.0
  %3635 = vmatpush2.msra.mxu0 0.0
  %3636 = vmatprep.mubr.f32.mxu0 0.0
  %3637 = vmatmul.mubr.f32.gmra.mxu0 %v3567
  %v3638 = vpop.f32.mrf.mxu0
  %v3639 = vadd.f32 %v3565, %v3638
  %v3640 = vpop.f32.mrf.mxu0
  %3641 = vmatprep.mubr.f32.mxu0 0.0
  %3642 = vmatmul.mubr.f32.gmra.mxu0 %v3570
  %v3643 = vpop.f32.mrf.mxu0
  %v3644 = vadd.f32 %v3565, %v3643
  %v3645 = vpop.f32.mrf.mxu0
  %3646 = vdwg.mxu0
  %v3647 = vadd.f32 %v3639, %v3443
  %v3648 = vadd.f32 %v3644, %v3444
  %v3649 = vsel %vm45, %v3647, 0.0
  %3650 = vadd.xlane.f32.xlu0 %v3649
  %v3651 = vpop.xlane.xlu0 %3650
  %v3652 = vsel %vm45, %v3648, 0.0
  %3653 = vadd.xlane.f32.xlu0 %v3652
  %v3654 = vpop.xlane.xlu0 %3653
  %v3655 = vmul.f32 %v3651, %v1592
  %v3656 = vmul.f32 %v3654, %v1592
  %v3657 = vsub.f32 %v3647, %v3655
  %v3658 = vsub.f32 %v3648, %v3656
  %v3659 = vmul.f32 %v3657, %v3657
  %v3660 = vmul.f32 %v3658, %v3658
  %v3661 = vsel %vm45, %v3659, 0.0
  %3662 = vadd.xlane.f32.xlu0 %v3661
  %v3663 = vpop.xlane.xlu0 %3662
  %v3664 = vsel %vm45, %v3660, 0.0
  %3665 = vadd.xlane.f32.xlu0 %v3664
  %v3666 = vpop.xlane.xlu0 %3665
  %v3667 = vmul.f32 %v3663, %v1592
  %v3668 = vmul.f32 %v3666, %v1592
  %v3669 = vadd.f32 %v3667, 1e-12
  %v3670 = vadd.f32 %v3668, 1e-12
  %v3671 = vrsqrt.pop %v3669
  %v3672 = vrsqrt.pop %v3670
  %v3673 = vmul.f32 %v3657, %v3671
  %v3674 = vmul.f32 %v3658, %v3672
  %v3675 = vlaneseq
  %v3676 = vshrl.u32 %v3675, 7
  %v3677 = vsub.s32 6, %v3676
  %v3678 = vrot.slane %v1872, %v3677
  %v3679 = vmul.f32 %v3673, %v3678
  %v3680 = vmul.f32 %v3674, %v3678
  %v3681 = vlaneseq
  %v3682 = vshrl.u32 %v3681, 7
  %v3683 = vsub.s32 7, %v3682
  %v3684 = vrot.slane %v1872, %v3683
  %v3685 = vadd.f32 %v3679, %v3684
  %v3686 = vadd.f32 %v3680, %v3684
  %v3687 = vadd.f32 %v1866, %v3685
  %v3688 = vadd.f32 %v1867, %v3686
  %s3689 = scalar_lea.vmem %s0, 32
  %v3690 = vld [vmem:[%s3689] sm:$0xff]
  %v3691 = vld [vmem:[%s3689 + $0x8] sm:$0xff]
  %s3692 = scalar_lea.vmem %s6, 16
  %v3693 = vld [vmem:[%s3692] sm:$0xff]
  %s3694 = scalar_lea.vmem %s2, 64
  %v3695 = vld [vmem:[%s3694] sm:$0xff]
  %v3696 = vld [vmem:[%s3694 + $0x8] sm:$0xff]
  %v3697 = vld [vmem:[%s3694 + $0x10] sm:$0xff]
  %v3698 = vld [vmem:[%s3694 + $0x18] sm:$0xff]
  %v3699 = vlaneseq
  %v3700 = vshrl.u32 %v3699, 7
  %v3701 = vsub.s32 0, %v3700
  %v3702 = vrot.slane %v3693, %v3701
  %v3704 = vsel %vm45, %v3690, 0
  %v3707 = vsel %vm45, %v3691, 0
  %3709 = vmatprep.subr.mxu0 0.0
  %3710 = vmatpush1.msra.mxu0 0.0
  %3711 = vmatprep.subr.mxu0 0.0
  %3712 = vmatpush1.msra.mxu0 0.0
  %3713 = vmatprep.subr.mxu0 0.0
  %3714 = vmatpush1.msra.mxu0 0.0
  %3715 = vmatprep.subr.mxu0 0.0
  %3716 = vmatpush1.msra.mxu0 0.0
  %3717 = vmatprep.subr.mxu0 0.0
  %3718 = vmatpush1.msra.mxu0 0.0
  %3719 = vmatprep.subr.mxu0 0.0
  %3720 = vmatpush1.msra.mxu0 0.0
  %3721 = vmatprep.subr.mxu0 0.0
  %3722 = vmatpush1.msra.mxu0 0.0
  %3723 = vmatprep.subr.mxu0 0.0
  %3724 = vmatpush1.msra.mxu0 0.0
  %3725 = vmatprep.subr.mxu0 0.0
  %3726 = vmatpush1.msra.mxu0 0.0
  %3727 = vmatprep.subr.mxu0 0.0
  %3728 = vmatpush1.msra.mxu0 0.0
  %3729 = vmatprep.subr.mxu0 0.0
  %3730 = vmatpush1.msra.mxu0 0.0
  %3731 = vmatprep.subr.mxu0 0.0
  %3732 = vmatpush1.msra.mxu0 0.0
  %3733 = vmatprep.subr.mxu0 0.0
  %3734 = vmatpush1.msra.mxu0 %v3698
  %3735 = vmatprep.subr.mxu0 0.0
  %3736 = vmatpush1.msra.mxu0 %v3697
  %3737 = vmatprep.subr.mxu0 0.0
  %3738 = vmatpush1.msra.mxu0 %v3696
  %3739 = vmatprep.subr.mxu0 0.0
  %3740 = vmatpush1.msra.mxu0 %v3695
  %3741 = vmatprep.subr.mxu0 0.0
  %3742 = vmatpush2.msra.mxu0 0.0
  %3743 = vmatprep.subr.mxu0 0.0
  %3744 = vmatpush2.msra.mxu0 0.0
  %3745 = vmatprep.subr.mxu0 0.0
  %3746 = vmatpush2.msra.mxu0 0.0
  %3747 = vmatprep.subr.mxu0 0.0
  %3748 = vmatpush2.msra.mxu0 0.0
  %3749 = vmatprep.subr.mxu0 0.0
  %3750 = vmatpush2.msra.mxu0 0.0
  %3751 = vmatprep.subr.mxu0 0.0
  %3752 = vmatpush2.msra.mxu0 0.0
  %3753 = vmatprep.subr.mxu0 0.0
  %3754 = vmatpush2.msra.mxu0 0.0
  %3755 = vmatprep.subr.mxu0 0.0
  %3756 = vmatpush2.msra.mxu0 0.0
  %3757 = vmatprep.subr.mxu0 0.0
  %3758 = vmatpush2.msra.mxu0 0.0
  %3759 = vmatprep.subr.mxu0 0.0
  %3760 = vmatpush2.msra.mxu0 0.0
  %3761 = vmatprep.subr.mxu0 0.0
  %3762 = vmatpush2.msra.mxu0 0.0
  %3763 = vmatprep.subr.mxu0 0.0
  %3764 = vmatpush2.msra.mxu0 0.0
  %3765 = vmatprep.subr.mxu0 0.0
  %3766 = vmatpush2.msra.mxu0 0.0
  %3767 = vmatprep.subr.mxu0 0.0
  %3768 = vmatpush2.msra.mxu0 0.0
  %3769 = vmatprep.subr.mxu0 0.0
  %3770 = vmatpush2.msra.mxu0 0.0
  %3771 = vmatprep.subr.mxu0 0.0
  %3772 = vmatpush2.msra.mxu0 0.0
  %3773 = vmatprep.mubr.f32.mxu0 0.0
  %3774 = vmatmul.mubr.f32.gmra.mxu0 %v3704
  %v3775 = vpop.f32.mrf.mxu0
  %v3776 = vadd.f32 %v3702, %v3775
  %v3777 = vpop.f32.mrf.mxu0
  %3778 = vmatprep.mubr.f32.mxu0 0.0
  %3779 = vmatmul.mubr.f32.gmra.mxu0 %v3707
  %v3780 = vpop.f32.mrf.mxu0
  %v3781 = vadd.f32 %v3702, %v3780
  %v3782 = vpop.f32.mrf.mxu0
  %3783 = vdwg.mxu0
  %3785 = vrot.lane.b32.xlu0 %v3776, 96
  %v3786 = vpop.permute.xlu0 %3785
  %v3787 = vsel %vm142, %v3776, 0
  %v3789 = vsel %vm142, %v3786, 0
  %3791 = vmatprep.subr.mxu0 0.0
  %3792 = vmatpush1.xpose.msra.mxu0 0.0
  %3793 = vmatprep.subr.mxu0 0.0
  %3794 = vmatpush1.xpose.msra.mxu0 0.0
  %3795 = vmatprep.subr.mxu0 0.0
  %3796 = vmatpush1.xpose.msra.mxu0 0.0
  %3797 = vmatprep.subr.mxu0 0.0
  %3798 = vmatpush1.xpose.msra.mxu0 0.0
  %3799 = vmatprep.subr.mxu0 0.0
  %3800 = vmatpush1.xpose.msra.mxu0 0.0
  %3801 = vmatprep.subr.mxu0 0.0
  %3802 = vmatpush1.xpose.msra.mxu0 0.0
  %3803 = vmatprep.subr.mxu0 0.0
  %3804 = vmatpush1.xpose.msra.mxu0 0.0
  %3805 = vmatprep.subr.mxu0 0.0
  %3806 = vmatpush1.xpose.msra.mxu0 0.0
  %3807 = vmatprep.subr.mxu0 0.0
  %3808 = vmatpush1.xpose.msra.mxu0 0.0
  %3809 = vmatprep.subr.mxu0 0.0
  %3810 = vmatpush1.xpose.msra.mxu0 0.0
  %3811 = vmatprep.subr.mxu0 0.0
  %3812 = vmatpush1.xpose.msra.mxu0 0.0
  %3813 = vmatprep.subr.mxu0 0.0
  %3814 = vmatpush1.xpose.msra.mxu0 0.0
  %3815 = vmatprep.subr.mxu0 0.0
  %3816 = vmatpush1.xpose.msra.mxu0 0.0
  %3817 = vmatprep.subr.mxu0 0.0
  %3818 = vmatpush1.xpose.msra.mxu0 0.0
  %3819 = vmatprep.subr.mxu0 0.0
  %3820 = vmatpush1.xpose.msra.mxu0 0.0
  %3821 = vmatprep.subr.mxu0 0.0
  %3822 = vmatpush1.xpose.msra.mxu0 %v3789
  %3823 = vmatprep.subr.mxu0 0.0
  %3824 = vmatpush2.xpose.msra.mxu0 0.0
  %3825 = vmatprep.subr.mxu0 0.0
  %3826 = vmatpush2.xpose.msra.mxu0 0.0
  %3827 = vmatprep.subr.mxu0 0.0
  %3828 = vmatpush2.xpose.msra.mxu0 0.0
  %3829 = vmatprep.subr.mxu0 0.0
  %3830 = vmatpush2.xpose.msra.mxu0 0.0
  %3831 = vmatprep.subr.mxu0 0.0
  %3832 = vmatpush2.xpose.msra.mxu0 0.0
  %3833 = vmatprep.subr.mxu0 0.0
  %3834 = vmatpush2.xpose.msra.mxu0 0.0
  %3835 = vmatprep.subr.mxu0 0.0
  %3836 = vmatpush2.xpose.msra.mxu0 0.0
  %3837 = vmatprep.subr.mxu0 0.0
  %3838 = vmatpush2.xpose.msra.mxu0 0.0
  %3839 = vmatprep.subr.mxu0 0.0
  %3840 = vmatpush2.xpose.msra.mxu0 0.0
  %3841 = vmatprep.subr.mxu0 0.0
  %3842 = vmatpush2.xpose.msra.mxu0 0.0
  %3843 = vmatprep.subr.mxu0 0.0
  %3844 = vmatpush2.xpose.msra.mxu0 0.0
  %3845 = vmatprep.subr.mxu0 0.0
  %3846 = vmatpush2.xpose.msra.mxu0 0.0
  %3847 = vmatprep.subr.mxu0 0.0
  %3848 = vmatpush2.xpose.msra.mxu0 0.0
  %3849 = vmatprep.subr.mxu0 0.0
  %3850 = vmatpush2.xpose.msra.mxu0 0.0
  %3851 = vmatprep.subr.mxu0 0.0
  %3852 = vmatpush2.xpose.msra.mxu0 0.0
  %3853 = vmatprep.subr.mxu0 0.0
  %3854 = vmatpush2.xpose.msra.mxu0 0.0
  %3855 = vmatprep.mubr.f32.mxu0 0.0
  %3856 = vmatmul.mubr.f32.gmra.mxu0 %v3787
  %v3857 = vpop.f32.mrf.mxu0
  %v3858 = vadd.f32 %v132, %v3857
  %v3859 = vpop.f32.mrf.mxu0
  %3860 = vdwg.mxu0
  %3862 = vrot.lane.b32.xlu0 %v3781, 96
  %v3863 = vpop.permute.xlu0 %3862
  %v3864 = vsel %vm142, %v3781, 0
  %v3866 = vsel %vm142, %v3863, 0
  %3868 = vmatprep.subr.mxu0 0.0
  %3869 = vmatpush1.xpose.msra.mxu0 0.0
  %3870 = vmatprep.subr.mxu0 0.0
  %3871 = vmatpush1.xpose.msra.mxu0 0.0
  %3872 = vmatprep.subr.mxu0 0.0
  %3873 = vmatpush1.xpose.msra.mxu0 0.0
  %3874 = vmatprep.subr.mxu0 0.0
  %3875 = vmatpush1.xpose.msra.mxu0 0.0
  %3876 = vmatprep.subr.mxu0 0.0
  %3877 = vmatpush1.xpose.msra.mxu0 0.0
  %3878 = vmatprep.subr.mxu0 0.0
  %3879 = vmatpush1.xpose.msra.mxu0 0.0
  %3880 = vmatprep.subr.mxu0 0.0
  %3881 = vmatpush1.xpose.msra.mxu0 0.0
  %3882 = vmatprep.subr.mxu0 0.0
  %3883 = vmatpush1.xpose.msra.mxu0 0.0
  %3884 = vmatprep.subr.mxu0 0.0
  %3885 = vmatpush1.xpose.msra.mxu0 0.0
  %3886 = vmatprep.subr.mxu0 0.0
  %3887 = vmatpush1.xpose.msra.mxu0 0.0
  %3888 = vmatprep.subr.mxu0 0.0
  %3889 = vmatpush1.xpose.msra.mxu0 0.0
  %3890 = vmatprep.subr.mxu0 0.0
  %3891 = vmatpush1.xpose.msra.mxu0 0.0
  %3892 = vmatprep.subr.mxu0 0.0
  %3893 = vmatpush1.xpose.msra.mxu0 0.0
  %3894 = vmatprep.subr.mxu0 0.0
  %3895 = vmatpush1.xpose.msra.mxu0 0.0
  %3896 = vmatprep.subr.mxu0 0.0
  %3897 = vmatpush1.xpose.msra.mxu0 0.0
  %3898 = vmatprep.subr.mxu0 0.0
  %3899 = vmatpush1.xpose.msra.mxu0 %v3866
  %3900 = vmatprep.subr.mxu0 0.0
  %3901 = vmatpush2.xpose.msra.mxu0 0.0
  %3902 = vmatprep.subr.mxu0 0.0
  %3903 = vmatpush2.xpose.msra.mxu0 0.0
  %3904 = vmatprep.subr.mxu0 0.0
  %3905 = vmatpush2.xpose.msra.mxu0 0.0
  %3906 = vmatprep.subr.mxu0 0.0
  %3907 = vmatpush2.xpose.msra.mxu0 0.0
  %3908 = vmatprep.subr.mxu0 0.0
  %3909 = vmatpush2.xpose.msra.mxu0 0.0
  %3910 = vmatprep.subr.mxu0 0.0
  %3911 = vmatpush2.xpose.msra.mxu0 0.0
  %3912 = vmatprep.subr.mxu0 0.0
  %3913 = vmatpush2.xpose.msra.mxu0 0.0
  %3914 = vmatprep.subr.mxu0 0.0
  %3915 = vmatpush2.xpose.msra.mxu0 0.0
  %3916 = vmatprep.subr.mxu0 0.0
  %3917 = vmatpush2.xpose.msra.mxu0 0.0
  %3918 = vmatprep.subr.mxu0 0.0
  %3919 = vmatpush2.xpose.msra.mxu0 0.0
  %3920 = vmatprep.subr.mxu0 0.0
  %3921 = vmatpush2.xpose.msra.mxu0 0.0
  %3922 = vmatprep.subr.mxu0 0.0
  %3923 = vmatpush2.xpose.msra.mxu0 0.0
  %3924 = vmatprep.subr.mxu0 0.0
  %3925 = vmatpush2.xpose.msra.mxu0 0.0
  %3926 = vmatprep.subr.mxu0 0.0
  %3927 = vmatpush2.xpose.msra.mxu0 0.0
  %3928 = vmatprep.subr.mxu0 0.0
  %3929 = vmatpush2.xpose.msra.mxu0 0.0
  %3930 = vmatprep.subr.mxu0 0.0
  %3931 = vmatpush2.xpose.msra.mxu0 0.0
  %3932 = vmatprep.mubr.f32.mxu0 0.0
  %3933 = vmatmul.mubr.f32.gmra.mxu0 %v3864
  %v3934 = vpop.f32.mrf.mxu0
  %v3935 = vadd.f32 %v136, %v3934
  %v3936 = vpop.f32.mrf.mxu0
  %3937 = vdwg.mxu0
  %v3938 = vsel %vm142, %v3858, -inf
  %3939 = vmax.xlane.f32.xlu0 %v3938
  %v3940 = vpop.xlane.xlu0 %3939
  %v3941 = vsel %vm142, %v3935, -inf
  %3942 = vmax.xlane.f32.xlu0 %v3941
  %v3943 = vpop.xlane.xlu0 %3942
  %v3944 = vsub.f32 %v3858, %v3940
  %v3945 = vsub.f32 %v3935, %v3943
  %v3946 = vmul.f32 %v3944, 1.442695
  %v3947 = vpow.pop %v3946
  %v3948 = vmul.f32 %v3945, 1.442695
  %v3949 = vpow.pop %v3948
  %v3950 = vsel %vm142, %v3947, 0.0
  %3951 = vadd.xlane.f32.xlu0 %v3950
  %v3952 = vpop.xlane.xlu0 %3951
  %v3953 = vsel %vm142, %v3949, 0.0
  %3954 = vadd.xlane.f32.xlu0 %v3953
  %v3955 = vpop.xlane.xlu0 %3954
  %v3956 = vrcp.pop %v3952
  %v3957 = vrcp.pop %v3955
  %v3958 = vmul.f32 %v3947, %v3956
  %v3959 = vmul.f32 %v3949, %v3957
  %3960 = vrot.lane.b32.xlu0 %v3776, 64
  %v3961 = vpop.permute.xlu0 %3960
  %v3964 = vsel %vm142, %v3958, 0
  %3966 = vmatprep.subr.mxu0 0.0
  %3967 = vmatpush1.msra.mxu0 0.0
  %3968 = vmatprep.subr.mxu0 0.0
  %3969 = vmatpush1.msra.mxu0 0.0
  %3970 = vmatprep.subr.mxu0 0.0
  %3971 = vmatpush1.msra.mxu0 0.0
  %3972 = vmatprep.subr.mxu0 0.0
  %3973 = vmatpush1.msra.mxu0 0.0
  %3974 = vmatprep.subr.mxu0 0.0
  %3975 = vmatpush1.msra.mxu0 0.0
  %3976 = vmatprep.subr.mxu0 0.0
  %3977 = vmatpush1.msra.mxu0 0.0
  %3978 = vmatprep.subr.mxu0 0.0
  %3979 = vmatpush1.msra.mxu0 0.0
  %3980 = vmatprep.subr.mxu0 0.0
  %3981 = vmatpush1.msra.mxu0 0.0
  %3982 = vmatprep.subr.mxu0 0.0
  %3983 = vmatpush1.msra.mxu0 0.0
  %3984 = vmatprep.subr.mxu0 0.0
  %3985 = vmatpush1.msra.mxu0 0.0
  %3986 = vmatprep.subr.mxu0 0.0
  %3987 = vmatpush1.msra.mxu0 0.0
  %3988 = vmatprep.subr.mxu0 0.0
  %3989 = vmatpush1.msra.mxu0 0.0
  %3990 = vmatprep.subr.mxu0 0.0
  %3991 = vmatpush1.msra.mxu0 0.0
  %3992 = vmatprep.subr.mxu0 0.0
  %3993 = vmatpush1.msra.mxu0 0.0
  %3994 = vmatprep.subr.mxu0 0.0
  %3995 = vmatpush1.msra.mxu0 0.0
  %3996 = vmatprep.subr.mxu0 0.0
  %3997 = vmatpush1.msra.mxu0 %v3961
  %3998 = vmatprep.subr.mxu0 0.0
  %3999 = vmatpush2.msra.mxu0 0.0
  %4000 = vmatprep.subr.mxu0 0.0
  %4001 = vmatpush2.msra.mxu0 0.0
  %4002 = vmatprep.subr.mxu0 0.0
  %4003 = vmatpush2.msra.mxu0 0.0
  %4004 = vmatprep.subr.mxu0 0.0
  %4005 = vmatpush2.msra.mxu0 0.0
  %4006 = vmatprep.subr.mxu0 0.0
  %4007 = vmatpush2.msra.mxu0 0.0
  %4008 = vmatprep.subr.mxu0 0.0
  %4009 = vmatpush2.msra.mxu0 0.0
  %4010 = vmatprep.subr.mxu0 0.0
  %4011 = vmatpush2.msra.mxu0 0.0
  %4012 = vmatprep.subr.mxu0 0.0
  %4013 = vmatpush2.msra.mxu0 0.0
  %4014 = vmatprep.subr.mxu0 0.0
  %4015 = vmatpush2.msra.mxu0 0.0
  %4016 = vmatprep.subr.mxu0 0.0
  %4017 = vmatpush2.msra.mxu0 0.0
  %4018 = vmatprep.subr.mxu0 0.0
  %4019 = vmatpush2.msra.mxu0 0.0
  %4020 = vmatprep.subr.mxu0 0.0
  %4021 = vmatpush2.msra.mxu0 0.0
  %4022 = vmatprep.subr.mxu0 0.0
  %4023 = vmatpush2.msra.mxu0 0.0
  %4024 = vmatprep.subr.mxu0 0.0
  %4025 = vmatpush2.msra.mxu0 0.0
  %4026 = vmatprep.subr.mxu0 0.0
  %4027 = vmatpush2.msra.mxu0 0.0
  %4028 = vmatprep.subr.mxu0 0.0
  %4029 = vmatpush2.msra.mxu0 0.0
  %4030 = vmatprep.mubr.f32.mxu0 0.0
  %4031 = vmatmul.mubr.f32.gmra.mxu0 %v3964
  %v4032 = vpop.f32.mrf.mxu0
  %v4033 = vadd.f32 0.0, %v4032
  %v4034 = vpop.f32.mrf.mxu0
  %4035 = vdwg.mxu0
  %4036 = vrot.lane.b32.xlu0 %v3781, 64
  %v4037 = vpop.permute.xlu0 %4036
  %v4040 = vsel %vm142, %v3959, 0
  %4042 = vmatprep.subr.mxu0 0.0
  %4043 = vmatpush1.msra.mxu0 0.0
  %4044 = vmatprep.subr.mxu0 0.0
  %4045 = vmatpush1.msra.mxu0 0.0
  %4046 = vmatprep.subr.mxu0 0.0
  %4047 = vmatpush1.msra.mxu0 0.0
  %4048 = vmatprep.subr.mxu0 0.0
  %4049 = vmatpush1.msra.mxu0 0.0
  %4050 = vmatprep.subr.mxu0 0.0
  %4051 = vmatpush1.msra.mxu0 0.0
  %4052 = vmatprep.subr.mxu0 0.0
  %4053 = vmatpush1.msra.mxu0 0.0
  %4054 = vmatprep.subr.mxu0 0.0
  %4055 = vmatpush1.msra.mxu0 0.0
  %4056 = vmatprep.subr.mxu0 0.0
  %4057 = vmatpush1.msra.mxu0 0.0
  %4058 = vmatprep.subr.mxu0 0.0
  %4059 = vmatpush1.msra.mxu0 0.0
  %4060 = vmatprep.subr.mxu0 0.0
  %4061 = vmatpush1.msra.mxu0 0.0
  %4062 = vmatprep.subr.mxu0 0.0
  %4063 = vmatpush1.msra.mxu0 0.0
  %4064 = vmatprep.subr.mxu0 0.0
  %4065 = vmatpush1.msra.mxu0 0.0
  %4066 = vmatprep.subr.mxu0 0.0
  %4067 = vmatpush1.msra.mxu0 0.0
  %4068 = vmatprep.subr.mxu0 0.0
  %4069 = vmatpush1.msra.mxu0 0.0
  %4070 = vmatprep.subr.mxu0 0.0
  %4071 = vmatpush1.msra.mxu0 0.0
  %4072 = vmatprep.subr.mxu0 0.0
  %4073 = vmatpush1.msra.mxu0 %v4037
  %4074 = vmatprep.subr.mxu0 0.0
  %4075 = vmatpush2.msra.mxu0 0.0
  %4076 = vmatprep.subr.mxu0 0.0
  %4077 = vmatpush2.msra.mxu0 0.0
  %4078 = vmatprep.subr.mxu0 0.0
  %4079 = vmatpush2.msra.mxu0 0.0
  %4080 = vmatprep.subr.mxu0 0.0
  %4081 = vmatpush2.msra.mxu0 0.0
  %4082 = vmatprep.subr.mxu0 0.0
  %4083 = vmatpush2.msra.mxu0 0.0
  %4084 = vmatprep.subr.mxu0 0.0
  %4085 = vmatpush2.msra.mxu0 0.0
  %4086 = vmatprep.subr.mxu0 0.0
  %4087 = vmatpush2.msra.mxu0 0.0
  %4088 = vmatprep.subr.mxu0 0.0
  %4089 = vmatpush2.msra.mxu0 0.0
  %4090 = vmatprep.subr.mxu0 0.0
  %4091 = vmatpush2.msra.mxu0 0.0
  %4092 = vmatprep.subr.mxu0 0.0
  %4093 = vmatpush2.msra.mxu0 0.0
  %4094 = vmatprep.subr.mxu0 0.0
  %4095 = vmatpush2.msra.mxu0 0.0
  %4096 = vmatprep.subr.mxu0 0.0
  %4097 = vmatpush2.msra.mxu0 0.0
  %4098 = vmatprep.subr.mxu0 0.0
  %4099 = vmatpush2.msra.mxu0 0.0
  %4100 = vmatprep.subr.mxu0 0.0
  %4101 = vmatpush2.msra.mxu0 0.0
  %4102 = vmatprep.subr.mxu0 0.0
  %4103 = vmatpush2.msra.mxu0 0.0
  %4104 = vmatprep.subr.mxu0 0.0
  %4105 = vmatpush2.msra.mxu0 0.0
  %4106 = vmatprep.mubr.f32.mxu0 0.0
  %4107 = vmatmul.mubr.f32.gmra.mxu0 %v4040
  %v4108 = vpop.f32.mrf.mxu0
  %v4109 = vadd.f32 0.0, %v4108
  %v4110 = vpop.f32.mrf.mxu0
  %4111 = vdwg.mxu0
  %4112 = vst.msk [vmem:[#allocation2] sm:$0xff] %vm142, %v4033
  %4113 = vst.msk [vmem:[#allocation2 + $0x8] sm:$0xff] %vm142, %v4109
  %4114 = vrot.lane.b32.xlu0 %v3776, 120
  %v4115 = vpop.permute.xlu0 %4114
  %4116 = vrot.lane.b32.xlu0 %v3776, 88
  %v4117 = vpop.permute.xlu0 %4116
  %v4118 = vsel %vm142, %v4115, 0
  %v4120 = vsel %vm142, %v4117, 0
  %4122 = vmatprep.subr.mxu0 0.0
  %4123 = vmatpush1.xpose.msra.mxu0 0.0
  %4124 = vmatprep.subr.mxu0 0.0
  %4125 = vmatpush1.xpose.msra.mxu0 0.0
  %4126 = vmatprep.subr.mxu0 0.0
  %4127 = vmatpush1.xpose.msra.mxu0 0.0
  %4128 = vmatprep.subr.mxu0 0.0
  %4129 = vmatpush1.xpose.msra.mxu0 0.0
  %4130 = vmatprep.subr.mxu0 0.0
  %4131 = vmatpush1.xpose.msra.mxu0 0.0
  %4132 = vmatprep.subr.mxu0 0.0
  %4133 = vmatpush1.xpose.msra.mxu0 0.0
  %4134 = vmatprep.subr.mxu0 0.0
  %4135 = vmatpush1.xpose.msra.mxu0 0.0
  %4136 = vmatprep.subr.mxu0 0.0
  %4137 = vmatpush1.xpose.msra.mxu0 0.0
  %4138 = vmatprep.subr.mxu0 0.0
  %4139 = vmatpush1.xpose.msra.mxu0 0.0
  %4140 = vmatprep.subr.mxu0 0.0
  %4141 = vmatpush1.xpose.msra.mxu0 0.0
  %4142 = vmatprep.subr.mxu0 0.0
  %4143 = vmatpush1.xpose.msra.mxu0 0.0
  %4144 = vmatprep.subr.mxu0 0.0
  %4145 = vmatpush1.xpose.msra.mxu0 0.0
  %4146 = vmatprep.subr.mxu0 0.0
  %4147 = vmatpush1.xpose.msra.mxu0 0.0
  %4148 = vmatprep.subr.mxu0 0.0
  %4149 = vmatpush1.xpose.msra.mxu0 0.0
  %4150 = vmatprep.subr.mxu0 0.0
  %4151 = vmatpush1.xpose.msra.mxu0 0.0
  %4152 = vmatprep.subr.mxu0 0.0
  %4153 = vmatpush1.xpose.msra.mxu0 %v4120
  %4154 = vmatprep.subr.mxu0 0.0
  %4155 = vmatpush2.xpose.msra.mxu0 0.0
  %4156 = vmatprep.subr.mxu0 0.0
  %4157 = vmatpush2.xpose.msra.mxu0 0.0
  %4158 = vmatprep.subr.mxu0 0.0
  %4159 = vmatpush2.xpose.msra.mxu0 0.0
  %4160 = vmatprep.subr.mxu0 0.0
  %4161 = vmatpush2.xpose.msra.mxu0 0.0
  %4162 = vmatprep.subr.mxu0 0.0
  %4163 = vmatpush2.xpose.msra.mxu0 0.0
  %4164 = vmatprep.subr.mxu0 0.0
  %4165 = vmatpush2.xpose.msra.mxu0 0.0
  %4166 = vmatprep.subr.mxu0 0.0
  %4167 = vmatpush2.xpose.msra.mxu0 0.0
  %4168 = vmatprep.subr.mxu0 0.0
  %4169 = vmatpush2.xpose.msra.mxu0 0.0
  %4170 = vmatprep.subr.mxu0 0.0
  %4171 = vmatpush2.xpose.msra.mxu0 0.0
  %4172 = vmatprep.subr.mxu0 0.0
  %4173 = vmatpush2.xpose.msra.mxu0 0.0
  %4174 = vmatprep.subr.mxu0 0.0
  %4175 = vmatpush2.xpose.msra.mxu0 0.0
  %4176 = vmatprep.subr.mxu0 0.0
  %4177 = vmatpush2.xpose.msra.mxu0 0.0
  %4178 = vmatprep.subr.mxu0 0.0
  %4179 = vmatpush2.xpose.msra.mxu0 0.0
  %4180 = vmatprep.subr.mxu0 0.0
  %4181 = vmatpush2.xpose.msra.mxu0 0.0
  %4182 = vmatprep.subr.mxu0 0.0
  %4183 = vmatpush2.xpose.msra.mxu0 0.0
  %4184 = vmatprep.subr.mxu0 0.0
  %4185 = vmatpush2.xpose.msra.mxu0 0.0
  %4186 = vmatprep.mubr.f32.mxu0 0.0
  %4187 = vmatmul.mubr.f32.gmra.mxu0 %v4118
  %v4188 = vpop.f32.mrf.mxu0
  %v4189 = vadd.f32 %v132, %v4188
  %v4190 = vpop.f32.mrf.mxu0
  %4191 = vdwg.mxu0
  %4192 = vrot.lane.b32.xlu0 %v3781, 120
  %v4193 = vpop.permute.xlu0 %4192
  %4194 = vrot.lane.b32.xlu0 %v3781, 88
  %v4195 = vpop.permute.xlu0 %4194
  %v4196 = vsel %vm142, %v4193, 0
  %v4198 = vsel %vm142, %v4195, 0
  %4200 = vmatprep.subr.mxu0 0.0
  %4201 = vmatpush1.xpose.msra.mxu0 0.0
  %4202 = vmatprep.subr.mxu0 0.0
  %4203 = vmatpush1.xpose.msra.mxu0 0.0
  %4204 = vmatprep.subr.mxu0 0.0
  %4205 = vmatpush1.xpose.msra.mxu0 0.0
  %4206 = vmatprep.subr.mxu0 0.0
  %4207 = vmatpush1.xpose.msra.mxu0 0.0
  %4208 = vmatprep.subr.mxu0 0.0
  %4209 = vmatpush1.xpose.msra.mxu0 0.0
  %4210 = vmatprep.subr.mxu0 0.0
  %4211 = vmatpush1.xpose.msra.mxu0 0.0
  %4212 = vmatprep.subr.mxu0 0.0
  %4213 = vmatpush1.xpose.msra.mxu0 0.0
  %4214 = vmatprep.subr.mxu0 0.0
  %4215 = vmatpush1.xpose.msra.mxu0 0.0
  %4216 = vmatprep.subr.mxu0 0.0
  %4217 = vmatpush1.xpose.msra.mxu0 0.0
  %4218 = vmatprep.subr.mxu0 0.0
  %4219 = vmatpush1.xpose.msra.mxu0 0.0
  %4220 = vmatprep.subr.mxu0 0.0
  %4221 = vmatpush1.xpose.msra.mxu0 0.0
  %4222 = vmatprep.subr.mxu0 0.0
  %4223 = vmatpush1.xpose.msra.mxu0 0.0
  %4224 = vmatprep.subr.mxu0 0.0
  %4225 = vmatpush1.xpose.msra.mxu0 0.0
  %4226 = vmatprep.subr.mxu0 0.0
  %4227 = vmatpush1.xpose.msra.mxu0 0.0
  %4228 = vmatprep.subr.mxu0 0.0
  %4229 = vmatpush1.xpose.msra.mxu0 0.0
  %4230 = vmatprep.subr.mxu0 0.0
  %4231 = vmatpush1.xpose.msra.mxu0 %v4198
  %4232 = vmatprep.subr.mxu0 0.0
  %4233 = vmatpush2.xpose.msra.mxu0 0.0
  %4234 = vmatprep.subr.mxu0 0.0
  %4235 = vmatpush2.xpose.msra.mxu0 0.0
  %4236 = vmatprep.subr.mxu0 0.0
  %4237 = vmatpush2.xpose.msra.mxu0 0.0
  %4238 = vmatprep.subr.mxu0 0.0
  %4239 = vmatpush2.xpose.msra.mxu0 0.0
  %4240 = vmatprep.subr.mxu0 0.0
  %4241 = vmatpush2.xpose.msra.mxu0 0.0
  %4242 = vmatprep.subr.mxu0 0.0
  %4243 = vmatpush2.xpose.msra.mxu0 0.0
  %4244 = vmatprep.subr.mxu0 0.0
  %4245 = vmatpush2.xpose.msra.mxu0 0.0
  %4246 = vmatprep.subr.mxu0 0.0
  %4247 = vmatpush2.xpose.msra.mxu0 0.0
  %4248 = vmatprep.subr.mxu0 0.0
  %4249 = vmatpush2.xpose.msra.mxu0 0.0
  %4250 = vmatprep.subr.mxu0 0.0
  %4251 = vmatpush2.xpose.msra.mxu0 0.0
  %4252 = vmatprep.subr.mxu0 0.0
  %4253 = vmatpush2.xpose.msra.mxu0 0.0
  %4254 = vmatprep.subr.mxu0 0.0
  %4255 = vmatpush2.xpose.msra.mxu0 0.0
  %4256 = vmatprep.subr.mxu0 0.0
  %4257 = vmatpush2.xpose.msra.mxu0 0.0
  %4258 = vmatprep.subr.mxu0 0.0
  %4259 = vmatpush2.xpose.msra.mxu0 0.0
  %4260 = vmatprep.subr.mxu0 0.0
  %4261 = vmatpush2.xpose.msra.mxu0 0.0
  %4262 = vmatprep.subr.mxu0 0.0
  %4263 = vmatpush2.xpose.msra.mxu0 0.0
  %4264 = vmatprep.mubr.f32.mxu0 0.0
  %4265 = vmatmul.mubr.f32.gmra.mxu0 %v4196
  %v4266 = vpop.f32.mrf.mxu0
  %v4267 = vadd.f32 %v136, %v4266
  %v4268 = vpop.f32.mrf.mxu0
  %4269 = vdwg.mxu0
  %v4270 = vsel %vm142, %v4189, -inf
  %4271 = vmax.xlane.f32.xlu0 %v4270
  %v4272 = vpop.xlane.xlu0 %4271
  %v4273 = vsel %vm142, %v4267, -inf
  %4274 = vmax.xlane.f32.xlu0 %v4273
  %v4275 = vpop.xlane.xlu0 %4274
  %v4276 = vsub.f32 %v4189, %v4272
  %v4277 = vsub.f32 %v4267, %v4275
  %v4278 = vmul.f32 %v4276, 1.442695
  %v4279 = vpow.pop %v4278
  %v4280 = vmul.f32 %v4277, 1.442695
  %v4281 = vpow.pop %v4280
  %v4282 = vsel %vm142, %v4279, 0.0
  %4283 = vadd.xlane.f32.xlu0 %v4282
  %v4284 = vpop.xlane.xlu0 %4283
  %v4285 = vsel %vm142, %v4281, 0.0
  %4286 = vadd.xlane.f32.xlu0 %v4285
  %v4287 = vpop.xlane.xlu0 %4286
  %v4288 = vrcp.pop %v4284
  %v4289 = vrcp.pop %v4287
  %v4290 = vmul.f32 %v4279, %v4288
  %v4291 = vmul.f32 %v4281, %v4289
  %4292 = vrot.lane.b32.xlu0 %v3776, 56
  %v4293 = vpop.permute.xlu0 %4292
  %v4296 = vsel %vm142, %v4290, 0
  %4298 = vmatprep.subr.mxu0 0.0
  %4299 = vmatpush1.msra.mxu0 0.0
  %4300 = vmatprep.subr.mxu0 0.0
  %4301 = vmatpush1.msra.mxu0 0.0
  %4302 = vmatprep.subr.mxu0 0.0
  %4303 = vmatpush1.msra.mxu0 0.0
  %4304 = vmatprep.subr.mxu0 0.0
  %4305 = vmatpush1.msra.mxu0 0.0
  %4306 = vmatprep.subr.mxu0 0.0
  %4307 = vmatpush1.msra.mxu0 0.0
  %4308 = vmatprep.subr.mxu0 0.0
  %4309 = vmatpush1.msra.mxu0 0.0
  %4310 = vmatprep.subr.mxu0 0.0
  %4311 = vmatpush1.msra.mxu0 0.0
  %4312 = vmatprep.subr.mxu0 0.0
  %4313 = vmatpush1.msra.mxu0 0.0
  %4314 = vmatprep.subr.mxu0 0.0
  %4315 = vmatpush1.msra.mxu0 0.0
  %4316 = vmatprep.subr.mxu0 0.0
  %4317 = vmatpush1.msra.mxu0 0.0
  %4318 = vmatprep.subr.mxu0 0.0
  %4319 = vmatpush1.msra.mxu0 0.0
  %4320 = vmatprep.subr.mxu0 0.0
  %4321 = vmatpush1.msra.mxu0 0.0
  %4322 = vmatprep.subr.mxu0 0.0
  %4323 = vmatpush1.msra.mxu0 0.0
  %4324 = vmatprep.subr.mxu0 0.0
  %4325 = vmatpush1.msra.mxu0 0.0
  %4326 = vmatprep.subr.mxu0 0.0
  %4327 = vmatpush1.msra.mxu0 0.0
  %4328 = vmatprep.subr.mxu0 0.0
  %4329 = vmatpush1.msra.mxu0 %v4293
  %4330 = vmatprep.subr.mxu0 0.0
  %4331 = vmatpush2.msra.mxu0 0.0
  %4332 = vmatprep.subr.mxu0 0.0
  %4333 = vmatpush2.msra.mxu0 0.0
  %4334 = vmatprep.subr.mxu0 0.0
  %4335 = vmatpush2.msra.mxu0 0.0
  %4336 = vmatprep.subr.mxu0 0.0
  %4337 = vmatpush2.msra.mxu0 0.0
  %4338 = vmatprep.subr.mxu0 0.0
  %4339 = vmatpush2.msra.mxu0 0.0
  %4340 = vmatprep.subr.mxu0 0.0
  %4341 = vmatpush2.msra.mxu0 0.0
  %4342 = vmatprep.subr.mxu0 0.0
  %4343 = vmatpush2.msra.mxu0 0.0
  %4344 = vmatprep.subr.mxu0 0.0
  %4345 = vmatpush2.msra.mxu0 0.0
  %4346 = vmatprep.subr.mxu0 0.0
  %4347 = vmatpush2.msra.mxu0 0.0
  %4348 = vmatprep.subr.mxu0 0.0
  %4349 = vmatpush2.msra.mxu0 0.0
  %4350 = vmatprep.subr.mxu0 0.0
  %4351 = vmatpush2.msra.mxu0 0.0
  %4352 = vmatprep.subr.mxu0 0.0
  %4353 = vmatpush2.msra.mxu0 0.0
  %4354 = vmatprep.subr.mxu0 0.0
  %4355 = vmatpush2.msra.mxu0 0.0
  %4356 = vmatprep.subr.mxu0 0.0
  %4357 = vmatpush2.msra.mxu0 0.0
  %4358 = vmatprep.subr.mxu0 0.0
  %4359 = vmatpush2.msra.mxu0 0.0
  %4360 = vmatprep.subr.mxu0 0.0
  %4361 = vmatpush2.msra.mxu0 0.0
  %4362 = vmatprep.mubr.f32.mxu0 0.0
  %4363 = vmatmul.mubr.f32.gmra.mxu0 %v4296
  %v4364 = vpop.f32.mrf.mxu0
  %v4365 = vadd.f32 0.0, %v4364
  %v4366 = vpop.f32.mrf.mxu0
  %4367 = vdwg.mxu0
  %4368 = vrot.lane.b32.xlu0 %v3781, 56
  %v4369 = vpop.permute.xlu0 %4368
  %v4372 = vsel %vm142, %v4291, 0
  %4374 = vmatprep.subr.mxu0 0.0
  %4375 = vmatpush1.msra.mxu0 0.0
  %4376 = vmatprep.subr.mxu0 0.0
  %4377 = vmatpush1.msra.mxu0 0.0
  %4378 = vmatprep.subr.mxu0 0.0
  %4379 = vmatpush1.msra.mxu0 0.0
  %4380 = vmatprep.subr.mxu0 0.0
  %4381 = vmatpush1.msra.mxu0 0.0
  %4382 = vmatprep.subr.mxu0 0.0
  %4383 = vmatpush1.msra.mxu0 0.0
  %4384 = vmatprep.subr.mxu0 0.0
  %4385 = vmatpush1.msra.mxu0 0.0
  %4386 = vmatprep.subr.mxu0 0.0
  %4387 = vmatpush1.msra.mxu0 0.0
  %4388 = vmatprep.subr.mxu0 0.0
  %4389 = vmatpush1.msra.mxu0 0.0
  %4390 = vmatprep.subr.mxu0 0.0
  %4391 = vmatpush1.msra.mxu0 0.0
  %4392 = vmatprep.subr.mxu0 0.0
  %4393 = vmatpush1.msra.mxu0 0.0
  %4394 = vmatprep.subr.mxu0 0.0
  %4395 = vmatpush1.msra.mxu0 0.0
  %4396 = vmatprep.subr.mxu0 0.0
  %4397 = vmatpush1.msra.mxu0 0.0
  %4398 = vmatprep.subr.mxu0 0.0
  %4399 = vmatpush1.msra.mxu0 0.0
  %4400 = vmatprep.subr.mxu0 0.0
  %4401 = vmatpush1.msra.mxu0 0.0
  %4402 = vmatprep.subr.mxu0 0.0
  %4403 = vmatpush1.msra.mxu0 0.0
  %4404 = vmatprep.subr.mxu0 0.0
  %4405 = vmatpush1.msra.mxu0 %v4369
  %4406 = vmatprep.subr.mxu0 0.0
  %4407 = vmatpush2.msra.mxu0 0.0
  %4408 = vmatprep.subr.mxu0 0.0
  %4409 = vmatpush2.msra.mxu0 0.0
  %4410 = vmatprep.subr.mxu0 0.0
  %4411 = vmatpush2.msra.mxu0 0.0
  %4412 = vmatprep.subr.mxu0 0.0
  %4413 = vmatpush2.msra.mxu0 0.0
  %4414 = vmatprep.subr.mxu0 0.0
  %4415 = vmatpush2.msra.mxu0 0.0
  %4416 = vmatprep.subr.mxu0 0.0
  %4417 = vmatpush2.msra.mxu0 0.0
  %4418 = vmatprep.subr.mxu0 0.0
  %4419 = vmatpush2.msra.mxu0 0.0
  %4420 = vmatprep.subr.mxu0 0.0
  %4421 = vmatpush2.msra.mxu0 0.0
  %4422 = vmatprep.subr.mxu0 0.0
  %4423 = vmatpush2.msra.mxu0 0.0
  %4424 = vmatprep.subr.mxu0 0.0
  %4425 = vmatpush2.msra.mxu0 0.0
  %4426 = vmatprep.subr.mxu0 0.0
  %4427 = vmatpush2.msra.mxu0 0.0
  %4428 = vmatprep.subr.mxu0 0.0
  %4429 = vmatpush2.msra.mxu0 0.0
  %4430 = vmatprep.subr.mxu0 0.0
  %4431 = vmatpush2.msra.mxu0 0.0
  %4432 = vmatprep.subr.mxu0 0.0
  %4433 = vmatpush2.msra.mxu0 0.0
  %4434 = vmatprep.subr.mxu0 0.0
  %4435 = vmatpush2.msra.mxu0 0.0
  %4436 = vmatprep.subr.mxu0 0.0
  %4437 = vmatpush2.msra.mxu0 0.0
  %4438 = vmatprep.mubr.f32.mxu0 0.0
  %4439 = vmatmul.mubr.f32.gmra.mxu0 %v4372
  %v4440 = vpop.f32.mrf.mxu0
  %v4441 = vadd.f32 0.0, %v4440
  %v4442 = vpop.f32.mrf.mxu0
  %4443 = vdwg.mxu0
  %4446 = vrot.lane.b32.xlu0 %v4365, 8
  %v4447 = vpop.permute.xlu0 %4446
  %4448 = vrot.lane.b32.xlu0 %v4441, 8
  %v4449 = vpop.permute.xlu0 %4448
  %4452 = vst.msk [vmem:[#allocation2] sm:$0xff] %vm808, %v4447
  %4453 = vst.msk [vmem:[#allocation2 + $0x8] sm:$0xff] %vm808, %v4449
  %4454 = vrot.lane.b32.xlu0 %v3776, 112
  %v4455 = vpop.permute.xlu0 %4454
  %4456 = vrot.lane.b32.xlu0 %v3776, 80
  %v4457 = vpop.permute.xlu0 %4456
  %v4458 = vsel %vm142, %v4455, 0
  %v4460 = vsel %vm142, %v4457, 0
  %4462 = vmatprep.subr.mxu0 0.0
  %4463 = vmatpush1.xpose.msra.mxu0 0.0
  %4464 = vmatprep.subr.mxu0 0.0
  %4465 = vmatpush1.xpose.msra.mxu0 0.0
  %4466 = vmatprep.subr.mxu0 0.0
  %4467 = vmatpush1.xpose.msra.mxu0 0.0
  %4468 = vmatprep.subr.mxu0 0.0
  %4469 = vmatpush1.xpose.msra.mxu0 0.0
  %4470 = vmatprep.subr.mxu0 0.0
  %4471 = vmatpush1.xpose.msra.mxu0 0.0
  %4472 = vmatprep.subr.mxu0 0.0
  %4473 = vmatpush1.xpose.msra.mxu0 0.0
  %4474 = vmatprep.subr.mxu0 0.0
  %4475 = vmatpush1.xpose.msra.mxu0 0.0
  %4476 = vmatprep.subr.mxu0 0.0
  %4477 = vmatpush1.xpose.msra.mxu0 0.0
  %4478 = vmatprep.subr.mxu0 0.0
  %4479 = vmatpush1.xpose.msra.mxu0 0.0
  %4480 = vmatprep.subr.mxu0 0.0
  %4481 = vmatpush1.xpose.msra.mxu0 0.0
  %4482 = vmatprep.subr.mxu0 0.0
  %4483 = vmatpush1.xpose.msra.mxu0 0.0
  %4484 = vmatprep.subr.mxu0 0.0
  %4485 = vmatpush1.xpose.msra.mxu0 0.0
  %4486 = vmatprep.subr.mxu0 0.0
  %4487 = vmatpush1.xpose.msra.mxu0 0.0
  %4488 = vmatprep.subr.mxu0 0.0
  %4489 = vmatpush1.xpose.msra.mxu0 0.0
  %4490 = vmatprep.subr.mxu0 0.0
  %4491 = vmatpush1.xpose.msra.mxu0 0.0
  %4492 = vmatprep.subr.mxu0 0.0
  %4493 = vmatpush1.xpose.msra.mxu0 %v4460
  %4494 = vmatprep.subr.mxu0 0.0
  %4495 = vmatpush2.xpose.msra.mxu0 0.0
  %4496 = vmatprep.subr.mxu0 0.0
  %4497 = vmatpush2.xpose.msra.mxu0 0.0
  %4498 = vmatprep.subr.mxu0 0.0
  %4499 = vmatpush2.xpose.msra.mxu0 0.0
  %4500 = vmatprep.subr.mxu0 0.0
  %4501 = vmatpush2.xpose.msra.mxu0 0.0
  %4502 = vmatprep.subr.mxu0 0.0
  %4503 = vmatpush2.xpose.msra.mxu0 0.0
  %4504 = vmatprep.subr.mxu0 0.0
  %4505 = vmatpush2.xpose.msra.mxu0 0.0
  %4506 = vmatprep.subr.mxu0 0.0
  %4507 = vmatpush2.xpose.msra.mxu0 0.0
  %4508 = vmatprep.subr.mxu0 0.0
  %4509 = vmatpush2.xpose.msra.mxu0 0.0
  %4510 = vmatprep.subr.mxu0 0.0
  %4511 = vmatpush2.xpose.msra.mxu0 0.0
  %4512 = vmatprep.subr.mxu0 0.0
  %4513 = vmatpush2.xpose.msra.mxu0 0.0
  %4514 = vmatprep.subr.mxu0 0.0
  %4515 = vmatpush2.xpose.msra.mxu0 0.0
  %4516 = vmatprep.subr.mxu0 0.0
  %4517 = vmatpush2.xpose.msra.mxu0 0.0
  %4518 = vmatprep.subr.mxu0 0.0
  %4519 = vmatpush2.xpose.msra.mxu0 0.0
  %4520 = vmatprep.subr.mxu0 0.0
  %4521 = vmatpush2.xpose.msra.mxu0 0.0
  %4522 = vmatprep.subr.mxu0 0.0
  %4523 = vmatpush2.xpose.msra.mxu0 0.0
  %4524 = vmatprep.subr.mxu0 0.0
  %4525 = vmatpush2.xpose.msra.mxu0 0.0
  %4526 = vmatprep.mubr.f32.mxu0 0.0
  %4527 = vmatmul.mubr.f32.gmra.mxu0 %v4458
  %v4528 = vpop.f32.mrf.mxu0
  %v4529 = vadd.f32 %v132, %v4528
  %v4530 = vpop.f32.mrf.mxu0
  %4531 = vdwg.mxu0
  %4532 = vrot.lane.b32.xlu0 %v3781, 112
  %v4533 = vpop.permute.xlu0 %4532
  %4534 = vrot.lane.b32.xlu0 %v3781, 80
  %v4535 = vpop.permute.xlu0 %4534
  %v4536 = vsel %vm142, %v4533, 0
  %v4538 = vsel %vm142, %v4535, 0
  %4540 = vmatprep.subr.mxu0 0.0
  %4541 = vmatpush1.xpose.msra.mxu0 0.0
  %4542 = vmatprep.subr.mxu0 0.0
  %4543 = vmatpush1.xpose.msra.mxu0 0.0
  %4544 = vmatprep.subr.mxu0 0.0
  %4545 = vmatpush1.xpose.msra.mxu0 0.0
  %4546 = vmatprep.subr.mxu0 0.0
  %4547 = vmatpush1.xpose.msra.mxu0 0.0
  %4548 = vmatprep.subr.mxu0 0.0
  %4549 = vmatpush1.xpose.msra.mxu0 0.0
  %4550 = vmatprep.subr.mxu0 0.0
  %4551 = vmatpush1.xpose.msra.mxu0 0.0
  %4552 = vmatprep.subr.mxu0 0.0
  %4553 = vmatpush1.xpose.msra.mxu0 0.0
  %4554 = vmatprep.subr.mxu0 0.0
  %4555 = vmatpush1.xpose.msra.mxu0 0.0
  %4556 = vmatprep.subr.mxu0 0.0
  %4557 = vmatpush1.xpose.msra.mxu0 0.0
  %4558 = vmatprep.subr.mxu0 0.0
  %4559 = vmatpush1.xpose.msra.mxu0 0.0
  %4560 = vmatprep.subr.mxu0 0.0
  %4561 = vmatpush1.xpose.msra.mxu0 0.0
  %4562 = vmatprep.subr.mxu0 0.0
  %4563 = vmatpush1.xpose.msra.mxu0 0.0
  %4564 = vmatprep.subr.mxu0 0.0
  %4565 = vmatpush1.xpose.msra.mxu0 0.0
  %4566 = vmatprep.subr.mxu0 0.0
  %4567 = vmatpush1.xpose.msra.mxu0 0.0
  %4568 = vmatprep.subr.mxu0 0.0
  %4569 = vmatpush1.xpose.msra.mxu0 0.0
  %4570 = vmatprep.subr.mxu0 0.0
  %4571 = vmatpush1.xpose.msra.mxu0 %v4538
  %4572 = vmatprep.subr.mxu0 0.0
  %4573 = vmatpush2.xpose.msra.mxu0 0.0
  %4574 = vmatprep.subr.mxu0 0.0
  %4575 = vmatpush2.xpose.msra.mxu0 0.0
  %4576 = vmatprep.subr.mxu0 0.0
  %4577 = vmatpush2.xpose.msra.mxu0 0.0
  %4578 = vmatprep.subr.mxu0 0.0
  %4579 = vmatpush2.xpose.msra.mxu0 0.0
  %4580 = vmatprep.subr.mxu0 0.0
  %4581 = vmatpush2.xpose.msra.mxu0 0.0
  %4582 = vmatprep.subr.mxu0 0.0
  %4583 = vmatpush2.xpose.msra.mxu0 0.0
  %4584 = vmatprep.subr.mxu0 0.0
  %4585 = vmatpush2.xpose.msra.mxu0 0.0
  %4586 = vmatprep.subr.mxu0 0.0
  %4587 = vmatpush2.xpose.msra.mxu0 0.0
  %4588 = vmatprep.subr.mxu0 0.0
  %4589 = vmatpush2.xpose.msra.mxu0 0.0
  %4590 = vmatprep.subr.mxu0 0.0
  %4591 = vmatpush2.xpose.msra.mxu0 0.0
  %4592 = vmatprep.subr.mxu0 0.0
  %4593 = vmatpush2.xpose.msra.mxu0 0.0
  %4594 = vmatprep.subr.mxu0 0.0
  %4595 = vmatpush2.xpose.msra.mxu0 0.0
  %4596 = vmatprep.subr.mxu0 0.0
  %4597 = vmatpush2.xpose.msra.mxu0 0.0
  %4598 = vmatprep.subr.mxu0 0.0
  %4599 = vmatpush2.xpose.msra.mxu0 0.0
  %4600 = vmatprep.subr.mxu0 0.0
  %4601 = vmatpush2.xpose.msra.mxu0 0.0
  %4602 = vmatprep.subr.mxu0 0.0
  %4603 = vmatpush2.xpose.msra.mxu0 0.0
  %4604 = vmatprep.mubr.f32.mxu0 0.0
  %4605 = vmatmul.mubr.f32.gmra.mxu0 %v4536
  %v4606 = vpop.f32.mrf.mxu0
  %v4607 = vadd.f32 %v136, %v4606
  %v4608 = vpop.f32.mrf.mxu0
  %4609 = vdwg.mxu0
  %v4610 = vsel %vm142, %v4529, -inf
  %4611 = vmax.xlane.f32.xlu0 %v4610
  %v4612 = vpop.xlane.xlu0 %4611
  %v4613 = vsel %vm142, %v4607, -inf
  %4614 = vmax.xlane.f32.xlu0 %v4613
  %v4615 = vpop.xlane.xlu0 %4614
  %v4616 = vsub.f32 %v4529, %v4612
  %v4617 = vsub.f32 %v4607, %v4615
  %v4618 = vmul.f32 %v4616, 1.442695
  %v4619 = vpow.pop %v4618
  %v4620 = vmul.f32 %v4617, 1.442695
  %v4621 = vpow.pop %v4620
  %v4622 = vsel %vm142, %v4619, 0.0
  %4623 = vadd.xlane.f32.xlu0 %v4622
  %v4624 = vpop.xlane.xlu0 %4623
  %v4625 = vsel %vm142, %v4621, 0.0
  %4626 = vadd.xlane.f32.xlu0 %v4625
  %v4627 = vpop.xlane.xlu0 %4626
  %v4628 = vrcp.pop %v4624
  %v4629 = vrcp.pop %v4627
  %v4630 = vmul.f32 %v4619, %v4628
  %v4631 = vmul.f32 %v4621, %v4629
  %4632 = vrot.lane.b32.xlu0 %v3776, 48
  %v4633 = vpop.permute.xlu0 %4632
  %v4636 = vsel %vm142, %v4630, 0
  %4638 = vmatprep.subr.mxu0 0.0
  %4639 = vmatpush1.msra.mxu0 0.0
  %4640 = vmatprep.subr.mxu0 0.0
  %4641 = vmatpush1.msra.mxu0 0.0
  %4642 = vmatprep.subr.mxu0 0.0
  %4643 = vmatpush1.msra.mxu0 0.0
  %4644 = vmatprep.subr.mxu0 0.0
  %4645 = vmatpush1.msra.mxu0 0.0
  %4646 = vmatprep.subr.mxu0 0.0
  %4647 = vmatpush1.msra.mxu0 0.0
  %4648 = vmatprep.subr.mxu0 0.0
  %4649 = vmatpush1.msra.mxu0 0.0
  %4650 = vmatprep.subr.mxu0 0.0
  %4651 = vmatpush1.msra.mxu0 0.0
  %4652 = vmatprep.subr.mxu0 0.0
  %4653 = vmatpush1.msra.mxu0 0.0
  %4654 = vmatprep.subr.mxu0 0.0
  %4655 = vmatpush1.msra.mxu0 0.0
  %4656 = vmatprep.subr.mxu0 0.0
  %4657 = vmatpush1.msra.mxu0 0.0
  %4658 = vmatprep.subr.mxu0 0.0
  %4659 = vmatpush1.msra.mxu0 0.0
  %4660 = vmatprep.subr.mxu0 0.0
  %4661 = vmatpush1.msra.mxu0 0.0
  %4662 = vmatprep.subr.mxu0 0.0
  %4663 = vmatpush1.msra.mxu0 0.0
  %4664 = vmatprep.subr.mxu0 0.0
  %4665 = vmatpush1.msra.mxu0 0.0
  %4666 = vmatprep.subr.mxu0 0.0
  %4667 = vmatpush1.msra.mxu0 0.0
  %4668 = vmatprep.subr.mxu0 0.0
  %4669 = vmatpush1.msra.mxu0 %v4633
  %4670 = vmatprep.subr.mxu0 0.0
  %4671 = vmatpush2.msra.mxu0 0.0
  %4672 = vmatprep.subr.mxu0 0.0
  %4673 = vmatpush2.msra.mxu0 0.0
  %4674 = vmatprep.subr.mxu0 0.0
  %4675 = vmatpush2.msra.mxu0 0.0
  %4676 = vmatprep.subr.mxu0 0.0
  %4677 = vmatpush2.msra.mxu0 0.0
  %4678 = vmatprep.subr.mxu0 0.0
  %4679 = vmatpush2.msra.mxu0 0.0
  %4680 = vmatprep.subr.mxu0 0.0
  %4681 = vmatpush2.msra.mxu0 0.0
  %4682 = vmatprep.subr.mxu0 0.0
  %4683 = vmatpush2.msra.mxu0 0.0
  %4684 = vmatprep.subr.mxu0 0.0
  %4685 = vmatpush2.msra.mxu0 0.0
  %4686 = vmatprep.subr.mxu0 0.0
  %4687 = vmatpush2.msra.mxu0 0.0
  %4688 = vmatprep.subr.mxu0 0.0
  %4689 = vmatpush2.msra.mxu0 0.0
  %4690 = vmatprep.subr.mxu0 0.0
  %4691 = vmatpush2.msra.mxu0 0.0
  %4692 = vmatprep.subr.mxu0 0.0
  %4693 = vmatpush2.msra.mxu0 0.0
  %4694 = vmatprep.subr.mxu0 0.0
  %4695 = vmatpush2.msra.mxu0 0.0
  %4696 = vmatprep.subr.mxu0 0.0
  %4697 = vmatpush2.msra.mxu0 0.0
  %4698 = vmatprep.subr.mxu0 0.0
  %4699 = vmatpush2.msra.mxu0 0.0
  %4700 = vmatprep.subr.mxu0 0.0
  %4701 = vmatpush2.msra.mxu0 0.0
  %4702 = vmatprep.mubr.f32.mxu0 0.0
  %4703 = vmatmul.mubr.f32.gmra.mxu0 %v4636
  %v4704 = vpop.f32.mrf.mxu0
  %v4705 = vadd.f32 0.0, %v4704
  %v4706 = vpop.f32.mrf.mxu0
  %4707 = vdwg.mxu0
  %4708 = vrot.lane.b32.xlu0 %v3781, 48
  %v4709 = vpop.permute.xlu0 %4708
  %v4712 = vsel %vm142, %v4631, 0
  %4714 = vmatprep.subr.mxu0 0.0
  %4715 = vmatpush1.msra.mxu0 0.0
  %4716 = vmatprep.subr.mxu0 0.0
  %4717 = vmatpush1.msra.mxu0 0.0
  %4718 = vmatprep.subr.mxu0 0.0
  %4719 = vmatpush1.msra.mxu0 0.0
  %4720 = vmatprep.subr.mxu0 0.0
  %4721 = vmatpush1.msra.mxu0 0.0
  %4722 = vmatprep.subr.mxu0 0.0
  %4723 = vmatpush1.msra.mxu0 0.0
  %4724 = vmatprep.subr.mxu0 0.0
  %4725 = vmatpush1.msra.mxu0 0.0
  %4726 = vmatprep.subr.mxu0 0.0
  %4727 = vmatpush1.msra.mxu0 0.0
  %4728 = vmatprep.subr.mxu0 0.0
  %4729 = vmatpush1.msra.mxu0 0.0
  %4730 = vmatprep.subr.mxu0 0.0
  %4731 = vmatpush1.msra.mxu0 0.0
  %4732 = vmatprep.subr.mxu0 0.0
  %4733 = vmatpush1.msra.mxu0 0.0
  %4734 = vmatprep.subr.mxu0 0.0
  %4735 = vmatpush1.msra.mxu0 0.0
  %4736 = vmatprep.subr.mxu0 0.0
  %4737 = vmatpush1.msra.mxu0 0.0
  %4738 = vmatprep.subr.mxu0 0.0
  %4739 = vmatpush1.msra.mxu0 0.0
  %4740 = vmatprep.subr.mxu0 0.0
  %4741 = vmatpush1.msra.mxu0 0.0
  %4742 = vmatprep.subr.mxu0 0.0
  %4743 = vmatpush1.msra.mxu0 0.0
  %4744 = vmatprep.subr.mxu0 0.0
  %4745 = vmatpush1.msra.mxu0 %v4709
  %4746 = vmatprep.subr.mxu0 0.0
  %4747 = vmatpush2.msra.mxu0 0.0
  %4748 = vmatprep.subr.mxu0 0.0
  %4749 = vmatpush2.msra.mxu0 0.0
  %4750 = vmatprep.subr.mxu0 0.0
  %4751 = vmatpush2.msra.mxu0 0.0
  %4752 = vmatprep.subr.mxu0 0.0
  %4753 = vmatpush2.msra.mxu0 0.0
  %4754 = vmatprep.subr.mxu0 0.0
  %4755 = vmatpush2.msra.mxu0 0.0
  %4756 = vmatprep.subr.mxu0 0.0
  %4757 = vmatpush2.msra.mxu0 0.0
  %4758 = vmatprep.subr.mxu0 0.0
  %4759 = vmatpush2.msra.mxu0 0.0
  %4760 = vmatprep.subr.mxu0 0.0
  %4761 = vmatpush2.msra.mxu0 0.0
  %4762 = vmatprep.subr.mxu0 0.0
  %4763 = vmatpush2.msra.mxu0 0.0
  %4764 = vmatprep.subr.mxu0 0.0
  %4765 = vmatpush2.msra.mxu0 0.0
  %4766 = vmatprep.subr.mxu0 0.0
  %4767 = vmatpush2.msra.mxu0 0.0
  %4768 = vmatprep.subr.mxu0 0.0
  %4769 = vmatpush2.msra.mxu0 0.0
  %4770 = vmatprep.subr.mxu0 0.0
  %4771 = vmatpush2.msra.mxu0 0.0
  %4772 = vmatprep.subr.mxu0 0.0
  %4773 = vmatpush2.msra.mxu0 0.0
  %4774 = vmatprep.subr.mxu0 0.0
  %4775 = vmatpush2.msra.mxu0 0.0
  %4776 = vmatprep.subr.mxu0 0.0
  %4777 = vmatpush2.msra.mxu0 0.0
  %4778 = vmatprep.mubr.f32.mxu0 0.0
  %4779 = vmatmul.mubr.f32.gmra.mxu0 %v4712
  %v4780 = vpop.f32.mrf.mxu0
  %v4781 = vadd.f32 0.0, %v4780
  %v4782 = vpop.f32.mrf.mxu0
  %4783 = vdwg.mxu0
  %4786 = vrot.lane.b32.xlu0 %v4705, 16
  %v4787 = vpop.permute.xlu0 %4786
  %4788 = vrot.lane.b32.xlu0 %v4781, 16
  %v4789 = vpop.permute.xlu0 %4788
  %4792 = vst.msk [vmem:[#allocation2] sm:$0xff] %vm1149, %v4787
  %4793 = vst.msk [vmem:[#allocation2 + $0x8] sm:$0xff] %vm1149, %v4789
  %4794 = vrot.lane.b32.xlu0 %v3776, 104
  %v4795 = vpop.permute.xlu0 %4794
  %4796 = vrot.lane.b32.xlu0 %v3776, 72
  %v4797 = vpop.permute.xlu0 %4796
  %v4798 = vsel %vm142, %v4795, 0
  %v4800 = vsel %vm142, %v4797, 0
  %4802 = vmatprep.subr.mxu0 0.0
  %4803 = vmatpush1.xpose.msra.mxu0 0.0
  %4804 = vmatprep.subr.mxu0 0.0
  %4805 = vmatpush1.xpose.msra.mxu0 0.0
  %4806 = vmatprep.subr.mxu0 0.0
  %4807 = vmatpush1.xpose.msra.mxu0 0.0
  %4808 = vmatprep.subr.mxu0 0.0
  %4809 = vmatpush1.xpose.msra.mxu0 0.0
  %4810 = vmatprep.subr.mxu0 0.0
  %4811 = vmatpush1.xpose.msra.mxu0 0.0
  %4812 = vmatprep.subr.mxu0 0.0
  %4813 = vmatpush1.xpose.msra.mxu0 0.0
  %4814 = vmatprep.subr.mxu0 0.0
  %4815 = vmatpush1.xpose.msra.mxu0 0.0
  %4816 = vmatprep.subr.mxu0 0.0
  %4817 = vmatpush1.xpose.msra.mxu0 0.0
  %4818 = vmatprep.subr.mxu0 0.0
  %4819 = vmatpush1.xpose.msra.mxu0 0.0
  %4820 = vmatprep.subr.mxu0 0.0
  %4821 = vmatpush1.xpose.msra.mxu0 0.0
  %4822 = vmatprep.subr.mxu0 0.0
  %4823 = vmatpush1.xpose.msra.mxu0 0.0
  %4824 = vmatprep.subr.mxu0 0.0
  %4825 = vmatpush1.xpose.msra.mxu0 0.0
  %4826 = vmatprep.subr.mxu0 0.0
  %4827 = vmatpush1.xpose.msra.mxu0 0.0
  %4828 = vmatprep.subr.mxu0 0.0
  %4829 = vmatpush1.xpose.msra.mxu0 0.0
  %4830 = vmatprep.subr.mxu0 0.0
  %4831 = vmatpush1.xpose.msra.mxu0 0.0
  %4832 = vmatprep.subr.mxu0 0.0
  %4833 = vmatpush1.xpose.msra.mxu0 %v4800
  %4834 = vmatprep.subr.mxu0 0.0
  %4835 = vmatpush2.xpose.msra.mxu0 0.0
  %4836 = vmatprep.subr.mxu0 0.0
  %4837 = vmatpush2.xpose.msra.mxu0 0.0
  %4838 = vmatprep.subr.mxu0 0.0
  %4839 = vmatpush2.xpose.msra.mxu0 0.0
  %4840 = vmatprep.subr.mxu0 0.0
  %4841 = vmatpush2.xpose.msra.mxu0 0.0
  %4842 = vmatprep.subr.mxu0 0.0
  %4843 = vmatpush2.xpose.msra.mxu0 0.0
  %4844 = vmatprep.subr.mxu0 0.0
  %4845 = vmatpush2.xpose.msra.mxu0 0.0
  %4846 = vmatprep.subr.mxu0 0.0
  %4847 = vmatpush2.xpose.msra.mxu0 0.0
  %4848 = vmatprep.subr.mxu0 0.0
  %4849 = vmatpush2.xpose.msra.mxu0 0.0
  %4850 = vmatprep.subr.mxu0 0.0
  %4851 = vmatpush2.xpose.msra.mxu0 0.0
  %4852 = vmatprep.subr.mxu0 0.0
  %4853 = vmatpush2.xpose.msra.mxu0 0.0
  %4854 = vmatprep.subr.mxu0 0.0
  %4855 = vmatpush2.xpose.msra.mxu0 0.0
  %4856 = vmatprep.subr.mxu0 0.0
  %4857 = vmatpush2.xpose.msra.mxu0 0.0
  %4858 = vmatprep.subr.mxu0 0.0
  %4859 = vmatpush2.xpose.msra.mxu0 0.0
  %4860 = vmatprep.subr.mxu0 0.0
  %4861 = vmatpush2.xpose.msra.mxu0 0.0
  %4862 = vmatprep.subr.mxu0 0.0
  %4863 = vmatpush2.xpose.msra.mxu0 0.0
  %4864 = vmatprep.subr.mxu0 0.0
  %4865 = vmatpush2.xpose.msra.mxu0 0.0
  %4866 = vmatprep.mubr.f32.mxu0 0.0
  %4867 = vmatmul.mubr.f32.gmra.mxu0 %v4798
  %v4868 = vpop.f32.mrf.mxu0
  %v4869 = vadd.f32 %v132, %v4868
  %v4870 = vpop.f32.mrf.mxu0
  %4871 = vdwg.mxu0
  %4872 = vrot.lane.b32.xlu0 %v3781, 104
  %v4873 = vpop.permute.xlu0 %4872
  %4874 = vrot.lane.b32.xlu0 %v3781, 72
  %v4875 = vpop.permute.xlu0 %4874
  %v4876 = vsel %vm142, %v4873, 0
  %v4878 = vsel %vm142, %v4875, 0
  %4880 = vmatprep.subr.mxu0 0.0
  %4881 = vmatpush1.xpose.msra.mxu0 0.0
  %4882 = vmatprep.subr.mxu0 0.0
  %4883 = vmatpush1.xpose.msra.mxu0 0.0
  %4884 = vmatprep.subr.mxu0 0.0
  %4885 = vmatpush1.xpose.msra.mxu0 0.0
  %4886 = vmatprep.subr.mxu0 0.0
  %4887 = vmatpush1.xpose.msra.mxu0 0.0
  %4888 = vmatprep.subr.mxu0 0.0
  %4889 = vmatpush1.xpose.msra.mxu0 0.0
  %4890 = vmatprep.subr.mxu0 0.0
  %4891 = vmatpush1.xpose.msra.mxu0 0.0
  %4892 = vmatprep.subr.mxu0 0.0
  %4893 = vmatpush1.xpose.msra.mxu0 0.0
  %4894 = vmatprep.subr.mxu0 0.0
  %4895 = vmatpush1.xpose.msra.mxu0 0.0
  %4896 = vmatprep.subr.mxu0 0.0
  %4897 = vmatpush1.xpose.msra.mxu0 0.0
  %4898 = vmatprep.subr.mxu0 0.0
  %4899 = vmatpush1.xpose.msra.mxu0 0.0
  %4900 = vmatprep.subr.mxu0 0.0
  %4901 = vmatpush1.xpose.msra.mxu0 0.0
  %4902 = vmatprep.subr.mxu0 0.0
  %4903 = vmatpush1.xpose.msra.mxu0 0.0
  %4904 = vmatprep.subr.mxu0 0.0
  %4905 = vmatpush1.xpose.msra.mxu0 0.0
  %4906 = vmatprep.subr.mxu0 0.0
  %4907 = vmatpush1.xpose.msra.mxu0 0.0
  %4908 = vmatprep.subr.mxu0 0.0
  %4909 = vmatpush1.xpose.msra.mxu0 0.0
  %4910 = vmatprep.subr.mxu0 0.0
  %4911 = vmatpush1.xpose.msra.mxu0 %v4878
  %4912 = vmatprep.subr.mxu0 0.0
  %4913 = vmatpush2.xpose.msra.mxu0 0.0
  %4914 = vmatprep.subr.mxu0 0.0
  %4915 = vmatpush2.xpose.msra.mxu0 0.0
  %4916 = vmatprep.subr.mxu0 0.0
  %4917 = vmatpush2.xpose.msra.mxu0 0.0
  %4918 = vmatprep.subr.mxu0 0.0
  %4919 = vmatpush2.xpose.msra.mxu0 0.0
  %4920 = vmatprep.subr.mxu0 0.0
  %4921 = vmatpush2.xpose.msra.mxu0 0.0
  %4922 = vmatprep.subr.mxu0 0.0
  %4923 = vmatpush2.xpose.msra.mxu0 0.0
  %4924 = vmatprep.subr.mxu0 0.0
  %4925 = vmatpush2.xpose.msra.mxu0 0.0
  %4926 = vmatprep.subr.mxu0 0.0
  %4927 = vmatpush2.xpose.msra.mxu0 0.0
  %4928 = vmatprep.subr.mxu0 0.0
  %4929 = vmatpush2.xpose.msra.mxu0 0.0
  %4930 = vmatprep.subr.mxu0 0.0
  %4931 = vmatpush2.xpose.msra.mxu0 0.0
  %4932 = vmatprep.subr.mxu0 0.0
  %4933 = vmatpush2.xpose.msra.mxu0 0.0
  %4934 = vmatprep.subr.mxu0 0.0
  %4935 = vmatpush2.xpose.msra.mxu0 0.0
  %4936 = vmatprep.subr.mxu0 0.0
  %4937 = vmatpush2.xpose.msra.mxu0 0.0
  %4938 = vmatprep.subr.mxu0 0.0
  %4939 = vmatpush2.xpose.msra.mxu0 0.0
  %4940 = vmatprep.subr.mxu0 0.0
  %4941 = vmatpush2.xpose.msra.mxu0 0.0
  %4942 = vmatprep.subr.mxu0 0.0
  %4943 = vmatpush2.xpose.msra.mxu0 0.0
  %4944 = vmatprep.mubr.f32.mxu0 0.0
  %4945 = vmatmul.mubr.f32.gmra.mxu0 %v4876
  %v4946 = vpop.f32.mrf.mxu0
  %v4947 = vadd.f32 %v136, %v4946
  %v4948 = vpop.f32.mrf.mxu0
  %4949 = vdwg.mxu0
  %v4950 = vsel %vm142, %v4869, -inf
  %4951 = vmax.xlane.f32.xlu0 %v4950
  %v4952 = vpop.xlane.xlu0 %4951
  %v4953 = vsel %vm142, %v4947, -inf
  %4954 = vmax.xlane.f32.xlu0 %v4953
  %v4955 = vpop.xlane.xlu0 %4954
  %v4956 = vsub.f32 %v4869, %v4952
  %v4957 = vsub.f32 %v4947, %v4955
  %v4958 = vmul.f32 %v4956, 1.442695
  %v4959 = vpow.pop %v4958
  %v4960 = vmul.f32 %v4957, 1.442695
  %v4961 = vpow.pop %v4960
  %v4962 = vsel %vm142, %v4959, 0.0
  %4963 = vadd.xlane.f32.xlu0 %v4962
  %v4964 = vpop.xlane.xlu0 %4963
  %v4965 = vsel %vm142, %v4961, 0.0
  %4966 = vadd.xlane.f32.xlu0 %v4965
  %v4967 = vpop.xlane.xlu0 %4966
  %v4968 = vrcp.pop %v4964
  %v4969 = vrcp.pop %v4967
  %v4970 = vmul.f32 %v4959, %v4968
  %v4971 = vmul.f32 %v4961, %v4969
  %4972 = vrot.lane.b32.xlu0 %v3776, 40
  %v4973 = vpop.permute.xlu0 %4972
  %v4976 = vsel %vm142, %v4970, 0
  %4978 = vmatprep.subr.mxu0 0.0
  %4979 = vmatpush1.msra.mxu0 0.0
  %4980 = vmatprep.subr.mxu0 0.0
  %4981 = vmatpush1.msra.mxu0 0.0
  %4982 = vmatprep.subr.mxu0 0.0
  %4983 = vmatpush1.msra.mxu0 0.0
  %4984 = vmatprep.subr.mxu0 0.0
  %4985 = vmatpush1.msra.mxu0 0.0
  %4986 = vmatprep.subr.mxu0 0.0
  %4987 = vmatpush1.msra.mxu0 0.0
  %4988 = vmatprep.subr.mxu0 0.0
  %4989 = vmatpush1.msra.mxu0 0.0
  %4990 = vmatprep.subr.mxu0 0.0
  %4991 = vmatpush1.msra.mxu0 0.0
  %4992 = vmatprep.subr.mxu0 0.0
  %4993 = vmatpush1.msra.mxu0 0.0
  %4994 = vmatprep.subr.mxu0 0.0
  %4995 = vmatpush1.msra.mxu0 0.0
  %4996 = vmatprep.subr.mxu0 0.0
  %4997 = vmatpush1.msra.mxu0 0.0
  %4998 = vmatprep.subr.mxu0 0.0
  %4999 = vmatpush1.msra.mxu0 0.0
  %5000 = vmatprep.subr.mxu0 0.0
  %5001 = vmatpush1.msra.mxu0 0.0
  %5002 = vmatprep.subr.mxu0 0.0
  %5003 = vmatpush1.msra.mxu0 0.0
  %5004 = vmatprep.subr.mxu0 0.0
  %5005 = vmatpush1.msra.mxu0 0.0
  %5006 = vmatprep.subr.mxu0 0.0
  %5007 = vmatpush1.msra.mxu0 0.0
  %5008 = vmatprep.subr.mxu0 0.0
  %5009 = vmatpush1.msra.mxu0 %v4973
  %5010 = vmatprep.subr.mxu0 0.0
  %5011 = vmatpush2.msra.mxu0 0.0
  %5012 = vmatprep.subr.mxu0 0.0
  %5013 = vmatpush2.msra.mxu0 0.0
  %5014 = vmatprep.subr.mxu0 0.0
  %5015 = vmatpush2.msra.mxu0 0.0
  %5016 = vmatprep.subr.mxu0 0.0
  %5017 = vmatpush2.msra.mxu0 0.0
  %5018 = vmatprep.subr.mxu0 0.0
  %5019 = vmatpush2.msra.mxu0 0.0
  %5020 = vmatprep.subr.mxu0 0.0
  %5021 = vmatpush2.msra.mxu0 0.0
  %5022 = vmatprep.subr.mxu0 0.0
  %5023 = vmatpush2.msra.mxu0 0.0
  %5024 = vmatprep.subr.mxu0 0.0
  %5025 = vmatpush2.msra.mxu0 0.0
  %5026 = vmatprep.subr.mxu0 0.0
  %5027 = vmatpush2.msra.mxu0 0.0
  %5028 = vmatprep.subr.mxu0 0.0
  %5029 = vmatpush2.msra.mxu0 0.0
  %5030 = vmatprep.subr.mxu0 0.0
  %5031 = vmatpush2.msra.mxu0 0.0
  %5032 = vmatprep.subr.mxu0 0.0
  %5033 = vmatpush2.msra.mxu0 0.0
  %5034 = vmatprep.subr.mxu0 0.0
  %5035 = vmatpush2.msra.mxu0 0.0
  %5036 = vmatprep.subr.mxu0 0.0
  %5037 = vmatpush2.msra.mxu0 0.0
  %5038 = vmatprep.subr.mxu0 0.0
  %5039 = vmatpush2.msra.mxu0 0.0
  %5040 = vmatprep.subr.mxu0 0.0
  %5041 = vmatpush2.msra.mxu0 0.0
  %5042 = vmatprep.mubr.f32.mxu0 0.0
  %5043 = vmatmul.mubr.f32.gmra.mxu0 %v4976
  %v5044 = vpop.f32.mrf.mxu0
  %v5045 = vadd.f32 0.0, %v5044
  %v5046 = vpop.f32.mrf.mxu0
  %5047 = vdwg.mxu0
  %5048 = vrot.lane.b32.xlu0 %v3781, 40
  %v5049 = vpop.permute.xlu0 %5048
  %v5052 = vsel %vm142, %v4971, 0
  %5054 = vmatprep.subr.mxu0 0.0
  %5055 = vmatpush1.msra.mxu0 0.0
  %5056 = vmatprep.subr.mxu0 0.0
  %5057 = vmatpush1.msra.mxu0 0.0
  %5058 = vmatprep.subr.mxu0 0.0
  %5059 = vmatpush1.msra.mxu0 0.0
  %5060 = vmatprep.subr.mxu0 0.0
  %5061 = vmatpush1.msra.mxu0 0.0
  %5062 = vmatprep.subr.mxu0 0.0
  %5063 = vmatpush1.msra.mxu0 0.0
  %5064 = vmatprep.subr.mxu0 0.0
  %5065 = vmatpush1.msra.mxu0 0.0
  %5066 = vmatprep.subr.mxu0 0.0
  %5067 = vmatpush1.msra.mxu0 0.0
  %5068 = vmatprep.subr.mxu0 0.0
  %5069 = vmatpush1.msra.mxu0 0.0
  %5070 = vmatprep.subr.mxu0 0.0
  %5071 = vmatpush1.msra.mxu0 0.0
  %5072 = vmatprep.subr.mxu0 0.0
  %5073 = vmatpush1.msra.mxu0 0.0
  %5074 = vmatprep.subr.mxu0 0.0
  %5075 = vmatpush1.msra.mxu0 0.0
  %5076 = vmatprep.subr.mxu0 0.0
  %5077 = vmatpush1.msra.mxu0 0.0
  %5078 = vmatprep.subr.mxu0 0.0
  %5079 = vmatpush1.msra.mxu0 0.0
  %5080 = vmatprep.subr.mxu0 0.0
  %5081 = vmatpush1.msra.mxu0 0.0
  %5082 = vmatprep.subr.mxu0 0.0
  %5083 = vmatpush1.msra.mxu0 0.0
  %5084 = vmatprep.subr.mxu0 0.0
  %5085 = vmatpush1.msra.mxu0 %v5049
  %5086 = vmatprep.subr.mxu0 0.0
  %5087 = vmatpush2.msra.mxu0 0.0
  %5088 = vmatprep.subr.mxu0 0.0
  %5089 = vmatpush2.msra.mxu0 0.0
  %5090 = vmatprep.subr.mxu0 0.0
  %5091 = vmatpush2.msra.mxu0 0.0
  %5092 = vmatprep.subr.mxu0 0.0
  %5093 = vmatpush2.msra.mxu0 0.0
  %5094 = vmatprep.subr.mxu0 0.0
  %5095 = vmatpush2.msra.mxu0 0.0
  %5096 = vmatprep.subr.mxu0 0.0
  %5097 = vmatpush2.msra.mxu0 0.0
  %5098 = vmatprep.subr.mxu0 0.0
  %5099 = vmatpush2.msra.mxu0 0.0
  %5100 = vmatprep.subr.mxu0 0.0
  %5101 = vmatpush2.msra.mxu0 0.0
  %5102 = vmatprep.subr.mxu0 0.0
  %5103 = vmatpush2.msra.mxu0 0.0
  %5104 = vmatprep.subr.mxu0 0.0
  %5105 = vmatpush2.msra.mxu0 0.0
  %5106 = vmatprep.subr.mxu0 0.0
  %5107 = vmatpush2.msra.mxu0 0.0
  %5108 = vmatprep.subr.mxu0 0.0
  %5109 = vmatpush2.msra.mxu0 0.0
  %5110 = vmatprep.subr.mxu0 0.0
  %5111 = vmatpush2.msra.mxu0 0.0
  %5112 = vmatprep.subr.mxu0 0.0
  %5113 = vmatpush2.msra.mxu0 0.0
  %5114 = vmatprep.subr.mxu0 0.0
  %5115 = vmatpush2.msra.mxu0 0.0
  %5116 = vmatprep.subr.mxu0 0.0
  %5117 = vmatpush2.msra.mxu0 0.0
  %5118 = vmatprep.mubr.f32.mxu0 0.0
  %5119 = vmatmul.mubr.f32.gmra.mxu0 %v5052
  %v5120 = vpop.f32.mrf.mxu0
  %v5121 = vadd.f32 0.0, %v5120
  %v5122 = vpop.f32.mrf.mxu0
  %5123 = vdwg.mxu0
  %5126 = vrot.lane.b32.xlu0 %v5045, 24
  %v5127 = vpop.permute.xlu0 %5126
  %5128 = vrot.lane.b32.xlu0 %v5121, 24
  %v5129 = vpop.permute.xlu0 %5128
  %5132 = vst.msk [vmem:[#allocation2] sm:$0xff] %vm1490, %v5127
  %5133 = vst.msk [vmem:[#allocation2 + $0x8] sm:$0xff] %vm1490, %v5129
  %v5134 = vld [vmem:[#allocation2] sm:$0xff]
  %v5135 = vld [vmem:[#allocation2 + $0x8] sm:$0xff]
  %s5136 = scalar_lea.vmem %s3, 64
  %v5137 = vld [vmem:[%s5136] sm:$0xff]
  %v5138 = vld [vmem:[%s5136 + $0x8] sm:$0xff]
  %v5139 = vld [vmem:[%s5136 + $0x10] sm:$0xff]
  %v5140 = vld [vmem:[%s5136 + $0x18] sm:$0xff]
  %v5141 = vlaneseq
  %v5142 = vshrl.u32 %v5141, 7
  %v5143 = vsub.s32 1, %v5142
  %v5144 = vrot.slane %v3693, %v5143
  %v5146 = vsel %vm45, %v5134, 0
  %v5149 = vsel %vm45, %v5135, 0
  %5151 = vmatprep.subr.mxu0 0.0
  %5152 = vmatpush1.msra.mxu0 0.0
  %5153 = vmatprep.subr.mxu0 0.0
  %5154 = vmatpush1.msra.mxu0 0.0
  %5155 = vmatprep.subr.mxu0 0.0
  %5156 = vmatpush1.msra.mxu0 0.0
  %5157 = vmatprep.subr.mxu0 0.0
  %5158 = vmatpush1.msra.mxu0 0.0
  %5159 = vmatprep.subr.mxu0 0.0
  %5160 = vmatpush1.msra.mxu0 0.0
  %5161 = vmatprep.subr.mxu0 0.0
  %5162 = vmatpush1.msra.mxu0 0.0
  %5163 = vmatprep.subr.mxu0 0.0
  %5164 = vmatpush1.msra.mxu0 0.0
  %5165 = vmatprep.subr.mxu0 0.0
  %5166 = vmatpush1.msra.mxu0 0.0
  %5167 = vmatprep.subr.mxu0 0.0
  %5168 = vmatpush1.msra.mxu0 0.0
  %5169 = vmatprep.subr.mxu0 0.0
  %5170 = vmatpush1.msra.mxu0 0.0
  %5171 = vmatprep.subr.mxu0 0.0
  %5172 = vmatpush1.msra.mxu0 0.0
  %5173 = vmatprep.subr.mxu0 0.0
  %5174 = vmatpush1.msra.mxu0 0.0
  %5175 = vmatprep.subr.mxu0 0.0
  %5176 = vmatpush1.msra.mxu0 %v5140
  %5177 = vmatprep.subr.mxu0 0.0
  %5178 = vmatpush1.msra.mxu0 %v5139
  %5179 = vmatprep.subr.mxu0 0.0
  %5180 = vmatpush1.msra.mxu0 %v5138
  %5181 = vmatprep.subr.mxu0 0.0
  %5182 = vmatpush1.msra.mxu0 %v5137
  %5183 = vmatprep.subr.mxu0 0.0
  %5184 = vmatpush2.msra.mxu0 0.0
  %5185 = vmatprep.subr.mxu0 0.0
  %5186 = vmatpush2.msra.mxu0 0.0
  %5187 = vmatprep.subr.mxu0 0.0
  %5188 = vmatpush2.msra.mxu0 0.0
  %5189 = vmatprep.subr.mxu0 0.0
  %5190 = vmatpush2.msra.mxu0 0.0
  %5191 = vmatprep.subr.mxu0 0.0
  %5192 = vmatpush2.msra.mxu0 0.0
  %5193 = vmatprep.subr.mxu0 0.0
  %5194 = vmatpush2.msra.mxu0 0.0
  %5195 = vmatprep.subr.mxu0 0.0
  %5196 = vmatpush2.msra.mxu0 0.0
  %5197 = vmatprep.subr.mxu0 0.0
  %5198 = vmatpush2.msra.mxu0 0.0
  %5199 = vmatprep.subr.mxu0 0.0
  %5200 = vmatpush2.msra.mxu0 0.0
  %5201 = vmatprep.subr.mxu0 0.0
  %5202 = vmatpush2.msra.mxu0 0.0
  %5203 = vmatprep.subr.mxu0 0.0
  %5204 = vmatpush2.msra.mxu0 0.0
  %5205 = vmatprep.subr.mxu0 0.0
  %5206 = vmatpush2.msra.mxu0 0.0
  %5207 = vmatprep.subr.mxu0 0.0
  %5208 = vmatpush2.msra.mxu0 0.0
  %5209 = vmatprep.subr.mxu0 0.0
  %5210 = vmatpush2.msra.mxu0 0.0
  %5211 = vmatprep.subr.mxu0 0.0
  %5212 = vmatpush2.msra.mxu0 0.0
  %5213 = vmatprep.subr.mxu0 0.0
  %5214 = vmatpush2.msra.mxu0 0.0
  %5215 = vmatprep.mubr.f32.mxu0 0.0
  %5216 = vmatmul.mubr.f32.gmra.mxu0 %v5146
  %v5217 = vpop.f32.mrf.mxu0
  %v5218 = vadd.f32 %v5144, %v5217
  %v5219 = vpop.f32.mrf.mxu0
  %5220 = vmatprep.mubr.f32.mxu0 0.0
  %5221 = vmatmul.mubr.f32.gmra.mxu0 %v5149
  %v5222 = vpop.f32.mrf.mxu0
  %v5223 = vadd.f32 %v5144, %v5222
  %v5224 = vpop.f32.mrf.mxu0
  %5225 = vdwg.mxu0
  %v5226 = vadd.f32 %v5218, %v3690
  %v5227 = vadd.f32 %v5223, %v3691
  %v5228 = vsel %vm45, %v5226, 0.0
  %5229 = vadd.xlane.f32.xlu0 %v5228
  %v5230 = vpop.xlane.xlu0 %5229
  %v5231 = vsel %vm45, %v5227, 0.0
  %5232 = vadd.xlane.f32.xlu0 %v5231
  %v5233 = vpop.xlane.xlu0 %5232
  %v5234 = vmul.f32 %v5230, %v1592
  %v5235 = vmul.f32 %v5233, %v1592
  %v5236 = vsub.f32 %v5226, %v5234
  %v5237 = vsub.f32 %v5227, %v5235
  %v5238 = vmul.f32 %v5236, %v5236
  %v5239 = vmul.f32 %v5237, %v5237
  %v5240 = vsel %vm45, %v5238, 0.0
  %5241 = vadd.xlane.f32.xlu0 %v5240
  %v5242 = vpop.xlane.xlu0 %5241
  %v5243 = vsel %vm45, %v5239, 0.0
  %5244 = vadd.xlane.f32.xlu0 %v5243
  %v5245 = vpop.xlane.xlu0 %5244
  %v5246 = vmul.f32 %v5242, %v1592
  %v5247 = vmul.f32 %v5245, %v1592
  %v5248 = vadd.f32 %v5246, 1e-12
  %v5249 = vadd.f32 %v5247, 1e-12
  %v5250 = vrsqrt.pop %v5248
  %v5251 = vrsqrt.pop %v5249
  %v5252 = vmul.f32 %v5236, %v5250
  %v5253 = vmul.f32 %v5237, %v5251
  %v5254 = vlaneseq
  %v5255 = vshrl.u32 %v5254, 7
  %v5256 = vsub.s32 2, %v5255
  %v5257 = vrot.slane %v3693, %v5256
  %v5258 = vmul.f32 %v5252, %v5257
  %v5259 = vmul.f32 %v5253, %v5257
  %v5260 = vlaneseq
  %v5261 = vshrl.u32 %v5260, 7
  %v5262 = vsub.s32 3, %v5261
  %v5263 = vrot.slane %v3693, %v5262
  %v5264 = vadd.f32 %v5258, %v5263
  %v5265 = vadd.f32 %v5259, %v5263
  %s5266 = scalar_lea.vmem %s4, 64
  %v5267 = vld [vmem:[%s5266] sm:$0xff]
  %v5268 = vld [vmem:[%s5266 + $0x8] sm:$0xff]
  %v5269 = vld [vmem:[%s5266 + $0x10] sm:$0xff]
  %v5270 = vld [vmem:[%s5266 + $0x18] sm:$0xff]
  %v5271 = vlaneseq
  %v5272 = vshrl.u32 %v5271, 7
  %v5273 = vsub.s32 4, %v5272
  %v5274 = vrot.slane %v3693, %v5273
  %v5276 = vsel %vm45, %v5264, 0
  %v5279 = vsel %vm45, %v5265, 0
  %5281 = vmatprep.subr.mxu0 0.0
  %5282 = vmatpush1.msra.mxu0 0.0
  %5283 = vmatprep.subr.mxu0 0.0
  %5284 = vmatpush1.msra.mxu0 0.0
  %5285 = vmatprep.subr.mxu0 0.0
  %5286 = vmatpush1.msra.mxu0 0.0
  %5287 = vmatprep.subr.mxu0 0.0
  %5288 = vmatpush1.msra.mxu0 0.0
  %5289 = vmatprep.subr.mxu0 0.0
  %5290 = vmatpush1.msra.mxu0 0.0
  %5291 = vmatprep.subr.mxu0 0.0
  %5292 = vmatpush1.msra.mxu0 0.0
  %5293 = vmatprep.subr.mxu0 0.0
  %5294 = vmatpush1.msra.mxu0 0.0
  %5295 = vmatprep.subr.mxu0 0.0
  %5296 = vmatpush1.msra.mxu0 0.0
  %5297 = vmatprep.subr.mxu0 0.0
  %5298 = vmatpush1.msra.mxu0 0.0
  %5299 = vmatprep.subr.mxu0 0.0
  %5300 = vmatpush1.msra.mxu0 0.0
  %5301 = vmatprep.subr.mxu0 0.0
  %5302 = vmatpush1.msra.mxu0 0.0
  %5303 = vmatprep.subr.mxu0 0.0
  %5304 = vmatpush1.msra.mxu0 0.0
  %5305 = vmatprep.subr.mxu0 0.0
  %5306 = vmatpush1.msra.mxu0 %v5270
  %5307 = vmatprep.subr.mxu0 0.0
  %5308 = vmatpush1.msra.mxu0 %v5269
  %5309 = vmatprep.subr.mxu0 0.0
  %5310 = vmatpush1.msra.mxu0 %v5268
  %5311 = vmatprep.subr.mxu0 0.0
  %5312 = vmatpush1.msra.mxu0 %v5267
  %5313 = vmatprep.subr.mxu0 0.0
  %5314 = vmatpush2.msra.mxu0 0.0
  %5315 = vmatprep.subr.mxu0 0.0
  %5316 = vmatpush2.msra.mxu0 0.0
  %5317 = vmatprep.subr.mxu0 0.0
  %5318 = vmatpush2.msra.mxu0 0.0
  %5319 = vmatprep.subr.mxu0 0.0
  %5320 = vmatpush2.msra.mxu0 0.0
  %5321 = vmatprep.subr.mxu0 0.0
  %5322 = vmatpush2.msra.mxu0 0.0
  %5323 = vmatprep.subr.mxu0 0.0
  %5324 = vmatpush2.msra.mxu0 0.0
  %5325 = vmatprep.subr.mxu0 0.0
  %5326 = vmatpush2.msra.mxu0 0.0
  %5327 = vmatprep.subr.mxu0 0.0
  %5328 = vmatpush2.msra.mxu0 0.0
  %5329 = vmatprep.subr.mxu0 0.0
  %5330 = vmatpush2.msra.mxu0 0.0
  %5331 = vmatprep.subr.mxu0 0.0
  %5332 = vmatpush2.msra.mxu0 0.0
  %5333 = vmatprep.subr.mxu0 0.0
  %5334 = vmatpush2.msra.mxu0 0.0
  %5335 = vmatprep.subr.mxu0 0.0
  %5336 = vmatpush2.msra.mxu0 0.0
  %5337 = vmatprep.subr.mxu0 0.0
  %5338 = vmatpush2.msra.mxu0 0.0
  %5339 = vmatprep.subr.mxu0 0.0
  %5340 = vmatpush2.msra.mxu0 0.0
  %5341 = vmatprep.subr.mxu0 0.0
  %5342 = vmatpush2.msra.mxu0 0.0
  %5343 = vmatprep.subr.mxu0 0.0
  %5344 = vmatpush2.msra.mxu0 0.0
  %5345 = vmatprep.mubr.f32.mxu0 0.0
  %5346 = vmatmul.mubr.f32.gmra.mxu0 %v5276
  %v5347 = vpop.f32.mrf.mxu0
  %v5348 = vadd.f32 %v5274, %v5347
  %v5349 = vpop.f32.mrf.mxu0
  %5350 = vmatprep.mubr.f32.mxu0 0.0
  %5351 = vmatmul.mubr.f32.gmra.mxu0 %v5279
  %v5352 = vpop.f32.mrf.mxu0
  %v5353 = vadd.f32 %v5274, %v5352
  %v5354 = vpop.f32.mrf.mxu0
  %5355 = vdwg.mxu0
  %v5356 = vmul.f32 %v5348, 0.5
  %v5357 = vmul.f32 %v5353, 0.5
  %v5358 = vmul.f32 %v5348, 0.044715
  %v5359 = vmul.f32 %v5353, 0.044715
  %v5360 = vmul.f32 %v5358, %v5348
  %v5361 = vmul.f32 %v5359, %v5353
  %v5362 = vmul.f32 %v5360, %v5348
  %v5363 = vmul.f32 %v5361, %v5353
  %v5364 = vadd.f32 %v5348, %v5362
  %v5365 = vadd.f32 %v5353, %v5363
  %v5366 = vmul.f32 %v5364, 0.7978846
  %v5367 = vmul.f32 %v5365, 0.7978846
  %v5368 = vtanh.pop %v5366
  %v5369 = vtanh.pop %v5367
  %v5370 = vadd.f32 %v5368, 1.0
  %v5371 = vadd.f32 %v5369, 1.0
  %v5372 = vmul.f32 %v5356, %v5370
  %v5373 = vmul.f32 %v5357, %v5371
  %s5374 = scalar_lea.vmem %s5, 128
  %v5375 = vld [vmem:[%s5374] sm:$0xff]
  %v5376 = vld [vmem:[%s5374 + $0x8] sm:$0xff]
  %v5377 = vld [vmem:[%s5374 + $0x10] sm:$0xff]
  %v5378 = vld [vmem:[%s5374 + $0x18] sm:$0xff]
  %v5379 = vld [vmem:[%s5374 + $0x20] sm:$0xff]
  %v5380 = vld [vmem:[%s5374 + $0x28] sm:$0xff]
  %v5381 = vld [vmem:[%s5374 + $0x30] sm:$0xff]
  %v5382 = vld [vmem:[%s5374 + $0x38] sm:$0xff]
  %v5383 = vlaneseq
  %v5384 = vshrl.u32 %v5383, 7
  %v5385 = vsub.s32 5, %v5384
  %v5386 = vrot.slane %v3693, %v5385
  %v5388 = vsel %vm1744, %v5372, 0
  %v5391 = vsel %vm1744, %v5373, 0
  %5393 = vmatprep.subr.mxu0 0.0
  %5394 = vmatpush1.msra.mxu0 0.0
  %5395 = vmatprep.subr.mxu0 0.0
  %5396 = vmatpush1.msra.mxu0 0.0
  %5397 = vmatprep.subr.mxu0 0.0
  %5398 = vmatpush1.msra.mxu0 0.0
  %5399 = vmatprep.subr.mxu0 0.0
  %5400 = vmatpush1.msra.mxu0 0.0
  %5401 = vmatprep.subr.mxu0 0.0
  %5402 = vmatpush1.msra.mxu0 0.0
  %5403 = vmatprep.subr.mxu0 0.0
  %5404 = vmatpush1.msra.mxu0 0.0
  %5405 = vmatprep.subr.mxu0 0.0
  %5406 = vmatpush1.msra.mxu0 0.0
  %5407 = vmatprep.subr.mxu0 0.0
  %5408 = vmatpush1.msra.mxu0 0.0
  %5409 = vmatprep.subr.mxu0 0.0
  %5410 = vmatpush1.msra.mxu0 %v5382
  %5411 = vmatprep.subr.mxu0 0.0
  %5412 = vmatpush1.msra.mxu0 %v5381
  %5413 = vmatprep.subr.mxu0 0.0
  %5414 = vmatpush1.msra.mxu0 %v5380
  %5415 = vmatprep.subr.mxu0 0.0
  %5416 = vmatpush1.msra.mxu0 %v5379
  %5417 = vmatprep.subr.mxu0 0.0
  %5418 = vmatpush1.msra.mxu0 %v5378
  %5419 = vmatprep.subr.mxu0 0.0
  %5420 = vmatpush1.msra.mxu0 %v5377
  %5421 = vmatprep.subr.mxu0 0.0
  %5422 = vmatpush1.msra.mxu0 %v5376
  %5423 = vmatprep.subr.mxu0 0.0
  %5424 = vmatpush1.msra.mxu0 %v5375
  %5425 = vmatprep.subr.mxu0 0.0
  %5426 = vmatpush2.msra.mxu0 0.0
  %5427 = vmatprep.subr.mxu0 0.0
  %5428 = vmatpush2.msra.mxu0 0.0
  %5429 = vmatprep.subr.mxu0 0.0
  %5430 = vmatpush2.msra.mxu0 0.0
  %5431 = vmatprep.subr.mxu0 0.0
  %5432 = vmatpush2.msra.mxu0 0.0
  %5433 = vmatprep.subr.mxu0 0.0
  %5434 = vmatpush2.msra.mxu0 0.0
  %5435 = vmatprep.subr.mxu0 0.0
  %5436 = vmatpush2.msra.mxu0 0.0
  %5437 = vmatprep.subr.mxu0 0.0
  %5438 = vmatpush2.msra.mxu0 0.0
  %5439 = vmatprep.subr.mxu0 0.0
  %5440 = vmatpush2.msra.mxu0 0.0
  %5441 = vmatprep.subr.mxu0 0.0
  %5442 = vmatpush2.msra.mxu0 0.0
  %5443 = vmatprep.subr.mxu0 0.0
  %5444 = vmatpush2.msra.mxu0 0.0
  %5445 = vmatprep.subr.mxu0 0.0
  %5446 = vmatpush2.msra.mxu0 0.0
  %5447 = vmatprep.subr.mxu0 0.0
  %5448 = vmatpush2.msra.mxu0 0.0
  %5449 = vmatprep.subr.mxu0 0.0
  %5450 = vmatpush2.msra.mxu0 0.0
  %5451 = vmatprep.subr.mxu0 0.0
  %5452 = vmatpush2.msra.mxu0 0.0
  %5453 = vmatprep.subr.mxu0 0.0
  %5454 = vmatpush2.msra.mxu0 0.0
  %5455 = vmatprep.subr.mxu0 0.0
  %5456 = vmatpush2.msra.mxu0 0.0
  %5457 = vmatprep.mubr.f32.mxu0 0.0
  %5458 = vmatmul.mubr.f32.gmra.mxu0 %v5388
  %v5459 = vpop.f32.mrf.mxu0
  %v5460 = vadd.f32 %v5386, %v5459
  %v5461 = vpop.f32.mrf.mxu0
  %5462 = vmatprep.mubr.f32.mxu0 0.0
  %5463 = vmatmul.mubr.f32.gmra.mxu0 %v5391
  %v5464 = vpop.f32.mrf.mxu0
  %v5465 = vadd.f32 %v5386, %v5464
  %v5466 = vpop.f32.mrf.mxu0
  %5467 = vdwg.mxu0
  %v5468 = vadd.f32 %v5460, %v5264
  %v5469 = vadd.f32 %v5465, %v5265
  %v5470 = vsel %vm45, %v5468, 0.0
  %5471 = vadd.xlane.f32.xlu0 %v5470
  %v5472 = vpop.xlane.xlu0 %5471
  %v5473 = vsel %vm45, %v5469, 0.0
  %5474 = vadd.xlane.f32.xlu0 %v5473
  %v5475 = vpop.xlane.xlu0 %5474
  %v5476 = vmul.f32 %v5472, %v1592
  %v5477 = vmul.f32 %v5475, %v1592
  %v5478 = vsub.f32 %v5468, %v5476
  %v5479 = vsub.f32 %v5469, %v5477
  %v5480 = vmul.f32 %v5478, %v5478
  %v5481 = vmul.f32 %v5479, %v5479
  %v5482 = vsel %vm45, %v5480, 0.0
  %5483 = vadd.xlane.f32.xlu0 %v5482
  %v5484 = vpop.xlane.xlu0 %5483
  %v5485 = vsel %vm45, %v5481, 0.0
  %5486 = vadd.xlane.f32.xlu0 %v5485
  %v5487 = vpop.xlane.xlu0 %5486
  %v5488 = vmul.f32 %v5484, %v1592
  %v5489 = vmul.f32 %v5487, %v1592
  %v5490 = vadd.f32 %v5488, 1e-12
  %v5491 = vadd.f32 %v5489, 1e-12
  %v5492 = vrsqrt.pop %v5490
  %v5493 = vrsqrt.pop %v5491
  %v5494 = vmul.f32 %v5478, %v5492
  %v5495 = vmul.f32 %v5479, %v5493
  %v5496 = vlaneseq
  %v5497 = vshrl.u32 %v5496, 7
  %v5498 = vsub.s32 6, %v5497
  %v5499 = vrot.slane %v3693, %v5498
  %v5500 = vmul.f32 %v5494, %v5499
  %v5501 = vmul.f32 %v5495, %v5499
  %v5502 = vlaneseq
  %v5503 = vshrl.u32 %v5502, 7
  %v5504 = vsub.s32 7, %v5503
  %v5505 = vrot.slane %v3693, %v5504
  %v5506 = vadd.f32 %v5500, %v5505
  %v5507 = vadd.f32 %v5501, %v5505
  %v5508 = vadd.f32 %v3687, %v5506
  %v5509 = vadd.f32 %v3688, %v5507
  %s5510 = scalar_lea.vmem %s0, 48
  %v5511 = vld [vmem:[%s5510] sm:$0xff]
  %v5512 = vld [vmem:[%s5510 + $0x8] sm:$0xff]
  %s5513 = scalar_lea.vmem %s6, 24
  %v5514 = vld [vmem:[%s5513] sm:$0xff]
  %s5515 = scalar_lea.vmem %s2, 96
  %v5516 = vld [vmem:[%s5515] sm:$0xff]
  %v5517 = vld [vmem:[%s5515 + $0x8] sm:$0xff]
  %v5518 = vld [vmem:[%s5515 + $0x10] sm:$0xff]
  %v5519 = vld [vmem:[%s5515 + $0x18] sm:$0xff]
  %v5520 = vlaneseq
  %v5521 = vshrl.u32 %v5520, 7
  %v5522 = vsub.s32 0, %v5521
  %v5523 = vrot.slane %v5514, %v5522
  %v5525 = vsel %vm45, %v5511, 0
  %v5528 = vsel %vm45, %v5512, 0
  %5530 = vmatprep.subr.mxu0 0.0
  %5531 = vmatpush1.msra.mxu0 0.0
  %5532 = vmatprep.subr.mxu0 0.0
  %5533 = vmatpush1.msra.mxu0 0.0
  %5534 = vmatprep.subr.mxu0 0.0
  %5535 = vmatpush1.msra.mxu0 0.0
  %5536 = vmatprep.subr.mxu0 0.0
  %5537 = vmatpush1.msra.mxu0 0.0
  %5538 = vmatprep.subr.mxu0 0.0
  %5539 = vmatpush1.msra.mxu0 0.0
  %5540 = vmatprep.subr.mxu0 0.0
  %5541 = vmatpush1.msra.mxu0 0.0
  %5542 = vmatprep.subr.mxu0 0.0
  %5543 = vmatpush1.msra.mxu0 0.0
  %5544 = vmatprep.subr.mxu0 0.0
  %5545 = vmatpush1.msra.mxu0 0.0
  %5546 = vmatprep.subr.mxu0 0.0
  %5547 = vmatpush1.msra.mxu0 0.0
  %5548 = vmatprep.subr.mxu0 0.0
  %5549 = vmatpush1.msra.mxu0 0.0
  %5550 = vmatprep.subr.mxu0 0.0
  %5551 = vmatpush1.msra.mxu0 0.0
  %5552 = vmatprep.subr.mxu0 0.0
  %5553 = vmatpush1.msra.mxu0 0.0
  %5554 = vmatprep.subr.mxu0 0.0
  %5555 = vmatpush1.msra.mxu0 %v5519
  %5556 = vmatprep.subr.mxu0 0.0
  %5557 = vmatpush1.msra.mxu0 %v5518
  %5558 = vmatprep.subr.mxu0 0.0
  %5559 = vmatpush1.msra.mxu0 %v5517
  %5560 = vmatprep.subr.mxu0 0.0
  %5561 = vmatpush1.msra.mxu0 %v5516
  %5562 = vmatprep.subr.mxu0 0.0
  %5563 = vmatpush2.msra.mxu0 0.0
  %5564 = vmatprep.subr.mxu0 0.0
  %5565 = vmatpush2.msra.mxu0 0.0
  %5566 = vmatprep.subr.mxu0 0.0
  %5567 = vmatpush2.msra.mxu0 0.0
  %5568 = vmatprep.subr.mxu0 0.0
  %5569 = vmatpush2.msra.mxu0 0.0
  %5570 = vmatprep.subr.mxu0 0.0
  %5571 = vmatpush2.msra.mxu0 0.0
  %5572 = vmatprep.subr.mxu0 0.0
  %5573 = vmatpush2.msra.mxu0 0.0
  %5574 = vmatprep.subr.mxu0 0.0
  %5575 = vmatpush2.msra.mxu0 0.0
  %5576 = vmatprep.subr.mxu0 0.0
  %5577 = vmatpush2.msra.mxu0 0.0
  %5578 = vmatprep.subr.mxu0 0.0
  %5579 = vmatpush2.msra.mxu0 0.0
  %5580 = vmatprep.subr.mxu0 0.0
  %5581 = vmatpush2.msra.mxu0 0.0
  %5582 = vmatprep.subr.mxu0 0.0
  %5583 = vmatpush2.msra.mxu0 0.0
  %5584 = vmatprep.subr.mxu0 0.0
  %5585 = vmatpush2.msra.mxu0 0.0
  %5586 = vmatprep.subr.mxu0 0.0
  %5587 = vmatpush2.msra.mxu0 0.0
  %5588 = vmatprep.subr.mxu0 0.0
  %5589 = vmatpush2.msra.mxu0 0.0
  %5590 = vmatprep.subr.mxu0 0.0
  %5591 = vmatpush2.msra.mxu0 0.0
  %5592 = vmatprep.subr.mxu0 0.0
  %5593 = vmatpush2.msra.mxu0 0.0
  %5594 = vmatprep.mubr.f32.mxu0 0.0
  %5595 = vmatmul.mubr.f32.gmra.mxu0 %v5525
  %v5596 = vpop.f32.mrf.mxu0
  %v5597 = vadd.f32 %v5523, %v5596
  %v5598 = vpop.f32.mrf.mxu0
  %5599 = vmatprep.mubr.f32.mxu0 0.0
  %5600 = vmatmul.mubr.f32.gmra.mxu0 %v5528
  %v5601 = vpop.f32.mrf.mxu0
  %v5602 = vadd.f32 %v5523, %v5601
  %v5603 = vpop.f32.mrf.mxu0
  %5604 = vdwg.mxu0
  %5606 = vrot.lane.b32.xlu0 %v5597, 96
  %v5607 = vpop.permute.xlu0 %5606
  %v5608 = vsel %vm142, %v5597, 0
  %v5610 = vsel %vm142, %v5607, 0
  %5612 = vmatprep.subr.mxu0 0.0
  %5613 = vmatpush1.xpose.msra.mxu0 0.0
  %5614 = vmatprep.subr.mxu0 0.0
  %5615 = vmatpush1.xpose.msra.mxu0 0.0
  %5616 = vmatprep.subr.mxu0 0.0
  %5617 = vmatpush1.xpose.msra.mxu0 0.0
  %5618 = vmatprep.subr.mxu0 0.0
  %5619 = vmatpush1.xpose.msra.mxu0 0.0
  %5620 = vmatprep.subr.mxu0 0.0
  %5621 = vmatpush1.xpose.msra.mxu0 0.0
  %5622 = vmatprep.subr.mxu0 0.0
  %5623 = vmatpush1.xpose.msra.mxu0 0.0
  %5624 = vmatprep.subr.mxu0 0.0
  %5625 = vmatpush1.xpose.msra.mxu0 0.0
  %5626 = vmatprep.subr.mxu0 0.0
  %5627 = vmatpush1.xpose.msra.mxu0 0.0
  %5628 = vmatprep.subr.mxu0 0.0
  %5629 = vmatpush1.xpose.msra.mxu0 0.0
  %5630 = vmatprep.subr.mxu0 0.0
  %5631 = vmatpush1.xpose.msra.mxu0 0.0
  %5632 = vmatprep.subr.mxu0 0.0
  %5633 = vmatpush1.xpose.msra.mxu0 0.0
  %5634 = vmatprep.subr.mxu0 0.0
  %5635 = vmatpush1.xpose.msra.mxu0 0.0
  %5636 = vmatprep.subr.mxu0 0.0
  %5637 = vmatpush1.xpose.msra.mxu0 0.0
  %5638 = vmatprep.subr.mxu0 0.0
  %5639 = vmatpush1.xpose.msra.mxu0 0.0
  %5640 = vmatprep.subr.mxu0 0.0
  %5641 = vmatpush1.xpose.msra.mxu0 0.0
  %5642 = vmatprep.subr.mxu0 0.0
  %5643 = vmatpush1.xpose.msra.mxu0 %v5610
  %5644 = vmatprep.subr.mxu0 0.0
  %5645 = vmatpush2.xpose.msra.mxu0 0.0
  %5646 = vmatprep.subr.mxu0 0.0
  %5647 = vmatpush2.xpose.msra.mxu0 0.0
  %5648 = vmatprep.subr.mxu0 0.0
  %5649 = vmatpush2.xpose.msra.mxu0 0.0
  %5650 = vmatprep.subr.mxu0 0.0
  %5651 = vmatpush2.xpose.msra.mxu0 0.0
  %5652 = vmatprep.subr.mxu0 0.0
  %5653 = vmatpush2.xpose.msra.mxu0 0.0
  %5654 = vmatprep.subr.mxu0 0.0
  %5655 = vmatpush2.xpose.msra.mxu0 0.0
  %5656 = vmatprep.subr.mxu0 0.0
  %5657 = vmatpush2.xpose.msra.mxu0 0.0
  %5658 = vmatprep.subr.mxu0 0.0
  %5659 = vmatpush2.xpose.msra.mxu0 0.0
  %5660 = vmatprep.subr.mxu0 0.0
  %5661 = vmatpush2.xpose.msra.mxu0 0.0
  %5662 = vmatprep.subr.mxu0 0.0
  %5663 = vmatpush2.xpose.msra.mxu0 0.0
  %5664 = vmatprep.subr.mxu0 0.0
  %5665 = vmatpush2.xpose.msra.mxu0 0.0
  %5666 = vmatprep.subr.mxu0 0.0
  %5667 = vmatpush2.xpose.msra.mxu0 0.0
  %5668 = vmatprep.subr.mxu0 0.0
  %5669 = vmatpush2.xpose.msra.mxu0 0.0
  %5670 = vmatprep.subr.mxu0 0.0
  %5671 = vmatpush2.xpose.msra.mxu0 0.0
  %5672 = vmatprep.subr.mxu0 0.0
  %5673 = vmatpush2.xpose.msra.mxu0 0.0
  %5674 = vmatprep.subr.mxu0 0.0
  %5675 = vmatpush2.xpose.msra.mxu0 0.0
  %5676 = vmatprep.mubr.f32.mxu0 0.0
  %5677 = vmatmul.mubr.f32.gmra.mxu0 %v5608
  %v5678 = vpop.f32.mrf.mxu0
  %v5679 = vadd.f32 %v132, %v5678
  %v5680 = vpop.f32.mrf.mxu0
  %5681 = vdwg.mxu0
  %5683 = vrot.lane.b32.xlu0 %v5602, 96
  %v5684 = vpop.permute.xlu0 %5683
  %v5685 = vsel %vm142, %v5602, 0
  %v5687 = vsel %vm142, %v5684, 0
  %5689 = vmatprep.subr.mxu0 0.0
  %5690 = vmatpush1.xpose.msra.mxu0 0.0
  %5691 = vmatprep.subr.mxu0 0.0
  %5692 = vmatpush1.xpose.msra.mxu0 0.0
  %5693 = vmatprep.subr.mxu0 0.0
  %5694 = vmatpush1.xpose.msra.mxu0 0.0
  %5695 = vmatprep.subr.mxu0 0.0
  %5696 = vmatpush1.xpose.msra.mxu0 0.0
  %5697 = vmatprep.subr.mxu0 0.0
  %5698 = vmatpush1.xpose.msra.mxu0 0.0
  %5699 = vmatprep.subr.mxu0 0.0
  %5700 = vmatpush1.xpose.msra.mxu0 0.0
  %5701 = vmatprep.subr.mxu0 0.0
  %5702 = vmatpush1.xpose.msra.mxu0 0.0
  %5703 = vmatprep.subr.mxu0 0.0
  %5704 = vmatpush1.xpose.msra.mxu0 0.0
  %5705 = vmatprep.subr.mxu0 0.0
  %5706 = vmatpush1.xpose.msra.mxu0 0.0
  %5707 = vmatprep.subr.mxu0 0.0
  %5708 = vmatpush1.xpose.msra.mxu0 0.0
  %5709 = vmatprep.subr.mxu0 0.0
  %5710 = vmatpush1.xpose.msra.mxu0 0.0
  %5711 = vmatprep.subr.mxu0 0.0
  %5712 = vmatpush1.xpose.msra.mxu0 0.0
  %5713 = vmatprep.subr.mxu0 0.0
  %5714 = vmatpush1.xpose.msra.mxu0 0.0
  %5715 = vmatprep.subr.mxu0 0.0
  %5716 = vmatpush1.xpose.msra.mxu0 0.0
  %5717 = vmatprep.subr.mxu0 0.0
  %5718 = vmatpush1.xpose.msra.mxu0 0.0
  %5719 = vmatprep.subr.mxu0 0.0
  %5720 = vmatpush1.xpose.msra.mxu0 %v5687
  %5721 = vmatprep.subr.mxu0 0.0
  %5722 = vmatpush2.xpose.msra.mxu0 0.0
  %5723 = vmatprep.subr.mxu0 0.0
  %5724 = vmatpush2.xpose.msra.mxu0 0.0
  %5725 = vmatprep.subr.mxu0 0.0
  %5726 = vmatpush2.xpose.msra.mxu0 0.0
  %5727 = vmatprep.subr.mxu0 0.0
  %5728 = vmatpush2.xpose.msra.mxu0 0.0
  %5729 = vmatprep.subr.mxu0 0.0
  %5730 = vmatpush2.xpose.msra.mxu0 0.0
  %5731 = vmatprep.subr.mxu0 0.0
  %5732 = vmatpush2.xpose.msra.mxu0 0.0
  %5733 = vmatprep.subr.mxu0 0.0
  %5734 = vmatpush2.xpose.msra.mxu0 0.0
  %5735 = vmatprep.subr.mxu0 0.0
  %5736 = vmatpush2.xpose.msra.mxu0 0.0
  %5737 = vmatprep.subr.mxu0 0.0
  %5738 = vmatpush2.xpose.msra.mxu0 0.0
  %5739 = vmatprep.subr.mxu0 0.0
  %5740 = vmatpush2.xpose.msra.mxu0 0.0
  %5741 = vmatprep.subr.mxu0 0.0
  %5742 = vmatpush2.xpose.msra.mxu0 0.0
  %5743 = vmatprep.subr.mxu0 0.0
  %5744 = vmatpush2.xpose.msra.mxu0 0.0
  %5745 = vmatprep.subr.mxu0 0.0
  %5746 = vmatpush2.xpose.msra.mxu0 0.0
  %5747 = vmatprep.subr.mxu0 0.0
  %5748 = vmatpush2.xpose.msra.mxu0 0.0
  %5749 = vmatprep.subr.mxu0 0.0
  %5750 = vmatpush2.xpose.msra.mxu0 0.0
  %5751 = vmatprep.subr.mxu0 0.0
  %5752 = vmatpush2.xpose.msra.mxu0 0.0
  %5753 = vmatprep.mubr.f32.mxu0 0.0
  %5754 = vmatmul.mubr.f32.gmra.mxu0 %v5685
  %v5755 = vpop.f32.mrf.mxu0
  %v5756 = vadd.f32 %v136, %v5755
  %v5757 = vpop.f32.mrf.mxu0
  %5758 = vdwg.mxu0
  %v5759 = vsel %vm142, %v5679, -inf
  %5760 = vmax.xlane.f32.xlu0 %v5759
  %v5761 = vpop.xlane.xlu0 %5760
  %v5762 = vsel %vm142, %v5756, -inf
  %5763 = vmax.xlane.f32.xlu0 %v5762
  %v5764 = vpop.xlane.xlu0 %5763
  %v5765 = vsub.f32 %v5679, %v5761
  %v5766 = vsub.f32 %v5756, %v5764
  %v5767 = vmul.f32 %v5765, 1.442695
  %v5768 = vpow.pop %v5767
  %v5769 = vmul.f32 %v5766, 1.442695
  %v5770 = vpow.pop %v5769
  %v5771 = vsel %vm142, %v5768, 0.0
  %5772 = vadd.xlane.f32.xlu0 %v5771
  %v5773 = vpop.xlane.xlu0 %5772
  %v5774 = vsel %vm142, %v5770, 0.0
  %5775 = vadd.xlane.f32.xlu0 %v5774
  %v5776 = vpop.xlane.xlu0 %5775
  %v5777 = vrcp.pop %v5773
  %v5778 = vrcp.pop %v5776
  %v5779 = vmul.f32 %v5768, %v5777
  %v5780 = vmul.f32 %v5770, %v5778
  %5781 = vrot.lane.b32.xlu0 %v5597, 64
  %v5782 = vpop.permute.xlu0 %5781
  %v5785 = vsel %vm142, %v5779, 0
  %5787 = vmatprep.subr.mxu0 0.0
  %5788 = vmatpush1.msra.mxu0 0.0
  %5789 = vmatprep.subr.mxu0 0.0
  %5790 = vmatpush1.msra.mxu0 0.0
  %5791 = vmatprep.subr.mxu0 0.0
  %5792 = vmatpush1.msra.mxu0 0.0
  %5793 = vmatprep.subr.mxu0 0.0
  %5794 = vmatpush1.msra.mxu0 0.0
  %5795 = vmatprep.subr.mxu0 0.0
  %5796 = vmatpush1.msra.mxu0 0.0
  %5797 = vmatprep.subr.mxu0 0.0
  %5798 = vmatpush1.msra.mxu0 0.0
  %5799 = vmatprep.subr.mxu0 0.0
  %5800 = vmatpush1.msra.mxu0 0.0
  %5801 = vmatprep.subr.mxu0 0.0
  %5802 = vmatpush1.msra.mxu0 0.0
  %5803 = vmatprep.subr.mxu0 0.0
  %5804 = vmatpush1.msra.mxu0 0.0
  %5805 = vmatprep.subr.mxu0 0.0
  %5806 = vmatpush1.msra.mxu0 0.0
  %5807 = vmatprep.subr.mxu0 0.0
  %5808 = vmatpush1.msra.mxu0 0.0
  %5809 = vmatprep.subr.mxu0 0.0
  %5810 = vmatpush1.msra.mxu0 0.0
  %5811 = vmatprep.subr.mxu0 0.0
  %5812 = vmatpush1.msra.mxu0 0.0
  %5813 = vmatprep.subr.mxu0 0.0
  %5814 = vmatpush1.msra.mxu0 0.0
  %5815 = vmatprep.subr.mxu0 0.0
  %5816 = vmatpush1.msra.mxu0 0.0
  %5817 = vmatprep.subr.mxu0 0.0
  %5818 = vmatpush1.msra.mxu0 %v5782
  %5819 = vmatprep.subr.mxu0 0.0
  %5820 = vmatpush2.msra.mxu0 0.0
  %5821 = vmatprep.subr.mxu0 0.0
  %5822 = vmatpush2.msra.mxu0 0.0
  %5823 = vmatprep.subr.mxu0 0.0
  %5824 = vmatpush2.msra.mxu0 0.0
  %5825 = vmatprep.subr.mxu0 0.0
  %5826 = vmatpush2.msra.mxu0 0.0
  %5827 = vmatprep.subr.mxu0 0.0
  %5828 = vmatpush2.msra.mxu0 0.0
  %5829 = vmatprep.subr.mxu0 0.0
  %5830 = vmatpush2.msra.mxu0 0.0
  %5831 = vmatprep.subr.mxu0 0.0
  %5832 = vmatpush2.msra.mxu0 0.0
  %5833 = vmatprep.subr.mxu0 0.0
  %5834 = vmatpush2.msra.mxu0 0.0
  %5835 = vmatprep.subr.mxu0 0.0
  %5836 = vmatpush2.msra.mxu0 0.0
  %5837 = vmatprep.subr.mxu0 0.0
  %5838 = vmatpush2.msra.mxu0 0.0
  %5839 = vmatprep.subr.mxu0 0.0
  %5840 = vmatpush2.msra.mxu0 0.0
  %5841 = vmatprep.subr.mxu0 0.0
  %5842 = vmatpush2.msra.mxu0 0.0
  %5843 = vmatprep.subr.mxu0 0.0
  %5844 = vmatpush2.msra.mxu0 0.0
  %5845 = vmatprep.subr.mxu0 0.0
  %5846 = vmatpush2.msra.mxu0 0.0
  %5847 = vmatprep.subr.mxu0 0.0
  %5848 = vmatpush2.msra.mxu0 0.0
  %5849 = vmatprep.subr.mxu0 0.0
  %5850 = vmatpush2.msra.mxu0 0.0
  %5851 = vmatprep.mubr.f32.mxu0 0.0
  %5852 = vmatmul.mubr.f32.gmra.mxu0 %v5785
  %v5853 = vpop.f32.mrf.mxu0
  %v5854 = vadd.f32 0.0, %v5853
  %v5855 = vpop.f32.mrf.mxu0
  %5856 = vdwg.mxu0
  %5857 = vrot.lane.b32.xlu0 %v5602, 64
  %v5858 = vpop.permute.xlu0 %5857
  %v5861 = vsel %vm142, %v5780, 0
  %5863 = vmatprep.subr.mxu0 0.0
  %5864 = vmatpush1.msra.mxu0 0.0
  %5865 = vmatprep.subr.mxu0 0.0
  %5866 = vmatpush1.msra.mxu0 0.0
  %5867 = vmatprep.subr.mxu0 0.0
  %5868 = vmatpush1.msra.mxu0 0.0
  %5869 = vmatprep.subr.mxu0 0.0
  %5870 = vmatpush1.msra.mxu0 0.0
  %5871 = vmatprep.subr.mxu0 0.0
  %5872 = vmatpush1.msra.mxu0 0.0
  %5873 = vmatprep.subr.mxu0 0.0
  %5874 = vmatpush1.msra.mxu0 0.0
  %5875 = vmatprep.subr.mxu0 0.0
  %5876 = vmatpush1.msra.mxu0 0.0
  %5877 = vmatprep.subr.mxu0 0.0
  %5878 = vmatpush1.msra.mxu0 0.0
  %5879 = vmatprep.subr.mxu0 0.0
  %5880 = vmatpush1.msra.mxu0 0.0
  %5881 = vmatprep.subr.mxu0 0.0
  %5882 = vmatpush1.msra.mxu0 0.0
  %5883 = vmatprep.subr.mxu0 0.0
  %5884 = vmatpush1.msra.mxu0 0.0
  %5885 = vmatprep.subr.mxu0 0.0
  %5886 = vmatpush1.msra.mxu0 0.0
  %5887 = vmatprep.subr.mxu0 0.0
  %5888 = vmatpush1.msra.mxu0 0.0
  %5889 = vmatprep.subr.mxu0 0.0
  %5890 = vmatpush1.msra.mxu0 0.0
  %5891 = vmatprep.subr.mxu0 0.0
  %5892 = vmatpush1.msra.mxu0 0.0
  %5893 = vmatprep.subr.mxu0 0.0
  %5894 = vmatpush1.msra.mxu0 %v5858
  %5895 = vmatprep.subr.mxu0 0.0
  %5896 = vmatpush2.msra.mxu0 0.0
  %5897 = vmatprep.subr.mxu0 0.0
  %5898 = vmatpush2.msra.mxu0 0.0
  %5899 = vmatprep.subr.mxu0 0.0
  %5900 = vmatpush2.msra.mxu0 0.0
  %5901 = vmatprep.subr.mxu0 0.0
  %5902 = vmatpush2.msra.mxu0 0.0
  %5903 = vmatprep.subr.mxu0 0.0
  %5904 = vmatpush2.msra.mxu0 0.0
  %5905 = vmatprep.subr.mxu0 0.0
  %5906 = vmatpush2.msra.mxu0 0.0
  %5907 = vmatprep.subr.mxu0 0.0
  %5908 = vmatpush2.msra.mxu0 0.0
  %5909 = vmatprep.subr.mxu0 0.0
  %5910 = vmatpush2.msra.mxu0 0.0
  %5911 = vmatprep.subr.mxu0 0.0
  %5912 = vmatpush2.msra.mxu0 0.0
  %5913 = vmatprep.subr.mxu0 0.0
  %5914 = vmatpush2.msra.mxu0 0.0
  %5915 = vmatprep.subr.mxu0 0.0
  %5916 = vmatpush2.msra.mxu0 0.0
  %5917 = vmatprep.subr.mxu0 0.0
  %5918 = vmatpush2.msra.mxu0 0.0
  %5919 = vmatprep.subr.mxu0 0.0
  %5920 = vmatpush2.msra.mxu0 0.0
  %5921 = vmatprep.subr.mxu0 0.0
  %5922 = vmatpush2.msra.mxu0 0.0
  %5923 = vmatprep.subr.mxu0 0.0
  %5924 = vmatpush2.msra.mxu0 0.0
  %5925 = vmatprep.subr.mxu0 0.0
  %5926 = vmatpush2.msra.mxu0 0.0
  %5927 = vmatprep.mubr.f32.mxu0 0.0
  %5928 = vmatmul.mubr.f32.gmra.mxu0 %v5861
  %v5929 = vpop.f32.mrf.mxu0
  %v5930 = vadd.f32 0.0, %v5929
  %v5931 = vpop.f32.mrf.mxu0
  %5932 = vdwg.mxu0
  %5933 = vst.msk [vmem:[#allocation2] sm:$0xff] %vm142, %v5854
  %5934 = vst.msk [vmem:[#allocation2 + $0x8] sm:$0xff] %vm142, %v5930
  %5935 = vrot.lane.b32.xlu0 %v5597, 120
  %v5936 = vpop.permute.xlu0 %5935
  %5937 = vrot.lane.b32.xlu0 %v5597, 88
  %v5938 = vpop.permute.xlu0 %5937
  %v5939 = vsel %vm142, %v5936, 0
  %v5941 = vsel %vm142, %v5938, 0
  %5943 = vmatprep.subr.mxu0 0.0
  %5944 = vmatpush1.xpose.msra.mxu0 0.0
  %5945 = vmatprep.subr.mxu0 0.0
  %5946 = vmatpush1.xpose.msra.mxu0 0.0
  %5947 = vmatprep.subr.mxu0 0.0
  %5948 = vmatpush1.xpose.msra.mxu0 0.0
  %5949 = vmatprep.subr.mxu0 0.0
  %5950 = vmatpush1.xpose.msra.mxu0 0.0
  %5951 = vmatprep.subr.mxu0 0.0
  %5952 = vmatpush1.xpose.msra.mxu0 0.0
  %5953 = vmatprep.subr.mxu0 0.0
  %5954 = vmatpush1.xpose.msra.mxu0 0.0
  %5955 = vmatprep.subr.mxu0 0.0
  %5956 = vmatpush1.xpose.msra.mxu0 0.0
  %5957 = vmatprep.subr.mxu0 0.0
  %5958 = vmatpush1.xpose.msra.mxu0 0.0
  %5959 = vmatprep.subr.mxu0 0.0
  %5960 = vmatpush1.xpose.msra.mxu0 0.0
  %5961 = vmatprep.subr.mxu0 0.0
  %5962 = vmatpush1.xpose.msra.mxu0 0.0
  %5963 = vmatprep.subr.mxu0 0.0
  %5964 = vmatpush1.xpose.msra.mxu0 0.0
  %5965 = vmatprep.subr.mxu0 0.0
  %5966 = vmatpush1.xpose.msra.mxu0 0.0
  %5967 = vmatprep.subr.mxu0 0.0
  %5968 = vmatpush1.xpose.msra.mxu0 0.0
  %5969 = vmatprep.subr.mxu0 0.0
  %5970 = vmatpush1.xpose.msra.mxu0 0.0
  %5971 = vmatprep.subr.mxu0 0.0
  %5972 = vmatpush1.xpose.msra.mxu0 0.0
  %5973 = vmatprep.subr.mxu0 0.0
  %5974 = vmatpush1.xpose.msra.mxu0 %v5941
  %5975 = vmatprep.subr.mxu0 0.0
  %5976 = vmatpush2.xpose.msra.mxu0 0.0
  %5977 = vmatprep.subr.mxu0 0.0
  %5978 = vmatpush2.xpose.msra.mxu0 0.0
  %5979 = vmatprep.subr.mxu0 0.0
  %5980 = vmatpush2.xpose.msra.mxu0 0.0
  %5981 = vmatprep.subr.mxu0 0.0
  %5982 = vmatpush2.xpose.msra.mxu0 0.0
  %5983 = vmatprep.subr.mxu0 0.0
  %5984 = vmatpush2.xpose.msra.mxu0 0.0
  %5985 = vmatprep.subr.mxu0 0.0
  %5986 = vmatpush2.xpose.msra.mxu0 0.0
  %5987 = vmatprep.subr.mxu0 0.0
  %5988 = vmatpush2.xpose.msra.mxu0 0.0
  %5989 = vmatprep.subr.mxu0 0.0
  %5990 = vmatpush2.xpose.msra.mxu0 0.0
  %5991 = vmatprep.subr.mxu0 0.0
  %5992 = vmatpush2.xpose.msra.mxu0 0.0
  %5993 = vmatprep.subr.mxu0 0.0
  %5994 = vmatpush2.xpose.msra.mxu0 0.0
  %5995 = vmatprep.subr.mxu0 0.0
  %5996 = vmatpush2.xpose.msra.mxu0 0.0
  %5997 = vmatprep.subr.mxu0 0.0
  %5998 = vmatpush2.xpose.msra.mxu0 0.0
  %5999 = vmatprep.subr.mxu0 0.0
  %6000 = vmatpush2.xpose.msra.mxu0 0.0
  %6001 = vmatprep.subr.mxu0 0.0
  %6002 = vmatpush2.xpose.msra.mxu0 0.0
  %6003 = vmatprep.subr.mxu0 0.0
  %6004 = vmatpush2.xpose.msra.mxu0 0.0
  %6005 = vmatprep.subr.mxu0 0.0
  %6006 = vmatpush2.xpose.msra.mxu0 0.0
  %6007 = vmatprep.mubr.f32.mxu0 0.0
  %6008 = vmatmul.mubr.f32.gmra.mxu0 %v5939
  %v6009 = vpop.f32.mrf.mxu0
  %v6010 = vadd.f32 %v132, %v6009
  %v6011 = vpop.f32.mrf.mxu0
  %6012 = vdwg.mxu0
  %6013 = vrot.lane.b32.xlu0 %v5602, 120
  %v6014 = vpop.permute.xlu0 %6013
  %6015 = vrot.lane.b32.xlu0 %v5602, 88
  %v6016 = vpop.permute.xlu0 %6015
  %v6017 = vsel %vm142, %v6014, 0
  %v6019 = vsel %vm142, %v6016, 0
  %6021 = vmatprep.subr.mxu0 0.0
  %6022 = vmatpush1.xpose.msra.mxu0 0.0
  %6023 = vmatprep.subr.mxu0 0.0
  %6024 = vmatpush1.xpose.msra.mxu0 0.0
  %6025 = vmatprep.subr.mxu0 0.0
  %6026 = vmatpush1.xpose.msra.mxu0 0.0
  %6027 = vmatprep.subr.mxu0 0.0
  %6028 = vmatpush1.xpose.msra.mxu0 0.0
  %6029 = vmatprep.subr.mxu0 0.0
  %6030 = vmatpush1.xpose.msra.mxu0 0.0
  %6031 = vmatprep.subr.mxu0 0.0
  %6032 = vmatpush1.xpose.msra.mxu0 0.0
  %6033 = vmatprep.subr.mxu0 0.0
  %6034 = vmatpush1.xpose.msra.mxu0 0.0
  %6035 = vmatprep.subr.mxu0 0.0
  %6036 = vmatpush1.xpose.msra.mxu0 0.0
  %6037 = vmatprep.subr.mxu0 0.0
  %6038 = vmatpush1.xpose.msra.mxu0 0.0
  %6039 = vmatprep.subr.mxu0 0.0
  %6040 = vmatpush1.xpose.msra.mxu0 0.0
  %6041 = vmatprep.subr.mxu0 0.0
  %6042 = vmatpush1.xpose.msra.mxu0 0.0
  %6043 = vmatprep.subr.mxu0 0.0
  %6044 = vmatpush1.xpose.msra.mxu0 0.0
  %6045 = vmatprep.subr.mxu0 0.0
  %6046 = vmatpush1.xpose.msra.mxu0 0.0
  %6047 = vmatprep.subr.mxu0 0.0
  %6048 = vmatpush1.xpose.msra.mxu0 0.0
  %6049 = vmatprep.subr.mxu0 0.0
  %6050 = vmatpush1.xpose.msra.mxu0 0.0
  %6051 = vmatprep.subr.mxu0 0.0
  %6052 = vmatpush1.xpose.msra.mxu0 %v6019
  %6053 = vmatprep.subr.mxu0 0.0
  %6054 = vmatpush2.xpose.msra.mxu0 0.0
  %6055 = vmatprep.subr.mxu0 0.0
  %6056 = vmatpush2.xpose.msra.mxu0 0.0
  %6057 = vmatprep.subr.mxu0 0.0
  %6058 = vmatpush2.xpose.msra.mxu0 0.0
  %6059 = vmatprep.subr.mxu0 0.0
  %6060 = vmatpush2.xpose.msra.mxu0 0.0
  %6061 = vmatprep.subr.mxu0 0.0
  %6062 = vmatpush2.xpose.msra.mxu0 0.0
  %6063 = vmatprep.subr.mxu0 0.0
  %6064 = vmatpush2.xpose.msra.mxu0 0.0
  %6065 = vmatprep.subr.mxu0 0.0
  %6066 = vmatpush2.xpose.msra.mxu0 0.0
  %6067 = vmatprep.subr.mxu0 0.0
  %6068 = vmatpush2.xpose.msra.mxu0 0.0
  %6069 = vmatprep.subr.mxu0 0.0
  %6070 = vmatpush2.xpose.msra.mxu0 0.0
  %6071 = vmatprep.subr.mxu0 0.0
  %6072 = vmatpush2.xpose.msra.mxu0 0.0
  %6073 = vmatprep.subr.mxu0 0.0
  %6074 = vmatpush2.xpose.msra.mxu0 0.0
  %6075 = vmatprep.subr.mxu0 0.0
  %6076 = vmatpush2.xpose.msra.mxu0 0.0
  %6077 = vmatprep.subr.mxu0 0.0
  %6078 = vmatpush2.xpose.msra.mxu0 0.0
  %6079 = vmatprep.subr.mxu0 0.0
  %6080 = vmatpush2.xpose.msra.mxu0 0.0
  %6081 = vmatprep.subr.mxu0 0.0
  %6082 = vmatpush2.xpose.msra.mxu0 0.0
  %6083 = vmatprep.subr.mxu0 0.0
  %6084 = vmatpush2.xpose.msra.mxu0 0.0
  %6085 = vmatprep.mubr.f32.mxu0 0.0
  %6086 = vmatmul.mubr.f32.gmra.mxu0 %v6017
  %v6087 = vpop.f32.mrf.mxu0
  %v6088 = vadd.f32 %v136, %v6087
  %v6089 = vpop.f32.mrf.mxu0
  %6090 = vdwg.mxu0
  %v6091 = vsel %vm142, %v6010, -inf
  %6092 = vmax.xlane.f32.xlu0 %v6091
  %v6093 = vpop.xlane.xlu0 %6092
  %v6094 = vsel %vm142, %v6088, -inf
  %6095 = vmax.xlane.f32.xlu0 %v6094
  %v6096 = vpop.xlane.xlu0 %6095
  %v6097 = vsub.f32 %v6010, %v6093
  %v6098 = vsub.f32 %v6088, %v6096
  %v6099 = vmul.f32 %v6097, 1.442695
  %v6100 = vpow.pop %v6099
  %v6101 = vmul.f32 %v6098, 1.442695
  %v6102 = vpow.pop %v6101
  %v6103 = vsel %vm142, %v6100, 0.0
  %6104 = vadd.xlane.f32.xlu0 %v6103
  %v6105 = vpop.xlane.xlu0 %6104
  %v6106 = vsel %vm142, %v6102, 0.0
  %6107 = vadd.xlane.f32.xlu0 %v6106
  %v6108 = vpop.xlane.xlu0 %6107
  %v6109 = vrcp.pop %v6105
  %v6110 = vrcp.pop %v6108
  %v6111 = vmul.f32 %v6100, %v6109
  %v6112 = vmul.f32 %v6102, %v6110
  %6113 = vrot.lane.b32.xlu0 %v5597, 56
  %v6114 = vpop.permute.xlu0 %6113
  %v6117 = vsel %vm142, %v6111, 0
  %6119 = vmatprep.subr.mxu0 0.0
  %6120 = vmatpush1.msra.mxu0 0.0
  %6121 = vmatprep.subr.mxu0 0.0
  %6122 = vmatpush1.msra.mxu0 0.0
  %6123 = vmatprep.subr.mxu0 0.0
  %6124 = vmatpush1.msra.mxu0 0.0
  %6125 = vmatprep.subr.mxu0 0.0
  %6126 = vmatpush1.msra.mxu0 0.0
  %6127 = vmatprep.subr.mxu0 0.0
  %6128 = vmatpush1.msra.mxu0 0.0
  %6129 = vmatprep.subr.mxu0 0.0
  %6130 = vmatpush1.msra.mxu0 0.0
  %6131 = vmatprep.subr.mxu0 0.0
  %6132 = vmatpush1.msra.mxu0 0.0
  %6133 = vmatprep.subr.mxu0 0.0
  %6134 = vmatpush1.msra.mxu0 0.0
  %6135 = vmatprep.subr.mxu0 0.0
  %6136 = vmatpush1.msra.mxu0 0.0
  %6137 = vmatprep.subr.mxu0 0.0
  %6138 = vmatpush1.msra.mxu0 0.0
  %6139 = vmatprep.subr.mxu0 0.0
  %6140 = vmatpush1.msra.mxu0 0.0
  %6141 = vmatprep.subr.mxu0 0.0
  %6142 = vmatpush1.msra.mxu0 0.0
  %6143 = vmatprep.subr.mxu0 0.0
  %6144 = vmatpush1.msra.mxu0 0.0
  %6145 = vmatprep.subr.mxu0 0.0
  %6146 = vmatpush1.msra.mxu0 0.0
  %6147 = vmatprep.subr.mxu0 0.0
  %6148 = vmatpush1.msra.mxu0 0.0
  %6149 = vmatprep.subr.mxu0 0.0
  %6150 = vmatpush1.msra.mxu0 %v6114
  %6151 = vmatprep.subr.mxu0 0.0
  %6152 = vmatpush2.msra.mxu0 0.0
  %6153 = vmatprep.subr.mxu0 0.0
  %6154 = vmatpush2.msra.mxu0 0.0
  %6155 = vmatprep.subr.mxu0 0.0
  %6156 = vmatpush2.msra.mxu0 0.0
  %6157 = vmatprep.subr.mxu0 0.0
  %6158 = vmatpush2.msra.mxu0 0.0
  %6159 = vmatprep.subr.mxu0 0.0
  %6160 = vmatpush2.msra.mxu0 0.0
  %6161 = vmatprep.subr.mxu0 0.0
  %6162 = vmatpush2.msra.mxu0 0.0
  %6163 = vmatprep.subr.mxu0 0.0
  %6164 = vmatpush2.msra.mxu0 0.0
  %6165 = vmatprep.subr.mxu0 0.0
  %6166 = vmatpush2.msra.mxu0 0.0
  %6167 = vmatprep.subr.mxu0 0.0
  %6168 = vmatpush2.msra.mxu0 0.0
  %6169 = vmatprep.subr.mxu0 0.0
  %6170 = vmatpush2.msra.mxu0 0.0
  %6171 = vmatprep.subr.mxu0 0.0
  %6172 = vmatpush2.msra.mxu0 0.0
  %6173 = vmatprep.subr.mxu0 0.0
  %6174 = vmatpush2.msra.mxu0 0.0
  %6175 = vmatprep.subr.mxu0 0.0
  %6176 = vmatpush2.msra.mxu0 0.0
  %6177 = vmatprep.subr.mxu0 0.0
  %6178 = vmatpush2.msra.mxu0 0.0
  %6179 = vmatprep.subr.mxu0 0.0
  %6180 = vmatpush2.msra.mxu0 0.0
  %6181 = vmatprep.subr.mxu0 0.0
  %6182 = vmatpush2.msra.mxu0 0.0
  %6183 = vmatprep.mubr.f32.mxu0 0.0
  %6184 = vmatmul.mubr.f32.gmra.mxu0 %v6117
  %v6185 = vpop.f32.mrf.mxu0
  %v6186 = vadd.f32 0.0, %v6185
  %v6187 = vpop.f32.mrf.mxu0
  %6188 = vdwg.mxu0
  %6189 = vrot.lane.b32.xlu0 %v5602, 56
  %v6190 = vpop.permute.xlu0 %6189
  %v6193 = vsel %vm142, %v6112, 0
  %6195 = vmatprep.subr.mxu0 0.0
  %6196 = vmatpush1.msra.mxu0 0.0
  %6197 = vmatprep.subr.mxu0 0.0
  %6198 = vmatpush1.msra.mxu0 0.0
  %6199 = vmatprep.subr.mxu0 0.0
  %6200 = vmatpush1.msra.mxu0 0.0
  %6201 = vmatprep.subr.mxu0 0.0
  %6202 = vmatpush1.msra.mxu0 0.0
  %6203 = vmatprep.subr.mxu0 0.0
  %6204 = vmatpush1.msra.mxu0 0.0
  %6205 = vmatprep.subr.mxu0 0.0
  %6206 = vmatpush1.msra.mxu0 0.0
  %6207 = vmatprep.subr.mxu0 0.0
  %6208 = vmatpush1.msra.mxu0 0.0
  %6209 = vmatprep.subr.mxu0 0.0
  %6210 = vmatpush1.msra.mxu0 0.0
  %6211 = vmatprep.subr.mxu0 0.0
  %6212 = vmatpush1.msra.mxu0 0.0
  %6213 = vmatprep.subr.mxu0 0.0
  %6214 = vmatpush1.msra.mxu0 0.0
  %6215 = vmatprep.subr.mxu0 0.0
  %6216 = vmatpush1.msra.mxu0 0.0
  %6217 = vmatprep.subr.mxu0 0.0
  %6218 = vmatpush1.msra.mxu0 0.0
  %6219 = vmatprep.subr.mxu0 0.0
  %6220 = vmatpush1.msra.mxu0 0.0
  %6221 = vmatprep.subr.mxu0 0.0
  %6222 = vmatpush1.msra.mxu0 0.0
  %6223 = vmatprep.subr.mxu0 0.0
  %6224 = vmatpush1.msra.mxu0 0.0
  %6225 = vmatprep.subr.mxu0 0.0
  %6226 = vmatpush1.msra.mxu0 %v6190
  %6227 = vmatprep.subr.mxu0 0.0
  %6228 = vmatpush2.msra.mxu0 0.0
  %6229 = vmatprep.subr.mxu0 0.0
  %6230 = vmatpush2.msra.mxu0 0.0
  %6231 = vmatprep.subr.mxu0 0.0
  %6232 = vmatpush2.msra.mxu0 0.0
  %6233 = vmatprep.subr.mxu0 0.0
  %6234 = vmatpush2.msra.mxu0 0.0
  %6235 = vmatprep.subr.mxu0 0.0
  %6236 = vmatpush2.msra.mxu0 0.0
  %6237 = vmatprep.subr.mxu0 0.0
  %6238 = vmatpush2.msra.mxu0 0.0
  %6239 = vmatprep.subr.mxu0 0.0
  %6240 = vmatpush2.msra.mxu0 0.0
  %6241 = vmatprep.subr.mxu0 0.0
  %6242 = vmatpush2.msra.mxu0 0.0
  %6243 = vmatprep.subr.mxu0 0.0
  %6244 = vmatpush2.msra.mxu0 0.0
  %6245 = vmatprep.subr.mxu0 0.0
  %6246 = vmatpush2.msra.mxu0 0.0
  %6247 = vmatprep.subr.mxu0 0.0
  %6248 = vmatpush2.msra.mxu0 0.0
  %6249 = vmatprep.subr.mxu0 0.0
  %6250 = vmatpush2.msra.mxu0 0.0
  %6251 = vmatprep.subr.mxu0 0.0
  %6252 = vmatpush2.msra.mxu0 0.0
  %6253 = vmatprep.subr.mxu0 0.0
  %6254 = vmatpush2.msra.mxu0 0.0
  %6255 = vmatprep.subr.mxu0 0.0
  %6256 = vmatpush2.msra.mxu0 0.0
  %6257 = vmatprep.subr.mxu0 0.0
  %6258 = vmatpush2.msra.mxu0 0.0
  %6259 = vmatprep.mubr.f32.mxu0 0.0
  %6260 = vmatmul.mubr.f32.gmra.mxu0 %v6193
  %v6261 = vpop.f32.mrf.mxu0
  %v6262 = vadd.f32 0.0, %v6261
  %v6263 = vpop.f32.mrf.mxu0
  %6264 = vdwg.mxu0
  %6267 = vrot.lane.b32.xlu0 %v6186, 8
  %v6268 = vpop.permute.xlu0 %6267
  %6269 = vrot.lane.b32.xlu0 %v6262, 8
  %v6270 = vpop.permute.xlu0 %6269
  %6273 = vst.msk [vmem:[#allocation2] sm:$0xff] %vm808, %v6268
  %6274 = vst.msk [vmem:[#allocation2 + $0x8] sm:$0xff] %vm808, %v6270
  %6275 = vrot.lane.b32.xlu0 %v5597, 112
  %v6276 = vpop.permute.xlu0 %6275
  %6277 = vrot.lane.b32.xlu0 %v5597, 80
  %v6278 = vpop.permute.xlu0 %6277
  %v6279 = vsel %vm142, %v6276, 0
  %v6281 = vsel %vm142, %v6278, 0
  %6283 = vmatprep.subr.mxu0 0.0
  %6284 = vmatpush1.xpose.msra.mxu0 0.0
  %6285 = vmatprep.subr.mxu0 0.0
  %6286 = vmatpush1.xpose.msra.mxu0 0.0
  %6287 = vmatprep.subr.mxu0 0.0
  %6288 = vmatpush1.xpose.msra.mxu0 0.0
  %6289 = vmatprep.subr.mxu0 0.0
  %6290 = vmatpush1.xpose.msra.mxu0 0.0
  %6291 = vmatprep.subr.mxu0 0.0
  %6292 = vmatpush1.xpose.msra.mxu0 0.0
  %6293 = vmatprep.subr.mxu0 0.0
  %6294 = vmatpush1.xpose.msra.mxu0 0.0
  %6295 = vmatprep.subr.mxu0 0.0
  %6296 = vmatpush1.xpose.msra.mxu0 0.0
  %6297 = vmatprep.subr.mxu0 0.0
  %6298 = vmatpush1.xpose.msra.mxu0 0.0
  %6299 = vmatprep.subr.mxu0 0.0
  %6300 = vmatpush1.xpose.msra.mxu0 0.0
  %6301 = vmatprep.subr.mxu0 0.0
  %6302 = vmatpush1.xpose.msra.mxu0 0.0
  %6303 = vmatprep.subr.mxu0 0.0
  %6304 = vmatpush1.xpose.msra.mxu0 0.0
  %6305 = vmatprep.subr.mxu0 0.0
  %6306 = vmatpush1.xpose.msra.mxu0 0.0
  %6307 = vmatprep.subr.mxu0 0.0
  %6308 = vmatpush1.xpose.msra.mxu0 0.0
  %6309 = vmatprep.subr.mxu0 0.0
  %6310 = vmatpush1.xpose.msra.mxu0 0.0
  %6311 = vmatprep.subr.mxu0 0.0
  %6312 = vmatpush1.xpose.msra.mxu0 0.0
  %6313 = vmatprep.subr.mxu0 0.0
  %6314 = vmatpush1.xpose.msra.mxu0 %v6281
  %6315 = vmatprep.subr.mxu0 0.0
  %6316 = vmatpush2.xpose.msra.mxu0 0.0
  %6317 = vmatprep.subr.mxu0 0.0
  %6318 = vmatpush2.xpose.msra.mxu0 0.0
  %6319 = vmatprep.subr.mxu0 0.0
  %6320 = vmatpush2.xpose.msra.mxu0 0.0
  %6321 = vmatprep.subr.mxu0 0.0
  %6322 = vmatpush2.xpose.msra.mxu0 0.0
  %6323 = vmatprep.subr.mxu0 0.0
  %6324 = vmatpush2.xpose.msra.mxu0 0.0
  %6325 = vmatprep.subr.mxu0 0.0
  %6326 = vmatpush2.xpose.msra.mxu0 0.0
  %6327 = vmatprep.subr.mxu0 0.0
  %6328 = vmatpush2.xpose.msra.mxu0 0.0
  %6329 = vmatprep.subr.mxu0 0.0
  %6330 = vmatpush2.xpose.msra.mxu0 0.0
  %6331 = vmatprep.subr.mxu0 0.0
  %6332 = vmatpush2.xpose.msra.mxu0 0.0
  %6333 = vmatprep.subr.mxu0 0.0
  %6334 = vmatpush2.xpose.msra.mxu0 0.0
  %6335 = vmatprep.subr.mxu0 0.0
  %6336 = vmatpush2.xpose.msra.mxu0 0.0
  %6337 = vmatprep.subr.mxu0 0.0
  %6338 = vmatpush2.xpose.msra.mxu0 0.0
  %6339 = vmatprep.subr.mxu0 0.0
  %6340 = vmatpush2.xpose.msra.mxu0 0.0
  %6341 = vmatprep.subr.mxu0 0.0
  %6342 = vmatpush2.xpose.msra.mxu0 0.0
  %6343 = vmatprep.subr.mxu0 0.0
  %6344 = vmatpush2.xpose.msra.mxu0 0.0
  %6345 = vmatprep.subr.mxu0 0.0
  %6346 = vmatpush2.xpose.msra.mxu0 0.0
  %6347 = vmatprep.mubr.f32.mxu0 0.0
  %6348 = vmatmul.mubr.f32.gmra.mxu0 %v6279
  %v6349 = vpop.f32.mrf.mxu0
  %v6350 = vadd.f32 %v132, %v6349
  %v6351 = vpop.f32.mrf.mxu0
  %6352 = vdwg.mxu0
  %6353 = vrot.lane.b32.xlu0 %v5602, 112
  %v6354 = vpop.permute.xlu0 %6353
  %6355 = vrot.lane.b32.xlu0 %v5602, 80
  %v6356 = vpop.permute.xlu0 %6355
  %v6357 = vsel %vm142, %v6354, 0
  %v6359 = vsel %vm142, %v6356, 0
  %6361 = vmatprep.subr.mxu0 0.0
  %6362 = vmatpush1.xpose.msra.mxu0 0.0
  %6363 = vmatprep.subr.mxu0 0.0
  %6364 = vmatpush1.xpose.msra.mxu0 0.0
  %6365 = vmatprep.subr.mxu0 0.0
  %6366 = vmatpush1.xpose.msra.mxu0 0.0
  %6367 = vmatprep.subr.mxu0 0.0
  %6368 = vmatpush1.xpose.msra.mxu0 0.0
  %6369 = vmatprep.subr.mxu0 0.0
  %6370 = vmatpush1.xpose.msra.mxu0 0.0
  %6371 = vmatprep.subr.mxu0 0.0
  %6372 = vmatpush1.xpose.msra.mxu0 0.0
  %6373 = vmatprep.subr.mxu0 0.0
  %6374 = vmatpush1.xpose.msra.mxu0 0.0
  %6375 = vmatprep.subr.mxu0 0.0
  %6376 = vmatpush1.xpose.msra.mxu0 0.0
  %6377 = vmatprep.subr.mxu0 0.0
  %6378 = vmatpush1.xpose.msra.mxu0 0.0
  %6379 = vmatprep.subr.mxu0 0.0
  %6380 = vmatpush1.xpose.msra.mxu0 0.0
  %6381 = vmatprep.subr.mxu0 0.0
  %6382 = vmatpush1.xpose.msra.mxu0 0.0
  %6383 = vmatprep.subr.mxu0 0.0
  %6384 = vmatpush1.xpose.msra.mxu0 0.0
  %6385 = vmatprep.subr.mxu0 0.0
  %6386 = vmatpush1.xpose.msra.mxu0 0.0
  %6387 = vmatprep.subr.mxu0 0.0
  %6388 = vmatpush1.xpose.msra.mxu0 0.0
  %6389 = vmatprep.subr.mxu0 0.0
  %6390 = vmatpush1.xpose.msra.mxu0 0.0
  %6391 = vmatprep.subr.mxu0 0.0
  %6392 = vmatpush1.xpose.msra.mxu0 %v6359
  %6393 = vmatprep.subr.mxu0 0.0
  %6394 = vmatpush2.xpose.msra.mxu0 0.0
  %6395 = vmatprep.subr.mxu0 0.0
  %6396 = vmatpush2.xpose.msra.mxu0 0.0
  %6397 = vmatprep.subr.mxu0 0.0
  %6398 = vmatpush2.xpose.msra.mxu0 0.0
  %6399 = vmatprep.subr.mxu0 0.0
  %6400 = vmatpush2.xpose.msra.mxu0 0.0
  %6401 = vmatprep.subr.mxu0 0.0
  %6402 = vmatpush2.xpose.msra.mxu0 0.0
  %6403 = vmatprep.subr.mxu0 0.0
  %6404 = vmatpush2.xpose.msra.mxu0 0.0
  %6405 = vmatprep.subr.mxu0 0.0
  %6406 = vmatpush2.xpose.msra.mxu0 0.0
  %6407 = vmatprep.subr.mxu0 0.0
  %6408 = vmatpush2.xpose.msra.mxu0 0.0
  %6409 = vmatprep.subr.mxu0 0.0
  %6410 = vmatpush2.xpose.msra.mxu0 0.0
  %6411 = vmatprep.subr.mxu0 0.0
  %6412 = vmatpush2.xpose.msra.mxu0 0.0
  %6413 = vmatprep.subr.mxu0 0.0
  %6414 = vmatpush2.xpose.msra.mxu0 0.0
  %6415 = vmatprep.subr.mxu0 0.0
  %6416 = vmatpush2.xpose.msra.mxu0 0.0
  %6417 = vmatprep.subr.mxu0 0.0
  %6418 = vmatpush2.xpose.msra.mxu0 0.0
  %6419 = vmatprep.subr.mxu0 0.0
  %6420 = vmatpush2.xpose.msra.mxu0 0.0
  %6421 = vmatprep.subr.mxu0 0.0
  %6422 = vmatpush2.xpose.msra.mxu0 0.0
  %6423 = vmatprep.subr.mxu0 0.0
  %6424 = vmatpush2.xpose.msra.mxu0 0.0
  %6425 = vmatprep.mubr.f32.mxu0 0.0
  %6426 = vmatmul.mubr.f32.gmra.mxu0 %v6357
  %v6427 = vpop.f32.mrf.mxu0
  %v6428 = vadd.f32 %v136, %v6427
  %v6429 = vpop.f32.mrf.mxu0
  %6430 = vdwg.mxu0
  %v6431 = vsel %vm142, %v6350, -inf
  %6432 = vmax.xlane.f32.xlu0 %v6431
  %v6433 = vpop.xlane.xlu0 %6432
  %v6434 = vsel %vm142, %v6428, -inf
  %6435 = vmax.xlane.f32.xlu0 %v6434
  %v6436 = vpop.xlane.xlu0 %6435
  %v6437 = vsub.f32 %v6350, %v6433
  %v6438 = vsub.f32 %v6428, %v6436
  %v6439 = vmul.f32 %v6437, 1.442695
  %v6440 = vpow.pop %v6439
  %v6441 = vmul.f32 %v6438, 1.442695
  %v6442 = vpow.pop %v6441
  %v6443 = vsel %vm142, %v6440, 0.0
  %6444 = vadd.xlane.f32.xlu0 %v6443
  %v6445 = vpop.xlane.xlu0 %6444
  %v6446 = vsel %vm142, %v6442, 0.0
  %6447 = vadd.xlane.f32.xlu0 %v6446
  %v6448 = vpop.xlane.xlu0 %6447
  %v6449 = vrcp.pop %v6445
  %v6450 = vrcp.pop %v6448
  %v6451 = vmul.f32 %v6440, %v6449
  %v6452 = vmul.f32 %v6442, %v6450
  %6453 = vrot.lane.b32.xlu0 %v5597, 48
  %v6454 = vpop.permute.xlu0 %6453
  %v6457 = vsel %vm142, %v6451, 0
  %6459 = vmatprep.subr.mxu0 0.0
  %6460 = vmatpush1.msra.mxu0 0.0
  %6461 = vmatprep.subr.mxu0 0.0
  %6462 = vmatpush1.msra.mxu0 0.0
  %6463 = vmatprep.subr.mxu0 0.0
  %6464 = vmatpush1.msra.mxu0 0.0
  %6465 = vmatprep.subr.mxu0 0.0
  %6466 = vmatpush1.msra.mxu0 0.0
  %6467 = vmatprep.subr.mxu0 0.0
  %6468 = vmatpush1.msra.mxu0 0.0
  %6469 = vmatprep.subr.mxu0 0.0
  %6470 = vmatpush1.msra.mxu0 0.0
  %6471 = vmatprep.subr.mxu0 0.0
  %6472 = vmatpush1.msra.mxu0 0.0
  %6473 = vmatprep.subr.mxu0 0.0
  %6474 = vmatpush1.msra.mxu0 0.0
  %6475 = vmatprep.subr.mxu0 0.0
  %6476 = vmatpush1.msra.mxu0 0.0
  %6477 = vmatprep.subr.mxu0 0.0
  %6478 = vmatpush1.msra.mxu0 0.0
  %6479 = vmatprep.subr.mxu0 0.0
  %6480 = vmatpush1.msra.mxu0 0.0
  %6481 = vmatprep.subr.mxu0 0.0
  %6482 = vmatpush1.msra.mxu0 0.0
  %6483 = vmatprep.subr.mxu0 0.0
  %6484 = vmatpush1.msra.mxu0 0.0
  %6485 = vmatprep.subr.mxu0 0.0
  %6486 = vmatpush1.msra.mxu0 0.0
  %6487 = vmatprep.subr.mxu0 0.0
  %6488 = vmatpush1.msra.mxu0 0.0
  %6489 = vmatprep.subr.mxu0 0.0
  %6490 = vmatpush1.msra.mxu0 %v6454
  %6491 = vmatprep.subr.mxu0 0.0
  %6492 = vmatpush2.msra.mxu0 0.0
  %6493 = vmatprep.subr.mxu0 0.0
  %6494 = vmatpush2.msra.mxu0 0.0
  %6495 = vmatprep.subr.mxu0 0.0
  %6496 = vmatpush2.msra.mxu0 0.0
  %6497 = vmatprep.subr.mxu0 0.0
  %6498 = vmatpush2.msra.mxu0 0.0
  %6499 = vmatprep.subr.mxu0 0.0
  %6500 = vmatpush2.msra.mxu0 0.0
  %6501 = vmatprep.subr.mxu0 0.0
  %6502 = vmatpush2.msra.mxu0 0.0
  %6503 = vmatprep.subr.mxu0 0.0
  %6504 = vmatpush2.msra.mxu0 0.0
  %6505 = vmatprep.subr.mxu0 0.0
  %6506 = vmatpush2.msra.mxu0 0.0
  %6507 = vmatprep.subr.mxu0 0.0
  %6508 = vmatpush2.msra.mxu0 0.0
  %6509 = vmatprep.subr.mxu0 0.0
  %6510 = vmatpush2.msra.mxu0 0.0
  %6511 = vmatprep.subr.mxu0 0.0
  %6512 = vmatpush2.msra.mxu0 0.0
  %6513 = vmatprep.subr.mxu0 0.0
  %6514 = vmatpush2.msra.mxu0 0.0
  %6515 = vmatprep.subr.mxu0 0.0
  %6516 = vmatpush2.msra.mxu0 0.0
  %6517 = vmatprep.subr.mxu0 0.0
  %6518 = vmatpush2.msra.mxu0 0.0
  %6519 = vmatprep.subr.mxu0 0.0
  %6520 = vmatpush2.msra.mxu0 0.0
  %6521 = vmatprep.subr.mxu0 0.0
  %6522 = vmatpush2.msra.mxu0 0.0
  %6523 = vmatprep.mubr.f32.mxu0 0.0
  %6524 = vmatmul.mubr.f32.gmra.mxu0 %v6457
  %v6525 = vpop.f32.mrf.mxu0
  %v6526 = vadd.f32 0.0, %v6525
  %v6527 = vpop.f32.mrf.mxu0
  %6528 = vdwg.mxu0
  %6529 = vrot.lane.b32.xlu0 %v5602, 48
  %v6530 = vpop.permute.xlu0 %6529
  %v6533 = vsel %vm142, %v6452, 0
  %6535 = vmatprep.subr.mxu0 0.0
  %6536 = vmatpush1.msra.mxu0 0.0
  %6537 = vmatprep.subr.mxu0 0.0
  %6538 = vmatpush1.msra.mxu0 0.0
  %6539 = vmatprep.subr.mxu0 0.0
  %6540 = vmatpush1.msra.mxu0 0.0
  %6541 = vmatprep.subr.mxu0 0.0
  %6542 = vmatpush1.msra.mxu0 0.0
  %6543 = vmatprep.subr.mxu0 0.0
  %6544 = vmatpush1.msra.mxu0 0.0
  %6545 = vmatprep.subr.mxu0 0.0
  %6546 = vmatpush1.msra.mxu0 0.0
  %6547 = vmatprep.subr.mxu0 0.0
  %6548 = vmatpush1.msra.mxu0 0.0
  %6549 = vmatprep.subr.mxu0 0.0
  %6550 = vmatpush1.msra.mxu0 0.0
  %6551 = vmatprep.subr.mxu0 0.0
  %6552 = vmatpush1.msra.mxu0 0.0
  %6553 = vmatprep.subr.mxu0 0.0
  %6554 = vmatpush1.msra.mxu0 0.0
  %6555 = vmatprep.subr.mxu0 0.0
  %6556 = vmatpush1.msra.mxu0 0.0
  %6557 = vmatprep.subr.mxu0 0.0
  %6558 = vmatpush1.msra.mxu0 0.0
  %6559 = vmatprep.subr.mxu0 0.0
  %6560 = vmatpush1.msra.mxu0 0.0
  %6561 = vmatprep.subr.mxu0 0.0
  %6562 = vmatpush1.msra.mxu0 0.0
  %6563 = vmatprep.subr.mxu0 0.0
  %6564 = vmatpush1.msra.mxu0 0.0
  %6565 = vmatprep.subr.mxu0 0.0
  %6566 = vmatpush1.msra.mxu0 %v6530
  %6567 = vmatprep.subr.mxu0 0.0
  %6568 = vmatpush2.msra.mxu0 0.0
  %6569 = vmatprep.subr.mxu0 0.0
  %6570 = vmatpush2.msra.mxu0 0.0
  %6571 = vmatprep.subr.mxu0 0.0
  %6572 = vmatpush2.msra.mxu0 0.0
  %6573 = vmatprep.subr.mxu0 0.0
  %6574 = vmatpush2.msra.mxu0 0.0
  %6575 = vmatprep.subr.mxu0 0.0
  %6576 = vmatpush2.msra.mxu0 0.0
  %6577 = vmatprep.subr.mxu0 0.0
  %6578 = vmatpush2.msra.mxu0 0.0
  %6579 = vmatprep.subr.mxu0 0.0
  %6580 = vmatpush2.msra.mxu0 0.0
  %6581 = vmatprep.subr.mxu0 0.0
  %6582 = vmatpush2.msra.mxu0 0.0
  %6583 = vmatprep.subr.mxu0 0.0
  %6584 = vmatpush2.msra.mxu0 0.0
  %6585 = vmatprep.subr.mxu0 0.0
  %6586 = vmatpush2.msra.mxu0 0.0
  %6587 = vmatprep.subr.mxu0 0.0
  %6588 = vmatpush2.msra.mxu0 0.0
  %6589 = vmatprep.subr.mxu0 0.0
  %6590 = vmatpush2.msra.mxu0 0.0
  %6591 = vmatprep.subr.mxu0 0.0
  %6592 = vmatpush2.msra.mxu0 0.0
  %6593 = vmatprep.subr.mxu0 0.0
  %6594 = vmatpush2.msra.mxu0 0.0
  %6595 = vmatprep.subr.mxu0 0.0
  %6596 = vmatpush2.msra.mxu0 0.0
  %6597 = vmatprep.subr.mxu0 0.0
  %6598 = vmatpush2.msra.mxu0 0.0
  %6599 = vmatprep.mubr.f32.mxu0 0.0
  %6600 = vmatmul.mubr.f32.gmra.mxu0 %v6533
  %v6601 = vpop.f32.mrf.mxu0
  %v6602 = vadd.f32 0.0, %v6601
  %v6603 = vpop.f32.mrf.mxu0
  %6604 = vdwg.mxu0
  %6607 = vrot.lane.b32.xlu0 %v6526, 16
  %v6608 = vpop.permute.xlu0 %6607
  %6609 = vrot.lane.b32.xlu0 %v6602, 16
  %v6610 = vpop.permute.xlu0 %6609
  %6613 = vst.msk [vmem:[#allocation2] sm:$0xff] %vm1149, %v6608
  %6614 = vst.msk [vmem:[#allocation2 + $0x8] sm:$0xff] %vm1149, %v6610
  %6615 = vrot.lane.b32.xlu0 %v5597, 104
  %v6616 = vpop.permute.xlu0 %6615
  %6617 = vrot.lane.b32.xlu0 %v5597, 72
  %v6618 = vpop.permute.xlu0 %6617
  %v6619 = vsel %vm142, %v6616, 0
  %v6621 = vsel %vm142, %v6618, 0
  %6623 = vmatprep.subr.mxu0 0.0
  %6624 = vmatpush1.xpose.msra.mxu0 0.0
  %6625 = vmatprep.subr.mxu0 0.0
  %6626 = vmatpush1.xpose.msra.mxu0 0.0
  %6627 = vmatprep.subr.mxu0 0.0
  %6628 = vmatpush1.xpose.msra.mxu0 0.0
  %6629 = vmatprep.subr.mxu0 0.0
  %6630 = vmatpush1.xpose.msra.mxu0 0.0
  %6631 = vmatprep.subr.mxu0 0.0
  %6632 = vmatpush1.xpose.msra.mxu0 0.0
  %6633 = vmatprep.subr.mxu0 0.0
  %6634 = vmatpush1.xpose.msra.mxu0 0.0
  %6635 = vmatprep.subr.mxu0 0.0
  %6636 = vmatpush1.xpose.msra.mxu0 0.0
  %6637 = vmatprep.subr.mxu0 0.0
  %6638 = vmatpush1.xpose.msra.mxu0 0.0
  %6639 = vmatprep.subr.mxu0 0.0
  %6640 = vmatpush1.xpose.msra.mxu0 0.0
  %6641 = vmatprep.subr.mxu0 0.0
  %6642 = vmatpush1.xpose.msra.mxu0 0.0
  %6643 = vmatprep.subr.mxu0 0.0
  %6644 = vmatpush1.xpose.msra.mxu0 0.0
  %6645 = vmatprep.subr.mxu0 0.0
  %6646 = vmatpush1.xpose.msra.mxu0 0.0
  %6647 = vmatprep.subr.mxu0 0.0
  %6648 = vmatpush1.xpose.msra.mxu0 0.0
  %6649 = vmatprep.subr.mxu0 0.0
  %6650 = vmatpush1.xpose.msra.mxu0 0.0
  %6651 = vmatprep.subr.mxu0 0.0
  %6652 = vmatpush1.xpose.msra.mxu0 0.0
  %6653 = vmatprep.subr.mxu0 0.0
  %6654 = vmatpush1.xpose.msra.mxu0 %v6621
  %6655 = vmatprep.subr.mxu0 0.0
  %6656 = vmatpush2.xpose.msra.mxu0 0.0
  %6657 = vmatprep.subr.mxu0 0.0
  %6658 = vmatpush2.xpose.msra.mxu0 0.0
  %6659 = vmatprep.subr.mxu0 0.0
  %6660 = vmatpush2.xpose.msra.mxu0 0.0
  %6661 = vmatprep.subr.mxu0 0.0
  %6662 = vmatpush2.xpose.msra.mxu0 0.0
  %6663 = vmatprep.subr.mxu0 0.0
  %6664 = vmatpush2.xpose.msra.mxu0 0.0
  %6665 = vmatprep.subr.mxu0 0.0
  %6666 = vmatpush2.xpose.msra.mxu0 0.0
  %6667 = vmatprep.subr.mxu0 0.0
  %6668 = vmatpush2.xpose.msra.mxu0 0.0
  %6669 = vmatprep.subr.mxu0 0.0
  %6670 = vmatpush2.xpose.msra.mxu0 0.0
  %6671 = vmatprep.subr.mxu0 0.0
  %6672 = vmatpush2.xpose.msra.mxu0 0.0
  %6673 = vmatprep.subr.mxu0 0.0
  %6674 = vmatpush2.xpose.msra.mxu0 0.0
  %6675 = vmatprep.subr.mxu0 0.0
  %6676 = vmatpush2.xpose.msra.mxu0 0.0
  %6677 = vmatprep.subr.mxu0 0.0
  %6678 = vmatpush2.xpose.msra.mxu0 0.0
  %6679 = vmatprep.subr.mxu0 0.0
  %6680 = vmatpush2.xpose.msra.mxu0 0.0
  %6681 = vmatprep.subr.mxu0 0.0
  %6682 = vmatpush2.xpose.msra.mxu0 0.0
  %6683 = vmatprep.subr.mxu0 0.0
  %6684 = vmatpush2.xpose.msra.mxu0 0.0
  %6685 = vmatprep.subr.mxu0 0.0
  %6686 = vmatpush2.xpose.msra.mxu0 0.0
  %6687 = vmatprep.mubr.f32.mxu0 0.0
  %6688 = vmatmul.mubr.f32.gmra.mxu0 %v6619
  %v6689 = vpop.f32.mrf.mxu0
  %v6690 = vadd.f32 %v132, %v6689
  %v6691 = vpop.f32.mrf.mxu0
  %6692 = vdwg.mxu0
  %6693 = vrot.lane.b32.xlu0 %v5602, 104
  %v6694 = vpop.permute.xlu0 %6693
  %6695 = vrot.lane.b32.xlu0 %v5602, 72
  %v6696 = vpop.permute.xlu0 %6695
  %v6697 = vsel %vm142, %v6694, 0
  %v6699 = vsel %vm142, %v6696, 0
  %6701 = vmatprep.subr.mxu0 0.0
  %6702 = vmatpush1.xpose.msra.mxu0 0.0
  %6703 = vmatprep.subr.mxu0 0.0
  %6704 = vmatpush1.xpose.msra.mxu0 0.0
  %6705 = vmatprep.subr.mxu0 0.0
  %6706 = vmatpush1.xpose.msra.mxu0 0.0
  %6707 = vmatprep.subr.mxu0 0.0
  %6708 = vmatpush1.xpose.msra.mxu0 0.0
  %6709 = vmatprep.subr.mxu0 0.0
  %6710 = vmatpush1.xpose.msra.mxu0 0.0
  %6711 = vmatprep.subr.mxu0 0.0
  %6712 = vmatpush1.xpose.msra.mxu0 0.0
  %6713 = vmatprep.subr.mxu0 0.0
  %6714 = vmatpush1.xpose.msra.mxu0 0.0
  %6715 = vmatprep.subr.mxu0 0.0
  %6716 = vmatpush1.xpose.msra.mxu0 0.0
  %6717 = vmatprep.subr.mxu0 0.0
  %6718 = vmatpush1.xpose.msra.mxu0 0.0
  %6719 = vmatprep.subr.mxu0 0.0
  %6720 = vmatpush1.xpose.msra.mxu0 0.0
  %6721 = vmatprep.subr.mxu0 0.0
  %6722 = vmatpush1.xpose.msra.mxu0 0.0
  %6723 = vmatprep.subr.mxu0 0.0
  %6724 = vmatpush1.xpose.msra.mxu0 0.0
  %6725 = vmatprep.subr.mxu0 0.0
  %6726 = vmatpush1.xpose.msra.mxu0 0.0
  %6727 = vmatprep.subr.mxu0 0.0
  %6728 = vmatpush1.xpose.msra.mxu0 0.0
  %6729 = vmatprep.subr.mxu0 0.0
  %6730 = vmatpush1.xpose.msra.mxu0 0.0
  %6731 = vmatprep.subr.mxu0 0.0
  %6732 = vmatpush1.xpose.msra.mxu0 %v6699
  %6733 = vmatprep.subr.mxu0 0.0
  %6734 = vmatpush2.xpose.msra.mxu0 0.0
  %6735 = vmatprep.subr.mxu0 0.0
  %6736 = vmatpush2.xpose.msra.mxu0 0.0
  %6737 = vmatprep.subr.mxu0 0.0
  %6738 = vmatpush2.xpose.msra.mxu0 0.0
  %6739 = vmatprep.subr.mxu0 0.0
  %6740 = vmatpush2.xpose.msra.mxu0 0.0
  %6741 = vmatprep.subr.mxu0 0.0
  %6742 = vmatpush2.xpose.msra.mxu0 0.0
  %6743 = vmatprep.subr.mxu0 0.0
  %6744 = vmatpush2.xpose.msra.mxu0 0.0
  %6745 = vmatprep.subr.mxu0 0.0
  %6746 = vmatpush2.xpose.msra.mxu0 0.0
  %6747 = vmatprep.subr.mxu0 0.0
  %6748 = vmatpush2.xpose.msra.mxu0 0.0
  %6749 = vmatprep.subr.mxu0 0.0
  %6750 = vmatpush2.xpose.msra.mxu0 0.0
  %6751 = vmatprep.subr.mxu0 0.0
  %6752 = vmatpush2.xpose.msra.mxu0 0.0
  %6753 = vmatprep.subr.mxu0 0.0
  %6754 = vmatpush2.xpose.msra.mxu0 0.0
  %6755 = vmatprep.subr.mxu0 0.0
  %6756 = vmatpush2.xpose.msra.mxu0 0.0
  %6757 = vmatprep.subr.mxu0 0.0
  %6758 = vmatpush2.xpose.msra.mxu0 0.0
  %6759 = vmatprep.subr.mxu0 0.0
  %6760 = vmatpush2.xpose.msra.mxu0 0.0
  %6761 = vmatprep.subr.mxu0 0.0
  %6762 = vmatpush2.xpose.msra.mxu0 0.0
  %6763 = vmatprep.subr.mxu0 0.0
  %6764 = vmatpush2.xpose.msra.mxu0 0.0
  %6765 = vmatprep.mubr.f32.mxu0 0.0
  %6766 = vmatmul.mubr.f32.gmra.mxu0 %v6697
  %v6767 = vpop.f32.mrf.mxu0
  %v6768 = vadd.f32 %v136, %v6767
  %v6769 = vpop.f32.mrf.mxu0
  %6770 = vdwg.mxu0
  %v6771 = vsel %vm142, %v6690, -inf
  %6772 = vmax.xlane.f32.xlu0 %v6771
  %v6773 = vpop.xlane.xlu0 %6772
  %v6774 = vsel %vm142, %v6768, -inf
  %6775 = vmax.xlane.f32.xlu0 %v6774
  %v6776 = vpop.xlane.xlu0 %6775
  %v6777 = vsub.f32 %v6690, %v6773
  %v6778 = vsub.f32 %v6768, %v6776
  %v6779 = vmul.f32 %v6777, 1.442695
  %v6780 = vpow.pop %v6779
  %v6781 = vmul.f32 %v6778, 1.442695
  %v6782 = vpow.pop %v6781
  %v6783 = vsel %vm142, %v6780, 0.0
  %6784 = vadd.xlane.f32.xlu0 %v6783
  %v6785 = vpop.xlane.xlu0 %6784
  %v6786 = vsel %vm142, %v6782, 0.0
  %6787 = vadd.xlane.f32.xlu0 %v6786
  %v6788 = vpop.xlane.xlu0 %6787
  %v6789 = vrcp.pop %v6785
  %v6790 = vrcp.pop %v6788
  %v6791 = vmul.f32 %v6780, %v6789
  %v6792 = vmul.f32 %v6782, %v6790
  %6793 = vrot.lane.b32.xlu0 %v5597, 40
  %v6794 = vpop.permute.xlu0 %6793
  %v6797 = vsel %vm142, %v6791, 0
  %6799 = vmatprep.subr.mxu0 0.0
  %6800 = vmatpush1.msra.mxu0 0.0
  %6801 = vmatprep.subr.mxu0 0.0
  %6802 = vmatpush1.msra.mxu0 0.0
  %6803 = vmatprep.subr.mxu0 0.0
  %6804 = vmatpush1.msra.mxu0 0.0
  %6805 = vmatprep.subr.mxu0 0.0
  %6806 = vmatpush1.msra.mxu0 0.0
  %6807 = vmatprep.subr.mxu0 0.0
  %6808 = vmatpush1.msra.mxu0 0.0
  %6809 = vmatprep.subr.mxu0 0.0
  %6810 = vmatpush1.msra.mxu0 0.0
  %6811 = vmatprep.subr.mxu0 0.0
  %6812 = vmatpush1.msra.mxu0 0.0
  %6813 = vmatprep.subr.mxu0 0.0
  %6814 = vmatpush1.msra.mxu0 0.0
  %6815 = vmatprep.subr.mxu0 0.0
  %6816 = vmatpush1.msra.mxu0 0.0
  %6817 = vmatprep.subr.mxu0 0.0
  %6818 = vmatpush1.msra.mxu0 0.0
  %6819 = vmatprep.subr.mxu0 0.0
  %6820 = vmatpush1.msra.mxu0 0.0
  %6821 = vmatprep.subr.mxu0 0.0
  %6822 = vmatpush1.msra.mxu0 0.0
  %6823 = vmatprep.subr.mxu0 0.0
  %6824 = vmatpush1.msra.mxu0 0.0
  %6825 = vmatprep.subr.mxu0 0.0
  %6826 = vmatpush1.msra.mxu0 0.0
  %6827 = vmatprep.subr.mxu0 0.0
  %6828 = vmatpush1.msra.mxu0 0.0
  %6829 = vmatprep.subr.mxu0 0.0
  %6830 = vmatpush1.msra.mxu0 %v6794
  %6831 = vmatprep.subr.mxu0 0.0
  %6832 = vmatpush2.msra.mxu0 0.0
  %6833 = vmatprep.subr.mxu0 0.0
  %6834 = vmatpush2.msra.mxu0 0.0
  %6835 = vmatprep.subr.mxu0 0.0
  %6836 = vmatpush2.msra.mxu0 0.0
  %6837 = vmatprep.subr.mxu0 0.0
  %6838 = vmatpush2.msra.mxu0 0.0
  %6839 = vmatprep.subr.mxu0 0.0
  %6840 = vmatpush2.msra.mxu0 0.0
  %6841 = vmatprep.subr.mxu0 0.0
  %6842 = vmatpush2.msra.mxu0 0.0
  %6843 = vmatprep.subr.mxu0 0.0
  %6844 = vmatpush2.msra.mxu0 0.0
  %6845 = vmatprep.subr.mxu0 0.0
  %6846 = vmatpush2.msra.mxu0 0.0
  %6847 = vmatprep.subr.mxu0 0.0
  %6848 = vmatpush2.msra.mxu0 0.0
  %6849 = vmatprep.subr.mxu0 0.0
  %6850 = vmatpush2.msra.mxu0 0.0
  %6851 = vmatprep.subr.mxu0 0.0
  %6852 = vmatpush2.msra.mxu0 0.0
  %6853 = vmatprep.subr.mxu0 0.0
  %6854 = vmatpush2.msra.mxu0 0.0
  %6855 = vmatprep.subr.mxu0 0.0
  %6856 = vmatpush2.msra.mxu0 0.0
  %6857 = vmatprep.subr.mxu0 0.0
  %6858 = vmatpush2.msra.mxu0 0.0
  %6859 = vmatprep.subr.mxu0 0.0
  %6860 = vmatpush2.msra.mxu0 0.0
  %6861 = vmatprep.subr.mxu0 0.0
  %6862 = vmatpush2.msra.mxu0 0.0
  %6863 = vmatprep.mubr.f32.mxu0 0.0
  %6864 = vmatmul.mubr.f32.gmra.mxu0 %v6797
  %v6865 = vpop.f32.mrf.mxu0
  %v6866 = vadd.f32 0.0, %v6865
  %v6867 = vpop.f32.mrf.mxu0
  %6868 = vdwg.mxu0
  %6869 = vrot.lane.b32.xlu0 %v5602, 40
  %v6870 = vpop.permute.xlu0 %6869
  %v6873 = vsel %vm142, %v6792, 0
  %6875 = vmatprep.subr.mxu0 0.0
  %6876 = vmatpush1.msra.mxu0 0.0
  %6877 = vmatprep.subr.mxu0 0.0
  %6878 = vmatpush1.msra.mxu0 0.0
  %6879 = vmatprep.subr.mxu0 0.0
  %6880 = vmatpush1.msra.mxu0 0.0
  %6881 = vmatprep.subr.mxu0 0.0
  %6882 = vmatpush1.msra.mxu0 0.0
  %6883 = vmatprep.subr.mxu0 0.0
  %6884 = vmatpush1.msra.mxu0 0.0
  %6885 = vmatprep.subr.mxu0 0.0
  %6886 = vmatpush1.msra.mxu0 0.0
  %6887 = vmatprep.subr.mxu0 0.0
  %6888 = vmatpush1.msra.mxu0 0.0
  %6889 = vmatprep.subr.mxu0 0.0
  %6890 = vmatpush1.msra.mxu0 0.0
  %6891 = vmatprep.subr.mxu0 0.0
  %6892 = vmatpush1.msra.mxu0 0.0
  %6893 = vmatprep.subr.mxu0 0.0
  %6894 = vmatpush1.msra.mxu0 0.0
  %6895 = vmatprep.subr.mxu0 0.0
  %6896 = vmatpush1.msra.mxu0 0.0
  %6897 = vmatprep.subr.mxu0 0.0
  %6898 = vmatpush1.msra.mxu0 0.0
  %6899 = vmatprep.subr.mxu0 0.0
  %6900 = vmatpush1.msra.mxu0 0.0
  %6901 = vmatprep.subr.mxu0 0.0
  %6902 = vmatpush1.msra.mxu0 0.0
  %6903 = vmatprep.subr.mxu0 0.0
  %6904 = vmatpush1.msra.mxu0 0.0
  %6905 = vmatprep.subr.mxu0 0.0
  %6906 = vmatpush1.msra.mxu0 %v6870
  %6907 = vmatprep.subr.mxu0 0.0
  %6908 = vmatpush2.msra.mxu0 0.0
  %6909 = vmatprep.subr.mxu0 0.0
  %6910 = vmatpush2.msra.mxu0 0.0
  %6911 = vmatprep.subr.mxu0 0.0
  %6912 = vmatpush2.msra.mxu0 0.0
  %6913 = vmatprep.subr.mxu0 0.0
  %6914 = vmatpush2.msra.mxu0 0.0
  %6915 = vmatprep.subr.mxu0 0.0
  %6916 = vmatpush2.msra.mxu0 0.0
  %6917 = vmatprep.subr.mxu0 0.0
  %6918 = vmatpush2.msra.mxu0 0.0
  %6919 = vmatprep.subr.mxu0 0.0
  %6920 = vmatpush2.msra.mxu0 0.0
  %6921 = vmatprep.subr.mxu0 0.0
  %6922 = vmatpush2.msra.mxu0 0.0
  %6923 = vmatprep.subr.mxu0 0.0
  %6924 = vmatpush2.msra.mxu0 0.0
  %6925 = vmatprep.subr.mxu0 0.0
  %6926 = vmatpush2.msra.mxu0 0.0
  %6927 = vmatprep.subr.mxu0 0.0
  %6928 = vmatpush2.msra.mxu0 0.0
  %6929 = vmatprep.subr.mxu0 0.0
  %6930 = vmatpush2.msra.mxu0 0.0
  %6931 = vmatprep.subr.mxu0 0.0
  %6932 = vmatpush2.msra.mxu0 0.0
  %6933 = vmatprep.subr.mxu0 0.0
  %6934 = vmatpush2.msra.mxu0 0.0
  %6935 = vmatprep.subr.mxu0 0.0
  %6936 = vmatpush2.msra.mxu0 0.0
  %6937 = vmatprep.subr.mxu0 0.0
  %6938 = vmatpush2.msra.mxu0 0.0
  %6939 = vmatprep.mubr.f32.mxu0 0.0
  %6940 = vmatmul.mubr.f32.gmra.mxu0 %v6873
  %v6941 = vpop.f32.mrf.mxu0
  %v6942 = vadd.f32 0.0, %v6941
  %v6943 = vpop.f32.mrf.mxu0
  %6944 = vdwg.mxu0
  %6947 = vrot.lane.b32.xlu0 %v6866, 24
  %v6948 = vpop.permute.xlu0 %6947
  %6949 = vrot.lane.b32.xlu0 %v6942, 24
  %v6950 = vpop.permute.xlu0 %6949
  %6953 = vst.msk [vmem:[#allocation2] sm:$0xff] %vm1490, %v6948
  %6954 = vst.msk [vmem:[#allocation2 + $0x8] sm:$0xff] %vm1490, %v6950
  %v6955 = vld [vmem:[#allocation2] sm:$0xff]
  %v6956 = vld [vmem:[#allocation2 + $0x8] sm:$0xff]
  %s6957 = scalar_lea.vmem %s3, 96
  %v6958 = vld [vmem:[%s6957] sm:$0xff]
  %v6959 = vld [vmem:[%s6957 + $0x8] sm:$0xff]
  %v6960 = vld [vmem:[%s6957 + $0x10] sm:$0xff]
  %v6961 = vld [vmem:[%s6957 + $0x18] sm:$0xff]
  %v6962 = vlaneseq
  %v6963 = vshrl.u32 %v6962, 7
  %v6964 = vsub.s32 1, %v6963
  %v6965 = vrot.slane %v5514, %v6964
  %v6967 = vsel %vm45, %v6955, 0
  %v6970 = vsel %vm45, %v6956, 0
  %6972 = vmatprep.subr.mxu0 0.0
  %6973 = vmatpush1.msra.mxu0 0.0
  %6974 = vmatprep.subr.mxu0 0.0
  %6975 = vmatpush1.msra.mxu0 0.0
  %6976 = vmatprep.subr.mxu0 0.0
  %6977 = vmatpush1.msra.mxu0 0.0
  %6978 = vmatprep.subr.mxu0 0.0
  %6979 = vmatpush1.msra.mxu0 0.0
  %6980 = vmatprep.subr.mxu0 0.0
  %6981 = vmatpush1.msra.mxu0 0.0
  %6982 = vmatprep.subr.mxu0 0.0
  %6983 = vmatpush1.msra.mxu0 0.0
  %6984 = vmatprep.subr.mxu0 0.0
  %6985 = vmatpush1.msra.mxu0 0.0
  %6986 = vmatprep.subr.mxu0 0.0
  %6987 = vmatpush1.msra.mxu0 0.0
  %6988 = vmatprep.subr.mxu0 0.0
  %6989 = vmatpush1.msra.mxu0 0.0
  %6990 = vmatprep.subr.mxu0 0.0
  %6991 = vmatpush1.msra.mxu0 0.0
  %6992 = vmatprep.subr.mxu0 0.0
  %6993 = vmatpush1.msra.mxu0 0.0
  %6994 = vmatprep.subr.mxu0 0.0
  %6995 = vmatpush1.msra.mxu0 0.0
  %6996 = vmatprep.subr.mxu0 0.0
  %6997 = vmatpush1.msra.mxu0 %v6961
  %6998 = vmatprep.subr.mxu0 0.0
  %6999 = vmatpush1.msra.mxu0 %v6960
  %7000 = vmatprep.subr.mxu0 0.0
  %7001 = vmatpush1.msra.mxu0 %v6959
  %7002 = vmatprep.subr.mxu0 0.0
  %7003 = vmatpush1.msra.mxu0 %v6958
  %7004 = vmatprep.subr.mxu0 0.0
  %7005 = vmatpush2.msra.mxu0 0.0
  %7006 = vmatprep.subr.mxu0 0.0
  %7007 = vmatpush2.msra.mxu0 0.0
  %7008 = vmatprep.subr.mxu0 0.0
  %7009 = vmatpush2.msra.mxu0 0.0
  %7010 = vmatprep.subr.mxu0 0.0
  %7011 = vmatpush2.msra.mxu0 0.0
  %7012 = vmatprep.subr.mxu0 0.0
  %7013 = vmatpush2.msra.mxu0 0.0
  %7014 = vmatprep.subr.mxu0 0.0
  %7015 = vmatpush2.msra.mxu0 0.0
  %7016 = vmatprep.subr.mxu0 0.0
  %7017 = vmatpush2.msra.mxu0 0.0
  %7018 = vmatprep.subr.mxu0 0.0
  %7019 = vmatpush2.msra.mxu0 0.0
  %7020 = vmatprep.subr.mxu0 0.0
  %7021 = vmatpush2.msra.mxu0 0.0
  %7022 = vmatprep.subr.mxu0 0.0
  %7023 = vmatpush2.msra.mxu0 0.0
  %7024 = vmatprep.subr.mxu0 0.0
  %7025 = vmatpush2.msra.mxu0 0.0
  %7026 = vmatprep.subr.mxu0 0.0
  %7027 = vmatpush2.msra.mxu0 0.0
  %7028 = vmatprep.subr.mxu0 0.0
  %7029 = vmatpush2.msra.mxu0 0.0
  %7030 = vmatprep.subr.mxu0 0.0
  %7031 = vmatpush2.msra.mxu0 0.0
  %7032 = vmatprep.subr.mxu0 0.0
  %7033 = vmatpush2.msra.mxu0 0.0
  %7034 = vmatprep.subr.mxu0 0.0
  %7035 = vmatpush2.msra.mxu0 0.0
  %7036 = vmatprep.mubr.f32.mxu0 0.0
  %7037 = vmatmul.mubr.f32.gmra.mxu0 %v6967
  %v7038 = vpop.f32.mrf.mxu0
  %v7039 = vadd.f32 %v6965, %v7038
  %v7040 = vpop.f32.mrf.mxu0
  %7041 = vmatprep.mubr.f32.mxu0 0.0
  %7042 = vmatmul.mubr.f32.gmra.mxu0 %v6970
  %v7043 = vpop.f32.mrf.mxu0
  %v7044 = vadd.f32 %v6965, %v7043
  %v7045 = vpop.f32.mrf.mxu0
  %7046 = vdwg.mxu0
  %v7047 = vadd.f32 %v7039, %v5511
  %v7048 = vadd.f32 %v7044, %v5512
  %v7049 = vsel %vm45, %v7047, 0.0
  %7050 = vadd.xlane.f32.xlu0 %v7049
  %v7051 = vpop.xlane.xlu0 %7050
  %v7052 = vsel %vm45, %v7048, 0.0
  %7053 = vadd.xlane.f32.xlu0 %v7052
  %v7054 = vpop.xlane.xlu0 %7053
  %v7055 = vmul.f32 %v7051, %v1592
  %v7056 = vmul.f32 %v7054, %v1592
  %v7057 = vsub.f32 %v7047, %v7055
  %v7058 = vsub.f32 %v7048, %v7056
  %v7059 = vmul.f32 %v7057, %v7057
  %v7060 = vmul.f32 %v7058, %v7058
  %v7061 = vsel %vm45, %v7059, 0.0
  %7062 = vadd.xlane.f32.xlu0 %v7061
  %v7063 = vpop.xlane.xlu0 %7062
  %v7064 = vsel %vm45, %v7060, 0.0
  %7065 = vadd.xlane.f32.xlu0 %v7064
  %v7066 = vpop.xlane.xlu0 %7065
  %v7067 = vmul.f32 %v7063, %v1592
  %v7068 = vmul.f32 %v7066, %v1592
  %v7069 = vadd.f32 %v7067, 1e-12
  %v7070 = vadd.f32 %v7068, 1e-12
  %v7071 = vrsqrt.pop %v7069
  %v7072 = vrsqrt.pop %v7070
  %v7073 = vmul.f32 %v7057, %v7071
  %v7074 = vmul.f32 %v7058, %v7072
  %v7075 = vlaneseq
  %v7076 = vshrl.u32 %v7075, 7
  %v7077 = vsub.s32 2, %v7076
  %v7078 = vrot.slane %v5514, %v7077
  %v7079 = vmul.f32 %v7073, %v7078
  %v7080 = vmul.f32 %v7074, %v7078
  %v7081 = vlaneseq
  %v7082 = vshrl.u32 %v7081, 7
  %v7083 = vsub.s32 3, %v7082
  %v7084 = vrot.slane %v5514, %v7083
  %v7085 = vadd.f32 %v7079, %v7084
  %v7086 = vadd.f32 %v7080, %v7084
  %s7087 = scalar_lea.vmem %s4, 96
  %v7088 = vld [vmem:[%s7087] sm:$0xff]
  %v7089 = vld [vmem:[%s7087 + $0x8] sm:$0xff]
  %v7090 = vld [vmem:[%s7087 + $0x10] sm:$0xff]
  %v7091 = vld [vmem:[%s7087 + $0x18] sm:$0xff]
  %v7092 = vlaneseq
  %v7093 = vshrl.u32 %v7092, 7
  %v7094 = vsub.s32 4, %v7093
  %v7095 = vrot.slane %v5514, %v7094
  %v7097 = vsel %vm45, %v7085, 0
  %v7100 = vsel %vm45, %v7086, 0
  %7102 = vmatprep.subr.mxu0 0.0
  %7103 = vmatpush1.msra.mxu0 0.0
  %7104 = vmatprep.subr.mxu0 0.0
  %7105 = vmatpush1.msra.mxu0 0.0
  %7106 = vmatprep.subr.mxu0 0.0
  %7107 = vmatpush1.msra.mxu0 0.0
  %7108 = vmatprep.subr.mxu0 0.0
  %7109 = vmatpush1.msra.mxu0 0.0
  %7110 = vmatprep.subr.mxu0 0.0
  %7111 = vmatpush1.msra.mxu0 0.0
  %7112 = vmatprep.subr.mxu0 0.0
  %7113 = vmatpush1.msra.mxu0 0.0
  %7114 = vmatprep.subr.mxu0 0.0
  %7115 = vmatpush1.msra.mxu0 0.0
  %7116 = vmatprep.subr.mxu0 0.0
  %7117 = vmatpush1.msra.mxu0 0.0
  %7118 = vmatprep.subr.mxu0 0.0
  %7119 = vmatpush1.msra.mxu0 0.0
  %7120 = vmatprep.subr.mxu0 0.0
  %7121 = vmatpush1.msra.mxu0 0.0
  %7122 = vmatprep.subr.mxu0 0.0
  %7123 = vmatpush1.msra.mxu0 0.0
  %7124 = vmatprep.subr.mxu0 0.0
  %7125 = vmatpush1.msra.mxu0 0.0
  %7126 = vmatprep.subr.mxu0 0.0
  %7127 = vmatpush1.msra.mxu0 %v7091
  %7128 = vmatprep.subr.mxu0 0.0
  %7129 = vmatpush1.msra.mxu0 %v7090
  %7130 = vmatprep.subr.mxu0 0.0
  %7131 = vmatpush1.msra.mxu0 %v7089
  %7132 = vmatprep.subr.mxu0 0.0
  %7133 = vmatpush1.msra.mxu0 %v7088
  %7134 = vmatprep.subr.mxu0 0.0
  %7135 = vmatpush2.msra.mxu0 0.0
  %7136 = vmatprep.subr.mxu0 0.0
  %7137 = vmatpush2.msra.mxu0 0.0
  %7138 = vmatprep.subr.mxu0 0.0
  %7139 = vmatpush2.msra.mxu0 0.0
  %7140 = vmatprep.subr.mxu0 0.0
  %7141 = vmatpush2.msra.mxu0 0.0
  %7142 = vmatprep.subr.mxu0 0.0
  %7143 = vmatpush2.msra.mxu0 0.0
  %7144 = vmatprep.subr.mxu0 0.0
  %7145 = vmatpush2.msra.mxu0 0.0
  %7146 = vmatprep.subr.mxu0 0.0
  %7147 = vmatpush2.msra.mxu0 0.0
  %7148 = vmatprep.subr.mxu0 0.0
  %7149 = vmatpush2.msra.mxu0 0.0
  %7150 = vmatprep.subr.mxu0 0.0
  %7151 = vmatpush2.msra.mxu0 0.0
  %7152 = vmatprep.subr.mxu0 0.0
  %7153 = vmatpush2.msra.mxu0 0.0
  %7154 = vmatprep.subr.mxu0 0.0
  %7155 = vmatpush2.msra.mxu0 0.0
  %7156 = vmatprep.subr.mxu0 0.0
  %7157 = vmatpush2.msra.mxu0 0.0
  %7158 = vmatprep.subr.mxu0 0.0
  %7159 = vmatpush2.msra.mxu0 0.0
  %7160 = vmatprep.subr.mxu0 0.0
  %7161 = vmatpush2.msra.mxu0 0.0
  %7162 = vmatprep.subr.mxu0 0.0
  %7163 = vmatpush2.msra.mxu0 0.0
  %7164 = vmatprep.subr.mxu0 0.0
  %7165 = vmatpush2.msra.mxu0 0.0
  %7166 = vmatprep.mubr.f32.mxu0 0.0
  %7167 = vmatmul.mubr.f32.gmra.mxu0 %v7097
  %v7168 = vpop.f32.mrf.mxu0
  %v7169 = vadd.f32 %v7095, %v7168
  %v7170 = vpop.f32.mrf.mxu0
  %7171 = vmatprep.mubr.f32.mxu0 0.0
  %7172 = vmatmul.mubr.f32.gmra.mxu0 %v7100
  %v7173 = vpop.f32.mrf.mxu0
  %v7174 = vadd.f32 %v7095, %v7173
  %v7175 = vpop.f32.mrf.mxu0
  %7176 = vdwg.mxu0
  %v7177 = vmul.f32 %v7169, 0.5
  %v7178 = vmul.f32 %v7174, 0.5
  %v7179 = vmul.f32 %v7169, 0.044715
  %v7180 = vmul.f32 %v7174, 0.044715
  %v7181 = vmul.f32 %v7179, %v7169
  %v7182 = vmul.f32 %v7180, %v7174
  %v7183 = vmul.f32 %v7181, %v7169
  %v7184 = vmul.f32 %v7182, %v7174
  %v7185 = vadd.f32 %v7169, %v7183
  %v7186 = vadd.f32 %v7174, %v7184
  %v7187 = vmul.f32 %v7185, 0.7978846
  %v7188 = vmul.f32 %v7186, 0.7978846
  %v7189 = vtanh.pop %v7187
  %v7190 = vtanh.pop %v7188
  %v7191 = vadd.f32 %v7189, 1.0
  %v7192 = vadd.f32 %v7190, 1.0
  %v7193 = vmul.f32 %v7177, %v7191
  %v7194 = vmul.f32 %v7178, %v7192
  %s7195 = scalar_lea.vmem %s5, 192
  %v7196 = vld [vmem:[%s7195] sm:$0xff]
  %v7197 = vld [vmem:[%s7195 + $0x8] sm:$0xff]
  %v7198 = vld [vmem:[%s7195 + $0x10] sm:$0xff]
  %v7199 = vld [vmem:[%s7195 + $0x18] sm:$0xff]
  %v7200 = vld [vmem:[%s7195 + $0x20] sm:$0xff]
  %v7201 = vld [vmem:[%s7195 + $0x28] sm:$0xff]
  %v7202 = vld [vmem:[%s7195 + $0x30] sm:$0xff]
  %v7203 = vld [vmem:[%s7195 + $0x38] sm:$0xff]
  %v7204 = vlaneseq
  %v7205 = vshrl.u32 %v7204, 7
  %v7206 = vsub.s32 5, %v7205
  %v7207 = vrot.slane %v5514, %v7206
  %v7209 = vsel %vm1744, %v7193, 0
  %v7212 = vsel %vm1744, %v7194, 0
  %7214 = vmatprep.subr.mxu0 0.0
  %7215 = vmatpush1.msra.mxu0 0.0
  %7216 = vmatprep.subr.mxu0 0.0
  %7217 = vmatpush1.msra.mxu0 0.0
  %7218 = vmatprep.subr.mxu0 0.0
  %7219 = vmatpush1.msra.mxu0 0.0
  %7220 = vmatprep.subr.mxu0 0.0
  %7221 = vmatpush1.msra.mxu0 0.0
  %7222 = vmatprep.subr.mxu0 0.0
  %7223 = vmatpush1.msra.mxu0 0.0
  %7224 = vmatprep.subr.mxu0 0.0
  %7225 = vmatpush1.msra.mxu0 0.0
  %7226 = vmatprep.subr.mxu0 0.0
  %7227 = vmatpush1.msra.mxu0 0.0
  %7228 = vmatprep.subr.mxu0 0.0
  %7229 = vmatpush1.msra.mxu0 0.0
  %7230 = vmatprep.subr.mxu0 0.0
  %7231 = vmatpush1.msra.mxu0 %v7203
  %7232 = vmatprep.subr.mxu0 0.0
  %7233 = vmatpush1.msra.mxu0 %v7202
  %7234 = vmatprep.subr.mxu0 0.0
  %7235 = vmatpush1.msra.mxu0 %v7201
  %7236 = vmatprep.subr.mxu0 0.0
  %7237 = vmatpush1.msra.mxu0 %v7200
  %7238 = vmatprep.subr.mxu0 0.0
  %7239 = vmatpush1.msra.mxu0 %v7199
  %7240 = vmatprep.subr.mxu0 0.0
  %7241 = vmatpush1.msra.mxu0 %v7198
  %7242 = vmatprep.subr.mxu0 0.0
  %7243 = vmatpush1.msra.mxu0 %v7197
  %7244 = vmatprep.subr.mxu0 0.0
  %7245 = vmatpush1.msra.mxu0 %v7196
  %7246 = vmatprep.subr.mxu0 0.0
  %7247 = vmatpush2.msra.mxu0 0.0
  %7248 = vmatprep.subr.mxu0 0.0
  %7249 = vmatpush2.msra.mxu0 0.0
  %7250 = vmatprep.subr.mxu0 0.0
  %7251 = vmatpush2.msra.mxu0 0.0
  %7252 = vmatprep.subr.mxu0 0.0
  %7253 = vmatpush2.msra.mxu0 0.0
  %7254 = vmatprep.subr.mxu0 0.0
  %7255 = vmatpush2.msra.mxu0 0.0
  %7256 = vmatprep.subr.mxu0 0.0
  %7257 = vmatpush2.msra.mxu0 0.0
  %7258 = vmatprep.subr.mxu0 0.0
  %7259 = vmatpush2.msra.mxu0 0.0
  %7260 = vmatprep.subr.mxu0 0.0
  %7261 = vmatpush2.msra.mxu0 0.0
  %7262 = vmatprep.subr.mxu0 0.0
  %7263 = vmatpush2.msra.mxu0 0.0
  %7264 = vmatprep.subr.mxu0 0.0
  %7265 = vmatpush2.msra.mxu0 0.0
  %7266 = vmatprep.subr.mxu0 0.0
  %7267 = vmatpush2.msra.mxu0 0.0
  %7268 = vmatprep.subr.mxu0 0.0
  %7269 = vmatpush2.msra.mxu0 0.0
  %7270 = vmatprep.subr.mxu0 0.0
  %7271 = vmatpush2.msra.mxu0 0.0
  %7272 = vmatprep.subr.mxu0 0.0
  %7273 = vmatpush2.msra.mxu0 0.0
  %7274 = vmatprep.subr.mxu0 0.0
  %7275 = vmatpush2.msra.mxu0 0.0
  %7276 = vmatprep.subr.mxu0 0.0
  %7277 = vmatpush2.msra.mxu0 0.0
  %7278 = vmatprep.mubr.f32.mxu0 0.0
  %7279 = vmatmul.mubr.f32.gmra.mxu0 %v7209
  %v7280 = vpop.f32.mrf.mxu0
  %v7281 = vadd.f32 %v7207, %v7280
  %v7282 = vpop.f32.mrf.mxu0
  %7283 = vmatprep.mubr.f32.mxu0 0.0
  %7284 = vmatmul.mubr.f32.gmra.mxu0 %v7212
  %v7285 = vpop.f32.mrf.mxu0
  %v7286 = vadd.f32 %v7207, %v7285
  %v7287 = vpop.f32.mrf.mxu0
  %7288 = vdwg.mxu0
  %v7289 = vadd.f32 %v7281, %v7085
  %v7290 = vadd.f32 %v7286, %v7086
  %v7291 = vsel %vm45, %v7289, 0.0
  %7292 = vadd.xlane.f32.xlu0 %v7291
  %v7293 = vpop.xlane.xlu0 %7292
  %v7294 = vsel %vm45, %v7290, 0.0
  %7295 = vadd.xlane.f32.xlu0 %v7294
  %v7296 = vpop.xlane.xlu0 %7295
  %v7297 = vmul.f32 %v7293, %v1592
  %v7298 = vmul.f32 %v7296, %v1592
  %v7299 = vsub.f32 %v7289, %v7297
  %v7300 = vsub.f32 %v7290, %v7298
  %v7301 = vmul.f32 %v7299, %v7299
  %v7302 = vmul.f32 %v7300, %v7300
  %v7303 = vsel %vm45, %v7301, 0.0
  %7304 = vadd.xlane.f32.xlu0 %v7303
  %v7305 = vpop.xlane.xlu0 %7304
  %v7306 = vsel %vm45, %v7302, 0.0
  %7307 = vadd.xlane.f32.xlu0 %v7306
  %v7308 = vpop.xlane.xlu0 %7307
  %v7309 = vmul.f32 %v7305, %v1592
  %v7310 = vmul.f32 %v7308, %v1592
  %v7311 = vadd.f32 %v7309, 1e-12
  %v7312 = vadd.f32 %v7310, 1e-12
  %v7313 = vrsqrt.pop %v7311
  %v7314 = vrsqrt.pop %v7312
  %v7315 = vmul.f32 %v7299, %v7313
  %v7316 = vmul.f32 %v7300, %v7314
  %v7317 = vlaneseq
  %v7318 = vshrl.u32 %v7317, 7
  %v7319 = vsub.s32 6, %v7318
  %v7320 = vrot.slane %v5514, %v7319
  %v7321 = vmul.f32 %v7315, %v7320
  %v7322 = vmul.f32 %v7316, %v7320
  %v7323 = vlaneseq
  %v7324 = vshrl.u32 %v7323, 7
  %v7325 = vsub.s32 7, %v7324
  %v7326 = vrot.slane %v5514, %v7325
  %v7327 = vadd.f32 %v7321, %v7326
  %v7328 = vadd.f32 %v7322, %v7326
  %v7329 = vadd.f32 %v5508, %v7327
  %v7330 = vadd.f32 %v5509, %v7328
  %v7331 = vmul.f32 %v7329, 0.25
  %v7332 = vmul.f32 %v7330, 0.25
  %v7333 = vld [vmem:[%s7] sm:$0xff]
  %v7334 = vld [vmem:[%s7 + $0x8] sm:$0xff]
  %v7335 = vld [vmem:[%s7 + $0x10] sm:$0xff]
  %v7336 = vld [vmem:[%s7 + $0x18] sm:$0xff]
  %v7337 = vld [vmem:[%s8] sm:$0x1]
  %v7339 = vlaneseq
  %v7340 = vshrl.u32 %v7339, 7
  %v7341 = vsub.s32 0, %v7340
  %v7342 = vrot.slane %v7337, %v7341
  %v7345 = vsel %vm45, %v7331, 0
  %v7348 = vsel %vm45, %v7332, 0
  %7350 = vmatprep.subr.mxu0 0.0
  %7351 = vmatpush1.msra.mxu0 0.0
  %7352 = vmatprep.subr.mxu0 0.0
  %7353 = vmatpush1.msra.mxu0 0.0
  %7354 = vmatprep.subr.mxu0 0.0
  %7355 = vmatpush1.msra.mxu0 0.0
  %7356 = vmatprep.subr.mxu0 0.0
  %7357 = vmatpush1.msra.mxu0 0.0
  %7358 = vmatprep.subr.mxu0 0.0
  %7359 = vmatpush1.msra.mxu0 0.0
  %7360 = vmatprep.subr.mxu0 0.0
  %7361 = vmatpush1.msra.mxu0 0.0
  %7362 = vmatprep.subr.mxu0 0.0
  %7363 = vmatpush1.msra.mxu0 0.0
  %7364 = vmatprep.subr.mxu0 0.0
  %7365 = vmatpush1.msra.mxu0 0.0
  %7366 = vmatprep.subr.mxu0 0.0
  %7367 = vmatpush1.msra.mxu0 0.0
  %7368 = vmatprep.subr.mxu0 0.0
  %7369 = vmatpush1.msra.mxu0 0.0
  %7370 = vmatprep.subr.mxu0 0.0
  %7371 = vmatpush1.msra.mxu0 0.0
  %7372 = vmatprep.subr.mxu0 0.0
  %7373 = vmatpush1.msra.mxu0 0.0
  %7374 = vmatprep.subr.mxu0 0.0
  %7375 = vmatpush1.msra.mxu0 %v7336
  %7376 = vmatprep.subr.mxu0 0.0
  %7377 = vmatpush1.msra.mxu0 %v7335
  %7378 = vmatprep.subr.mxu0 0.0
  %7379 = vmatpush1.msra.mxu0 %v7334
  %7380 = vmatprep.subr.mxu0 0.0
  %7381 = vmatpush1.msra.mxu0 %v7333
  %7382 = vmatprep.subr.mxu0 0.0
  %7383 = vmatpush2.msra.mxu0 0.0
  %7384 = vmatprep.subr.mxu0 0.0
  %7385 = vmatpush2.msra.mxu0 0.0
  %7386 = vmatprep.subr.mxu0 0.0
  %7387 = vmatpush2.msra.mxu0 0.0
  %7388 = vmatprep.subr.mxu0 0.0
  %7389 = vmatpush2.msra.mxu0 0.0
  %7390 = vmatprep.subr.mxu0 0.0
  %7391 = vmatpush2.msra.mxu0 0.0
  %7392 = vmatprep.subr.mxu0 0.0
  %7393 = vmatpush2.msra.mxu0 0.0
  %7394 = vmatprep.subr.mxu0 0.0
  %7395 = vmatpush2.msra.mxu0 0.0
  %7396 = vmatprep.subr.mxu0 0.0
  %7397 = vmatpush2.msra.mxu0 0.0
  %7398 = vmatprep.subr.mxu0 0.0
  %7399 = vmatpush2.msra.mxu0 0.0
  %7400 = vmatprep.subr.mxu0 0.0
  %7401 = vmatpush2.msra.mxu0 0.0
  %7402 = vmatprep.subr.mxu0 0.0
  %7403 = vmatpush2.msra.mxu0 0.0
  %7404 = vmatprep.subr.mxu0 0.0
  %7405 = vmatpush2.msra.mxu0 0.0
  %7406 = vmatprep.subr.mxu0 0.0
  %7407 = vmatpush2.msra.mxu0 0.0
  %7408 = vmatprep.subr.mxu0 0.0
  %7409 = vmatpush2.msra.mxu0 0.0
  %7410 = vmatprep.subr.mxu0 0.0
  %7411 = vmatpush2.msra.mxu0 0.0
  %7412 = vmatprep.subr.mxu0 0.0
  %7413 = vmatpush2.msra.mxu0 0.0
  %7414 = vmatprep.mubr.f32.mxu0 0.0
  %7415 = vmatmul.mubr.f32.gmra.mxu0 %v7345
  %v7416 = vpop.f32.mrf.mxu0
  %v7417 = vadd.f32 %v7342, %v7416
  %v7418 = vpop.f32.mrf.mxu0
  %7419 = vmatprep.mubr.f32.mxu0 0.0
  %7420 = vmatmul.mubr.f32.gmra.mxu0 %v7348
  %v7421 = vpop.f32.mrf.mxu0
  %v7422 = vadd.f32 %v7342, %v7421
  %v7423 = vpop.f32.mrf.mxu0
  %7424 = vdwg.mxu0
  %7425 = vst [vmem:[%s9] sm:$0xff] %v7417
  %7426 = vst [vmem:[%s9 + $0x8] sm:$0xff] %v7422
  // Predicated region
  $region38: #{psum_mixlayer_forward.1} parent=0 // pred_check
    _
  $region39: #{psum_mixlayer_forward.1} parent=0 // pred_check_branch
    %7428 = sbr.rel (0) target = $region41
  $region40: #{psum_mixlayer_forward.1} parent=0 // pred_region
    _
  $region41: #{psum_mixlayer_forward.1} parent=0 // pred_fallthru
    _
  // Predicated region
  $region42: #{psum_mixlayer_forward.1} parent=0 // pred_check
    _
  $region43: #{psum_mixlayer_forward.1} parent=0 // pred_check_branch
    %7430 = sbr.rel (0) target = $region45
  $region44: #{psum_mixlayer_forward.1} parent=0 // pred_region
    _
  $region45: #{psum_mixlayer_forward.1} parent=0 // pred_fallthru
    _

</llo_original>
